<compile_context>
chip_gen: v7x
topology: tpu7x:2x2x1
jax: 0.10.0
libtpu: 0.0.40
codegen_flags: <defaults>
</compile_context>

<pallas_src>
import functools

import jax
import jax.numpy as jnp
import numpy as np
from jax import lax
from jax.experimental import pallas as pl
from jax.experimental.pallas import tpu as pltpu


# ----------------------------------------------------------------------------
# small helpers
# ----------------------------------------------------------------------------
def _cdiv(a, b):
    return -(-a // b)


def _round_up(a, b):
    return _cdiv(a, b) * b


def _pick_group_block(G, c_in_g, c_out_g):
    """Groups per channel block: smallest divisor of G whose input AND output channel
    slabs are 128-lane multiples (lane-dense DMA, stores and matmuls); otherwise all
    groups at once (full channel width is always a legal TPU block)."""
    if G == 1:
        return 1
    for d in range(1, G):
        if G % d == 0 and (d * c_in_g) % 128 == 0 and (d * c_out_g) % 128 == 0:
            return d
    return G


# ----------------------------------------------------------------------------
# Pallas kernel: one (channel-block, batch, L-tile) grid step of a conv1d whose stride
# phases have been folded into the contraction.  bf16 in, f32 accumulate, fused bias +
# LeakyReLU, single lane-dense bf16 output store.
# ----------------------------------------------------------------------------
def _conv_kernel(*refs, Q, TL, HQ, NPH, CW, neg_slope):
    # refs:
    #   [xm_p, xh_p] * NPH : main (TL, CW) and halo (HQ, CW) folded-row windows, bf16
    #   w_ref  : (Q, CD, COS)   folded block-diagonal weights of this channel block, bf16
    #   b_ref  : (1, COS)       bias, f32
    #   o_ref  : (TL, COS)      output tile, bf16
    #   xfold  : (TL+HQ, CD)    VMEM scratch: folded contraction window, bf16
    #   acc    : (TL, COS)      VMEM scratch: f32 channels-last accumulator
    ins = refs[:2 * NPH]
    w_ref, b_ref, o_ref = refs[2 * NPH:2 * NPH + 3]
    xfold_ref, acc_ref = refs[2 * NPH + 3:]

    # Assemble the folded window once per tile with lane/sublane-aligned copies
    # (CW is either a 128-multiple or the full channel width; TL, HQ are 8-multiples).
    for p in range(NPH):
        xm_ref = ins[2 * p]
        xh_ref = ins[2 * p + 1]
        xfold_ref[pl.ds(0, TL), pl.ds(p * CW, CW)] = xm_ref[...]
        xfold_ref[pl.ds(TL, HQ), pl.ds(p * CW, CW)] = xh_ref[...]

    # Folded tap loop: Q = ceil(K/stride) matmuls with contraction depth stride*CHS,
    # accumulated into a lane-dense channels-last f32 scratch.
    for q in range(Q):
        lhs = xfold_ref[pl.ds(q, TL), :]                       # (TL, CD) bf16
        contrib = jnp.dot(lhs, w_ref[q], preferred_element_type=jnp.float32)
        if q == 0:
            acc_ref[...] = contrib
        else:
            acc_ref[...] += contrib

    y = acc_ref[...] + b_ref[...]                              # f32 epilogue
    if neg_slope is not None:
        y = jnp.where(y > 0, y, neg_slope * y)                 # LeakyReLU
    o_ref[...] = y.astype(o_ref.dtype)                         # single lane-dense store


def _conv_layer_pallas(x, lp):
    """One conv layer (cross-correlation, PyTorch semantics) + optional LeakyReLU.

    x:  (B, L, C_in) channels-last activations (cast to bf16).
    lp: layer dict produced by prepare_kernel_params.
    Returns (B, L_out, C_out) bf16.
    """
    B, L, C_in = x.shape
    assert C_in == lp["C_in"], (C_in, lp["C_in"])
    stride, padding, K = lp["stride"], lp["padding"], lp["K"]
    Q, CD, COS = lp["Q"], lp["CD"], lp["COS"]
    NIB, NOB, C_out = lp["NIB"], lp["NOB"], lp["C_out"]
    slope = lp["slope"]

    NPH = stride if NIB > 1 else 1          # number of per-phase input views
    CW = CD // NPH                          # channel width of each input view

    L_out = (L + 2 * padding - K) // stride + 1
    assert L_out >= 1

    HQ = _round_up(max(Q - 1, 1), 8)        # halo rows (folded space), multiple of 8
    TL = _round_up(min(512, L_out), HQ)     # output rows per tile
    assert TL % HQ == 0 and TL % 8 == 0, (TL, HQ)
    NLT = _cdiv(L_out, TL)
    L4 = NLT * TL + HQ                      # folded rows made visible to the kernel
    L_inp = stride * L4
    pad_r = L_inp - L - padding
    assert pad_r >= 0

    # Conv left-pad + right-pad up to the tiled extent, then a free space-to-depth
    # reshape folding the stride phases into channels.
    x_p = jnp.pad(x.astype(jnp.bfloat16), ((0, 0), (padding, pad_r), (0, 0)))
    x4 = x_p.reshape(B, L4, stride * C_in)

    follow = 1 if NIB > 1 else 0            # grouped blocks: input slab follows ob
    tl_hq = TL // HQ
    in_specs = []
    for p in range(NPH):
        def main_map(ob, b, j, p=p):
            return (b, j, p * NIB + follow * ob)

        def halo_map(ob, b, j, p=p):
            return (b, (j + 1) * tl_hq, p * NIB + follow * ob)

        in_specs.append(pl.BlockSpec((None, TL, CW), main_map))
        in_specs.append(pl.BlockSpec((None, HQ, CW), halo_map))
    # whole weight slab of this channel block; resident across (batch, tile) iterations
    in_specs.append(pl.BlockSpec((None, Q, CD, COS), lambda ob, b, j: (ob, 0, 0, 0)))
    in_specs.append(pl.BlockSpec((None, 1, COS), lambda ob, b, j: (ob, 0, 0)))

    kernel = functools.partial(_conv_kernel, Q=Q, TL=TL, HQ=HQ, NPH=NPH, CW=CW,
                               neg_slope=slope)

    out = pl.pallas_call(
        kernel,
        out_shape=jax.ShapeDtypeStruct((B, NLT * TL, C_out), jnp.bfloat16),
        grid=(NOB, B, NLT),
        in_specs=in_specs,
        out_specs=pl.BlockSpec((None, TL, COS), lambda ob, b, j: (b, j, ob)),
        scratch_shapes=[
            pltpu.VMEM((TL + HQ, CD), jnp.bfloat16),   # folded contraction window
            pltpu.VMEM((TL, COS), jnp.float32),        # lane-dense f32 accumulator
        ],
        compiler_params=pltpu.CompilerParams(
            dimension_semantics=("parallel", "parallel", "parallel"),
            vmem_limit_bytes=32 * 1024 * 1024),
    )(*([x4] * (2 * NPH) + [lp["w"], lp["b"]]))

    return out[:, :L_out, :]


# ----------------------------------------------------------------------------
# Parameters (PyTorch Conv1d layout) + one-time kernel-layout preparation
# ----------------------------------------------------------------------------
def _conv_init(key, c_out, c_in_g, k):
    # mimic torch Conv1d default init: U(-1/sqrt(fan_in), 1/sqrt(fan_in))
    k1, k2 = jax.random.split(key)
    bound = 1.0 / float(np.sqrt(c_in_g * k))
    w = jax.random.uniform(k1, (c_out, c_in_g, k), jnp.float32, -bound, bound)
    b = jax.random.uniform(k2, (c_out,), jnp.float32, -bound, bound)
    return w, b


def make_params(key, dim_in, dim_h=16, groups=(4, 16, 64, 256), max_dim=1024):
    keys = jax.random.split(key, len(groups) + 3)
    params = {"init": _conv_init(keys[0], dim_h, dim_in, 15), "layers": []}
    cur = dim_h
    for i, g in enumerate(groups):
        out_dim = min(cur * 4, max_dim)
        params["layers"].append((_conv_init(keys[i + 1], out_dim, cur // g, 41), g))
        cur = out_dim
    params["logit1"] = _conv_init(keys[-2], cur, cur, 5)
    params["logit2"] = _conv_init(keys[-1], 1, cur, 3)
    return params


def _prep_layer(w, b, groups, stride, padding, slope):
    """Torch (C_out, C_in/G, K) weights -> folded block-diagonal bf16 slabs
    (NOB, Q, stride*CHS, COS); bias -> f32 (NOB, 1, COS).  Done once per model."""
    w_np = np.asarray(w, np.float32)
    b_np = np.asarray(b, np.float32)
    C_out, C_in_g, K = w_np.shape
    C_in = C_in_g * groups
    C_out_g = C_out // groups
    Q = _cdiv(K, stride)

    if groups > 1:
        GB = _pick_group_block(groups, C_in_g, C_out_g)
        CHS = GB * C_in_g
        COS = GB * C_out_g
        NIB = groups // GB
        NOB = groups // GB
    else:
        GB = 1
        CHS = C_in
        NIB = 1
        COS = 256 if (C_out > 256 and C_out % 256 == 0) else C_out
        NOB = C_out // COS
    CD = stride * CHS

    W = np.zeros((NOB, Q, CD, COS), np.float32)
    for ob in range(NOB):
        for q in range(Q):
            for r in range(stride):
                k = q * stride + r
                if k >= K:
                    continue
                if groups > 1:
                    for gb in range(GB):
                        g = ob * GB + gb
                        blk = w_np[g * C_out_g:(g + 1) * C_out_g, :, k]   # (C_out_g, C_in_g)
                        W[ob, q,
                          r * CHS + gb * C_in_g: r * CHS + (gb + 1) * C_in_g,
                          gb * C_out_g:(gb + 1) * C_out_g] = blk.T
                else:
                    blk = w_np[ob * COS:(ob + 1) * COS, :, k]             # (COS, C_in)
                    W[ob, q, r * CHS:(r + 1) * CHS, :] = blk.T

    bias = b_np.reshape(NOB, 1, COS)
    return dict(
        w=jnp.asarray(W, jnp.bfloat16), b=jnp.asarray(bias, jnp.float32),
        stride=stride, padding=padding, slope=slope, K=K,
        C_in=C_in, C_out=C_out, CHS=CHS, COS=COS, NIB=NIB, NOB=NOB, Q=Q, CD=CD)


def prepare_kernel_params(params):
    """One-time weight relayout (hoisted out of the forward pass)."""
    layers = []
    w, b = params["init"]
    layers.append(_prep_layer(w, b, groups=1, stride=1, padding=7, slope=None))
    for (w, b), g in params["layers"]:
        layers.append(_prep_layer(w, b, groups=g, stride=4, padding=20, slope=0.1))
    w, b = params["logit1"]
    layers.append(_prep_layer(w, b, groups=1, stride=1, padding=2, slope=0.1))
    w, b = params["logit2"]
    layers.append(_prep_layer(w, b, groups=1, stride=1, padding=1, slope=None))
    return layers


# ----------------------------------------------------------------------------
# Forward passes
# ----------------------------------------------------------------------------
def multiscale_discriminator_pallas(layers, x_ncl):
    """layers: prepare_kernel_params(...) output.  x_ncl: (B, dim_in, L) PyTorch NCL.
    Returns (B, 1, L_out) f32 logits."""
    x = jnp.transpose(x_ncl, (0, 2, 1)).astype(jnp.bfloat16)   # -> (B, L, C)
    for lp in layers:
        x = _conv_layer_pallas(x, lp)
    return jnp.transpose(x, (0, 2, 1)).astype(jnp.float32)     # back to NCL


def _conv1d_ref(x_ncl, w, b, stride, padding, groups):
    out = lax.conv_general_dilated(
        x_ncl, w, window_strides=(stride,), padding=[(padding, padding)],
        dimension_numbers=("NCH", "OIH", "NCH"), feature_group_count=groups,
        preferred_element_type=jnp.float32)
    return out + b[None, :, None].astype(jnp.float32)


def multiscale_discriminator_ref(params, x_ncl):
    """Pure-XLA reference with matching bf16-in / f32-accumulate numerics."""
    def layer(x, w, b, stride, padding, groups, slope):
        y = _conv1d_ref(x, w.astype(jnp.bfloat16), b, stride, padding, groups)
        if slope is not None:
            y = jnp.where(y > 0, y, slope * y)
        return y.astype(jnp.bfloat16)

    x = x_ncl.astype(jnp.bfloat16)
    w, b = params["init"]
    x = layer(x, w, b, 1, 7, 1, None)
    for (w, b), g in params["layers"]:
        x = layer(x, w, b, 4, 20, g, 0.1)
    w, b = params["logit1"]
    x = layer(x, w, b, 1, 2, 1, 0.1)
    w, b = params["logit2"]
    x = layer(x, w, b, 1, 1, 1, None)
    return x.astype(jnp.float32)


# ----------------------------------------------------------------------------
if __name__ == "__main__":
    # Small config consistent with the module: dim_in=4, dim_h=16, groups=(4, 16),
    # max_dim=256; batch=2, seq=64 in PyTorch NCL layout.
    key = jax.random.PRNGKey(0)
    pkey, xkey = jax.random.split(key)
    params = make_params(pkey, dim_in=4, dim_h=16, groups=(4, 16), max_dim=256)
    layers = prepare_kernel_params(params)                 # one-time weight relayout
    x = jax.random.normal(xkey, (2, 4, 64), jnp.float32)   # (B, C, L)

    fwd = jax.jit(lambda inp: multiscale_discriminator_pallas(layers, inp))
    out = jax.block_until_ready(fwd(x))

    ref = jax.block_until_ready(multiscale_discriminator_ref(params, x))
    assert out.shape == ref.shape == (2, 1, 4), (out.shape, ref.shape)
    np.testing.assert_allclose(np.asarray(out), np.asarray(ref), rtol=2e-2, atol=2e-2)
    print("KERNEL_OK")
</pallas_src>

<mosaic_0001>
module attributes {stable_mosaic.version = 11 : i64} {
  func.func @_conv_kernel(%arg0: i32, %arg1: i32, %arg2: i32, %arg3: memref<1x64x4xbf16, #tpu.memory_space<vmem>>, %arg4: memref<1x16x4xbf16, #tpu.memory_space<vmem>>, %arg5: memref<1x15x4x16xbf16, #tpu.memory_space<vmem>>, %arg6: memref<1x1x16xf32, #tpu.memory_space<vmem>>, %arg7: memref<1x64x16xbf16, #tpu.memory_space<vmem>>, %arg8: memref<80x4xbf16, #tpu.memory_space<vmem>>, %arg9: memref<64x16xf32, #tpu.memory_space<vmem>>) attributes {dimension_semantics = [#tpu.dimension_semantics<parallel>, #tpu.dimension_semantics<parallel>, #tpu.dimension_semantics<parallel>], iteration_bounds = array<i64: 1, 2, 1>, scalar_prefetch = 0 : i64, scratch_operands = 2 : i64, tpu.core_type = #tpu.core_type<tc>, window_params = [{transform_indices = @transform_0, window_bounds = array<i64: 1, 64, 4>}, {transform_indices = @transform_1, window_bounds = array<i64: 1, 16, 4>}, {transform_indices = @transform_2, window_bounds = array<i64: 1, 15, 4, 16>}, {transform_indices = @transform_3, window_bounds = array<i64: 1, 1, 16>}, {transform_indices = @transform_4, window_bounds = array<i64: 1, 64, 16>}]} {
    %c0 = arith.constant 0 : index
    %c0_0 = arith.constant 0 : index
    %c0_1 = arith.constant 0 : index
    %0 = vector.load %arg3[%c0, %c0_0, %c0_1] : memref<1x64x4xbf16, #tpu.memory_space<vmem>>, vector<1x64x4xbf16>
    %1 = vector.shape_cast %0 : vector<1x64x4xbf16> to vector<64x4xbf16>
    %c0_2 = arith.constant 0 : index
    %c0_3 = arith.constant 0 : index
    %2 = vector.load %arg8[%c0_2, %c0_3] : memref<80x4xbf16, #tpu.memory_space<vmem>>, vector<64x4xbf16>
    tpu.vector_store %arg8[%c0_2, %c0_3], %1 {strides = array<i32>} : memref<80x4xbf16, #tpu.memory_space<vmem>>, vector<64x4xbf16>,
    %c0_4 = arith.constant 0 : index
    %c0_5 = arith.constant 0 : index
    %c0_6 = arith.constant 0 : index
    %3 = vector.load %arg4[%c0_4, %c0_5, %c0_6] : memref<1x16x4xbf16, #tpu.memory_space<vmem>>, vector<1x16x4xbf16>
    %4 = vector.shape_cast %3 : vector<1x16x4xbf16> to vector<16x4xbf16>
    %c64 = arith.constant 64 : index
    %c0_7 = arith.constant 0 : index
    %5 = vector.load %arg8[%c64, %c0_7] : memref<80x4xbf16, #tpu.memory_space<vmem>>, vector<16x4xbf16>
    tpu.vector_store %arg8[%c64, %c0_7], %4 {strides = array<i32>} : memref<80x4xbf16, #tpu.memory_space<vmem>>, vector<16x4xbf16>,
    %c0_8 = arith.constant 0 : index
    %c0_9 = arith.constant 0 : index
    %6 = vector.load %arg8[%c0_8, %c0_9] : memref<80x4xbf16, #tpu.memory_space<vmem>>, vector<64x4xbf16>
    %c0_10 = arith.constant 0 : index
    %c0_11 = arith.constant 0 : index
    %c0_12 = arith.constant 0 : index
    %c0_13 = arith.constant 0 : index
    %7 = vector.load %arg5[%c0_10, %c0_11, %c0_12, %c0_13] : memref<1x15x4x16xbf16, #tpu.memory_space<vmem>>, vector<1x1x4x16xbf16>
    %8 = vector.shape_cast %7 : vector<1x1x4x16xbf16> to vector<4x16xbf16>
    %cst = arith.constant dense<0.000000e+00> : vector<64x16xf32>
    %9 = tpu.matmul %6, %8, %cst {dimension_numbers = #tpu.dot_dimension_numbers<[1], [0], [0], [1], [0, 0, 1, 1], [], []>} : vector<64x4xbf16>, vector<4x16xbf16>, vector<64x16xf32> -> vector<64x16xf32>
    %c0_14 = arith.constant 0 : index
    %c0_15 = arith.constant 0 : index
    %10 = vector.load %arg9[%c0_14, %c0_15] : memref<64x16xf32, #tpu.memory_space<vmem>>, vector<64x16xf32>
    tpu.vector_store %arg9[%c0_14, %c0_15], %9 {strides = array<i32>} : memref<64x16xf32, #tpu.memory_space<vmem>>, vector<64x16xf32>,
    %c1 = arith.constant 1 : index
    %c0_16 = arith.constant 0 : index
    %11 = vector.load %arg8[%c1, %c0_16] : memref<80x4xbf16, #tpu.memory_space<vmem>>, vector<64x4xbf16>
    %c0_17 = arith.constant 0 : index
    %c1_18 = arith.constant 1 : index
    %c0_19 = arith.constant 0 : index
    %c0_20 = arith.constant 0 : index
    %12 = vector.load %arg5[%c0_17, %c1_18, %c0_19, %c0_20] : memref<1x15x4x16xbf16, #tpu.memory_space<vmem>>, vector<1x1x4x16xbf16>
    %13 = vector.shape_cast %12 : vector<1x1x4x16xbf16> to vector<4x16xbf16>
    %cst_21 = arith.constant dense<0.000000e+00> : vector<64x16xf32>
    %14 = tpu.matmul %11, %13, %cst_21 {dimension_numbers = #tpu.dot_dimension_numbers<[1], [0], [0], [1], [0, 0, 1, 1], [], []>} : vector<64x4xbf16>, vector<4x16xbf16>, vector<64x16xf32> -> vector<64x16xf32>
    %c0_22 = arith.constant 0 : index
    %c0_23 = arith.constant 0 : index
    %15 = vector.load %arg9[%c0_22, %c0_23] : memref<64x16xf32, #tpu.memory_space<vmem>>, vector<64x16xf32>
    %16 = arith.addf %15, %14 : vector<64x16xf32>
    %c0_24 = arith.constant 0 : index
    %c0_25 = arith.constant 0 : index
    %17 = vector.load %arg9[%c0_24, %c0_25] : memref<64x16xf32, #tpu.memory_space<vmem>>, vector<64x16xf32>
    tpu.vector_store %arg9[%c0_24, %c0_25], %16 {strides = array<i32>} : memref<64x16xf32, #tpu.memory_space<vmem>>, vector<64x16xf32>,
    %c2 = arith.constant 2 : index
    %c0_26 = arith.constant 0 : index
    %18 = vector.load %arg8[%c2, %c0_26] : memref<80x4xbf16, #tpu.memory_space<vmem>>, vector<64x4xbf16>
    %c0_27 = arith.constant 0 : index
    %c2_28 = arith.constant 2 : index
    %c0_29 = arith.constant 0 : index
    %c0_30 = arith.constant 0 : index
    %19 = vector.load %arg5[%c0_27, %c2_28, %c0_29, %c0_30] : memref<1x15x4x16xbf16, #tpu.memory_space<vmem>>, vector<1x1x4x16xbf16>
    %20 = vector.shape_cast %19 : vector<1x1x4x16xbf16> to vector<4x16xbf16>
    %cst_31 = arith.constant dense<0.000000e+00> : vector<64x16xf32>
    %21 = tpu.matmul %18, %20, %cst_31 {dimension_numbers = #tpu.dot_dimension_numbers<[1], [0], [0], [1], [0, 0, 1, 1], [], []>} : vector<64x4xbf16>, vector<4x16xbf16>, vector<64x16xf32> -> vector<64x16xf32>
    %c0_32 = arith.constant 0 : index
    %c0_33 = arith.constant 0 : index
    %22 = vector.load %arg9[%c0_32, %c0_33] : memref<64x16xf32, #tpu.memory_space<vmem>>, vector<64x16xf32>
    %23 = arith.addf %22, %21 : vector<64x16xf32>
    %c0_34 = arith.constant 0 : index
    %c0_35 = arith.constant 0 : index
    %24 = vector.load %arg9[%c0_34, %c0_35] : memref<64x16xf32, #tpu.memory_space<vmem>>, vector<64x16xf32>
    tpu.vector_store %arg9[%c0_34, %c0_35], %23 {strides = array<i32>} : memref<64x16xf32, #tpu.memory_space<vmem>>, vector<64x16xf32>,
    %c3 = arith.constant 3 : index
    %c0_36 = arith.constant 0 : index
    %25 = vector.load %arg8[%c3, %c0_36] : memref<80x4xbf16, #tpu.memory_space<vmem>>, vector<64x4xbf16>
    %c0_37 = arith.constant 0 : index
    %c3_38 = arith.constant 3 : index
    %c0_39 = arith.constant 0 : index
    %c0_40 = arith.constant 0 : index
    %26 = vector.load %arg5[%c0_37, %c3_38, %c0_39, %c0_40] : memref<1x15x4x16xbf16, #tpu.memory_space<vmem>>, vector<1x1x4x16xbf16>
    %27 = vector.shape_cast %26 : vector<1x1x4x16xbf16> to vector<4x16xbf16>
    %cst_41 = arith.constant dense<0.000000e+00> : vector<64x16xf32>
    %28 = tpu.matmul %25, %27, %cst_41 {dimension_numbers = #tpu.dot_dimension_numbers<[1], [0], [0], [1], [0, 0, 1, 1], [], []>} : vector<64x4xbf16>, vector<4x16xbf16>, vector<64x16xf32> -> vector<64x16xf32>
    %c0_42 = arith.constant 0 : index
    %c0_43 = arith.constant 0 : index
    %29 = vector.load %arg9[%c0_42, %c0_43] : memref<64x16xf32, #tpu.memory_space<vmem>>, vector<64x16xf32>
    %30 = arith.addf %29, %28 : vector<64x16xf32>
    %c0_44 = arith.constant 0 : index
    %c0_45 = arith.constant 0 : index
    %31 = vector.load %arg9[%c0_44, %c0_45] : memref<64x16xf32, #tpu.memory_space<vmem>>, vector<64x16xf32>
    tpu.vector_store %arg9[%c0_44, %c0_45], %30 {strides = array<i32>} : memref<64x16xf32, #tpu.memory_space<vmem>>, vector<64x16xf32>,
    %c4 = arith.constant 4 : index
    %c0_46 = arith.constant 0 : index
    %32 = vector.load %arg8[%c4, %c0_46] : memref<80x4xbf16, #tpu.memory_space<vmem>>, vector<64x4xbf16>
    %c0_47 = arith.constant 0 : index
    %c4_48 = arith.constant 4 : index
    %c0_49 = arith.constant 0 : index
    %c0_50 = arith.constant 0 : index
    %33 = vector.load %arg5[%c0_47, %c4_48, %c0_49, %c0_50] : memref<1x15x4x16xbf16, #tpu.memory_space<vmem>>, vector<1x1x4x16xbf16>
    %34 = vector.shape_cast %33 : vector<1x1x4x16xbf16> to vector<4x16xbf16>
    %cst_51 = arith.constant dense<0.000000e+00> : vector<64x16xf32>
    %35 = tpu.matmul %32, %34, %cst_51 {dimension_numbers = #tpu.dot_dimension_numbers<[1], [0], [0], [1], [0, 0, 1, 1], [], []>} : vector<64x4xbf16>, vector<4x16xbf16>, vector<64x16xf32> -> vector<64x16xf32>
    %c0_52 = arith.constant 0 : index
    %c0_53 = arith.constant 0 : index
    %36 = vector.load %arg9[%c0_52, %c0_53] : memref<64x16xf32, #tpu.memory_space<vmem>>, vector<64x16xf32>
    %37 = arith.addf %36, %35 : vector<64x16xf32>
    %c0_54 = arith.constant 0 : index
    %c0_55 = arith.constant 0 : index
    %38 = vector.load %arg9[%c0_54, %c0_55] : memref<64x16xf32, #tpu.memory_space<vmem>>, vector<64x16xf32>
    tpu.vector_store %arg9[%c0_54, %c0_55], %37 {strides = array<i32>} : memref<64x16xf32, #tpu.memory_space<vmem>>, vector<64x16xf32>,
    %c5 = arith.constant 5 : index
    %c0_56 = arith.constant 0 : index
    %39 = vector.load %arg8[%c5, %c0_56] : memref<80x4xbf16, #tpu.memory_space<vmem>>, vector<64x4xbf16>
    %c0_57 = arith.constant 0 : index
    %c5_58 = arith.constant 5 : index
    %c0_59 = arith.constant 0 : index
    %c0_60 = arith.constant 0 : index
    %40 = vector.load %arg5[%c0_57, %c5_58, %c0_59, %c0_60] : memref<1x15x4x16xbf16, #tpu.memory_space<vmem>>, vector<1x1x4x16xbf16>
    %41 = vector.shape_cast %40 : vector<1x1x4x16xbf16> to vector<4x16xbf16>
    %cst_61 = arith.constant dense<0.000000e+00> : vector<64x16xf32>
    %42 = tpu.matmul %39, %41, %cst_61 {dimension_numbers = #tpu.dot_dimension_numbers<[1], [0], [0], [1], [0, 0, 1, 1], [], []>} : vector<64x4xbf16>, vector<4x16xbf16>, vector<64x16xf32> -> vector<64x16xf32>
    %c0_62 = arith.constant 0 : index
    %c0_63 = arith.constant 0 : index
    %43 = vector.load %arg9[%c0_62, %c0_63] : memref<64x16xf32, #tpu.memory_space<vmem>>, vector<64x16xf32>
    %44 = arith.addf %43, %42 : vector<64x16xf32>
    %c0_64 = arith.constant 0 : index
    %c0_65 = arith.constant 0 : index
    %45 = vector.load %arg9[%c0_64, %c0_65] : memref<64x16xf32, #tpu.memory_space<vmem>>, vector<64x16xf32>
    tpu.vector_store %arg9[%c0_64, %c0_65], %44 {strides = array<i32>} : memref<64x16xf32, #tpu.memory_space<vmem>>, vector<64x16xf32>,
    %c6 = arith.constant 6 : index
    %c0_66 = arith.constant 0 : index
    %46 = vector.load %arg8[%c6, %c0_66] : memref<80x4xbf16, #tpu.memory_space<vmem>>, vector<64x4xbf16>
    %c0_67 = arith.constant 0 : index
    %c6_68 = arith.constant 6 : index
    %c0_69 = arith.constant 0 : index
    %c0_70 = arith.constant 0 : index
    %47 = vector.load %arg5[%c0_67, %c6_68, %c0_69, %c0_70] : memref<1x15x4x16xbf16, #tpu.memory_space<vmem>>, vector<1x1x4x16xbf16>
    %48 = vector.shape_cast %47 : vector<1x1x4x16xbf16> to vector<4x16xbf16>
    %cst_71 = arith.constant dense<0.000000e+00> : vector<64x16xf32>
    %49 = tpu.matmul %46, %48, %cst_71 {dimension_numbers = #tpu.dot_dimension_numbers<[1], [0], [0], [1], [0, 0, 1, 1], [], []>} : vector<64x4xbf16>, vector<4x16xbf16>, vector<64x16xf32> -> vector<64x16xf32>
    %c0_72 = arith.constant 0 : index
    %c0_73 = arith.constant 0 : index
    %50 = vector.load %arg9[%c0_72, %c0_73] : memref<64x16xf32, #tpu.memory_space<vmem>>, vector<64x16xf32>
    %51 = arith.addf %50, %49 : vector<64x16xf32>
    %c0_74 = arith.constant 0 : index
    %c0_75 = arith.constant 0 : index
    %52 = vector.load %arg9[%c0_74, %c0_75] : memref<64x16xf32, #tpu.memory_space<vmem>>, vector<64x16xf32>
    tpu.vector_store %arg9[%c0_74, %c0_75], %51 {strides = array<i32>} : memref<64x16xf32, #tpu.memory_space<vmem>>, vector<64x16xf32>,
    %c7 = arith.constant 7 : index
    %c0_76 = arith.constant 0 : index
    %53 = vector.load %arg8[%c7, %c0_76] : memref<80x4xbf16, #tpu.memory_space<vmem>>, vector<64x4xbf16>
    %c0_77 = arith.constant 0 : index
    %c7_78 = arith.constant 7 : index
    %c0_79 = arith.constant 0 : index
    %c0_80 = arith.constant 0 : index
    %54 = vector.load %arg5[%c0_77, %c7_78, %c0_79, %c0_80] : memref<1x15x4x16xbf16, #tpu.memory_space<vmem>>, vector<1x1x4x16xbf16>
    %55 = vector.shape_cast %54 : vector<1x1x4x16xbf16> to vector<4x16xbf16>
    %cst_81 = arith.constant dense<0.000000e+00> : vector<64x16xf32>
    %56 = tpu.matmul %53, %55, %cst_81 {dimension_numbers = #tpu.dot_dimension_numbers<[1], [0], [0], [1], [0, 0, 1, 1], [], []>} : vector<64x4xbf16>, vector<4x16xbf16>, vector<64x16xf32> -> vector<64x16xf32>
    %c0_82 = arith.constant 0 : index
    %c0_83 = arith.constant 0 : index
    %57 = vector.load %arg9[%c0_82, %c0_83] : memref<64x16xf32, #tpu.memory_space<vmem>>, vector<64x16xf32>
    %58 = arith.addf %57, %56 : vector<64x16xf32>
    %c0_84 = arith.constant 0 : index
    %c0_85 = arith.constant 0 : index
    %59 = vector.load %arg9[%c0_84, %c0_85] : memref<64x16xf32, #tpu.memory_space<vmem>>, vector<64x16xf32>
    tpu.vector_store %arg9[%c0_84, %c0_85], %58 {strides = array<i32>} : memref<64x16xf32, #tpu.memory_space<vmem>>, vector<64x16xf32>,
    %c8 = arith.constant 8 : index
    %c0_86 = arith.constant 0 : index
    %60 = vector.load %arg8[%c8, %c0_86] : memref<80x4xbf16, #tpu.memory_space<vmem>>, vector<64x4xbf16>
    %c0_87 = arith.constant 0 : index
    %c8_88 = arith.constant 8 : index
    %c0_89 = arith.constant 0 : index
    %c0_90 = arith.constant 0 : index
    %61 = vector.load %arg5[%c0_87, %c8_88, %c0_89, %c0_90] : memref<1x15x4x16xbf16, #tpu.memory_space<vmem>>, vector<1x1x4x16xbf16>
    %62 = vector.shape_cast %61 : vector<1x1x4x16xbf16> to vector<4x16xbf16>
    %cst_91 = arith.constant dense<0.000000e+00> : vector<64x16xf32>
    %63 = tpu.matmul %60, %62, %cst_91 {dimension_numbers = #tpu.dot_dimension_numbers<[1], [0], [0], [1], [0, 0, 1, 1], [], []>} : vector<64x4xbf16>, vector<4x16xbf16>, vector<64x16xf32> -> vector<64x16xf32>
    %c0_92 = arith.constant 0 : index
    %c0_93 = arith.constant 0 : index
    %64 = vector.load %arg9[%c0_92, %c0_93] : memref<64x16xf32, #tpu.memory_space<vmem>>, vector<64x16xf32>
    %65 = arith.addf %64, %63 : vector<64x16xf32>
    %c0_94 = arith.constant 0 : index
    %c0_95 = arith.constant 0 : index
    %66 = vector.load %arg9[%c0_94, %c0_95] : memref<64x16xf32, #tpu.memory_space<vmem>>, vector<64x16xf32>
    tpu.vector_store %arg9[%c0_94, %c0_95], %65 {strides = array<i32>} : memref<64x16xf32, #tpu.memory_space<vmem>>, vector<64x16xf32>,
    %c9 = arith.constant 9 : index
    %c0_96 = arith.constant 0 : index
    %67 = vector.load %arg8[%c9, %c0_96] : memref<80x4xbf16, #tpu.memory_space<vmem>>, vector<64x4xbf16>
    %c0_97 = arith.constant 0 : index
    %c9_98 = arith.constant 9 : index
    %c0_99 = arith.constant 0 : index
    %c0_100 = arith.constant 0 : index
    %68 = vector.load %arg5[%c0_97, %c9_98, %c0_99, %c0_100] : memref<1x15x4x16xbf16, #tpu.memory_space<vmem>>, vector<1x1x4x16xbf16>
    %69 = vector.shape_cast %68 : vector<1x1x4x16xbf16> to vector<4x16xbf16>
    %cst_101 = arith.constant dense<0.000000e+00> : vector<64x16xf32>
    %70 = tpu.matmul %67, %69, %cst_101 {dimension_numbers = #tpu.dot_dimension_numbers<[1], [0], [0], [1], [0, 0, 1, 1], [], []>} : vector<64x4xbf16>, vector<4x16xbf16>, vector<64x16xf32> -> vector<64x16xf32>
    %c0_102 = arith.constant 0 : index
    %c0_103 = arith.constant 0 : index
    %71 = vector.load %arg9[%c0_102, %c0_103] : memref<64x16xf32, #tpu.memory_space<vmem>>, vector<64x16xf32>
    %72 = arith.addf %71, %70 : vector<64x16xf32>
    %c0_104 = arith.constant 0 : index
    %c0_105 = arith.constant 0 : index
    %73 = vector.load %arg9[%c0_104, %c0_105] : memref<64x16xf32, #tpu.memory_space<vmem>>, vector<64x16xf32>
    tpu.vector_store %arg9[%c0_104, %c0_105], %72 {strides = array<i32>} : memref<64x16xf32, #tpu.memory_space<vmem>>, vector<64x16xf32>,
    %c10 = arith.constant 10 : index
    %c0_106 = arith.constant 0 : index
    %74 = vector.load %arg8[%c10, %c0_106] : memref<80x4xbf16, #tpu.memory_space<vmem>>, vector<64x4xbf16>
    %c0_107 = arith.constant 0 : index
    %c10_108 = arith.constant 10 : index
    %c0_109 = arith.constant 0 : index
    %c0_110 = arith.constant 0 : index
    %75 = vector.load %arg5[%c0_107, %c10_108, %c0_109, %c0_110] : memref<1x15x4x16xbf16, #tpu.memory_space<vmem>>, vector<1x1x4x16xbf16>
    %76 = vector.shape_cast %75 : vector<1x1x4x16xbf16> to vector<4x16xbf16>
    %cst_111 = arith.constant dense<0.000000e+00> : vector<64x16xf32>
    %77 = tpu.matmul %74, %76, %cst_111 {dimension_numbers = #tpu.dot_dimension_numbers<[1], [0], [0], [1], [0, 0, 1, 1], [], []>} : vector<64x4xbf16>, vector<4x16xbf16>, vector<64x16xf32> -> vector<64x16xf32>
    %c0_112 = arith.constant 0 : index
    %c0_113 = arith.constant 0 : index
    %78 = vector.load %arg9[%c0_112, %c0_113] : memref<64x16xf32, #tpu.memory_space<vmem>>, vector<64x16xf32>
    %79 = arith.addf %78, %77 : vector<64x16xf32>
    %c0_114 = arith.constant 0 : index
    %c0_115 = arith.constant 0 : index
    %80 = vector.load %arg9[%c0_114, %c0_115] : memref<64x16xf32, #tpu.memory_space<vmem>>, vector<64x16xf32>
    tpu.vector_store %arg9[%c0_114, %c0_115], %79 {strides = array<i32>} : memref<64x16xf32, #tpu.memory_space<vmem>>, vector<64x16xf32>,
    %c11 = arith.constant 11 : index
    %c0_116 = arith.constant 0 : index
    %81 = vector.load %arg8[%c11, %c0_116] : memref<80x4xbf16, #tpu.memory_space<vmem>>, vector<64x4xbf16>
    %c0_117 = arith.constant 0 : index
    %c11_118 = arith.constant 11 : index
    %c0_119 = arith.constant 0 : index
    %c0_120 = arith.constant 0 : index
    %82 = vector.load %arg5[%c0_117, %c11_118, %c0_119, %c0_120] : memref<1x15x4x16xbf16, #tpu.memory_space<vmem>>, vector<1x1x4x16xbf16>
    %83 = vector.shape_cast %82 : vector<1x1x4x16xbf16> to vector<4x16xbf16>
    %cst_121 = arith.constant dense<0.000000e+00> : vector<64x16xf32>
    %84 = tpu.matmul %81, %83, %cst_121 {dimension_numbers = #tpu.dot_dimension_numbers<[1], [0], [0], [1], [0, 0, 1, 1], [], []>} : vector<64x4xbf16>, vector<4x16xbf16>, vector<64x16xf32> -> vector<64x16xf32>
    %c0_122 = arith.constant 0 : index
    %c0_123 = arith.constant 0 : index
    %85 = vector.load %arg9[%c0_122, %c0_123] : memref<64x16xf32, #tpu.memory_space<vmem>>, vector<64x16xf32>
    %86 = arith.addf %85, %84 : vector<64x16xf32>
    %c0_124 = arith.constant 0 : index
    %c0_125 = arith.constant 0 : index
    %87 = vector.load %arg9[%c0_124, %c0_125] : memref<64x16xf32, #tpu.memory_space<vmem>>, vector<64x16xf32>
    tpu.vector_store %arg9[%c0_124, %c0_125], %86 {strides = array<i32>} : memref<64x16xf32, #tpu.memory_space<vmem>>, vector<64x16xf32>,
    %c12 = arith.constant 12 : index
    %c0_126 = arith.constant 0 : index
    %88 = vector.load %arg8[%c12, %c0_126] : memref<80x4xbf16, #tpu.memory_space<vmem>>, vector<64x4xbf16>
    %c0_127 = arith.constant 0 : index
    %c12_128 = arith.constant 12 : index
    %c0_129 = arith.constant 0 : index
    %c0_130 = arith.constant 0 : index
    %89 = vector.load %arg5[%c0_127, %c12_128, %c0_129, %c0_130] : memref<1x15x4x16xbf16, #tpu.memory_space<vmem>>, vector<1x1x4x16xbf16>
    %90 = vector.shape_cast %89 : vector<1x1x4x16xbf16> to vector<4x16xbf16>
    %cst_131 = arith.constant dense<0.000000e+00> : vector<64x16xf32>
    %91 = tpu.matmul %88, %90, %cst_131 {dimension_numbers = #tpu.dot_dimension_numbers<[1], [0], [0], [1], [0, 0, 1, 1], [], []>} : vector<64x4xbf16>, vector<4x16xbf16>, vector<64x16xf32> -> vector<64x16xf32>
    %c0_132 = arith.constant 0 : index
    %c0_133 = arith.constant 0 : index
    %92 = vector.load %arg9[%c0_132, %c0_133] : memref<64x16xf32, #tpu.memory_space<vmem>>, vector<64x16xf32>
    %93 = arith.addf %92, %91 : vector<64x16xf32>
    %c0_134 = arith.constant 0 : index
    %c0_135 = arith.constant 0 : index
    %94 = vector.load %arg9[%c0_134, %c0_135] : memref<64x16xf32, #tpu.memory_space<vmem>>, vector<64x16xf32>
    tpu.vector_store %arg9[%c0_134, %c0_135], %93 {strides = array<i32>} : memref<64x16xf32, #tpu.memory_space<vmem>>, vector<64x16xf32>,
    %c13 = arith.constant 13 : index
    %c0_136 = arith.constant 0 : index
    %95 = vector.load %arg8[%c13, %c0_136] : memref<80x4xbf16, #tpu.memory_space<vmem>>, vector<64x4xbf16>
    %c0_137 = arith.constant 0 : index
    %c13_138 = arith.constant 13 : index
    %c0_139 = arith.constant 0 : index
    %c0_140 = arith.constant 0 : index
    %96 = vector.load %arg5[%c0_137, %c13_138, %c0_139, %c0_140] : memref<1x15x4x16xbf16, #tpu.memory_space<vmem>>, vector<1x1x4x16xbf16>
    %97 = vector.shape_cast %96 : vector<1x1x4x16xbf16> to vector<4x16xbf16>
    %cst_141 = arith.constant dense<0.000000e+00> : vector<64x16xf32>
    %98 = tpu.matmul %95, %97, %cst_141 {dimension_numbers = #tpu.dot_dimension_numbers<[1], [0], [0], [1], [0, 0, 1, 1], [], []>} : vector<64x4xbf16>, vector<4x16xbf16>, vector<64x16xf32> -> vector<64x16xf32>
    %c0_142 = arith.constant 0 : index
    %c0_143 = arith.constant 0 : index
    %99 = vector.load %arg9[%c0_142, %c0_143] : memref<64x16xf32, #tpu.memory_space<vmem>>, vector<64x16xf32>
    %100 = arith.addf %99, %98 : vector<64x16xf32>
    %c0_144 = arith.constant 0 : index
    %c0_145 = arith.constant 0 : index
    %101 = vector.load %arg9[%c0_144, %c0_145] : memref<64x16xf32, #tpu.memory_space<vmem>>, vector<64x16xf32>
    tpu.vector_store %arg9[%c0_144, %c0_145], %100 {strides = array<i32>} : memref<64x16xf32, #tpu.memory_space<vmem>>, vector<64x16xf32>,
    %c14 = arith.constant 14 : index
    %c0_146 = arith.constant 0 : index
    %102 = vector.load %arg8[%c14, %c0_146] : memref<80x4xbf16, #tpu.memory_space<vmem>>, vector<64x4xbf16>
    %c0_147 = arith.constant 0 : index
    %c14_148 = arith.constant 14 : index
    %c0_149 = arith.constant 0 : index
    %c0_150 = arith.constant 0 : index
    %103 = vector.load %arg5[%c0_147, %c14_148, %c0_149, %c0_150] : memref<1x15x4x16xbf16, #tpu.memory_space<vmem>>, vector<1x1x4x16xbf16>
    %104 = vector.shape_cast %103 : vector<1x1x4x16xbf16> to vector<4x16xbf16>
    %cst_151 = arith.constant dense<0.000000e+00> : vector<64x16xf32>
    %105 = tpu.matmul %102, %104, %cst_151 {dimension_numbers = #tpu.dot_dimension_numbers<[1], [0], [0], [1], [0, 0, 1, 1], [], []>} : vector<64x4xbf16>, vector<4x16xbf16>, vector<64x16xf32> -> vector<64x16xf32>
    %c0_152 = arith.constant 0 : index
    %c0_153 = arith.constant 0 : index
    %106 = vector.load %arg9[%c0_152, %c0_153] : memref<64x16xf32, #tpu.memory_space<vmem>>, vector<64x16xf32>
    %107 = arith.addf %106, %105 : vector<64x16xf32>
    %c0_154 = arith.constant 0 : index
    %c0_155 = arith.constant 0 : index
    %108 = vector.load %arg9[%c0_154, %c0_155] : memref<64x16xf32, #tpu.memory_space<vmem>>, vector<64x16xf32>
    tpu.vector_store %arg9[%c0_154, %c0_155], %107 {strides = array<i32>} : memref<64x16xf32, #tpu.memory_space<vmem>>, vector<64x16xf32>,
    %c0_156 = arith.constant 0 : index
    %c0_157 = arith.constant 0 : index
    %109 = vector.load %arg9[%c0_156, %c0_157] : memref<64x16xf32, #tpu.memory_space<vmem>>, vector<64x16xf32>
    %c0_158 = arith.constant 0 : index
    %c0_159 = arith.constant 0 : index
    %c0_160 = arith.constant 0 : index
    %110 = vector.load %arg6[%c0_158, %c0_159, %c0_160] : memref<1x1x16xf32, #tpu.memory_space<vmem>>, vector<1x1x16xf32>
    %111 = vector.shape_cast %110 : vector<1x1x16xf32> to vector<1x16xf32>
    %112 = vector.broadcast %111 : vector<1x16xf32> to vector<64x16xf32>
    %113 = arith.addf %109, %112 : vector<64x16xf32>
    %114 = arith.truncf %113 : vector<64x16xf32> to vector<64x16xbf16>
    %c0_161 = arith.constant 0 : index
    %c0_162 = arith.constant 0 : index
    %c0_163 = arith.constant 0 : index
    %115 = vector.load %arg7[%c0_161, %c0_162, %c0_163] : memref<1x64x16xbf16, #tpu.memory_space<vmem>>, vector<1x64x16xbf16>
    %116 = vector.shape_cast %115 : vector<1x64x16xbf16> to vector<64x16xbf16>
    %117 = vector.shape_cast %114 : vector<64x16xbf16> to vector<1x64x16xbf16>
    tpu.vector_store %arg7[%c0_161, %c0_162, %c0_163], %117 {strides = array<i32>} : memref<1x64x16xbf16, #tpu.memory_space<vmem>>, vector<1x64x16xbf16>,
    return
  }
  func.func @transform_0(%arg0: i32, %arg1: i32, %arg2: i32) -> (i32, i32, i32) {
    %c0_i32 = arith.constant 0 : i32
    %0 = arith.muli %c0_i32, %arg0 : i32
    %c0_i32_0 = arith.constant 0 : i32
    %1 = arith.addi %c0_i32_0, %0 : i32
    %c0_i32_1 = arith.constant 0 : i32
    return %arg1, %arg2, %1 : i32, i32, i32
  }
  func.func @transform_1(%arg0: i32, %arg1: i32, %arg2: i32) -> (i32, i32, i32) {
    %c1_i32 = arith.constant 1 : i32
    %0 = arith.addi %arg2, %c1_i32 : i32
    %c4_i32 = arith.constant 4 : i32
    %1 = arith.muli %0, %c4_i32 : i32
    %c0_i32 = arith.constant 0 : i32
    %2 = arith.muli %c0_i32, %arg0 : i32
    %c0_i32_0 = arith.constant 0 : i32
    %3 = arith.addi %c0_i32_0, %2 : i32
    %c0_i32_1 = arith.constant 0 : i32
    return %arg1, %1, %3 : i32, i32, i32
  }
  func.func @transform_2(%arg0: i32, %arg1: i32, %arg2: i32) -> (i32, i32, i32, i32) {
    %c0_i32 = arith.constant 0 : i32
    %c0_i32_0 = arith.constant 0 : i32
    %c0_i32_1 = arith.constant 0 : i32
    %c0_i32_2 = arith.constant 0 : i32
    return %arg0, %c0_i32, %c0_i32_0, %c0_i32_1 : i32, i32, i32, i32
  }
  func.func @transform_3(%arg0: i32, %arg1: i32, %arg2: i32) -> (i32, i32, i32) {
    %c0_i32 = arith.constant 0 : i32
    %c0_i32_0 = arith.constant 0 : i32
    %c0_i32_1 = arith.constant 0 : i32
    return %arg0, %c0_i32, %c0_i32_0 : i32, i32, i32
  }
  func.func @transform_4(%arg0: i32, %arg1: i32, %arg2: i32) -> (i32, i32, i32) {
    %c0_i32 = arith.constant 0 : i32
    return %arg1, %arg2, %arg0 : i32, i32, i32
  }
}

module attributes {stable_mosaic.version = 11 : i64} {
  func.func @_conv_kernel(%arg0: i32, %arg1: i32, %arg2: i32, %arg3: memref<1x16x64xbf16, #tpu.memory_space<vmem>>, %arg4: memref<1x16x64xbf16, #tpu.memory_space<vmem>>, %arg5: memref<1x11x64x64xbf16, #tpu.memory_space<vmem>>, %arg6: memref<1x1x64xf32, #tpu.memory_space<vmem>>, %arg7: memref<1x16x64xbf16, #tpu.memory_space<vmem>>, %arg8: memref<32x64xbf16, #tpu.memory_space<vmem>>, %arg9: memref<16x64xf32, #tpu.memory_space<vmem>>) attributes {dimension_semantics = [#tpu.dimension_semantics<parallel>, #tpu.dimension_semantics<parallel>, #tpu.dimension_semantics<parallel>], iteration_bounds = array<i64: 1, 2, 1>, scalar_prefetch = 0 : i64, scratch_operands = 2 : i64, tpu.core_type = #tpu.core_type<tc>, window_params = [{transform_indices = @transform_0, window_bounds = array<i64: 1, 16, 64>}, {transform_indices = @transform_1, window_bounds = array<i64: 1, 16, 64>}, {transform_indices = @transform_2, window_bounds = array<i64: 1, 11, 64, 64>}, {transform_indices = @transform_3, window_bounds = array<i64: 1, 1, 64>}, {transform_indices = @transform_4, window_bounds = array<i64: 1, 16, 64>}]} {
    %c0 = arith.constant 0 : index
    %c0_0 = arith.constant 0 : index
    %c0_1 = arith.constant 0 : index
    %0 = vector.load %arg3[%c0, %c0_0, %c0_1] : memref<1x16x64xbf16, #tpu.memory_space<vmem>>, vector<1x16x64xbf16>
    %1 = vector.shape_cast %0 : vector<1x16x64xbf16> to vector<16x64xbf16>
    %c0_2 = arith.constant 0 : index
    %c0_3 = arith.constant 0 : index
    %2 = vector.load %arg8[%c0_2, %c0_3] : memref<32x64xbf16, #tpu.memory_space<vmem>>, vector<16x64xbf16>
    tpu.vector_store %arg8[%c0_2, %c0_3], %1 {strides = array<i32>} : memref<32x64xbf16, #tpu.memory_space<vmem>>, vector<16x64xbf16>,
    %c0_4 = arith.constant 0 : index
    %c0_5 = arith.constant 0 : index
    %c0_6 = arith.constant 0 : index
    %3 = vector.load %arg4[%c0_4, %c0_5, %c0_6] : memref<1x16x64xbf16, #tpu.memory_space<vmem>>, vector<1x16x64xbf16>
    %4 = vector.shape_cast %3 : vector<1x16x64xbf16> to vector<16x64xbf16>
    %c16 = arith.constant 16 : index
    %c0_7 = arith.constant 0 : index
    %5 = vector.load %arg8[%c16, %c0_7] : memref<32x64xbf16, #tpu.memory_space<vmem>>, vector<16x64xbf16>
    tpu.vector_store %arg8[%c16, %c0_7], %4 {strides = array<i32>} : memref<32x64xbf16, #tpu.memory_space<vmem>>, vector<16x64xbf16>,
    %c0_8 = arith.constant 0 : index
    %c0_9 = arith.constant 0 : index
    %6 = vector.load %arg8[%c0_8, %c0_9] : memref<32x64xbf16, #tpu.memory_space<vmem>>, vector<16x64xbf16>
    %c0_10 = arith.constant 0 : index
    %c0_11 = arith.constant 0 : index
    %c0_12 = arith.constant 0 : index
    %c0_13 = arith.constant 0 : index
    %7 = vector.load %arg5[%c0_10, %c0_11, %c0_12, %c0_13] : memref<1x11x64x64xbf16, #tpu.memory_space<vmem>>, vector<1x1x64x64xbf16>
    %8 = vector.shape_cast %7 : vector<1x1x64x64xbf16> to vector<64x64xbf16>
    %cst = arith.constant dense<0.000000e+00> : vector<16x64xf32>
    %9 = tpu.matmul %6, %8, %cst {dimension_numbers = #tpu.dot_dimension_numbers<[1], [0], [0], [1], [0, 0, 1, 1], [], []>} : vector<16x64xbf16>, vector<64x64xbf16>, vector<16x64xf32> -> vector<16x64xf32>
    %c0_14 = arith.constant 0 : index
    %c0_15 = arith.constant 0 : index
    %10 = vector.load %arg9[%c0_14, %c0_15] : memref<16x64xf32, #tpu.memory_space<vmem>>, vector<16x64xf32>
    tpu.vector_store %arg9[%c0_14, %c0_15], %9 {strides = array<i32>} : memref<16x64xf32, #tpu.memory_space<vmem>>, vector<16x64xf32>,
    %c1 = arith.constant 1 : index
    %c0_16 = arith.constant 0 : index
    %11 = vector.load %arg8[%c1, %c0_16] : memref<32x64xbf16, #tpu.memory_space<vmem>>, vector<16x64xbf16>
    %c0_17 = arith.constant 0 : index
    %c1_18 = arith.constant 1 : index
    %c0_19 = arith.constant 0 : index
    %c0_20 = arith.constant 0 : index
    %12 = vector.load %arg5[%c0_17, %c1_18, %c0_19, %c0_20] : memref<1x11x64x64xbf16, #tpu.memory_space<vmem>>, vector<1x1x64x64xbf16>
    %13 = vector.shape_cast %12 : vector<1x1x64x64xbf16> to vector<64x64xbf16>
    %cst_21 = arith.constant dense<0.000000e+00> : vector<16x64xf32>
    %14 = tpu.matmul %11, %13, %cst_21 {dimension_numbers = #tpu.dot_dimension_numbers<[1], [0], [0], [1], [0, 0, 1, 1], [], []>} : vector<16x64xbf16>, vector<64x64xbf16>, vector<16x64xf32> -> vector<16x64xf32>
    %c0_22 = arith.constant 0 : index
    %c0_23 = arith.constant 0 : index
    %15 = vector.load %arg9[%c0_22, %c0_23] : memref<16x64xf32, #tpu.memory_space<vmem>>, vector<16x64xf32>
    %16 = arith.addf %15, %14 : vector<16x64xf32>
    %c0_24 = arith.constant 0 : index
    %c0_25 = arith.constant 0 : index
    %17 = vector.load %arg9[%c0_24, %c0_25] : memref<16x64xf32, #tpu.memory_space<vmem>>, vector<16x64xf32>
    tpu.vector_store %arg9[%c0_24, %c0_25], %16 {strides = array<i32>} : memref<16x64xf32, #tpu.memory_space<vmem>>, vector<16x64xf32>,
    %c2 = arith.constant 2 : index
    %c0_26 = arith.constant 0 : index
    %18 = vector.load %arg8[%c2, %c0_26] : memref<32x64xbf16, #tpu.memory_space<vmem>>, vector<16x64xbf16>
    %c0_27 = arith.constant 0 : index
    %c2_28 = arith.constant 2 : index
    %c0_29 = arith.constant 0 : index
    %c0_30 = arith.constant 0 : index
    %19 = vector.load %arg5[%c0_27, %c2_28, %c0_29, %c0_30] : memref<1x11x64x64xbf16, #tpu.memory_space<vmem>>, vector<1x1x64x64xbf16>
    %20 = vector.shape_cast %19 : vector<1x1x64x64xbf16> to vector<64x64xbf16>
    %cst_31 = arith.constant dense<0.000000e+00> : vector<16x64xf32>
    %21 = tpu.matmul %18, %20, %cst_31 {dimension_numbers = #tpu.dot_dimension_numbers<[1], [0], [0], [1], [0, 0, 1, 1], [], []>} : vector<16x64xbf16>, vector<64x64xbf16>, vector<16x64xf32> -> vector<16x64xf32>
    %c0_32 = arith.constant 0 : index
    %c0_33 = arith.constant 0 : index
    %22 = vector.load %arg9[%c0_32, %c0_33] : memref<16x64xf32, #tpu.memory_space<vmem>>, vector<16x64xf32>
    %23 = arith.addf %22, %21 : vector<16x64xf32>
    %c0_34 = arith.constant 0 : index
    %c0_35 = arith.constant 0 : index
    %24 = vector.load %arg9[%c0_34, %c0_35] : memref<16x64xf32, #tpu.memory_space<vmem>>, vector<16x64xf32>
    tpu.vector_store %arg9[%c0_34, %c0_35], %23 {strides = array<i32>} : memref<16x64xf32, #tpu.memory_space<vmem>>, vector<16x64xf32>,
    %c3 = arith.constant 3 : index
    %c0_36 = arith.constant 0 : index
    %25 = vector.load %arg8[%c3, %c0_36] : memref<32x64xbf16, #tpu.memory_space<vmem>>, vector<16x64xbf16>
    %c0_37 = arith.constant 0 : index
    %c3_38 = arith.constant 3 : index
    %c0_39 = arith.constant 0 : index
    %c0_40 = arith.constant 0 : index
    %26 = vector.load %arg5[%c0_37, %c3_38, %c0_39, %c0_40] : memref<1x11x64x64xbf16, #tpu.memory_space<vmem>>, vector<1x1x64x64xbf16>
    %27 = vector.shape_cast %26 : vector<1x1x64x64xbf16> to vector<64x64xbf16>
    %cst_41 = arith.constant dense<0.000000e+00> : vector<16x64xf32>
    %28 = tpu.matmul %25, %27, %cst_41 {dimension_numbers = #tpu.dot_dimension_numbers<[1], [0], [0], [1], [0, 0, 1, 1], [], []>} : vector<16x64xbf16>, vector<64x64xbf16>, vector<16x64xf32> -> vector<16x64xf32>
    %c0_42 = arith.constant 0 : index
    %c0_43 = arith.constant 0 : index
    %29 = vector.load %arg9[%c0_42, %c0_43] : memref<16x64xf32, #tpu.memory_space<vmem>>, vector<16x64xf32>
    %30 = arith.addf %29, %28 : vector<16x64xf32>
    %c0_44 = arith.constant 0 : index
    %c0_45 = arith.constant 0 : index
    %31 = vector.load %arg9[%c0_44, %c0_45] : memref<16x64xf32, #tpu.memory_space<vmem>>, vector<16x64xf32>
    tpu.vector_store %arg9[%c0_44, %c0_45], %30 {strides = array<i32>} : memref<16x64xf32, #tpu.memory_space<vmem>>, vector<16x64xf32>,
    %c4 = arith.constant 4 : index
    %c0_46 = arith.constant 0 : index
    %32 = vector.load %arg8[%c4, %c0_46] : memref<32x64xbf16, #tpu.memory_space<vmem>>, vector<16x64xbf16>
    %c0_47 = arith.constant 0 : index
    %c4_48 = arith.constant 4 : index
    %c0_49 = arith.constant 0 : index
    %c0_50 = arith.constant 0 : index
    %33 = vector.load %arg5[%c0_47, %c4_48, %c0_49, %c0_50] : memref<1x11x64x64xbf16, #tpu.memory_space<vmem>>, vector<1x1x64x64xbf16>
    %34 = vector.shape_cast %33 : vector<1x1x64x64xbf16> to vector<64x64xbf16>
    %cst_51 = arith.constant dense<0.000000e+00> : vector<16x64xf32>
    %35 = tpu.matmul %32, %34, %cst_51 {dimension_numbers = #tpu.dot_dimension_numbers<[1], [0], [0], [1], [0, 0, 1, 1], [], []>} : vector<16x64xbf16>, vector<64x64xbf16>, vector<16x64xf32> -> vector<16x64xf32>
    %c0_52 = arith.constant 0 : index
    %c0_53 = arith.constant 0 : index
    %36 = vector.load %arg9[%c0_52, %c0_53] : memref<16x64xf32, #tpu.memory_space<vmem>>, vector<16x64xf32>
    %37 = arith.addf %36, %35 : vector<16x64xf32>
    %c0_54 = arith.constant 0 : index
    %c0_55 = arith.constant 0 : index
    %38 = vector.load %arg9[%c0_54, %c0_55] : memref<16x64xf32, #tpu.memory_space<vmem>>, vector<16x64xf32>
    tpu.vector_store %arg9[%c0_54, %c0_55], %37 {strides = array<i32>} : memref<16x64xf32, #tpu.memory_space<vmem>>, vector<16x64xf32>,
    %c5 = arith.constant 5 : index
    %c0_56 = arith.constant 0 : index
    %39 = vector.load %arg8[%c5, %c0_56] : memref<32x64xbf16, #tpu.memory_space<vmem>>, vector<16x64xbf16>
    %c0_57 = arith.constant 0 : index
    %c5_58 = arith.constant 5 : index
    %c0_59 = arith.constant 0 : index
    %c0_60 = arith.constant 0 : index
    %40 = vector.load %arg5[%c0_57, %c5_58, %c0_59, %c0_60] : memref<1x11x64x64xbf16, #tpu.memory_space<vmem>>, vector<1x1x64x64xbf16>
    %41 = vector.shape_cast %40 : vector<1x1x64x64xbf16> to vector<64x64xbf16>
    %cst_61 = arith.constant dense<0.000000e+00> : vector<16x64xf32>
    %42 = tpu.matmul %39, %41, %cst_61 {dimension_numbers = #tpu.dot_dimension_numbers<[1], [0], [0], [1], [0, 0, 1, 1], [], []>} : vector<16x64xbf16>, vector<64x64xbf16>, vector<16x64xf32> -> vector<16x64xf32>
    %c0_62 = arith.constant 0 : index
    %c0_63 = arith.constant 0 : index
    %43 = vector.load %arg9[%c0_62, %c0_63] : memref<16x64xf32, #tpu.memory_space<vmem>>, vector<16x64xf32>
    %44 = arith.addf %43, %42 : vector<16x64xf32>
    %c0_64 = arith.constant 0 : index
    %c0_65 = arith.constant 0 : index
    %45 = vector.load %arg9[%c0_64, %c0_65] : memref<16x64xf32, #tpu.memory_space<vmem>>, vector<16x64xf32>
    tpu.vector_store %arg9[%c0_64, %c0_65], %44 {strides = array<i32>} : memref<16x64xf32, #tpu.memory_space<vmem>>, vector<16x64xf32>,
    %c6 = arith.constant 6 : index
    %c0_66 = arith.constant 0 : index
    %46 = vector.load %arg8[%c6, %c0_66] : memref<32x64xbf16, #tpu.memory_space<vmem>>, vector<16x64xbf16>
    %c0_67 = arith.constant 0 : index
    %c6_68 = arith.constant 6 : index
    %c0_69 = arith.constant 0 : index
    %c0_70 = arith.constant 0 : index
    %47 = vector.load %arg5[%c0_67, %c6_68, %c0_69, %c0_70] : memref<1x11x64x64xbf16, #tpu.memory_space<vmem>>, vector<1x1x64x64xbf16>
    %48 = vector.shape_cast %47 : vector<1x1x64x64xbf16> to vector<64x64xbf16>
    %cst_71 = arith.constant dense<0.000000e+00> : vector<16x64xf32>
    %49 = tpu.matmul %46, %48, %cst_71 {dimension_numbers = #tpu.dot_dimension_numbers<[1], [0], [0], [1], [0, 0, 1, 1], [], []>} : vector<16x64xbf16>, vector<64x64xbf16>, vector<16x64xf32> -> vector<16x64xf32>
    %c0_72 = arith.constant 0 : index
    %c0_73 = arith.constant 0 : index
    %50 = vector.load %arg9[%c0_72, %c0_73] : memref<16x64xf32, #tpu.memory_space<vmem>>, vector<16x64xf32>
    %51 = arith.addf %50, %49 : vector<16x64xf32>
    %c0_74 = arith.constant 0 : index
    %c0_75 = arith.constant 0 : index
    %52 = vector.load %arg9[%c0_74, %c0_75] : memref<16x64xf32, #tpu.memory_space<vmem>>, vector<16x64xf32>
    tpu.vector_store %arg9[%c0_74, %c0_75], %51 {strides = array<i32>} : memref<16x64xf32, #tpu.memory_space<vmem>>, vector<16x64xf32>,
    %c7 = arith.constant 7 : index
    %c0_76 = arith.constant 0 : index
    %53 = vector.load %arg8[%c7, %c0_76] : memref<32x64xbf16, #tpu.memory_space<vmem>>, vector<16x64xbf16>
    %c0_77 = arith.constant 0 : index
    %c7_78 = arith.constant 7 : index
    %c0_79 = arith.constant 0 : index
    %c0_80 = arith.constant 0 : index
    %54 = vector.load %arg5[%c0_77, %c7_78, %c0_79, %c0_80] : memref<1x11x64x64xbf16, #tpu.memory_space<vmem>>, vector<1x1x64x64xbf16>
    %55 = vector.shape_cast %54 : vector<1x1x64x64xbf16> to vector<64x64xbf16>
    %cst_81 = arith.constant dense<0.000000e+00> : vector<16x64xf32>
    %56 = tpu.matmul %53, %55, %cst_81 {dimension_numbers = #tpu.dot_dimension_numbers<[1], [0], [0], [1], [0, 0, 1, 1], [], []>} : vector<16x64xbf16>, vector<64x64xbf16>, vector<16x64xf32> -> vector<16x64xf32>
    %c0_82 = arith.constant 0 : index
    %c0_83 = arith.constant 0 : index
    %57 = vector.load %arg9[%c0_82, %c0_83] : memref<16x64xf32, #tpu.memory_space<vmem>>, vector<16x64xf32>
    %58 = arith.addf %57, %56 : vector<16x64xf32>
    %c0_84 = arith.constant 0 : index
    %c0_85 = arith.constant 0 : index
    %59 = vector.load %arg9[%c0_84, %c0_85] : memref<16x64xf32, #tpu.memory_space<vmem>>, vector<16x64xf32>
    tpu.vector_store %arg9[%c0_84, %c0_85], %58 {strides = array<i32>} : memref<16x64xf32, #tpu.memory_space<vmem>>, vector<16x64xf32>,
    %c8 = arith.constant 8 : index
    %c0_86 = arith.constant 0 : index
    %60 = vector.load %arg8[%c8, %c0_86] : memref<32x64xbf16, #tpu.memory_space<vmem>>, vector<16x64xbf16>
    %c0_87 = arith.constant 0 : index
    %c8_88 = arith.constant 8 : index
    %c0_89 = arith.constant 0 : index
    %c0_90 = arith.constant 0 : index
    %61 = vector.load %arg5[%c0_87, %c8_88, %c0_89, %c0_90] : memref<1x11x64x64xbf16, #tpu.memory_space<vmem>>, vector<1x1x64x64xbf16>
    %62 = vector.shape_cast %61 : vector<1x1x64x64xbf16> to vector<64x64xbf16>
    %cst_91 = arith.constant dense<0.000000e+00> : vector<16x64xf32>
    %63 = tpu.matmul %60, %62, %cst_91 {dimension_numbers = #tpu.dot_dimension_numbers<[1], [0], [0], [1], [0, 0, 1, 1], [], []>} : vector<16x64xbf16>, vector<64x64xbf16>, vector<16x64xf32> -> vector<16x64xf32>
    %c0_92 = arith.constant 0 : index
    %c0_93 = arith.constant 0 : index
    %64 = vector.load %arg9[%c0_92, %c0_93] : memref<16x64xf32, #tpu.memory_space<vmem>>, vector<16x64xf32>
    %65 = arith.addf %64, %63 : vector<16x64xf32>
    %c0_94 = arith.constant 0 : index
    %c0_95 = arith.constant 0 : index
    %66 = vector.load %arg9[%c0_94, %c0_95] : memref<16x64xf32, #tpu.memory_space<vmem>>, vector<16x64xf32>
    tpu.vector_store %arg9[%c0_94, %c0_95], %65 {strides = array<i32>} : memref<16x64xf32, #tpu.memory_space<vmem>>, vector<16x64xf32>,
    %c9 = arith.constant 9 : index
    %c0_96 = arith.constant 0 : index
    %67 = vector.load %arg8[%c9, %c0_96] : memref<32x64xbf16, #tpu.memory_space<vmem>>, vector<16x64xbf16>
    %c0_97 = arith.constant 0 : index
    %c9_98 = arith.constant 9 : index
    %c0_99 = arith.constant 0 : index
    %c0_100 = arith.constant 0 : index
    %68 = vector.load %arg5[%c0_97, %c9_98, %c0_99, %c0_100] : memref<1x11x64x64xbf16, #tpu.memory_space<vmem>>, vector<1x1x64x64xbf16>
    %69 = vector.shape_cast %68 : vector<1x1x64x64xbf16> to vector<64x64xbf16>
    %cst_101 = arith.constant dense<0.000000e+00> : vector<16x64xf32>
    %70 = tpu.matmul %67, %69, %cst_101 {dimension_numbers = #tpu.dot_dimension_numbers<[1], [0], [0], [1], [0, 0, 1, 1], [], []>} : vector<16x64xbf16>, vector<64x64xbf16>, vector<16x64xf32> -> vector<16x64xf32>
    %c0_102 = arith.constant 0 : index
    %c0_103 = arith.constant 0 : index
    %71 = vector.load %arg9[%c0_102, %c0_103] : memref<16x64xf32, #tpu.memory_space<vmem>>, vector<16x64xf32>
    %72 = arith.addf %71, %70 : vector<16x64xf32>
    %c0_104 = arith.constant 0 : index
    %c0_105 = arith.constant 0 : index
    %73 = vector.load %arg9[%c0_104, %c0_105] : memref<16x64xf32, #tpu.memory_space<vmem>>, vector<16x64xf32>
    tpu.vector_store %arg9[%c0_104, %c0_105], %72 {strides = array<i32>} : memref<16x64xf32, #tpu.memory_space<vmem>>, vector<16x64xf32>,
    %c10 = arith.constant 10 : index
    %c0_106 = arith.constant 0 : index
    %74 = vector.load %arg8[%c10, %c0_106] : memref<32x64xbf16, #tpu.memory_space<vmem>>, vector<16x64xbf16>
    %c0_107 = arith.constant 0 : index
    %c10_108 = arith.constant 10 : index
    %c0_109 = arith.constant 0 : index
    %c0_110 = arith.constant 0 : index
    %75 = vector.load %arg5[%c0_107, %c10_108, %c0_109, %c0_110] : memref<1x11x64x64xbf16, #tpu.memory_space<vmem>>, vector<1x1x64x64xbf16>
    %76 = vector.shape_cast %75 : vector<1x1x64x64xbf16> to vector<64x64xbf16>
    %cst_111 = arith.constant dense<0.000000e+00> : vector<16x64xf32>
    %77 = tpu.matmul %74, %76, %cst_111 {dimension_numbers = #tpu.dot_dimension_numbers<[1], [0], [0], [1], [0, 0, 1, 1], [], []>} : vector<16x64xbf16>, vector<64x64xbf16>, vector<16x64xf32> -> vector<16x64xf32>
    %c0_112 = arith.constant 0 : index
    %c0_113 = arith.constant 0 : index
    %78 = vector.load %arg9[%c0_112, %c0_113] : memref<16x64xf32, #tpu.memory_space<vmem>>, vector<16x64xf32>
    %79 = arith.addf %78, %77 : vector<16x64xf32>
    %c0_114 = arith.constant 0 : index
    %c0_115 = arith.constant 0 : index
    %80 = vector.load %arg9[%c0_114, %c0_115] : memref<16x64xf32, #tpu.memory_space<vmem>>, vector<16x64xf32>
    tpu.vector_store %arg9[%c0_114, %c0_115], %79 {strides = array<i32>} : memref<16x64xf32, #tpu.memory_space<vmem>>, vector<16x64xf32>,
    %c0_116 = arith.constant 0 : index
    %c0_117 = arith.constant 0 : index
    %81 = vector.load %arg9[%c0_116, %c0_117] : memref<16x64xf32, #tpu.memory_space<vmem>>, vector<16x64xf32>
    %c0_118 = arith.constant 0 : index
    %c0_119 = arith.constant 0 : index
    %c0_120 = arith.constant 0 : index
    %82 = vector.load %arg6[%c0_118, %c0_119, %c0_120] : memref<1x1x64xf32, #tpu.memory_space<vmem>>, vector<1x1x64xf32>
    %83 = vector.shape_cast %82 : vector<1x1x64xf32> to vector<1x64xf32>
    %84 = vector.broadcast %83 : vector<1x64xf32> to vector<16x64xf32>
    %85 = arith.addf %81, %84 : vector<16x64xf32>
    %cst_121 = arith.constant 0.000000e+00 : f32
    %86 = vector.broadcast %cst_121 : f32 to vector<16x64xf32>
    %87 = arith.cmpf ogt, %85, %86 : vector<16x64xf32>
    %cst_122 = arith.constant 1.000000e-01 : f32
    %88 = vector.broadcast %cst_122 : f32 to vector<16x64xf32>
    %89 = arith.mulf %88, %85 : vector<16x64xf32>
    %90 = arith.select %87, %85, %89 : vector<16x64xi1>, vector<16x64xf32>
    %91 = arith.truncf %90 : vector<16x64xf32> to vector<16x64xbf16>
    %c0_123 = arith.constant 0 : index
    %c0_124 = arith.constant 0 : index
    %c0_125 = arith.constant 0 : index
    %92 = vector.load %arg7[%c0_123, %c0_124, %c0_125] : memref<1x16x64xbf16, #tpu.memory_space<vmem>>, vector<1x16x64xbf16>
    %93 = vector.shape_cast %92 : vector<1x16x64xbf16> to vector<16x64xbf16>
    %94 = vector.shape_cast %91 : vector<16x64xbf16> to vector<1x16x64xbf16>
    tpu.vector_store %arg7[%c0_123, %c0_124, %c0_125], %94 {strides = array<i32>} : memref<1x16x64xbf16, #tpu.memory_space<vmem>>, vector<1x16x64xbf16>,
    return
  }
  func.func @transform_0(%arg0: i32, %arg1: i32, %arg2: i32) -> (i32, i32, i32) {
    %c0_i32 = arith.constant 0 : i32
    %0 = arith.muli %c0_i32, %arg0 : i32
    %c0_i32_0 = arith.constant 0 : i32
    %1 = arith.addi %c0_i32_0, %0 : i32
    %c0_i32_1 = arith.constant 0 : i32
    return %arg1, %arg2, %1 : i32, i32, i32
  }
  func.func @transform_1(%arg0: i32, %arg1: i32, %arg2: i32) -> (i32, i32, i32) {
    %c1_i32 = arith.constant 1 : i32
    %0 = arith.addi %arg2, %c1_i32 : i32
    %c1_i32_0 = arith.constant 1 : i32
    %1 = arith.muli %0, %c1_i32_0 : i32
    %c0_i32 = arith.constant 0 : i32
    %2 = arith.muli %c0_i32, %arg0 : i32
    %c0_i32_1 = arith.constant 0 : i32
    %3 = arith.addi %c0_i32_1, %2 : i32
    %c0_i32_2 = arith.constant 0 : i32
    return %arg1, %1, %3 : i32, i32, i32
  }
  func.func @transform_2(%arg0: i32, %arg1: i32, %arg2: i32) -> (i32, i32, i32, i32) {
    %c0_i32 = arith.constant 0 : i32
    %c0_i32_0 = arith.constant 0 : i32
    %c0_i32_1 = arith.constant 0 : i32
    %c0_i32_2 = arith.constant 0 : i32
    return %arg0, %c0_i32, %c0_i32_0, %c0_i32_1 : i32, i32, i32, i32
  }
  func.func @transform_3(%arg0: i32, %arg1: i32, %arg2: i32) -> (i32, i32, i32) {
    %c0_i32 = arith.constant 0 : i32
    %c0_i32_0 = arith.constant 0 : i32
    %c0_i32_1 = arith.constant 0 : i32
    return %arg0, %c0_i32, %c0_i32_0 : i32, i32, i32
  }
  func.func @transform_4(%arg0: i32, %arg1: i32, %arg2: i32) -> (i32, i32, i32) {
    %c0_i32 = arith.constant 0 : i32
    return %arg1, %arg2, %arg0 : i32, i32, i32
  }
}

module attributes {stable_mosaic.version = 11 : i64} {
  func.func @_conv_kernel(%arg0: i32, %arg1: i32, %arg2: i32, %arg3: memref<1x16x256xbf16, #tpu.memory_space<vmem>>, %arg4: memref<1x16x256xbf16, #tpu.memory_space<vmem>>, %arg5: memref<1x11x256x256xbf16, #tpu.memory_space<vmem>>, %arg6: memref<1x1x256xf32, #tpu.memory_space<vmem>>, %arg7: memref<1x16x256xbf16, #tpu.memory_space<vmem>>, %arg8: memref<32x256xbf16, #tpu.memory_space<vmem>>, %arg9: memref<16x256xf32, #tpu.memory_space<vmem>>) attributes {dimension_semantics = [#tpu.dimension_semantics<parallel>, #tpu.dimension_semantics<parallel>, #tpu.dimension_semantics<parallel>], iteration_bounds = array<i64: 1, 2, 1>, scalar_prefetch = 0 : i64, scratch_operands = 2 : i64, tpu.core_type = #tpu.core_type<tc>, window_params = [{transform_indices = @transform_0, window_bounds = array<i64: 1, 16, 256>}, {transform_indices = @transform_1, window_bounds = array<i64: 1, 16, 256>}, {transform_indices = @transform_2, window_bounds = array<i64: 1, 11, 256, 256>}, {transform_indices = @transform_3, window_bounds = array<i64: 1, 1, 256>}, {transform_indices = @transform_4, window_bounds = array<i64: 1, 16, 256>}]} {
    %c0 = arith.constant 0 : index
    %c0_0 = arith.constant 0 : index
    %c0_1 = arith.constant 0 : index
    %0 = vector.load %arg3[%c0, %c0_0, %c0_1] : memref<1x16x256xbf16, #tpu.memory_space<vmem>>, vector<1x16x256xbf16>
    %1 = vector.shape_cast %0 : vector<1x16x256xbf16> to vector<16x256xbf16>
    %c0_2 = arith.constant 0 : index
    %c0_3 = arith.constant 0 : index
    %2 = vector.load %arg8[%c0_2, %c0_3] : memref<32x256xbf16, #tpu.memory_space<vmem>>, vector<16x256xbf16>
    tpu.vector_store %arg8[%c0_2, %c0_3], %1 {strides = array<i32>} : memref<32x256xbf16, #tpu.memory_space<vmem>>, vector<16x256xbf16>,
    %c0_4 = arith.constant 0 : index
    %c0_5 = arith.constant 0 : index
    %c0_6 = arith.constant 0 : index
    %3 = vector.load %arg4[%c0_4, %c0_5, %c0_6] : memref<1x16x256xbf16, #tpu.memory_space<vmem>>, vector<1x16x256xbf16>
    %4 = vector.shape_cast %3 : vector<1x16x256xbf16> to vector<16x256xbf16>
    %c16 = arith.constant 16 : index
    %c0_7 = arith.constant 0 : index
    %5 = vector.load %arg8[%c16, %c0_7] : memref<32x256xbf16, #tpu.memory_space<vmem>>, vector<16x256xbf16>
    tpu.vector_store %arg8[%c16, %c0_7], %4 {strides = array<i32>} : memref<32x256xbf16, #tpu.memory_space<vmem>>, vector<16x256xbf16>,
    %c0_8 = arith.constant 0 : index
    %c0_9 = arith.constant 0 : index
    %6 = vector.load %arg8[%c0_8, %c0_9] : memref<32x256xbf16, #tpu.memory_space<vmem>>, vector<16x256xbf16>
    %c0_10 = arith.constant 0 : index
    %c0_11 = arith.constant 0 : index
    %c0_12 = arith.constant 0 : index
    %c0_13 = arith.constant 0 : index
    %7 = vector.load %arg5[%c0_10, %c0_11, %c0_12, %c0_13] : memref<1x11x256x256xbf16, #tpu.memory_space<vmem>>, vector<1x1x256x256xbf16>
    %8 = vector.shape_cast %7 : vector<1x1x256x256xbf16> to vector<256x256xbf16>
    %cst = arith.constant dense<0.000000e+00> : vector<16x256xf32>
    %9 = tpu.matmul %6, %8, %cst {dimension_numbers = #tpu.dot_dimension_numbers<[1], [0], [0], [1], [0, 0, 1, 1], [], []>} : vector<16x256xbf16>, vector<256x256xbf16>, vector<16x256xf32> -> vector<16x256xf32>
    %c0_14 = arith.constant 0 : index
    %c0_15 = arith.constant 0 : index
    %10 = vector.load %arg9[%c0_14, %c0_15] : memref<16x256xf32, #tpu.memory_space<vmem>>, vector<16x256xf32>
    tpu.vector_store %arg9[%c0_14, %c0_15], %9 {strides = array<i32>} : memref<16x256xf32, #tpu.memory_space<vmem>>, vector<16x256xf32>,
    %c1 = arith.constant 1 : index
    %c0_16 = arith.constant 0 : index
    %11 = vector.load %arg8[%c1, %c0_16] : memref<32x256xbf16, #tpu.memory_space<vmem>>, vector<16x256xbf16>
    %c0_17 = arith.constant 0 : index
    %c1_18 = arith.constant 1 : index
    %c0_19 = arith.constant 0 : index
    %c0_20 = arith.constant 0 : index
    %12 = vector.load %arg5[%c0_17, %c1_18, %c0_19, %c0_20] : memref<1x11x256x256xbf16, #tpu.memory_space<vmem>>, vector<1x1x256x256xbf16>
    %13 = vector.shape_cast %12 : vector<1x1x256x256xbf16> to vector<256x256xbf16>
    %cst_21 = arith.constant dense<0.000000e+00> : vector<16x256xf32>
    %14 = tpu.matmul %11, %13, %cst_21 {dimension_numbers = #tpu.dot_dimension_numbers<[1], [0], [0], [1], [0, 0, 1, 1], [], []>} : vector<16x256xbf16>, vector<256x256xbf16>, vector<16x256xf32> -> vector<16x256xf32>
    %c0_22 = arith.constant 0 : index
    %c0_23 = arith.constant 0 : index
    %15 = vector.load %arg9[%c0_22, %c0_23] : memref<16x256xf32, #tpu.memory_space<vmem>>, vector<16x256xf32>
    %16 = arith.addf %15, %14 : vector<16x256xf32>
    %c0_24 = arith.constant 0 : index
    %c0_25 = arith.constant 0 : index
    %17 = vector.load %arg9[%c0_24, %c0_25] : memref<16x256xf32, #tpu.memory_space<vmem>>, vector<16x256xf32>
    tpu.vector_store %arg9[%c0_24, %c0_25], %16 {strides = array<i32>} : memref<16x256xf32, #tpu.memory_space<vmem>>, vector<16x256xf32>,
    %c2 = arith.constant 2 : index
    %c0_26 = arith.constant 0 : index
    %18 = vector.load %arg8[%c2, %c0_26] : memref<32x256xbf16, #tpu.memory_space<vmem>>, vector<16x256xbf16>
    %c0_27 = arith.constant 0 : index
    %c2_28 = arith.constant 2 : index
    %c0_29 = arith.constant 0 : index
    %c0_30 = arith.constant 0 : index
    %19 = vector.load %arg5[%c0_27, %c2_28, %c0_29, %c0_30] : memref<1x11x256x256xbf16, #tpu.memory_space<vmem>>, vector<1x1x256x256xbf16>
    %20 = vector.shape_cast %19 : vector<1x1x256x256xbf16> to vector<256x256xbf16>
    %cst_31 = arith.constant dense<0.000000e+00> : vector<16x256xf32>
    %21 = tpu.matmul %18, %20, %cst_31 {dimension_numbers = #tpu.dot_dimension_numbers<[1], [0], [0], [1], [0, 0, 1, 1], [], []>} : vector<16x256xbf16>, vector<256x256xbf16>, vector<16x256xf32> -> vector<16x256xf32>
    %c0_32 = arith.constant 0 : index
    %c0_33 = arith.constant 0 : index
    %22 = vector.load %arg9[%c0_32, %c0_33] : memref<16x256xf32, #tpu.memory_space<vmem>>, vector<16x256xf32>
    %23 = arith.addf %22, %21 : vector<16x256xf32>
    %c0_34 = arith.constant 0 : index
    %c0_35 = arith.constant 0 : index
    %24 = vector.load %arg9[%c0_34, %c0_35] : memref<16x256xf32, #tpu.memory_space<vmem>>, vector<16x256xf32>
    tpu.vector_store %arg9[%c0_34, %c0_35], %23 {strides = array<i32>} : memref<16x256xf32, #tpu.memory_space<vmem>>, vector<16x256xf32>,
    %c3 = arith.constant 3 : index
    %c0_36 = arith.constant 0 : index
    %25 = vector.load %arg8[%c3, %c0_36] : memref<32x256xbf16, #tpu.memory_space<vmem>>, vector<16x256xbf16>
    %c0_37 = arith.constant 0 : index
    %c3_38 = arith.constant 3 : index
    %c0_39 = arith.constant 0 : index
    %c0_40 = arith.constant 0 : index
    %26 = vector.load %arg5[%c0_37, %c3_38, %c0_39, %c0_40] : memref<1x11x256x256xbf16, #tpu.memory_space<vmem>>, vector<1x1x256x256xbf16>
    %27 = vector.shape_cast %26 : vector<1x1x256x256xbf16> to vector<256x256xbf16>
    %cst_41 = arith.constant dense<0.000000e+00> : vector<16x256xf32>
    %28 = tpu.matmul %25, %27, %cst_41 {dimension_numbers = #tpu.dot_dimension_numbers<[1], [0], [0], [1], [0, 0, 1, 1], [], []>} : vector<16x256xbf16>, vector<256x256xbf16>, vector<16x256xf32> -> vector<16x256xf32>
    %c0_42 = arith.constant 0 : index
    %c0_43 = arith.constant 0 : index
    %29 = vector.load %arg9[%c0_42, %c0_43] : memref<16x256xf32, #tpu.memory_space<vmem>>, vector<16x256xf32>
    %30 = arith.addf %29, %28 : vector<16x256xf32>
    %c0_44 = arith.constant 0 : index
    %c0_45 = arith.constant 0 : index
    %31 = vector.load %arg9[%c0_44, %c0_45] : memref<16x256xf32, #tpu.memory_space<vmem>>, vector<16x256xf32>
    tpu.vector_store %arg9[%c0_44, %c0_45], %30 {strides = array<i32>} : memref<16x256xf32, #tpu.memory_space<vmem>>, vector<16x256xf32>,
    %c4 = arith.constant 4 : index
    %c0_46 = arith.constant 0 : index
    %32 = vector.load %arg8[%c4, %c0_46] : memref<32x256xbf16, #tpu.memory_space<vmem>>, vector<16x256xbf16>
    %c0_47 = arith.constant 0 : index
    %c4_48 = arith.constant 4 : index
    %c0_49 = arith.constant 0 : index
    %c0_50 = arith.constant 0 : index
    %33 = vector.load %arg5[%c0_47, %c4_48, %c0_49, %c0_50] : memref<1x11x256x256xbf16, #tpu.memory_space<vmem>>, vector<1x1x256x256xbf16>
    %34 = vector.shape_cast %33 : vector<1x1x256x256xbf16> to vector<256x256xbf16>
    %cst_51 = arith.constant dense<0.000000e+00> : vector<16x256xf32>
    %35 = tpu.matmul %32, %34, %cst_51 {dimension_numbers = #tpu.dot_dimension_numbers<[1], [0], [0], [1], [0, 0, 1, 1], [], []>} : vector<16x256xbf16>, vector<256x256xbf16>, vector<16x256xf32> -> vector<16x256xf32>
    %c0_52 = arith.constant 0 : index
    %c0_53 = arith.constant 0 : index
    %36 = vector.load %arg9[%c0_52, %c0_53] : memref<16x256xf32, #tpu.memory_space<vmem>>, vector<16x256xf32>
    %37 = arith.addf %36, %35 : vector<16x256xf32>
    %c0_54 = arith.constant 0 : index
    %c0_55 = arith.constant 0 : index
    %38 = vector.load %arg9[%c0_54, %c0_55] : memref<16x256xf32, #tpu.memory_space<vmem>>, vector<16x256xf32>
    tpu.vector_store %arg9[%c0_54, %c0_55], %37 {strides = array<i32>} : memref<16x256xf32, #tpu.memory_space<vmem>>, vector<16x256xf32>,
    %c5 = arith.constant 5 : index
    %c0_56 = arith.constant 0 : index
    %39 = vector.load %arg8[%c5, %c0_56] : memref<32x256xbf16, #tpu.memory_space<vmem>>, vector<16x256xbf16>
    %c0_57 = arith.constant 0 : index
    %c5_58 = arith.constant 5 : index
    %c0_59 = arith.constant 0 : index
    %c0_60 = arith.constant 0 : index
    %40 = vector.load %arg5[%c0_57, %c5_58, %c0_59, %c0_60] : memref<1x11x256x256xbf16, #tpu.memory_space<vmem>>, vector<1x1x256x256xbf16>
    %41 = vector.shape_cast %40 : vector<1x1x256x256xbf16> to vector<256x256xbf16>
    %cst_61 = arith.constant dense<0.000000e+00> : vector<16x256xf32>
    %42 = tpu.matmul %39, %41, %cst_61 {dimension_numbers = #tpu.dot_dimension_numbers<[1], [0], [0], [1], [0, 0, 1, 1], [], []>} : vector<16x256xbf16>, vector<256x256xbf16>, vector<16x256xf32> -> vector<16x256xf32>
    %c0_62 = arith.constant 0 : index
    %c0_63 = arith.constant 0 : index
    %43 = vector.load %arg9[%c0_62, %c0_63] : memref<16x256xf32, #tpu.memory_space<vmem>>, vector<16x256xf32>
    %44 = arith.addf %43, %42 : vector<16x256xf32>
    %c0_64 = arith.constant 0 : index
    %c0_65 = arith.constant 0 : index
    %45 = vector.load %arg9[%c0_64, %c0_65] : memref<16x256xf32, #tpu.memory_space<vmem>>, vector<16x256xf32>
    tpu.vector_store %arg9[%c0_64, %c0_65], %44 {strides = array<i32>} : memref<16x256xf32, #tpu.memory_space<vmem>>, vector<16x256xf32>,
    %c6 = arith.constant 6 : index
    %c0_66 = arith.constant 0 : index
    %46 = vector.load %arg8[%c6, %c0_66] : memref<32x256xbf16, #tpu.memory_space<vmem>>, vector<16x256xbf16>
    %c0_67 = arith.constant 0 : index
    %c6_68 = arith.constant 6 : index
    %c0_69 = arith.constant 0 : index
    %c0_70 = arith.constant 0 : index
    %47 = vector.load %arg5[%c0_67, %c6_68, %c0_69, %c0_70] : memref<1x11x256x256xbf16, #tpu.memory_space<vmem>>, vector<1x1x256x256xbf16>
    %48 = vector.shape_cast %47 : vector<1x1x256x256xbf16> to vector<256x256xbf16>
    %cst_71 = arith.constant dense<0.000000e+00> : vector<16x256xf32>
    %49 = tpu.matmul %46, %48, %cst_71 {dimension_numbers = #tpu.dot_dimension_numbers<[1], [0], [0], [1], [0, 0, 1, 1], [], []>} : vector<16x256xbf16>, vector<256x256xbf16>, vector<16x256xf32> -> vector<16x256xf32>
    %c0_72 = arith.constant 0 : index
    %c0_73 = arith.constant 0 : index
    %50 = vector.load %arg9[%c0_72, %c0_73] : memref<16x256xf32, #tpu.memory_space<vmem>>, vector<16x256xf32>
    %51 = arith.addf %50, %49 : vector<16x256xf32>
    %c0_74 = arith.constant 0 : index
    %c0_75 = arith.constant 0 : index
    %52 = vector.load %arg9[%c0_74, %c0_75] : memref<16x256xf32, #tpu.memory_space<vmem>>, vector<16x256xf32>
    tpu.vector_store %arg9[%c0_74, %c0_75], %51 {strides = array<i32>} : memref<16x256xf32, #tpu.memory_space<vmem>>, vector<16x256xf32>,
    %c7 = arith.constant 7 : index
    %c0_76 = arith.constant 0 : index
    %53 = vector.load %arg8[%c7, %c0_76] : memref<32x256xbf16, #tpu.memory_space<vmem>>, vector<16x256xbf16>
    %c0_77 = arith.constant 0 : index
    %c7_78 = arith.constant 7 : index
    %c0_79 = arith.constant 0 : index
    %c0_80 = arith.constant 0 : index
    %54 = vector.load %arg5[%c0_77, %c7_78, %c0_79, %c0_80] : memref<1x11x256x256xbf16, #tpu.memory_space<vmem>>, vector<1x1x256x256xbf16>
    %55 = vector.shape_cast %54 : vector<1x1x256x256xbf16> to vector<256x256xbf16>
    %cst_81 = arith.constant dense<0.000000e+00> : vector<16x256xf32>
    %56 = tpu.matmul %53, %55, %cst_81 {dimension_numbers = #tpu.dot_dimension_numbers<[1], [0], [0], [1], [0, 0, 1, 1], [], []>} : vector<16x256xbf16>, vector<256x256xbf16>, vector<16x256xf32> -> vector<16x256xf32>
    %c0_82 = arith.constant 0 : index
    %c0_83 = arith.constant 0 : index
    %57 = vector.load %arg9[%c0_82, %c0_83] : memref<16x256xf32, #tpu.memory_space<vmem>>, vector<16x256xf32>
    %58 = arith.addf %57, %56 : vector<16x256xf32>
    %c0_84 = arith.constant 0 : index
    %c0_85 = arith.constant 0 : index
    %59 = vector.load %arg9[%c0_84, %c0_85] : memref<16x256xf32, #tpu.memory_space<vmem>>, vector<16x256xf32>
    tpu.vector_store %arg9[%c0_84, %c0_85], %58 {strides = array<i32>} : memref<16x256xf32, #tpu.memory_space<vmem>>, vector<16x256xf32>,
    %c8 = arith.constant 8 : index
    %c0_86 = arith.constant 0 : index
    %60 = vector.load %arg8[%c8, %c0_86] : memref<32x256xbf16, #tpu.memory_space<vmem>>, vector<16x256xbf16>
    %c0_87 = arith.constant 0 : index
    %c8_88 = arith.constant 8 : index
    %c0_89 = arith.constant 0 : index
    %c0_90 = arith.constant 0 : index
    %61 = vector.load %arg5[%c0_87, %c8_88, %c0_89, %c0_90] : memref<1x11x256x256xbf16, #tpu.memory_space<vmem>>, vector<1x1x256x256xbf16>
    %62 = vector.shape_cast %61 : vector<1x1x256x256xbf16> to vector<256x256xbf16>
    %cst_91 = arith.constant dense<0.000000e+00> : vector<16x256xf32>
    %63 = tpu.matmul %60, %62, %cst_91 {dimension_numbers = #tpu.dot_dimension_numbers<[1], [0], [0], [1], [0, 0, 1, 1], [], []>} : vector<16x256xbf16>, vector<256x256xbf16>, vector<16x256xf32> -> vector<16x256xf32>
    %c0_92 = arith.constant 0 : index
    %c0_93 = arith.constant 0 : index
    %64 = vector.load %arg9[%c0_92, %c0_93] : memref<16x256xf32, #tpu.memory_space<vmem>>, vector<16x256xf32>
    %65 = arith.addf %64, %63 : vector<16x256xf32>
    %c0_94 = arith.constant 0 : index
    %c0_95 = arith.constant 0 : index
    %66 = vector.load %arg9[%c0_94, %c0_95] : memref<16x256xf32, #tpu.memory_space<vmem>>, vector<16x256xf32>
    tpu.vector_store %arg9[%c0_94, %c0_95], %65 {strides = array<i32>} : memref<16x256xf32, #tpu.memory_space<vmem>>, vector<16x256xf32>,
    %c9 = arith.constant 9 : index
    %c0_96 = arith.constant 0 : index
    %67 = vector.load %arg8[%c9, %c0_96] : memref<32x256xbf16, #tpu.memory_space<vmem>>, vector<16x256xbf16>
    %c0_97 = arith.constant 0 : index
    %c9_98 = arith.constant 9 : index
    %c0_99 = arith.constant 0 : index
    %c0_100 = arith.constant 0 : index
    %68 = vector.load %arg5[%c0_97, %c9_98, %c0_99, %c0_100] : memref<1x11x256x256xbf16, #tpu.memory_space<vmem>>, vector<1x1x256x256xbf16>
    %69 = vector.shape_cast %68 : vector<1x1x256x256xbf16> to vector<256x256xbf16>
    %cst_101 = arith.constant dense<0.000000e+00> : vector<16x256xf32>
    %70 = tpu.matmul %67, %69, %cst_101 {dimension_numbers = #tpu.dot_dimension_numbers<[1], [0], [0], [1], [0, 0, 1, 1], [], []>} : vector<16x256xbf16>, vector<256x256xbf16>, vector<16x256xf32> -> vector<16x256xf32>
    %c0_102 = arith.constant 0 : index
    %c0_103 = arith.constant 0 : index
    %71 = vector.load %arg9[%c0_102, %c0_103] : memref<16x256xf32, #tpu.memory_space<vmem>>, vector<16x256xf32>
    %72 = arith.addf %71, %70 : vector<16x256xf32>
    %c0_104 = arith.constant 0 : index
    %c0_105 = arith.constant 0 : index
    %73 = vector.load %arg9[%c0_104, %c0_105] : memref<16x256xf32, #tpu.memory_space<vmem>>, vector<16x256xf32>
    tpu.vector_store %arg9[%c0_104, %c0_105], %72 {strides = array<i32>} : memref<16x256xf32, #tpu.memory_space<vmem>>, vector<16x256xf32>,
    %c10 = arith.constant 10 : index
    %c0_106 = arith.constant 0 : index
    %74 = vector.load %arg8[%c10, %c0_106] : memref<32x256xbf16, #tpu.memory_space<vmem>>, vector<16x256xbf16>
    %c0_107 = arith.constant 0 : index
    %c10_108 = arith.constant 10 : index
    %c0_109 = arith.constant 0 : index
    %c0_110 = arith.constant 0 : index
    %75 = vector.load %arg5[%c0_107, %c10_108, %c0_109, %c0_110] : memref<1x11x256x256xbf16, #tpu.memory_space<vmem>>, vector<1x1x256x256xbf16>
    %76 = vector.shape_cast %75 : vector<1x1x256x256xbf16> to vector<256x256xbf16>
    %cst_111 = arith.constant dense<0.000000e+00> : vector<16x256xf32>
    %77 = tpu.matmul %74, %76, %cst_111 {dimension_numbers = #tpu.dot_dimension_numbers<[1], [0], [0], [1], [0, 0, 1, 1], [], []>} : vector<16x256xbf16>, vector<256x256xbf16>, vector<16x256xf32> -> vector<16x256xf32>
    %c0_112 = arith.constant 0 : index
    %c0_113 = arith.constant 0 : index
    %78 = vector.load %arg9[%c0_112, %c0_113] : memref<16x256xf32, #tpu.memory_space<vmem>>, vector<16x256xf32>
    %79 = arith.addf %78, %77 : vector<16x256xf32>
    %c0_114 = arith.constant 0 : index
    %c0_115 = arith.constant 0 : index
    %80 = vector.load %arg9[%c0_114, %c0_115] : memref<16x256xf32, #tpu.memory_space<vmem>>, vector<16x256xf32>
    tpu.vector_store %arg9[%c0_114, %c0_115], %79 {strides = array<i32>} : memref<16x256xf32, #tpu.memory_space<vmem>>, vector<16x256xf32>,
    %c0_116 = arith.constant 0 : index
    %c0_117 = arith.constant 0 : index
    %81 = vector.load %arg9[%c0_116, %c0_117] : memref<16x256xf32, #tpu.memory_space<vmem>>, vector<16x256xf32>
    %c0_118 = arith.constant 0 : index
    %c0_119 = arith.constant 0 : index
    %c0_120 = arith.constant 0 : index
    %82 = vector.load %arg6[%c0_118, %c0_119, %c0_120] : memref<1x1x256xf32, #tpu.memory_space<vmem>>, vector<1x1x256xf32>
    %83 = vector.shape_cast %82 : vector<1x1x256xf32> to vector<1x256xf32>
    %84 = vector.broadcast %83 : vector<1x256xf32> to vector<16x256xf32>
    %85 = arith.addf %81, %84 : vector<16x256xf32>
    %cst_121 = arith.constant 0.000000e+00 : f32
    %86 = vector.broadcast %cst_121 : f32 to vector<16x256xf32>
    %87 = arith.cmpf ogt, %85, %86 : vector<16x256xf32>
    %cst_122 = arith.constant 1.000000e-01 : f32
    %88 = vector.broadcast %cst_122 : f32 to vector<16x256xf32>
    %89 = arith.mulf %88, %85 : vector<16x256xf32>
    %90 = arith.select %87, %85, %89 : vector<16x256xi1>, vector<16x256xf32>
    %91 = arith.truncf %90 : vector<16x256xf32> to vector<16x256xbf16>
    %c0_123 = arith.constant 0 : index
    %c0_124 = arith.constant 0 : index
    %c0_125 = arith.constant 0 : index
    %92 = vector.load %arg7[%c0_123, %c0_124, %c0_125] : memref<1x16x256xbf16, #tpu.memory_space<vmem>>, vector<1x16x256xbf16>
    %93 = vector.shape_cast %92 : vector<1x16x256xbf16> to vector<16x256xbf16>
    %94 = vector.shape_cast %91 : vector<16x256xbf16> to vector<1x16x256xbf16>
    tpu.vector_store %arg7[%c0_123, %c0_124, %c0_125], %94 {strides = array<i32>} : memref<1x16x256xbf16, #tpu.memory_space<vmem>>, vector<1x16x256xbf16>,
    return
  }
  func.func @transform_0(%arg0: i32, %arg1: i32, %arg2: i32) -> (i32, i32, i32) {
    %c0_i32 = arith.constant 0 : i32
    %0 = arith.muli %c0_i32, %arg0 : i32
    %c0_i32_0 = arith.constant 0 : i32
    %1 = arith.addi %c0_i32_0, %0 : i32
    %c0_i32_1 = arith.constant 0 : i32
    return %arg1, %arg2, %1 : i32, i32, i32
  }
  func.func @transform_1(%arg0: i32, %arg1: i32, %arg2: i32) -> (i32, i32, i32) {
    %c1_i32 = arith.constant 1 : i32
    %0 = arith.addi %arg2, %c1_i32 : i32
    %c1_i32_0 = arith.constant 1 : i32
    %1 = arith.muli %0, %c1_i32_0 : i32
    %c0_i32 = arith.constant 0 : i32
    %2 = arith.muli %c0_i32, %arg0 : i32
    %c0_i32_1 = arith.constant 0 : i32
    %3 = arith.addi %c0_i32_1, %2 : i32
    %c0_i32_2 = arith.constant 0 : i32
    return %arg1, %1, %3 : i32, i32, i32
  }
  func.func @transform_2(%arg0: i32, %arg1: i32, %arg2: i32) -> (i32, i32, i32, i32) {
    %c0_i32 = arith.constant 0 : i32
    %c0_i32_0 = arith.constant 0 : i32
    %c0_i32_1 = arith.constant 0 : i32
    %c0_i32_2 = arith.constant 0 : i32
    return %arg0, %c0_i32, %c0_i32_0, %c0_i32_1 : i32, i32, i32, i32
  }
  func.func @transform_3(%arg0: i32, %arg1: i32, %arg2: i32) -> (i32, i32, i32) {
    %c0_i32 = arith.constant 0 : i32
    %c0_i32_0 = arith.constant 0 : i32
    %c0_i32_1 = arith.constant 0 : i32
    return %arg0, %c0_i32, %c0_i32_0 : i32, i32, i32
  }
  func.func @transform_4(%arg0: i32, %arg1: i32, %arg2: i32) -> (i32, i32, i32) {
    %c0_i32 = arith.constant 0 : i32
    return %arg1, %arg2, %arg0 : i32, i32, i32
  }
}

module attributes {stable_mosaic.version = 11 : i64} {
  func.func @_conv_kernel(%arg0: i32, %arg1: i32, %arg2: i32, %arg3: memref<1x8x256xbf16, #tpu.memory_space<vmem>>, %arg4: memref<1x8x256xbf16, #tpu.memory_space<vmem>>, %arg5: memref<1x5x256x256xbf16, #tpu.memory_space<vmem>>, %arg6: memref<1x1x256xf32, #tpu.memory_space<vmem>>, %arg7: memref<1x8x256xbf16, #tpu.memory_space<vmem>>, %arg8: memref<16x256xbf16, #tpu.memory_space<vmem>>, %arg9: memref<8x256xf32, #tpu.memory_space<vmem>>) attributes {dimension_semantics = [#tpu.dimension_semantics<parallel>, #tpu.dimension_semantics<parallel>, #tpu.dimension_semantics<parallel>], iteration_bounds = array<i64: 1, 2, 1>, scalar_prefetch = 0 : i64, scratch_operands = 2 : i64, tpu.core_type = #tpu.core_type<tc>, window_params = [{transform_indices = @transform_0, window_bounds = array<i64: 1, 8, 256>}, {transform_indices = @transform_1, window_bounds = array<i64: 1, 8, 256>}, {transform_indices = @transform_2, window_bounds = array<i64: 1, 5, 256, 256>}, {transform_indices = @transform_3, window_bounds = array<i64: 1, 1, 256>}, {transform_indices = @transform_4, window_bounds = array<i64: 1, 8, 256>}]} {
    %c0 = arith.constant 0 : index
    %c0_0 = arith.constant 0 : index
    %c0_1 = arith.constant 0 : index
    %0 = vector.load %arg3[%c0, %c0_0, %c0_1] : memref<1x8x256xbf16, #tpu.memory_space<vmem>>, vector<1x8x256xbf16>
    %1 = vector.shape_cast %0 : vector<1x8x256xbf16> to vector<8x256xbf16>
    %c0_2 = arith.constant 0 : index
    %c0_3 = arith.constant 0 : index
    %2 = vector.load %arg8[%c0_2, %c0_3] : memref<16x256xbf16, #tpu.memory_space<vmem>>, vector<8x256xbf16>
    tpu.vector_store %arg8[%c0_2, %c0_3], %1 {strides = array<i32>} : memref<16x256xbf16, #tpu.memory_space<vmem>>, vector<8x256xbf16>,
    %c0_4 = arith.constant 0 : index
    %c0_5 = arith.constant 0 : index
    %c0_6 = arith.constant 0 : index
    %3 = vector.load %arg4[%c0_4, %c0_5, %c0_6] : memref<1x8x256xbf16, #tpu.memory_space<vmem>>, vector<1x8x256xbf16>
    %4 = vector.shape_cast %3 : vector<1x8x256xbf16> to vector<8x256xbf16>
    %c8 = arith.constant 8 : index
    %c0_7 = arith.constant 0 : index
    %5 = vector.load %arg8[%c8, %c0_7] : memref<16x256xbf16, #tpu.memory_space<vmem>>, vector<8x256xbf16>
    tpu.vector_store %arg8[%c8, %c0_7], %4 {strides = array<i32>} : memref<16x256xbf16, #tpu.memory_space<vmem>>, vector<8x256xbf16>,
    %c0_8 = arith.constant 0 : index
    %c0_9 = arith.constant 0 : index
    %6 = vector.load %arg8[%c0_8, %c0_9] : memref<16x256xbf16, #tpu.memory_space<vmem>>, vector<8x256xbf16>
    %c0_10 = arith.constant 0 : index
    %c0_11 = arith.constant 0 : index
    %c0_12 = arith.constant 0 : index
    %c0_13 = arith.constant 0 : index
    %7 = vector.load %arg5[%c0_10, %c0_11, %c0_12, %c0_13] : memref<1x5x256x256xbf16, #tpu.memory_space<vmem>>, vector<1x1x256x256xbf16>
    %8 = vector.shape_cast %7 : vector<1x1x256x256xbf16> to vector<256x256xbf16>
    %cst = arith.constant dense<0.000000e+00> : vector<8x256xf32>
    %9 = tpu.matmul %6, %8, %cst {dimension_numbers = #tpu.dot_dimension_numbers<[1], [0], [0], [1], [0, 0, 1, 1], [], []>} : vector<8x256xbf16>, vector<256x256xbf16>, vector<8x256xf32> -> vector<8x256xf32>
    %c0_14 = arith.constant 0 : index
    %c0_15 = arith.constant 0 : index
    %10 = vector.load %arg9[%c0_14, %c0_15] : memref<8x256xf32, #tpu.memory_space<vmem>>, vector<8x256xf32>
    tpu.vector_store %arg9[%c0_14, %c0_15], %9 {strides = array<i32>} : memref<8x256xf32, #tpu.memory_space<vmem>>, vector<8x256xf32>,
    %c1 = arith.constant 1 : index
    %c0_16 = arith.constant 0 : index
    %11 = vector.load %arg8[%c1, %c0_16] : memref<16x256xbf16, #tpu.memory_space<vmem>>, vector<8x256xbf16>
    %c0_17 = arith.constant 0 : index
    %c1_18 = arith.constant 1 : index
    %c0_19 = arith.constant 0 : index
    %c0_20 = arith.constant 0 : index
    %12 = vector.load %arg5[%c0_17, %c1_18, %c0_19, %c0_20] : memref<1x5x256x256xbf16, #tpu.memory_space<vmem>>, vector<1x1x256x256xbf16>
    %13 = vector.shape_cast %12 : vector<1x1x256x256xbf16> to vector<256x256xbf16>
    %cst_21 = arith.constant dense<0.000000e+00> : vector<8x256xf32>
    %14 = tpu.matmul %11, %13, %cst_21 {dimension_numbers = #tpu.dot_dimension_numbers<[1], [0], [0], [1], [0, 0, 1, 1], [], []>} : vector<8x256xbf16>, vector<256x256xbf16>, vector<8x256xf32> -> vector<8x256xf32>
    %c0_22 = arith.constant 0 : index
    %c0_23 = arith.constant 0 : index
    %15 = vector.load %arg9[%c0_22, %c0_23] : memref<8x256xf32, #tpu.memory_space<vmem>>, vector<8x256xf32>
    %16 = arith.addf %15, %14 : vector<8x256xf32>
    %c0_24 = arith.constant 0 : index
    %c0_25 = arith.constant 0 : index
    %17 = vector.load %arg9[%c0_24, %c0_25] : memref<8x256xf32, #tpu.memory_space<vmem>>, vector<8x256xf32>
    tpu.vector_store %arg9[%c0_24, %c0_25], %16 {strides = array<i32>} : memref<8x256xf32, #tpu.memory_space<vmem>>, vector<8x256xf32>,
    %c2 = arith.constant 2 : index
    %c0_26 = arith.constant 0 : index
    %18 = vector.load %arg8[%c2, %c0_26] : memref<16x256xbf16, #tpu.memory_space<vmem>>, vector<8x256xbf16>
    %c0_27 = arith.constant 0 : index
    %c2_28 = arith.constant 2 : index
    %c0_29 = arith.constant 0 : index
    %c0_30 = arith.constant 0 : index
    %19 = vector.load %arg5[%c0_27, %c2_28, %c0_29, %c0_30] : memref<1x5x256x256xbf16, #tpu.memory_space<vmem>>, vector<1x1x256x256xbf16>
    %20 = vector.shape_cast %19 : vector<1x1x256x256xbf16> to vector<256x256xbf16>
    %cst_31 = arith.constant dense<0.000000e+00> : vector<8x256xf32>
    %21 = tpu.matmul %18, %20, %cst_31 {dimension_numbers = #tpu.dot_dimension_numbers<[1], [0], [0], [1], [0, 0, 1, 1], [], []>} : vector<8x256xbf16>, vector<256x256xbf16>, vector<8x256xf32> -> vector<8x256xf32>
    %c0_32 = arith.constant 0 : index
    %c0_33 = arith.constant 0 : index
    %22 = vector.load %arg9[%c0_32, %c0_33] : memref<8x256xf32, #tpu.memory_space<vmem>>, vector<8x256xf32>
    %23 = arith.addf %22, %21 : vector<8x256xf32>
    %c0_34 = arith.constant 0 : index
    %c0_35 = arith.constant 0 : index
    %24 = vector.load %arg9[%c0_34, %c0_35] : memref<8x256xf32, #tpu.memory_space<vmem>>, vector<8x256xf32>
    tpu.vector_store %arg9[%c0_34, %c0_35], %23 {strides = array<i32>} : memref<8x256xf32, #tpu.memory_space<vmem>>, vector<8x256xf32>,
    %c3 = arith.constant 3 : index
    %c0_36 = arith.constant 0 : index
    %25 = vector.load %arg8[%c3, %c0_36] : memref<16x256xbf16, #tpu.memory_space<vmem>>, vector<8x256xbf16>
    %c0_37 = arith.constant 0 : index
    %c3_38 = arith.constant 3 : index
    %c0_39 = arith.constant 0 : index
    %c0_40 = arith.constant 0 : index
    %26 = vector.load %arg5[%c0_37, %c3_38, %c0_39, %c0_40] : memref<1x5x256x256xbf16, #tpu.memory_space<vmem>>, vector<1x1x256x256xbf16>
    %27 = vector.shape_cast %26 : vector<1x1x256x256xbf16> to vector<256x256xbf16>
    %cst_41 = arith.constant dense<0.000000e+00> : vector<8x256xf32>
    %28 = tpu.matmul %25, %27, %cst_41 {dimension_numbers = #tpu.dot_dimension_numbers<[1], [0], [0], [1], [0, 0, 1, 1], [], []>} : vector<8x256xbf16>, vector<256x256xbf16>, vector<8x256xf32> -> vector<8x256xf32>
    %c0_42 = arith.constant 0 : index
    %c0_43 = arith.constant 0 : index
    %29 = vector.load %arg9[%c0_42, %c0_43] : memref<8x256xf32, #tpu.memory_space<vmem>>, vector<8x256xf32>
    %30 = arith.addf %29, %28 : vector<8x256xf32>
    %c0_44 = arith.constant 0 : index
    %c0_45 = arith.constant 0 : index
    %31 = vector.load %arg9[%c0_44, %c0_45] : memref<8x256xf32, #tpu.memory_space<vmem>>, vector<8x256xf32>
    tpu.vector_store %arg9[%c0_44, %c0_45], %30 {strides = array<i32>} : memref<8x256xf32, #tpu.memory_space<vmem>>, vector<8x256xf32>,
    %c4 = arith.constant 4 : index
    %c0_46 = arith.constant 0 : index
    %32 = vector.load %arg8[%c4, %c0_46] : memref<16x256xbf16, #tpu.memory_space<vmem>>, vector<8x256xbf16>
    %c0_47 = arith.constant 0 : index
    %c4_48 = arith.constant 4 : index
    %c0_49 = arith.constant 0 : index
    %c0_50 = arith.constant 0 : index
    %33 = vector.load %arg5[%c0_47, %c4_48, %c0_49, %c0_50] : memref<1x5x256x256xbf16, #tpu.memory_space<vmem>>, vector<1x1x256x256xbf16>
    %34 = vector.shape_cast %33 : vector<1x1x256x256xbf16> to vector<256x256xbf16>
    %cst_51 = arith.constant dense<0.000000e+00> : vector<8x256xf32>
    %35 = tpu.matmul %32, %34, %cst_51 {dimension_numbers = #tpu.dot_dimension_numbers<[1], [0], [0], [1], [0, 0, 1, 1], [], []>} : vector<8x256xbf16>, vector<256x256xbf16>, vector<8x256xf32> -> vector<8x256xf32>
    %c0_52 = arith.constant 0 : index
    %c0_53 = arith.constant 0 : index
    %36 = vector.load %arg9[%c0_52, %c0_53] : memref<8x256xf32, #tpu.memory_space<vmem>>, vector<8x256xf32>
    %37 = arith.addf %36, %35 : vector<8x256xf32>
    %c0_54 = arith.constant 0 : index
    %c0_55 = arith.constant 0 : index
    %38 = vector.load %arg9[%c0_54, %c0_55] : memref<8x256xf32, #tpu.memory_space<vmem>>, vector<8x256xf32>
    tpu.vector_store %arg9[%c0_54, %c0_55], %37 {strides = array<i32>} : memref<8x256xf32, #tpu.memory_space<vmem>>, vector<8x256xf32>,
    %c0_56 = arith.constant 0 : index
    %c0_57 = arith.constant 0 : index
    %39 = vector.load %arg9[%c0_56, %c0_57] : memref<8x256xf32, #tpu.memory_space<vmem>>, vector<8x256xf32>
    %c0_58 = arith.constant 0 : index
    %c0_59 = arith.constant 0 : index
    %c0_60 = arith.constant 0 : index
    %40 = vector.load %arg6[%c0_58, %c0_59, %c0_60] : memref<1x1x256xf32, #tpu.memory_space<vmem>>, vector<1x1x256xf32>
    %41 = vector.shape_cast %40 : vector<1x1x256xf32> to vector<1x256xf32>
    %42 = vector.broadcast %41 : vector<1x256xf32> to vector<8x256xf32>
    %43 = arith.addf %39, %42 : vector<8x256xf32>
    %cst_61 = arith.constant 0.000000e+00 : f32
    %44 = vector.broadcast %cst_61 : f32 to vector<8x256xf32>
    %45 = arith.cmpf ogt, %43, %44 : vector<8x256xf32>
    %cst_62 = arith.constant 1.000000e-01 : f32
    %46 = vector.broadcast %cst_62 : f32 to vector<8x256xf32>
    %47 = arith.mulf %46, %43 : vector<8x256xf32>
    %48 = arith.select %45, %43, %47 : vector<8x256xi1>, vector<8x256xf32>
    %49 = arith.truncf %48 : vector<8x256xf32> to vector<8x256xbf16>
    %c0_63 = arith.constant 0 : index
    %c0_64 = arith.constant 0 : index
    %c0_65 = arith.constant 0 : index
    %50 = vector.load %arg7[%c0_63, %c0_64, %c0_65] : memref<1x8x256xbf16, #tpu.memory_space<vmem>>, vector<1x8x256xbf16>
    %51 = vector.shape_cast %50 : vector<1x8x256xbf16> to vector<8x256xbf16>
    %52 = vector.shape_cast %49 : vector<8x256xbf16> to vector<1x8x256xbf16>
    tpu.vector_store %arg7[%c0_63, %c0_64, %c0_65], %52 {strides = array<i32>} : memref<1x8x256xbf16, #tpu.memory_space<vmem>>, vector<1x8x256xbf16>,
    return
  }
  func.func @transform_0(%arg0: i32, %arg1: i32, %arg2: i32) -> (i32, i32, i32) {
    %c0_i32 = arith.constant 0 : i32
    %0 = arith.muli %c0_i32, %arg0 : i32
    %c0_i32_0 = arith.constant 0 : i32
    %1 = arith.addi %c0_i32_0, %0 : i32
    %c0_i32_1 = arith.constant 0 : i32
    return %arg1, %arg2, %1 : i32, i32, i32
  }
  func.func @transform_1(%arg0: i32, %arg1: i32, %arg2: i32) -> (i32, i32, i32) {
    %c1_i32 = arith.constant 1 : i32
    %0 = arith.addi %arg2, %c1_i32 : i32
    %c1_i32_0 = arith.constant 1 : i32
    %1 = arith.muli %0, %c1_i32_0 : i32
    %c0_i32 = arith.constant 0 : i32
    %2 = arith.muli %c0_i32, %arg0 : i32
    %c0_i32_1 = arith.constant 0 : i32
    %3 = arith.addi %c0_i32_1, %2 : i32
    %c0_i32_2 = arith.constant 0 : i32
    return %arg1, %1, %3 : i32, i32, i32
  }
  func.func @transform_2(%arg0: i32, %arg1: i32, %arg2: i32) -> (i32, i32, i32, i32) {
    %c0_i32 = arith.constant 0 : i32
    %c0_i32_0 = arith.constant 0 : i32
    %c0_i32_1 = arith.constant 0 : i32
    %c0_i32_2 = arith.constant 0 : i32
    return %arg0, %c0_i32, %c0_i32_0, %c0_i32_1 : i32, i32, i32, i32
  }
  func.func @transform_3(%arg0: i32, %arg1: i32, %arg2: i32) -> (i32, i32, i32) {
    %c0_i32 = arith.constant 0 : i32
    %c0_i32_0 = arith.constant 0 : i32
    %c0_i32_1 = arith.constant 0 : i32
    return %arg0, %c0_i32, %c0_i32_0 : i32, i32, i32
  }
  func.func @transform_4(%arg0: i32, %arg1: i32, %arg2: i32) -> (i32, i32, i32) {
    %c0_i32 = arith.constant 0 : i32
    return %arg1, %arg2, %arg0 : i32, i32, i32
  }
}

module attributes {stable_mosaic.version = 11 : i64} {
  func.func @_conv_kernel(%arg0: i32, %arg1: i32, %arg2: i32, %arg3: memref<1x8x256xbf16, #tpu.memory_space<vmem>>, %arg4: memref<1x8x256xbf16, #tpu.memory_space<vmem>>, %arg5: memref<1x3x256x1xbf16, #tpu.memory_space<vmem>>, %arg6: memref<1x1x1xf32, #tpu.memory_space<vmem>>, %arg7: memref<1x8x1xbf16, #tpu.memory_space<vmem>>, %arg8: memref<16x256xbf16, #tpu.memory_space<vmem>>, %arg9: memref<8x1xf32, #tpu.memory_space<vmem>>) attributes {dimension_semantics = [#tpu.dimension_semantics<parallel>, #tpu.dimension_semantics<parallel>, #tpu.dimension_semantics<parallel>], iteration_bounds = array<i64: 1, 2, 1>, scalar_prefetch = 0 : i64, scratch_operands = 2 : i64, tpu.core_type = #tpu.core_type<tc>, window_params = [{transform_indices = @transform_0, window_bounds = array<i64: 1, 8, 256>}, {transform_indices = @transform_1, window_bounds = array<i64: 1, 8, 256>}, {transform_indices = @transform_2, window_bounds = array<i64: 1, 3, 256, 1>}, {transform_indices = @transform_3, window_bounds = array<i64: 1, 1, 1>}, {transform_indices = @transform_4, window_bounds = array<i64: 1, 8, 1>}]} {
    %c0 = arith.constant 0 : index
    %c0_0 = arith.constant 0 : index
    %c0_1 = arith.constant 0 : index
    %0 = vector.load %arg3[%c0, %c0_0, %c0_1] : memref<1x8x256xbf16, #tpu.memory_space<vmem>>, vector<1x8x256xbf16>
    %1 = vector.shape_cast %0 : vector<1x8x256xbf16> to vector<8x256xbf16>
    %c0_2 = arith.constant 0 : index
    %c0_3 = arith.constant 0 : index
    %2 = vector.load %arg8[%c0_2, %c0_3] : memref<16x256xbf16, #tpu.memory_space<vmem>>, vector<8x256xbf16>
    tpu.vector_store %arg8[%c0_2, %c0_3], %1 {strides = array<i32>} : memref<16x256xbf16, #tpu.memory_space<vmem>>, vector<8x256xbf16>,
    %c0_4 = arith.constant 0 : index
    %c0_5 = arith.constant 0 : index
    %c0_6 = arith.constant 0 : index
    %3 = vector.load %arg4[%c0_4, %c0_5, %c0_6] : memref<1x8x256xbf16, #tpu.memory_space<vmem>>, vector<1x8x256xbf16>
    %4 = vector.shape_cast %3 : vector<1x8x256xbf16> to vector<8x256xbf16>
    %c8 = arith.constant 8 : index
    %c0_7 = arith.constant 0 : index
    %5 = vector.load %arg8[%c8, %c0_7] : memref<16x256xbf16, #tpu.memory_space<vmem>>, vector<8x256xbf16>
    tpu.vector_store %arg8[%c8, %c0_7], %4 {strides = array<i32>} : memref<16x256xbf16, #tpu.memory_space<vmem>>, vector<8x256xbf16>,
    %c0_8 = arith.constant 0 : index
    %c0_9 = arith.constant 0 : index
    %6 = vector.load %arg8[%c0_8, %c0_9] : memref<16x256xbf16, #tpu.memory_space<vmem>>, vector<8x256xbf16>
    %c0_10 = arith.constant 0 : index
    %c0_11 = arith.constant 0 : index
    %c0_12 = arith.constant 0 : index
    %c0_13 = arith.constant 0 : index
    %7 = vector.load %arg5[%c0_10, %c0_11, %c0_12, %c0_13] : memref<1x3x256x1xbf16, #tpu.memory_space<vmem>>, vector<1x1x256x1xbf16>
    %8 = vector.shape_cast %7 : vector<1x1x256x1xbf16> to vector<256x1xbf16>
    %cst = arith.constant dense<0.000000e+00> : vector<8x1xf32>
    %9 = tpu.matmul %6, %8, %cst {dimension_numbers = #tpu.dot_dimension_numbers<[1], [0], [0], [1], [0, 0, 1, 1], [], []>} : vector<8x256xbf16>, vector<256x1xbf16>, vector<8x1xf32> -> vector<8x1xf32>
    %c0_14 = arith.constant 0 : index
    %c0_15 = arith.constant 0 : index
    %10 = vector.load %arg9[%c0_14, %c0_15] : memref<8x1xf32, #tpu.memory_space<vmem>>, vector<8x1xf32>
    tpu.vector_store %arg9[%c0_14, %c0_15], %9 {strides = array<i32>} : memref<8x1xf32, #tpu.memory_space<vmem>>, vector<8x1xf32>,
    %c1 = arith.constant 1 : index
    %c0_16 = arith.constant 0 : index
    %11 = vector.load %arg8[%c1, %c0_16] : memref<16x256xbf16, #tpu.memory_space<vmem>>, vector<8x256xbf16>
    %c0_17 = arith.constant 0 : index
    %c1_18 = arith.constant 1 : index
    %c0_19 = arith.constant 0 : index
    %c0_20 = arith.constant 0 : index
    %12 = vector.load %arg5[%c0_17, %c1_18, %c0_19, %c0_20] : memref<1x3x256x1xbf16, #tpu.memory_space<vmem>>, vector<1x1x256x1xbf16>
    %13 = vector.shape_cast %12 : vector<1x1x256x1xbf16> to vector<256x1xbf16>
    %cst_21 = arith.constant dense<0.000000e+00> : vector<8x1xf32>
    %14 = tpu.matmul %11, %13, %cst_21 {dimension_numbers = #tpu.dot_dimension_numbers<[1], [0], [0], [1], [0, 0, 1, 1], [], []>} : vector<8x256xbf16>, vector<256x1xbf16>, vector<8x1xf32> -> vector<8x1xf32>
    %c0_22 = arith.constant 0 : index
    %c0_23 = arith.constant 0 : index
    %15 = vector.load %arg9[%c0_22, %c0_23] : memref<8x1xf32, #tpu.memory_space<vmem>>, vector<8x1xf32>
    %16 = arith.addf %15, %14 : vector<8x1xf32>
    %c0_24 = arith.constant 0 : index
    %c0_25 = arith.constant 0 : index
    %17 = vector.load %arg9[%c0_24, %c0_25] : memref<8x1xf32, #tpu.memory_space<vmem>>, vector<8x1xf32>
    tpu.vector_store %arg9[%c0_24, %c0_25], %16 {strides = array<i32>} : memref<8x1xf32, #tpu.memory_space<vmem>>, vector<8x1xf32>,
    %c2 = arith.constant 2 : index
    %c0_26 = arith.constant 0 : index
    %18 = vector.load %arg8[%c2, %c0_26] : memref<16x256xbf16, #tpu.memory_space<vmem>>, vector<8x256xbf16>
    %c0_27 = arith.constant 0 : index
    %c2_28 = arith.constant 2 : index
    %c0_29 = arith.constant 0 : index
    %c0_30 = arith.constant 0 : index
    %19 = vector.load %arg5[%c0_27, %c2_28, %c0_29, %c0_30] : memref<1x3x256x1xbf16, #tpu.memory_space<vmem>>, vector<1x1x256x1xbf16>
    %20 = vector.shape_cast %19 : vector<1x1x256x1xbf16> to vector<256x1xbf16>
    %cst_31 = arith.constant dense<0.000000e+00> : vector<8x1xf32>
    %21 = tpu.matmul %18, %20, %cst_31 {dimension_numbers = #tpu.dot_dimension_numbers<[1], [0], [0], [1], [0, 0, 1, 1], [], []>} : vector<8x256xbf16>, vector<256x1xbf16>, vector<8x1xf32> -> vector<8x1xf32>
    %c0_32 = arith.constant 0 : index
    %c0_33 = arith.constant 0 : index
    %22 = vector.load %arg9[%c0_32, %c0_33] : memref<8x1xf32, #tpu.memory_space<vmem>>, vector<8x1xf32>
    %23 = arith.addf %22, %21 : vector<8x1xf32>
    %c0_34 = arith.constant 0 : index
    %c0_35 = arith.constant 0 : index
    %24 = vector.load %arg9[%c0_34, %c0_35] : memref<8x1xf32, #tpu.memory_space<vmem>>, vector<8x1xf32>
    tpu.vector_store %arg9[%c0_34, %c0_35], %23 {strides = array<i32>} : memref<8x1xf32, #tpu.memory_space<vmem>>, vector<8x1xf32>,
    %c0_36 = arith.constant 0 : index
    %c0_37 = arith.constant 0 : index
    %25 = vector.load %arg9[%c0_36, %c0_37] : memref<8x1xf32, #tpu.memory_space<vmem>>, vector<8x1xf32>
    %c0_38 = arith.constant 0 : index
    %c0_39 = arith.constant 0 : index
    %c0_40 = arith.constant 0 : index
    %26 = vector.load %arg6[%c0_38, %c0_39, %c0_40] : memref<1x1x1xf32, #tpu.memory_space<vmem>>, vector<1x1x1xf32>
    %27 = vector.shape_cast %26 : vector<1x1x1xf32> to vector<1x1xf32>
    %28 = vector.broadcast %27 : vector<1x1xf32> to vector<8x1xf32>
    %29 = arith.addf %25, %28 : vector<8x1xf32>
    %30 = arith.truncf %29 : vector<8x1xf32> to vector<8x1xbf16>
    %c0_41 = arith.constant 0 : index
    %c0_42 = arith.constant 0 : index
    %c0_43 = arith.constant 0 : index
    %31 = vector.load %arg7[%c0_41, %c0_42, %c0_43] : memref<1x8x1xbf16, #tpu.memory_space<vmem>>, vector<1x8x1xbf16>
    %32 = vector.shape_cast %31 : vector<1x8x1xbf16> to vector<8x1xbf16>
    %33 = vector.shape_cast %30 : vector<8x1xbf16> to vector<1x8x1xbf16>
    tpu.vector_store %arg7[%c0_41, %c0_42, %c0_43], %33 {strides = array<i32>} : memref<1x8x1xbf16, #tpu.memory_space<vmem>>, vector<1x8x1xbf16>,
    return
  }
  func.func @transform_0(%arg0: i32, %arg1: i32, %arg2: i32) -> (i32, i32, i32) {
    %c0_i32 = arith.constant 0 : i32
    %0 = arith.muli %c0_i32, %arg0 : i32
    %c0_i32_0 = arith.constant 0 : i32
    %1 = arith.addi %c0_i32_0, %0 : i32
    %c0_i32_1 = arith.constant 0 : i32
    return %arg1, %arg2, %1 : i32, i32, i32
  }
  func.func @transform_1(%arg0: i32, %arg1: i32, %arg2: i32) -> (i32, i32, i32) {
    %c1_i32 = arith.constant 1 : i32
    %0 = arith.addi %arg2, %c1_i32 : i32
    %c1_i32_0 = arith.constant 1 : i32
    %1 = arith.muli %0, %c1_i32_0 : i32
    %c0_i32 = arith.constant 0 : i32
    %2 = arith.muli %c0_i32, %arg0 : i32
    %c0_i32_1 = arith.constant 0 : i32
    %3 = arith.addi %c0_i32_1, %2 : i32
    %c0_i32_2 = arith.constant 0 : i32
    return %arg1, %1, %3 : i32, i32, i32
  }
  func.func @transform_2(%arg0: i32, %arg1: i32, %arg2: i32) -> (i32, i32, i32, i32) {
    %c0_i32 = arith.constant 0 : i32
    %c0_i32_0 = arith.constant 0 : i32
    %c0_i32_1 = arith.constant 0 : i32
    %c0_i32_2 = arith.constant 0 : i32
    return %arg0, %c0_i32, %c0_i32_0, %c0_i32_1 : i32, i32, i32, i32
  }
  func.func @transform_3(%arg0: i32, %arg1: i32, %arg2: i32) -> (i32, i32, i32) {
    %c0_i32 = arith.constant 0 : i32
    %c0_i32_0 = arith.constant 0 : i32
    %c0_i32_1 = arith.constant 0 : i32
    return %arg0, %c0_i32, %c0_i32_0 : i32, i32, i32
  }
  func.func @transform_4(%arg0: i32, %arg1: i32, %arg2: i32) -> (i32, i32, i32) {
    %c0_i32 = arith.constant 0 : i32
    return %arg1, %arg2, %arg0 : i32, i32, i32
  }
}

</mosaic_0001>

<llo_original>
// kernel: _lambda_.6
$region0: #{_lambda_.6}
  #allocation0 [shape = 'u32[]', space=smem, size = 0x4, offset = 0x4, fixed_abs, tag = 'smem constant byte address 0x4 - core index']
  #allocation1 [shape = 'u32[144,128]{1,0:T(1,128)}', space=vmem, size = 0x12000, scoped, tag = 'internal scratch']
  #allocation2 [shape = 'bf16[32,64]{1,0:T(16,128)(2,1)}', space=vmem, size = 0x2000, scoped, tag = 'scratch operand']
  #allocation3 [shape = 'f32[16,64]{1,0:T(8,128)}', space=vmem, size = 0x2000, scoped, tag = 'scratch operand']
  %s0 = inlined_call_operand.vmem [shape: bf16[2,32,64], index: 0, kind: input, shape index: {}, may-alias: {0,1}]
  %s1 = inlined_call_operand.vmem [shape: bf16[2,32,64], index: 1, kind: input, shape index: {}, may-alias: {0,1}]
  %s2 = inlined_call_operand.hbm [shape: bf16[1,11,64,64], index: 2, kind: input, shape index: {}]
  %s3 = inlined_call_operand.hbm [shape: f32[1,1,64], index: 3, kind: input, shape index: {}]
  %s4 = inlined_call_operand.vmem [shape: bf16[2,16,64], index: 4, kind: output, shape index: {}]
  %s5 = sld [smem:[#allocation0]]
  $region57: #{_lambda_.6} parent=0
    _
  %s7 = ssub.s32 1, %s5
  %s8 = scalar_select 0, %s7, %s5
  $region1: #{_lambda_.6} parent=0
    #allocation4 [shape = 'u8[180224]{0}', space=vmem, size = 0x2c000, scoped, tag = 'input window, operand 2, single buffered']
    #allocation5 [shape = 's32[2]{0}', space=sflag, size = 0x8, scoped, tag = 'scoped memory for _lambda_.6']
    #allocation6 [shape = 'u8[512]{0}', space=vmem, size = 0x400, scoped, tag = 'input window, operand 3, single buffered']
    #allocation7 [shape = 's32[1]{0}', space=sflag, size = 0x4, scoped, tag = 'scoped memory for _lambda_.6']
    %9 = vsyncpa [#allocation5], 0
    %10 = vsyncpa [#allocation7], 0
    loop: start=0, step=1, limit=4
    $region2: #{_lambda_.6} parent=1 // loop_pre_header
      _
    $region3: #{_lambda_.6} parent=1 // loop_header
      %s12 = sphi 0, %s16
      %p13 = scmp.ge.s32.totalorder %s12, 4
      %s19 = sphi 0, %s38
      %s20 = sphi 0, %s34
      %s21 = sphi 0, %s30
      %s22 = sphi 0, %s19
      %s23 = sphi 0, %s20
      %s24 = sphi 0, %s21
      %s25 = sphi 0, %s22
      %s26 = sphi 0, %s23
      %s27 = sphi 0, %s24
      %s43 = sphi 0, %s45
      %s46 = sphi 0, %s43
      %s47 = sphi 0, %s46
      %s63 = sphi 0, %s47
      %s73 = sphi 0, %s75
      %s76 = sphi 0, %s73
      %s77 = sphi 0, %s76
      %s93 = sphi 0, %s77
      %s99 = sphi 0, %s101
      %s102 = sphi 0, %s99
      %s103 = sphi 0, %s102
      %s119 = sphi 0, %s103
      %s125 = sphi 0, %s127
      %s128 = sphi 0, %s125
      %s129 = sphi 0, %s128
      %s145 = sphi 0, %s129
      %s155 = sphi 0, %s157
      %s158 = sphi 0, %s155
      %s159 = sphi 0, %s158
      %s175 = sphi 0, %s159
    $region4: #{_lambda_.6} parent=1 // loop_header_branch
      %15 = sbr.rel (%p13) target = $region8
    $region5: #{_lambda_.6} parent=1 // loop_body
      %s17 = ssub.s32 %s12, 1
      %s18 = ssub.s32 %s12, 2
      %s28 = sadd.s32 1, %s21
      %p29 = scmp.ge.s32.totalorder %s28, 1
      %s30 = scalar_select %p29, 0, %s28
      %s31 = sadd.s32 1, %s20
      %s32 = scalar_select %p29, %s31, %s20
      %p33 = scmp.ge.s32.totalorder %s32, 2
      %s34 = scalar_select %p33, 0, %s32
      %s35 = sadd.s32 1, %s19
      %s36 = scalar_select %p33, %s35, %s19
      %p37 = scmp.ge.s32.totalorder %s36, 1
      %s38 = scalar_select %p37, 0, %s36
      %s39 = ssub.s32 %s20, %s34
      %s40 = ssub.s32 %s21, %s30
      %s41 = sor.u32 %s39, %s40
      %p42 = scmp.eq.s32.totalorder %s41, 0
      %s44 = sadd.s32 %s43, 1
      %s45 = scalar_select %p42, %s43, %s44
      %p48 = pneg %p42
      %p49 = scmp.eq.s32.totalorder %s12, 1
      %p50 = por %p48, %p49
      %p51 = scmp.ne.s32.totalorder %s43, %s46
      %p52 = scmp.eq.s32.totalorder %s12, 0
      %p53 = por %p51, %p52
      %p54 = scmp.ne.s32.totalorder %s43, %s46
      %p55 = scmp.eq.s32.totalorder %s17, 1
      %p56 = por %p54, %p55
      %p57 = scmp.ne.s32.totalorder %s46, %s47
      %p58 = scmp.eq.s32.totalorder %s17, 0
      %p59 = por %p57, %p58
      %p60 = scmp.ne.s32.totalorder %s46, %s47
      %p61 = scmp.eq.s32.totalorder %s18, 1
      %p62 = por %p60, %p61
      %p64 = scmp.ne.s32.totalorder %s47, %s63
      %p65 = scmp.eq.s32.totalorder %s18, 0
      %p66 = por %p64, %p65
      %s67 = sadd.s32 %s21, 1
      %s68 = sadd.s32 %s30, 1
      %s69 = ssub.s32 %s20, %s34
      %s70 = ssub.s32 %s67, %s68
      %s71 = sor.u32 %s69, %s70
      %p72 = scmp.eq.s32.totalorder %s71, 0
      %s74 = sadd.s32 %s73, 1
      %s75 = scalar_select %p72, %s73, %s74
      %p78 = pneg %p72
      %p79 = scmp.eq.s32.totalorder %s12, 1
      %p80 = por %p78, %p79
      %p81 = scmp.ne.s32.totalorder %s73, %s76
      %p82 = scmp.eq.s32.totalorder %s12, 0
      %p83 = por %p81, %p82
      %p84 = scmp.ne.s32.totalorder %s73, %s76
      %p85 = scmp.eq.s32.totalorder %s17, 1
      %p86 = por %p84, %p85
      %p87 = scmp.ne.s32.totalorder %s76, %s77
      %p88 = scmp.eq.s32.totalorder %s17, 0
      %p89 = por %p87, %p88
      %p90 = scmp.ne.s32.totalorder %s76, %s77
      %p91 = scmp.eq.s32.totalorder %s18, 1
      %p92 = por %p90, %p91
      %p94 = scmp.ne.s32.totalorder %s77, %s93
      %p95 = scmp.eq.s32.totalorder %s18, 0
      %p96 = por %p94, %p95
      %s97 = ssub.s32 %s19, %s38
      %p98 = scmp.eq.s32.totalorder %s97, 0
      %s100 = sadd.s32 %s99, 1
      %s101 = scalar_select %p98, %s99, %s100
      %p104 = pneg %p98
      %p105 = scmp.eq.s32.totalorder %s12, 1
      %p106 = por %p104, %p105
      %p107 = scmp.ne.s32.totalorder %s99, %s102
      %p108 = scmp.eq.s32.totalorder %s12, 0
      %p109 = por %p107, %p108
      %p110 = scmp.ne.s32.totalorder %s99, %s102
      %p111 = scmp.eq.s32.totalorder %s17, 1
      %p112 = por %p110, %p111
      %p113 = scmp.ne.s32.totalorder %s102, %s103
      %p114 = scmp.eq.s32.totalorder %s17, 0
      %p115 = por %p113, %p114
      %p116 = scmp.ne.s32.totalorder %s102, %s103
      %p117 = scmp.eq.s32.totalorder %s18, 1
      %p118 = por %p116, %p117
      %p120 = scmp.ne.s32.totalorder %s103, %s119
      %p121 = scmp.eq.s32.totalorder %s18, 0
      %p122 = por %p120, %p121
      %s123 = ssub.s32 %s19, %s38
      %p124 = scmp.eq.s32.totalorder %s123, 0
      %s126 = sadd.s32 %s125, 1
      %s127 = scalar_select %p124, %s125, %s126
      %p130 = pneg %p124
      %p131 = scmp.eq.s32.totalorder %s12, 1
      %p132 = por %p130, %p131
      %p133 = scmp.ne.s32.totalorder %s125, %s128
      %p134 = scmp.eq.s32.totalorder %s12, 0
      %p135 = por %p133, %p134
      %p136 = scmp.ne.s32.totalorder %s125, %s128
      %p137 = scmp.eq.s32.totalorder %s17, 1
      %p138 = por %p136, %p137
      %p139 = scmp.ne.s32.totalorder %s128, %s129
      %p140 = scmp.eq.s32.totalorder %s17, 0
      %p141 = por %p139, %p140
      %p142 = scmp.ne.s32.totalorder %s128, %s129
      %p143 = scmp.eq.s32.totalorder %s18, 1
      %p144 = por %p142, %p143
      %p146 = scmp.ne.s32.totalorder %s129, %s145
      %p147 = scmp.eq.s32.totalorder %s18, 0
      %p148 = por %p146, %p147
      %s149 = ssub.s32 %s20, %s34
      %s150 = ssub.s32 %s21, %s30
      %s151 = sor.u32 %s149, %s150
      %s152 = ssub.s32 %s19, %s38
      %s153 = sor.u32 %s151, %s152
      %p154 = scmp.eq.s32.totalorder %s153, 0
      %s156 = sadd.s32 %s155, 1
      %s157 = scalar_select %p154, %s155, %s156
      %p160 = pneg %p154
      %p161 = scmp.eq.s32.totalorder %s12, 1
      %p162 = por %p160, %p161
      %p163 = scmp.ne.s32.totalorder %s155, %s158
      %p164 = scmp.eq.s32.totalorder %s12, 0
      %p165 = por %p163, %p164
      %p166 = scmp.ne.s32.totalorder %s155, %s158
      %p167 = scmp.eq.s32.totalorder %s17, 1
      %p168 = por %p166, %p167
      %p169 = scmp.ne.s32.totalorder %s158, %s159
      %p170 = scmp.eq.s32.totalorder %s17, 0
      %p171 = por %p169, %p170
      %p172 = scmp.ne.s32.totalorder %s158, %s159
      %p173 = scmp.eq.s32.totalorder %s18, 1
      %p174 = por %p172, %p173
      %p176 = scmp.ne.s32.totalorder %s159, %s175
      %p177 = scmp.eq.s32.totalorder %s18, 0
      %p178 = por %p176, %p177
      %p179 = scmp.le.s32.totalorder 1, %s12
      %p180 = scmp.lt.s32.totalorder %s12, 3
      %p181 = pnand %p179, %p180
      %p182 = pneg %p181
      // Predicated region
      $region9: #{_lambda_.6} parent=5 // pred_check
        _
      $region10: #{_lambda_.6} parent=5 // pred_check_branch
        %184 = sbr.rel (%p181) target = $region12
      $region11: #{_lambda_.6} parent=5 // pred_region
        %s185 = ssub.s32 %s12, 1
        // Predicated region
        $region13: #{_lambda_.6} parent=11 // pred_check
          %p186 = pneg %p115
        $region14: #{_lambda_.6} parent=11 // pred_check_branch
          %188 = sbr.rel (%p186) target = $region16
        $region15: #{_lambda_.6} parent=11 // pred_region
          %s190 = ssub.s32 5632, 5632
          %191 = vsyncadd [#allocation5], %s190
          %s192 = smul.addr %s22, 88
          %s193 = smul.addr %s192, 64
          %s194 = scalar_lea.hbm %s2, %s193
          %s195 = sshll.u32 [#allocation4], 4
          %s196 = int_to_ptr.vmem [resolvable:$true] %s195
          %201 = dma.hbm_to_vmem [thread:$0]  %s194, 5632, %s196, [#allocation5], 64, 64, 4
        $region16: #{_lambda_.6} parent=11 // pred_fallthru
          _
        // Predicated region
        $region17: #{_lambda_.6} parent=11 // pred_check
          %p202 = pneg %p141
        $region18: #{_lambda_.6} parent=11 // pred_check_branch
          %204 = sbr.rel (%p202) target = $region20
        $region19: #{_lambda_.6} parent=11 // pred_region
          %s206 = ssub.s32 16, 16
          %207 = vsyncadd [#allocation7], %s206
          %s208 = smul.addr %s22, 16
          %s209 = scalar_lea.hbm %s3, %s208
          %s211 = sshll.u32 [#allocation6], 4
          %s212 = int_to_ptr.vmem [resolvable:$true] %s211
          %214 = dma.hbm_to_vmem [thread:$0]  %s209, 16, %s212, [#allocation7]
        $region20: #{_lambda_.6} parent=11 // pred_fallthru
          _
      $region12: #{_lambda_.6} parent=5 // pred_fallthru
        _
      %p215 = scmp.lt.s32.totalorder %s12, 2
      // Predicated region
      $region21: #{_lambda_.6} parent=5 // pred_check
        %p216 = pneg %p215
      $region22: #{_lambda_.6} parent=5 // pred_check_branch
        %218 = sbr.rel (%p216) target = $region24
      $region23: #{_lambda_.6} parent=5 // pred_region
        // Predicated region
        $region25: #{_lambda_.6} parent=23 // pred_check
          %p219 = pneg %p53
        $region26: #{_lambda_.6} parent=23 // pred_check_branch
          %221 = sbr.rel (%p219) target = $region28
        $region27: #{_lambda_.6} parent=23 // pred_region
          %s222 = smul.u32 2, %s21
          %p223 = scmp.lt.s32.totalorder %s20, 1
          %s224 = scalar_select %p223, %s20, 1
          %p225 = scmp.lt.s32.totalorder %s222, 3
          %s226 = scalar_select %p225, %s222, 3
          %s227 = smul.addr %s224, 4
          %s228 = sadd.s32 %s226, %s227
          %s229 = smul.addr %s228, 4
          %s230 = scalar_lea.vmem %s0, %s229
          %s231 = smul.u32 2, %s21
        $region28: #{_lambda_.6} parent=23 // pred_fallthru
          _
        // Predicated region
        $region29: #{_lambda_.6} parent=23 // pred_check
          %p232 = pneg %p83
        $region30: #{_lambda_.6} parent=23 // pred_check_branch
          %234 = sbr.rel (%p232) target = $region32
        $region31: #{_lambda_.6} parent=23 // pred_region
          %s235 = sadd.s32 %s21, 1
          %s236 = smul.u32 2, %s235
          %p237 = scmp.lt.s32.totalorder %s20, 1
          %s238 = scalar_select %p237, %s20, 1
          %p239 = scmp.lt.s32.totalorder %s236, 3
          %s240 = scalar_select %p239, %s236, 3
          %s241 = smul.addr %s238, 4
          %s242 = sadd.s32 %s240, %s241
          %s243 = smul.addr %s242, 4
          %s244 = scalar_lea.vmem %s1, %s243
          %s245 = sadd.s32 %s21, 1
          %s246 = smul.u32 2, %s245
        $region32: #{_lambda_.6} parent=23 // pred_fallthru
          _
      $region24: #{_lambda_.6} parent=5 // pred_fallthru
        _
      %p247 = scmp.le.s32.totalorder 1, %s12
      %p248 = scmp.lt.s32.totalorder %s12, 3
      %p249 = pnand %p247, %p248
      %p250 = pneg %p249
      // Predicated region
      $region33: #{_lambda_.6} parent=5 // pred_check
        _
      $region34: #{_lambda_.6} parent=5 // pred_check_branch
        %252 = sbr.rel (%p249) target = $region36
      $region35: #{_lambda_.6} parent=5 // pred_region
        %s253 = ssub.s32 %s12, 1
        // Predicated region
        $region37: #{_lambda_.6} parent=35 // pred_check
          %p254 = pneg %p115
        $region38: #{_lambda_.6} parent=35 // pred_check_branch
          %256 = sbr.rel (%p254) target = $region40
        $region39: #{_lambda_.6} parent=35 // pred_region
          %257 = dma.done [#allocation5], 5632
        $region40: #{_lambda_.6} parent=35 // pred_fallthru
          _
        // Predicated region
        $region41: #{_lambda_.6} parent=35 // pred_check
          %p258 = pneg %p141
        $region42: #{_lambda_.6} parent=35 // pred_check_branch
          %260 = sbr.rel (%p258) target = $region44
        $region43: #{_lambda_.6} parent=35 // pred_region
          %261 = dma.done [#allocation7], 16
        $region44: #{_lambda_.6} parent=35 // pred_fallthru
          _
        %s262 = smul.u32 2, %s24
        %p263 = scmp.lt.s32.totalorder %s23, 1
        %s264 = scalar_select %p263, %s23, 1
        %p265 = scmp.lt.s32.totalorder %s262, 3
        %s266 = scalar_select %p265, %s262, 3
        %s267 = smul.addr %s264, 4
        %s268 = sadd.s32 %s266, %s267
        %s269 = smul.addr %s268, 4
        %s270 = scalar_lea.vmem %s0, %s269
        %p271 = pneg %p59
        %p272 = pneg %p56
        %s273 = sadd.s32 %s24, 1
        %s274 = smul.u32 2, %s273
        %p275 = scmp.lt.s32.totalorder %s23, 1
        %s276 = scalar_select %p275, %s23, 1
        %p277 = scmp.lt.s32.totalorder %s274, 3
        %s278 = scalar_select %p277, %s274, 3
        %s279 = smul.addr %s276, 4
        %s280 = sadd.s32 %s278, %s279
        %s281 = smul.addr %s280, 4
        %s282 = scalar_lea.vmem %s1, %s281
        %p283 = pneg %p89
        %p284 = pneg %p86
        %p285 = pneg %p115
        %p286 = pneg %p112
        %p287 = pneg %p141
        %p288 = pneg %p138
        %p289 = pneg %p171
        %p290 = pneg %p168
        %s291 = smul.u32 2, %s24
        %p292 = scmp.lt.s32.totalorder %s23, 1
        %s293 = scalar_select %p292, %s23, 1
        %p294 = scmp.lt.s32.totalorder %s291, 1
        %s295 = scalar_select %p294, %s291, 1
        %p296 = scmp.lt.s32.totalorder %s22, 0
        %s297 = scalar_select %p296, %s22, 0
        %s298 = sadd.s32 %s297, %s295
        %s299 = smul.addr %s293, 2
        %s300 = sadd.s32 %s298, %s299
        %s301 = smul.addr %s300, 4
        %s302 = scalar_lea.vmem %s4, %s301
        %s303 = smul.u32 2, %s24
        %p304 = scmp.lt.s32.totalorder %s23, 1
        %s305 = scalar_select %p304, %s23, 1
        %p306 = scmp.lt.s32.totalorder %s303, 3
        %s307 = scalar_select %p306, %s303, 3
        %s308 = smul.addr %s305, 4
        %s309 = sadd.s32 %s307, %s308
        %s310 = smul.addr %s309, 4
        %s311 = scalar_lea.vmem %s0, %s310
        %s312 = smul.u32 2, %s24
        %s313 = sadd.s32 %s24, 1
        %s314 = smul.u32 2, %s313
        %p315 = scmp.lt.s32.totalorder %s23, 1
        %s316 = scalar_select %p315, %s23, 1
        %p317 = scmp.lt.s32.totalorder %s314, 3
        %s318 = scalar_select %p317, %s314, 3
        %s319 = smul.addr %s316, 4
        %s320 = sadd.s32 %s318, %s319
        %s321 = smul.addr %s320, 4
        %s322 = scalar_lea.vmem %s1, %s321
        %s323 = sadd.s32 %s24, 1
        %s324 = smul.u32 2, %s323
        %s325 = smul.u32 2, %s24
        %p326 = scmp.lt.s32.totalorder %s23, 1
        %s327 = scalar_select %p326, %s23, 1
        %p328 = scmp.lt.s32.totalorder %s325, 1
        %s329 = scalar_select %p328, %s325, 1
        %p330 = scmp.lt.s32.totalorder %s22, 0
        %s331 = scalar_select %p330, %s22, 0
        %s332 = sadd.s32 %s331, %s329
        %s333 = smul.addr %s327, 2
        %s334 = sadd.s32 %s332, %s333
        %s335 = smul.addr %s334, 4
        %s336 = scalar_lea.vmem %s4, %s335
        %s337 = smul.u32 2, %s24
        %v339 = vld [vmem:[%s311] sm:$0xf]
        %v340 = vld [vmem:[%s311 + $0x4] sm:$0xf]
        %v343 = vunpack.c.l.b16 %v339
        %v344 = vunpack.c.l.b16 %v340
        %v345 = vpack.c.b16 %v344, %v343
        %vm347 = vcmask 523264
        %348 = vst.msk [vmem:[#allocation2] sm:$0xff] %vm347, %v345
        %v349 = vld [vmem:[%s322] sm:$0xf]
        %v350 = vld [vmem:[%s322 + $0x4] sm:$0xf]
        %v353 = vunpack.c.l.b16 %v349
        %v354 = vunpack.c.l.b16 %v350
        %v355 = vpack.c.b16 %v354, %v353
        %357 = vst.msk [vmem:[#allocation2 + $0x8] sm:$0xff] %vm347, %v355
        %v358 = vld [vmem:[#allocation2] sm:$0xff]
        %v359 = vld [vmem:[#allocation4] sm:$0xf]
        %v360 = vld [vmem:[#allocation4 + $0x4] sm:$0xf]
        %v361 = vld [vmem:[#allocation4 + $0x8] sm:$0xf]
        %v362 = vld [vmem:[#allocation4 + $0xc] sm:$0xf]
        %v363 = vld [vmem:[#allocation4 + $0x10] sm:$0xf]
        %v364 = vld [vmem:[#allocation4 + $0x14] sm:$0xf]
        %v365 = vld [vmem:[#allocation4 + $0x18] sm:$0xf]
        %v366 = vld [vmem:[#allocation4 + $0x1c] sm:$0xf]
        %v375 = vunpack.c.l.b16 %v359
        %v376 = vunpack.c.l.b16 %v360
        %v377 = vunpack.c.l.b16 %v361
        %v378 = vunpack.c.l.b16 %v362
        %v379 = vunpack.c.l.b16 %v363
        %v380 = vunpack.c.l.b16 %v364
        %v381 = vunpack.c.l.b16 %v365
        %v382 = vunpack.c.l.b16 %v366
        %v383 = vpack.c.b16 %v376, %v375
        %v384 = vpack.c.b16 %v378, %v377
        %v385 = vpack.c.b16 %v380, %v379
        %v386 = vpack.c.b16 %v382, %v381
        %v392 = vsel %vm347, %v358, 0
        %394 = vmatprep.subr.bf16.mxu0 0
        %395 = vmatpush1.bf16.msra.mxu0 %v383
        %396 = vmatprep.subr.bf16.mxu0 0
        %397 = vmatpush1.bf16.msra.mxu0 %v384
        %398 = vmatprep.subr.bf16.mxu0 0
        %399 = vmatpush1.bf16.msra.mxu0 %v385
        %400 = vmatprep.subr.bf16.mxu0 0
        %401 = vmatpush1.bf16.msra.mxu0 %v386
        %402 = vmatprep.subr.bf16.mxu0 0
        %403 = vmatpush1.bf16.msra.mxu0 0
        %404 = vmatprep.subr.bf16.mxu0 0
        %405 = vmatpush1.bf16.msra.mxu0 0
        %406 = vmatprep.subr.bf16.mxu0 0
        %407 = vmatpush1.bf16.msra.mxu0 0
        %408 = vmatprep.subr.bf16.mxu0 0
        %409 = vmatpush1.bf16.msra.mxu0 0
        %410 = vmatprep.subr.bf16.mxu0 0
        %411 = vmatpush1.bf16.msra.mxu0 0
        %412 = vmatprep.subr.bf16.mxu0 0
        %413 = vmatpush1.bf16.msra.mxu0 0
        %414 = vmatprep.subr.bf16.mxu0 0
        %415 = vmatpush1.bf16.msra.mxu0 0
        %416 = vmatprep.subr.bf16.mxu0 0
        %417 = vmatpush1.bf16.msra.mxu0 0
        %418 = vmatprep.subr.bf16.mxu0 0
        %419 = vmatpush1.bf16.msra.mxu0 0
        %420 = vmatprep.subr.bf16.mxu0 0
        %421 = vmatpush1.bf16.msra.mxu0 0
        %422 = vmatprep.subr.bf16.mxu0 0
        %423 = vmatpush1.bf16.msra.mxu0 0
        %424 = vmatprep.subr.bf16.mxu0 0
        %425 = vmatpush1.bf16.msra.mxu0 0
        %426 = vmatprep.mubr.bf16.mxu0 0
        %427 = vmatmul.mubr.bf16.gmra.mrb[0].mxu0 %v392
        %v428 = vpop.f32.mrb[0].mxu0
        %v429 = vadd.f32 0.0, %v428
        %v430 = vpop.f32.mrb[0].mxu0
        %v431 = vpop.f32.mrb[0].mxu0
        %v432 = vadd.f32 0.0, %v431
        %v433 = vpop.f32.mrb[0].mxu0
        %434 = vdwg.mxu0
        %435 = vst.msk [vmem:[#allocation3] sm:$0xff] %vm347, %v429
        %436 = vst.msk [vmem:[#allocation3 + $0x8] sm:$0xff] %vm347, %v432
        %v437 = vld [vmem:[#allocation2] sm:$0xff]
        %v438 = vld [vmem:[#allocation2 + $0x8] sm:$0x1]
        %s439 = scalar_lea.vmem [#allocation4], 32
        %v440 = vld [vmem:[%s439] sm:$0xf]
        %v441 = vld [vmem:[%s439 + $0x4] sm:$0xf]
        %v442 = vld [vmem:[%s439 + $0x8] sm:$0xf]
        %v443 = vld [vmem:[%s439 + $0xc] sm:$0xf]
        %v444 = vld [vmem:[%s439 + $0x10] sm:$0xf]
        %v445 = vld [vmem:[%s439 + $0x14] sm:$0xf]
        %v446 = vld [vmem:[%s439 + $0x18] sm:$0xf]
        %v447 = vld [vmem:[%s439 + $0x1c] sm:$0xf]
        %vm448 = vsmask.f32 7424
        %v450 = vshrl.u32 %v437, 16
        %v452 = vshll.u32 %v437, 16
        %v454 = vrot.slane %v452, 1
        %v455 = vor.u32 %v450, %v454
        %v457 = vshll.u32 %v438, 16
        %v459 = vrot.slane %v457, 1
        %v460 = vsel %vm448, %v455, %v459
        %v469 = vunpack.c.l.b16 %v440
        %v470 = vunpack.c.l.b16 %v441
        %v471 = vunpack.c.l.b16 %v442
        %v472 = vunpack.c.l.b16 %v443
        %v473 = vunpack.c.l.b16 %v444
        %v474 = vunpack.c.l.b16 %v445
        %v475 = vunpack.c.l.b16 %v446
        %v476 = vunpack.c.l.b16 %v447
        %v477 = vpack.c.b16 %v470, %v469
        %v478 = vpack.c.b16 %v472, %v471
        %v479 = vpack.c.b16 %v474, %v473
        %v480 = vpack.c.b16 %v476, %v475
        %v486 = vsel %vm347, %v460, 0
        %488 = vmatprep.subr.bf16.mxu0 0
        %489 = vmatpush1.bf16.msra.mxu0 %v477
        %490 = vmatprep.subr.bf16.mxu0 0
        %491 = vmatpush1.bf16.msra.mxu0 %v478
        %492 = vmatprep.subr.bf16.mxu0 0
        %493 = vmatpush1.bf16.msra.mxu0 %v479
        %494 = vmatprep.subr.bf16.mxu0 0
        %495 = vmatpush1.bf16.msra.mxu0 %v480
        %496 = vmatprep.subr.bf16.mxu0 0
        %497 = vmatpush1.bf16.msra.mxu0 0
        %498 = vmatprep.subr.bf16.mxu0 0
        %499 = vmatpush1.bf16.msra.mxu0 0
        %500 = vmatprep.subr.bf16.mxu0 0
        %501 = vmatpush1.bf16.msra.mxu0 0
        %502 = vmatprep.subr.bf16.mxu0 0
        %503 = vmatpush1.bf16.msra.mxu0 0
        %504 = vmatprep.subr.bf16.mxu0 0
        %505 = vmatpush1.bf16.msra.mxu0 0
        %506 = vmatprep.subr.bf16.mxu0 0
        %507 = vmatpush1.bf16.msra.mxu0 0
        %508 = vmatprep.subr.bf16.mxu0 0
        %509 = vmatpush1.bf16.msra.mxu0 0
        %510 = vmatprep.subr.bf16.mxu0 0
        %511 = vmatpush1.bf16.msra.mxu0 0
        %512 = vmatprep.subr.bf16.mxu0 0
        %513 = vmatpush1.bf16.msra.mxu0 0
        %514 = vmatprep.subr.bf16.mxu0 0
        %515 = vmatpush1.bf16.msra.mxu0 0
        %516 = vmatprep.subr.bf16.mxu0 0
        %517 = vmatpush1.bf16.msra.mxu0 0
        %518 = vmatprep.subr.bf16.mxu0 0
        %519 = vmatpush1.bf16.msra.mxu0 0
        %520 = vmatprep.mubr.bf16.mxu0 0
        %521 = vmatmul.mubr.bf16.gmra.mrb[0].mxu0 %v486
        %v522 = vpop.f32.mrb[0].mxu0
        %v523 = vadd.f32 0.0, %v522
        %v524 = vpop.f32.mrb[0].mxu0
        %v525 = vpop.f32.mrb[0].mxu0
        %v526 = vadd.f32 0.0, %v525
        %v527 = vpop.f32.mrb[0].mxu0
        %528 = vdwg.mxu0
        %v529 = vld [vmem:[#allocation3] sm:$0xff]
        %v530 = vld [vmem:[#allocation3 + $0x8] sm:$0xff]
        %v531 = vadd.f32 %v529, %v523
        %v532 = vadd.f32 %v530, %v526
        %533 = vst.msk [vmem:[#allocation3] sm:$0xff] %vm347, %v531
        %534 = vst.msk [vmem:[#allocation3 + $0x8] sm:$0xff] %vm347, %v532
        %v535 = vld [vmem:[#allocation2] sm:$0xfe]
        %v536 = vld [vmem:[#allocation2 + $0x8] sm:$0x1]
        %s537 = scalar_lea.vmem [#allocation4], 64
        %v538 = vld [vmem:[%s537] sm:$0xf]
        %v539 = vld [vmem:[%s537 + $0x4] sm:$0xf]
        %v540 = vld [vmem:[%s537 + $0x8] sm:$0xf]
        %v541 = vld [vmem:[%s537 + $0xc] sm:$0xf]
        %v542 = vld [vmem:[%s537 + $0x10] sm:$0xf]
        %v543 = vld [vmem:[%s537 + $0x14] sm:$0xf]
        %v544 = vld [vmem:[%s537 + $0x18] sm:$0xf]
        %v545 = vld [vmem:[%s537 + $0x1c] sm:$0xf]
        %vm548 = vcmask 1046528
        %v549 = vrot.slane %v535, 1
        %v550 = vrot.slane %v536, 1
        %v551 = vsel %vm548, %v549, %v550
        %v560 = vunpack.c.l.b16 %v538
        %v561 = vunpack.c.l.b16 %v539
        %v562 = vunpack.c.l.b16 %v540
        %v563 = vunpack.c.l.b16 %v541
        %v564 = vunpack.c.l.b16 %v542
        %v565 = vunpack.c.l.b16 %v543
        %v566 = vunpack.c.l.b16 %v544
        %v567 = vunpack.c.l.b16 %v545
        %v568 = vpack.c.b16 %v561, %v560
        %v569 = vpack.c.b16 %v563, %v562
        %v570 = vpack.c.b16 %v565, %v564
        %v571 = vpack.c.b16 %v567, %v566
        %v577 = vsel %vm347, %v551, 0
        %579 = vmatprep.subr.bf16.mxu0 0
        %580 = vmatpush1.bf16.msra.mxu0 %v568
        %581 = vmatprep.subr.bf16.mxu0 0
        %582 = vmatpush1.bf16.msra.mxu0 %v569
        %583 = vmatprep.subr.bf16.mxu0 0
        %584 = vmatpush1.bf16.msra.mxu0 %v570
        %585 = vmatprep.subr.bf16.mxu0 0
        %586 = vmatpush1.bf16.msra.mxu0 %v571
        %587 = vmatprep.subr.bf16.mxu0 0
        %588 = vmatpush1.bf16.msra.mxu0 0
        %589 = vmatprep.subr.bf16.mxu0 0
        %590 = vmatpush1.bf16.msra.mxu0 0
        %591 = vmatprep.subr.bf16.mxu0 0
        %592 = vmatpush1.bf16.msra.mxu0 0
        %593 = vmatprep.subr.bf16.mxu0 0
        %594 = vmatpush1.bf16.msra.mxu0 0
        %595 = vmatprep.subr.bf16.mxu0 0
        %596 = vmatpush1.bf16.msra.mxu0 0
        %597 = vmatprep.subr.bf16.mxu0 0
        %598 = vmatpush1.bf16.msra.mxu0 0
        %599 = vmatprep.subr.bf16.mxu0 0
        %600 = vmatpush1.bf16.msra.mxu0 0
        %601 = vmatprep.subr.bf16.mxu0 0
        %602 = vmatpush1.bf16.msra.mxu0 0
        %603 = vmatprep.subr.bf16.mxu0 0
        %604 = vmatpush1.bf16.msra.mxu0 0
        %605 = vmatprep.subr.bf16.mxu0 0
        %606 = vmatpush1.bf16.msra.mxu0 0
        %607 = vmatprep.subr.bf16.mxu0 0
        %608 = vmatpush1.bf16.msra.mxu0 0
        %609 = vmatprep.subr.bf16.mxu0 0
        %610 = vmatpush1.bf16.msra.mxu0 0
        %611 = vmatprep.mubr.bf16.mxu0 0
        %612 = vmatmul.mubr.bf16.gmra.mrb[0].mxu0 %v577
        %v613 = vpop.f32.mrb[0].mxu0
        %v614 = vadd.f32 0.0, %v613
        %v615 = vpop.f32.mrb[0].mxu0
        %v616 = vpop.f32.mrb[0].mxu0
        %v617 = vadd.f32 0.0, %v616
        %v618 = vpop.f32.mrb[0].mxu0
        %619 = vdwg.mxu0
        %v620 = vld [vmem:[#allocation3] sm:$0xff]
        %v621 = vld [vmem:[#allocation3 + $0x8] sm:$0xff]
        %v622 = vadd.f32 %v620, %v614
        %v623 = vadd.f32 %v621, %v617
        %624 = vst.msk [vmem:[#allocation3] sm:$0xff] %vm347, %v622
        %625 = vst.msk [vmem:[#allocation3 + $0x8] sm:$0xff] %vm347, %v623
        %v626 = vld [vmem:[#allocation2] sm:$0xfe]
        %v627 = vld [vmem:[#allocation2 + $0x8] sm:$0x3]
        %s628 = scalar_lea.vmem [#allocation4], 96
        %v629 = vld [vmem:[%s628] sm:$0xf]
        %v630 = vld [vmem:[%s628 + $0x4] sm:$0xf]
        %v631 = vld [vmem:[%s628 + $0x8] sm:$0xf]
        %v632 = vld [vmem:[%s628 + $0xc] sm:$0xf]
        %v633 = vld [vmem:[%s628 + $0x10] sm:$0xf]
        %v634 = vld [vmem:[%s628 + $0x14] sm:$0xf]
        %v635 = vld [vmem:[%s628 + $0x18] sm:$0xf]
        %v636 = vld [vmem:[%s628 + $0x1c] sm:$0xf]
        %vm637 = vsmask.f32 6400
        %v639 = vshrl.u32 %v626, 16
        %v641 = vrot.slane %v639, 1
        %v642 = vshll.u32 %v626, 16
        %v644 = vrot.slane %v642, 2
        %v645 = vor.u32 %v641, %v644
        %v647 = vshrl.u32 %v627, 16
        %v649 = vrot.slane %v647, 1
        %v650 = vshll.u32 %v627, 16
        %v652 = vrot.slane %v650, 2
        %v653 = vor.u32 %v649, %v652
        %v654 = vsel %vm637, %v645, %v653
        %v663 = vunpack.c.l.b16 %v629
        %v664 = vunpack.c.l.b16 %v630
        %v665 = vunpack.c.l.b16 %v631
        %v666 = vunpack.c.l.b16 %v632
        %v667 = vunpack.c.l.b16 %v633
        %v668 = vunpack.c.l.b16 %v634
        %v669 = vunpack.c.l.b16 %v635
        %v670 = vunpack.c.l.b16 %v636
        %v671 = vpack.c.b16 %v664, %v663
        %v672 = vpack.c.b16 %v666, %v665
        %v673 = vpack.c.b16 %v668, %v667
        %v674 = vpack.c.b16 %v670, %v669
        %v680 = vsel %vm347, %v654, 0
        %682 = vmatprep.subr.bf16.mxu0 0
        %683 = vmatpush1.bf16.msra.mxu0 %v671
        %684 = vmatprep.subr.bf16.mxu0 0
        %685 = vmatpush1.bf16.msra.mxu0 %v672
        %686 = vmatprep.subr.bf16.mxu0 0
        %687 = vmatpush1.bf16.msra.mxu0 %v673
        %688 = vmatprep.subr.bf16.mxu0 0
        %689 = vmatpush1.bf16.msra.mxu0 %v674
        %690 = vmatprep.subr.bf16.mxu0 0
        %691 = vmatpush1.bf16.msra.mxu0 0
        %692 = vmatprep.subr.bf16.mxu0 0
        %693 = vmatpush1.bf16.msra.mxu0 0
        %694 = vmatprep.subr.bf16.mxu0 0
        %695 = vmatpush1.bf16.msra.mxu0 0
        %696 = vmatprep.subr.bf16.mxu0 0
        %697 = vmatpush1.bf16.msra.mxu0 0
        %698 = vmatprep.subr.bf16.mxu0 0
        %699 = vmatpush1.bf16.msra.mxu0 0
        %700 = vmatprep.subr.bf16.mxu0 0
        %701 = vmatpush1.bf16.msra.mxu0 0
        %702 = vmatprep.subr.bf16.mxu0 0
        %703 = vmatpush1.bf16.msra.mxu0 0
        %704 = vmatprep.subr.bf16.mxu0 0
        %705 = vmatpush1.bf16.msra.mxu0 0
        %706 = vmatprep.subr.bf16.mxu0 0
        %707 = vmatpush1.bf16.msra.mxu0 0
        %708 = vmatprep.subr.bf16.mxu0 0
        %709 = vmatpush1.bf16.msra.mxu0 0
        %710 = vmatprep.subr.bf16.mxu0 0
        %711 = vmatpush1.bf16.msra.mxu0 0
        %712 = vmatprep.subr.bf16.mxu0 0
        %713 = vmatpush1.bf16.msra.mxu0 0
        %714 = vmatprep.mubr.bf16.mxu0 0
        %715 = vmatmul.mubr.bf16.gmra.mrb[0].mxu0 %v680
        %v716 = vpop.f32.mrb[0].mxu0
        %v717 = vadd.f32 0.0, %v716
        %v718 = vpop.f32.mrb[0].mxu0
        %v719 = vpop.f32.mrb[0].mxu0
        %v720 = vadd.f32 0.0, %v719
        %v721 = vpop.f32.mrb[0].mxu0
        %722 = vdwg.mxu0
        %v723 = vld [vmem:[#allocation3] sm:$0xff]
        %v724 = vld [vmem:[#allocation3 + $0x8] sm:$0xff]
        %v725 = vadd.f32 %v723, %v717
        %v726 = vadd.f32 %v724, %v720
        %727 = vst.msk [vmem:[#allocation3] sm:$0xff] %vm347, %v725
        %728 = vst.msk [vmem:[#allocation3 + $0x8] sm:$0xff] %vm347, %v726
        %v729 = vld [vmem:[#allocation2] sm:$0xfc]
        %v730 = vld [vmem:[#allocation2 + $0x8] sm:$0x3]
        %s731 = scalar_lea.vmem [#allocation4], 128
        %v732 = vld [vmem:[%s731] sm:$0xf]
        %v733 = vld [vmem:[%s731 + $0x4] sm:$0xf]
        %v734 = vld [vmem:[%s731 + $0x8] sm:$0xf]
        %v735 = vld [vmem:[%s731 + $0xc] sm:$0xf]
        %v736 = vld [vmem:[%s731 + $0x10] sm:$0xf]
        %v737 = vld [vmem:[%s731 + $0x14] sm:$0xf]
        %v738 = vld [vmem:[%s731 + $0x18] sm:$0xf]
        %v739 = vld [vmem:[%s731 + $0x1c] sm:$0xf]
        %vm742 = vcmask 1045504
        %v743 = vrot.slane %v729, 2
        %v744 = vrot.slane %v730, 2
        %v745 = vsel %vm742, %v743, %v744
        %v754 = vunpack.c.l.b16 %v732
        %v755 = vunpack.c.l.b16 %v733
        %v756 = vunpack.c.l.b16 %v734
        %v757 = vunpack.c.l.b16 %v735
        %v758 = vunpack.c.l.b16 %v736
        %v759 = vunpack.c.l.b16 %v737
        %v760 = vunpack.c.l.b16 %v738
        %v761 = vunpack.c.l.b16 %v739
        %v762 = vpack.c.b16 %v755, %v754
        %v763 = vpack.c.b16 %v757, %v756
        %v764 = vpack.c.b16 %v759, %v758
        %v765 = vpack.c.b16 %v761, %v760
        %v771 = vsel %vm347, %v745, 0
        %773 = vmatprep.subr.bf16.mxu0 0
        %774 = vmatpush1.bf16.msra.mxu0 %v762
        %775 = vmatprep.subr.bf16.mxu0 0
        %776 = vmatpush1.bf16.msra.mxu0 %v763
        %777 = vmatprep.subr.bf16.mxu0 0
        %778 = vmatpush1.bf16.msra.mxu0 %v764
        %779 = vmatprep.subr.bf16.mxu0 0
        %780 = vmatpush1.bf16.msra.mxu0 %v765
        %781 = vmatprep.subr.bf16.mxu0 0
        %782 = vmatpush1.bf16.msra.mxu0 0
        %783 = vmatprep.subr.bf16.mxu0 0
        %784 = vmatpush1.bf16.msra.mxu0 0
        %785 = vmatprep.subr.bf16.mxu0 0
        %786 = vmatpush1.bf16.msra.mxu0 0
        %787 = vmatprep.subr.bf16.mxu0 0
        %788 = vmatpush1.bf16.msra.mxu0 0
        %789 = vmatprep.subr.bf16.mxu0 0
        %790 = vmatpush1.bf16.msra.mxu0 0
        %791 = vmatprep.subr.bf16.mxu0 0
        %792 = vmatpush1.bf16.msra.mxu0 0
        %793 = vmatprep.subr.bf16.mxu0 0
        %794 = vmatpush1.bf16.msra.mxu0 0
        %795 = vmatprep.subr.bf16.mxu0 0
        %796 = vmatpush1.bf16.msra.mxu0 0
        %797 = vmatprep.subr.bf16.mxu0 0
        %798 = vmatpush1.bf16.msra.mxu0 0
        %799 = vmatprep.subr.bf16.mxu0 0
        %800 = vmatpush1.bf16.msra.mxu0 0
        %801 = vmatprep.subr.bf16.mxu0 0
        %802 = vmatpush1.bf16.msra.mxu0 0
        %803 = vmatprep.subr.bf16.mxu0 0
        %804 = vmatpush1.bf16.msra.mxu0 0
        %805 = vmatprep.mubr.bf16.mxu0 0
        %806 = vmatmul.mubr.bf16.gmra.mrb[0].mxu0 %v771
        %v807 = vpop.f32.mrb[0].mxu0
        %v808 = vadd.f32 0.0, %v807
        %v809 = vpop.f32.mrb[0].mxu0
        %v810 = vpop.f32.mrb[0].mxu0
        %v811 = vadd.f32 0.0, %v810
        %v812 = vpop.f32.mrb[0].mxu0
        %813 = vdwg.mxu0
        %v814 = vld [vmem:[#allocation3] sm:$0xff]
        %v815 = vld [vmem:[#allocation3 + $0x8] sm:$0xff]
        %v816 = vadd.f32 %v814, %v808
        %v817 = vadd.f32 %v815, %v811
        %818 = vst.msk [vmem:[#allocation3] sm:$0xff] %vm347, %v816
        %819 = vst.msk [vmem:[#allocation3 + $0x8] sm:$0xff] %vm347, %v817
        %v820 = vld [vmem:[#allocation2] sm:$0xfc]
        %v821 = vld [vmem:[#allocation2 + $0x8] sm:$0x7]
        %s822 = scalar_lea.vmem [#allocation4], 160
        %v823 = vld [vmem:[%s822] sm:$0xf]
        %v824 = vld [vmem:[%s822 + $0x4] sm:$0xf]
        %v825 = vld [vmem:[%s822 + $0x8] sm:$0xf]
        %v826 = vld [vmem:[%s822 + $0xc] sm:$0xf]
        %v827 = vld [vmem:[%s822 + $0x10] sm:$0xf]
        %v828 = vld [vmem:[%s822 + $0x14] sm:$0xf]
        %v829 = vld [vmem:[%s822 + $0x18] sm:$0xf]
        %v830 = vld [vmem:[%s822 + $0x1c] sm:$0xf]
        %vm831 = vsmask.f32 5376
        %v833 = vshrl.u32 %v820, 16
        %v835 = vrot.slane %v833, 2
        %v836 = vshll.u32 %v820, 16
        %v838 = vrot.slane %v836, 3
        %v839 = vor.u32 %v835, %v838
        %v841 = vshrl.u32 %v821, 16
        %v843 = vrot.slane %v841, 2
        %v844 = vshll.u32 %v821, 16
        %v846 = vrot.slane %v844, 3
        %v847 = vor.u32 %v843, %v846
        %v848 = vsel %vm831, %v839, %v847
        %v857 = vunpack.c.l.b16 %v823
        %v858 = vunpack.c.l.b16 %v824
        %v859 = vunpack.c.l.b16 %v825
        %v860 = vunpack.c.l.b16 %v826
        %v861 = vunpack.c.l.b16 %v827
        %v862 = vunpack.c.l.b16 %v828
        %v863 = vunpack.c.l.b16 %v829
        %v864 = vunpack.c.l.b16 %v830
        %v865 = vpack.c.b16 %v858, %v857
        %v866 = vpack.c.b16 %v860, %v859
        %v867 = vpack.c.b16 %v862, %v861
        %v868 = vpack.c.b16 %v864, %v863
        %v874 = vsel %vm347, %v848, 0
        %876 = vmatprep.subr.bf16.mxu0 0
        %877 = vmatpush1.bf16.msra.mxu0 %v865
        %878 = vmatprep.subr.bf16.mxu0 0
        %879 = vmatpush1.bf16.msra.mxu0 %v866
        %880 = vmatprep.subr.bf16.mxu0 0
        %881 = vmatpush1.bf16.msra.mxu0 %v867
        %882 = vmatprep.subr.bf16.mxu0 0
        %883 = vmatpush1.bf16.msra.mxu0 %v868
        %884 = vmatprep.subr.bf16.mxu0 0
        %885 = vmatpush1.bf16.msra.mxu0 0
        %886 = vmatprep.subr.bf16.mxu0 0
        %887 = vmatpush1.bf16.msra.mxu0 0
        %888 = vmatprep.subr.bf16.mxu0 0
        %889 = vmatpush1.bf16.msra.mxu0 0
        %890 = vmatprep.subr.bf16.mxu0 0
        %891 = vmatpush1.bf16.msra.mxu0 0
        %892 = vmatprep.subr.bf16.mxu0 0
        %893 = vmatpush1.bf16.msra.mxu0 0
        %894 = vmatprep.subr.bf16.mxu0 0
        %895 = vmatpush1.bf16.msra.mxu0 0
        %896 = vmatprep.subr.bf16.mxu0 0
        %897 = vmatpush1.bf16.msra.mxu0 0
        %898 = vmatprep.subr.bf16.mxu0 0
        %899 = vmatpush1.bf16.msra.mxu0 0
        %900 = vmatprep.subr.bf16.mxu0 0
        %901 = vmatpush1.bf16.msra.mxu0 0
        %902 = vmatprep.subr.bf16.mxu0 0
        %903 = vmatpush1.bf16.msra.mxu0 0
        %904 = vmatprep.subr.bf16.mxu0 0
        %905 = vmatpush1.bf16.msra.mxu0 0
        %906 = vmatprep.subr.bf16.mxu0 0
        %907 = vmatpush1.bf16.msra.mxu0 0
        %908 = vmatprep.mubr.bf16.mxu0 0
        %909 = vmatmul.mubr.bf16.gmra.mrb[0].mxu0 %v874
        %v910 = vpop.f32.mrb[0].mxu0
        %v911 = vadd.f32 0.0, %v910
        %v912 = vpop.f32.mrb[0].mxu0
        %v913 = vpop.f32.mrb[0].mxu0
        %v914 = vadd.f32 0.0, %v913
        %v915 = vpop.f32.mrb[0].mxu0
        %916 = vdwg.mxu0
        %v917 = vld [vmem:[#allocation3] sm:$0xff]
        %v918 = vld [vmem:[#allocation3 + $0x8] sm:$0xff]
        %v919 = vadd.f32 %v917, %v911
        %v920 = vadd.f32 %v918, %v914
        %921 = vst.msk [vmem:[#allocation3] sm:$0xff] %vm347, %v919
        %922 = vst.msk [vmem:[#allocation3 + $0x8] sm:$0xff] %vm347, %v920
        %v923 = vld [vmem:[#allocation2] sm:$0xf8]
        %v924 = vld [vmem:[#allocation2 + $0x8] sm:$0x7]
        %s925 = scalar_lea.vmem [#allocation4], 192
        %v926 = vld [vmem:[%s925] sm:$0xf]
        %v927 = vld [vmem:[%s925 + $0x4] sm:$0xf]
        %v928 = vld [vmem:[%s925 + $0x8] sm:$0xf]
        %v929 = vld [vmem:[%s925 + $0xc] sm:$0xf]
        %v930 = vld [vmem:[%s925 + $0x10] sm:$0xf]
        %v931 = vld [vmem:[%s925 + $0x14] sm:$0xf]
        %v932 = vld [vmem:[%s925 + $0x18] sm:$0xf]
        %v933 = vld [vmem:[%s925 + $0x1c] sm:$0xf]
        %vm936 = vcmask 1044480
        %v937 = vrot.slane %v923, 3
        %v938 = vrot.slane %v924, 3
        %v939 = vsel %vm936, %v937, %v938
        %v948 = vunpack.c.l.b16 %v926
        %v949 = vunpack.c.l.b16 %v927
        %v950 = vunpack.c.l.b16 %v928
        %v951 = vunpack.c.l.b16 %v929
        %v952 = vunpack.c.l.b16 %v930
        %v953 = vunpack.c.l.b16 %v931
        %v954 = vunpack.c.l.b16 %v932
        %v955 = vunpack.c.l.b16 %v933
        %v956 = vpack.c.b16 %v949, %v948
        %v957 = vpack.c.b16 %v951, %v950
        %v958 = vpack.c.b16 %v953, %v952
        %v959 = vpack.c.b16 %v955, %v954
        %v965 = vsel %vm347, %v939, 0
        %967 = vmatprep.subr.bf16.mxu0 0
        %968 = vmatpush1.bf16.msra.mxu0 %v956
        %969 = vmatprep.subr.bf16.mxu0 0
        %970 = vmatpush1.bf16.msra.mxu0 %v957
        %971 = vmatprep.subr.bf16.mxu0 0
        %972 = vmatpush1.bf16.msra.mxu0 %v958
        %973 = vmatprep.subr.bf16.mxu0 0
        %974 = vmatpush1.bf16.msra.mxu0 %v959
        %975 = vmatprep.subr.bf16.mxu0 0
        %976 = vmatpush1.bf16.msra.mxu0 0
        %977 = vmatprep.subr.bf16.mxu0 0
        %978 = vmatpush1.bf16.msra.mxu0 0
        %979 = vmatprep.subr.bf16.mxu0 0
        %980 = vmatpush1.bf16.msra.mxu0 0
        %981 = vmatprep.subr.bf16.mxu0 0
        %982 = vmatpush1.bf16.msra.mxu0 0
        %983 = vmatprep.subr.bf16.mxu0 0
        %984 = vmatpush1.bf16.msra.mxu0 0
        %985 = vmatprep.subr.bf16.mxu0 0
        %986 = vmatpush1.bf16.msra.mxu0 0
        %987 = vmatprep.subr.bf16.mxu0 0
        %988 = vmatpush1.bf16.msra.mxu0 0
        %989 = vmatprep.subr.bf16.mxu0 0
        %990 = vmatpush1.bf16.msra.mxu0 0
        %991 = vmatprep.subr.bf16.mxu0 0
        %992 = vmatpush1.bf16.msra.mxu0 0
        %993 = vmatprep.subr.bf16.mxu0 0
        %994 = vmatpush1.bf16.msra.mxu0 0
        %995 = vmatprep.subr.bf16.mxu0 0
        %996 = vmatpush1.bf16.msra.mxu0 0
        %997 = vmatprep.subr.bf16.mxu0 0
        %998 = vmatpush1.bf16.msra.mxu0 0
        %999 = vmatprep.mubr.bf16.mxu0 0
        %1000 = vmatmul.mubr.bf16.gmra.mrb[0].mxu0 %v965
        %v1001 = vpop.f32.mrb[0].mxu0
        %v1002 = vadd.f32 0.0, %v1001
        %v1003 = vpop.f32.mrb[0].mxu0
        %v1004 = vpop.f32.mrb[0].mxu0
        %v1005 = vadd.f32 0.0, %v1004
        %v1006 = vpop.f32.mrb[0].mxu0
        %1007 = vdwg.mxu0
        %v1008 = vld [vmem:[#allocation3] sm:$0xff]
        %v1009 = vld [vmem:[#allocation3 + $0x8] sm:$0xff]
        %v1010 = vadd.f32 %v1008, %v1002
        %v1011 = vadd.f32 %v1009, %v1005
        %1012 = vst.msk [vmem:[#allocation3] sm:$0xff] %vm347, %v1010
        %1013 = vst.msk [vmem:[#allocation3 + $0x8] sm:$0xff] %vm347, %v1011
        %v1014 = vld [vmem:[#allocation2] sm:$0xf8]
        %v1015 = vld [vmem:[#allocation2 + $0x8] sm:$0xf]
        %s1016 = scalar_lea.vmem [#allocation4], 224
        %v1017 = vld [vmem:[%s1016] sm:$0xf]
        %v1018 = vld [vmem:[%s1016 + $0x4] sm:$0xf]
        %v1019 = vld [vmem:[%s1016 + $0x8] sm:$0xf]
        %v1020 = vld [vmem:[%s1016 + $0xc] sm:$0xf]
        %v1021 = vld [vmem:[%s1016 + $0x10] sm:$0xf]
        %v1022 = vld [vmem:[%s1016 + $0x14] sm:$0xf]
        %v1023 = vld [vmem:[%s1016 + $0x18] sm:$0xf]
        %v1024 = vld [vmem:[%s1016 + $0x1c] sm:$0xf]
        %vm1025 = vsmask.f32 4352
        %v1027 = vshrl.u32 %v1014, 16
        %v1029 = vrot.slane %v1027, 3
        %v1030 = vshll.u32 %v1014, 16
        %v1032 = vrot.slane %v1030, 4
        %v1033 = vor.u32 %v1029, %v1032
        %v1035 = vshrl.u32 %v1015, 16
        %v1037 = vrot.slane %v1035, 3
        %v1038 = vshll.u32 %v1015, 16
        %v1040 = vrot.slane %v1038, 4
        %v1041 = vor.u32 %v1037, %v1040
        %v1042 = vsel %vm1025, %v1033, %v1041
        %v1051 = vunpack.c.l.b16 %v1017
        %v1052 = vunpack.c.l.b16 %v1018
        %v1053 = vunpack.c.l.b16 %v1019
        %v1054 = vunpack.c.l.b16 %v1020
        %v1055 = vunpack.c.l.b16 %v1021
        %v1056 = vunpack.c.l.b16 %v1022
        %v1057 = vunpack.c.l.b16 %v1023
        %v1058 = vunpack.c.l.b16 %v1024
        %v1059 = vpack.c.b16 %v1052, %v1051
        %v1060 = vpack.c.b16 %v1054, %v1053
        %v1061 = vpack.c.b16 %v1056, %v1055
        %v1062 = vpack.c.b16 %v1058, %v1057
        %v1068 = vsel %vm347, %v1042, 0
        %1070 = vmatprep.subr.bf16.mxu0 0
        %1071 = vmatpush1.bf16.msra.mxu0 %v1059
        %1072 = vmatprep.subr.bf16.mxu0 0
        %1073 = vmatpush1.bf16.msra.mxu0 %v1060
        %1074 = vmatprep.subr.bf16.mxu0 0
        %1075 = vmatpush1.bf16.msra.mxu0 %v1061
        %1076 = vmatprep.subr.bf16.mxu0 0
        %1077 = vmatpush1.bf16.msra.mxu0 %v1062
        %1078 = vmatprep.subr.bf16.mxu0 0
        %1079 = vmatpush1.bf16.msra.mxu0 0
        %1080 = vmatprep.subr.bf16.mxu0 0
        %1081 = vmatpush1.bf16.msra.mxu0 0
        %1082 = vmatprep.subr.bf16.mxu0 0
        %1083 = vmatpush1.bf16.msra.mxu0 0
        %1084 = vmatprep.subr.bf16.mxu0 0
        %1085 = vmatpush1.bf16.msra.mxu0 0
        %1086 = vmatprep.subr.bf16.mxu0 0
        %1087 = vmatpush1.bf16.msra.mxu0 0
        %1088 = vmatprep.subr.bf16.mxu0 0
        %1089 = vmatpush1.bf16.msra.mxu0 0
        %1090 = vmatprep.subr.bf16.mxu0 0
        %1091 = vmatpush1.bf16.msra.mxu0 0
        %1092 = vmatprep.subr.bf16.mxu0 0
        %1093 = vmatpush1.bf16.msra.mxu0 0
        %1094 = vmatprep.subr.bf16.mxu0 0
        %1095 = vmatpush1.bf16.msra.mxu0 0
        %1096 = vmatprep.subr.bf16.mxu0 0
        %1097 = vmatpush1.bf16.msra.mxu0 0
        %1098 = vmatprep.subr.bf16.mxu0 0
        %1099 = vmatpush1.bf16.msra.mxu0 0
        %1100 = vmatprep.subr.bf16.mxu0 0
        %1101 = vmatpush1.bf16.msra.mxu0 0
        %1102 = vmatprep.mubr.bf16.mxu0 0
        %1103 = vmatmul.mubr.bf16.gmra.mrb[0].mxu0 %v1068
        %v1104 = vpop.f32.mrb[0].mxu0
        %v1105 = vadd.f32 0.0, %v1104
        %v1106 = vpop.f32.mrb[0].mxu0
        %v1107 = vpop.f32.mrb[0].mxu0
        %v1108 = vadd.f32 0.0, %v1107
        %v1109 = vpop.f32.mrb[0].mxu0
        %1110 = vdwg.mxu0
        %v1111 = vld [vmem:[#allocation3] sm:$0xff]
        %v1112 = vld [vmem:[#allocation3 + $0x8] sm:$0xff]
        %v1113 = vadd.f32 %v1111, %v1105
        %v1114 = vadd.f32 %v1112, %v1108
        %1115 = vst.msk [vmem:[#allocation3] sm:$0xff] %vm347, %v1113
        %1116 = vst.msk [vmem:[#allocation3 + $0x8] sm:$0xff] %vm347, %v1114
        %v1117 = vld [vmem:[#allocation2] sm:$0xf0]
        %v1118 = vld [vmem:[#allocation2 + $0x8] sm:$0xf]
        %s1119 = scalar_lea.vmem [#allocation4], 256
        %v1120 = vld [vmem:[%s1119] sm:$0xf]
        %v1121 = vld [vmem:[%s1119 + $0x4] sm:$0xf]
        %v1122 = vld [vmem:[%s1119 + $0x8] sm:$0xf]
        %v1123 = vld [vmem:[%s1119 + $0xc] sm:$0xf]
        %v1124 = vld [vmem:[%s1119 + $0x10] sm:$0xf]
        %v1125 = vld [vmem:[%s1119 + $0x14] sm:$0xf]
        %v1126 = vld [vmem:[%s1119 + $0x18] sm:$0xf]
        %v1127 = vld [vmem:[%s1119 + $0x1c] sm:$0xf]
        %vm1130 = vcmask 1043456
        %v1131 = vrot.slane %v1117, 4
        %v1132 = vrot.slane %v1118, 4
        %v1133 = vsel %vm1130, %v1131, %v1132
        %v1142 = vunpack.c.l.b16 %v1120
        %v1143 = vunpack.c.l.b16 %v1121
        %v1144 = vunpack.c.l.b16 %v1122
        %v1145 = vunpack.c.l.b16 %v1123
        %v1146 = vunpack.c.l.b16 %v1124
        %v1147 = vunpack.c.l.b16 %v1125
        %v1148 = vunpack.c.l.b16 %v1126
        %v1149 = vunpack.c.l.b16 %v1127
        %v1150 = vpack.c.b16 %v1143, %v1142
        %v1151 = vpack.c.b16 %v1145, %v1144
        %v1152 = vpack.c.b16 %v1147, %v1146
        %v1153 = vpack.c.b16 %v1149, %v1148
        %v1159 = vsel %vm347, %v1133, 0
        %1161 = vmatprep.subr.bf16.mxu0 0
        %1162 = vmatpush1.bf16.msra.mxu0 %v1150
        %1163 = vmatprep.subr.bf16.mxu0 0
        %1164 = vmatpush1.bf16.msra.mxu0 %v1151
        %1165 = vmatprep.subr.bf16.mxu0 0
        %1166 = vmatpush1.bf16.msra.mxu0 %v1152
        %1167 = vmatprep.subr.bf16.mxu0 0
        %1168 = vmatpush1.bf16.msra.mxu0 %v1153
        %1169 = vmatprep.subr.bf16.mxu0 0
        %1170 = vmatpush1.bf16.msra.mxu0 0
        %1171 = vmatprep.subr.bf16.mxu0 0
        %1172 = vmatpush1.bf16.msra.mxu0 0
        %1173 = vmatprep.subr.bf16.mxu0 0
        %1174 = vmatpush1.bf16.msra.mxu0 0
        %1175 = vmatprep.subr.bf16.mxu0 0
        %1176 = vmatpush1.bf16.msra.mxu0 0
        %1177 = vmatprep.subr.bf16.mxu0 0
        %1178 = vmatpush1.bf16.msra.mxu0 0
        %1179 = vmatprep.subr.bf16.mxu0 0
        %1180 = vmatpush1.bf16.msra.mxu0 0
        %1181 = vmatprep.subr.bf16.mxu0 0
        %1182 = vmatpush1.bf16.msra.mxu0 0
        %1183 = vmatprep.subr.bf16.mxu0 0
        %1184 = vmatpush1.bf16.msra.mxu0 0
        %1185 = vmatprep.subr.bf16.mxu0 0
        %1186 = vmatpush1.bf16.msra.mxu0 0
        %1187 = vmatprep.subr.bf16.mxu0 0
        %1188 = vmatpush1.bf16.msra.mxu0 0
        %1189 = vmatprep.subr.bf16.mxu0 0
        %1190 = vmatpush1.bf16.msra.mxu0 0
        %1191 = vmatprep.subr.bf16.mxu0 0
        %1192 = vmatpush1.bf16.msra.mxu0 0
        %1193 = vmatprep.mubr.bf16.mxu0 0
        %1194 = vmatmul.mubr.bf16.gmra.mrb[0].mxu0 %v1159
        %v1195 = vpop.f32.mrb[0].mxu0
        %v1196 = vadd.f32 0.0, %v1195
        %v1197 = vpop.f32.mrb[0].mxu0
        %v1198 = vpop.f32.mrb[0].mxu0
        %v1199 = vadd.f32 0.0, %v1198
        %v1200 = vpop.f32.mrb[0].mxu0
        %1201 = vdwg.mxu0
        %v1202 = vld [vmem:[#allocation3] sm:$0xff]
        %v1203 = vld [vmem:[#allocation3 + $0x8] sm:$0xff]
        %v1204 = vadd.f32 %v1202, %v1196
        %v1205 = vadd.f32 %v1203, %v1199
        %1206 = vst.msk [vmem:[#allocation3] sm:$0xff] %vm347, %v1204
        %1207 = vst.msk [vmem:[#allocation3 + $0x8] sm:$0xff] %vm347, %v1205
        %v1208 = vld [vmem:[#allocation2] sm:$0xf0]
        %v1209 = vld [vmem:[#allocation2 + $0x8] sm:$0x1f]
        %s1210 = scalar_lea.vmem [#allocation4], 288
        %v1211 = vld [vmem:[%s1210] sm:$0xf]
        %v1212 = vld [vmem:[%s1210 + $0x4] sm:$0xf]
        %v1213 = vld [vmem:[%s1210 + $0x8] sm:$0xf]
        %v1214 = vld [vmem:[%s1210 + $0xc] sm:$0xf]
        %v1215 = vld [vmem:[%s1210 + $0x10] sm:$0xf]
        %v1216 = vld [vmem:[%s1210 + $0x14] sm:$0xf]
        %v1217 = vld [vmem:[%s1210 + $0x18] sm:$0xf]
        %v1218 = vld [vmem:[%s1210 + $0x1c] sm:$0xf]
        %vm1219 = vsmask.f32 3328
        %v1221 = vshrl.u32 %v1208, 16
        %v1223 = vrot.slane %v1221, 4
        %v1224 = vshll.u32 %v1208, 16
        %v1226 = vrot.slane %v1224, 5
        %v1227 = vor.u32 %v1223, %v1226
        %v1229 = vshrl.u32 %v1209, 16
        %v1231 = vrot.slane %v1229, 4
        %v1232 = vshll.u32 %v1209, 16
        %v1234 = vrot.slane %v1232, 5
        %v1235 = vor.u32 %v1231, %v1234
        %v1236 = vsel %vm1219, %v1227, %v1235
        %v1245 = vunpack.c.l.b16 %v1211
        %v1246 = vunpack.c.l.b16 %v1212
        %v1247 = vunpack.c.l.b16 %v1213
        %v1248 = vunpack.c.l.b16 %v1214
        %v1249 = vunpack.c.l.b16 %v1215
        %v1250 = vunpack.c.l.b16 %v1216
        %v1251 = vunpack.c.l.b16 %v1217
        %v1252 = vunpack.c.l.b16 %v1218
        %v1253 = vpack.c.b16 %v1246, %v1245
        %v1254 = vpack.c.b16 %v1248, %v1247
        %v1255 = vpack.c.b16 %v1250, %v1249
        %v1256 = vpack.c.b16 %v1252, %v1251
        %v1262 = vsel %vm347, %v1236, 0
        %1264 = vmatprep.subr.bf16.mxu0 0
        %1265 = vmatpush1.bf16.msra.mxu0 %v1253
        %1266 = vmatprep.subr.bf16.mxu0 0
        %1267 = vmatpush1.bf16.msra.mxu0 %v1254
        %1268 = vmatprep.subr.bf16.mxu0 0
        %1269 = vmatpush1.bf16.msra.mxu0 %v1255
        %1270 = vmatprep.subr.bf16.mxu0 0
        %1271 = vmatpush1.bf16.msra.mxu0 %v1256
        %1272 = vmatprep.subr.bf16.mxu0 0
        %1273 = vmatpush1.bf16.msra.mxu0 0
        %1274 = vmatprep.subr.bf16.mxu0 0
        %1275 = vmatpush1.bf16.msra.mxu0 0
        %1276 = vmatprep.subr.bf16.mxu0 0
        %1277 = vmatpush1.bf16.msra.mxu0 0
        %1278 = vmatprep.subr.bf16.mxu0 0
        %1279 = vmatpush1.bf16.msra.mxu0 0
        %1280 = vmatprep.subr.bf16.mxu0 0
        %1281 = vmatpush1.bf16.msra.mxu0 0
        %1282 = vmatprep.subr.bf16.mxu0 0
        %1283 = vmatpush1.bf16.msra.mxu0 0
        %1284 = vmatprep.subr.bf16.mxu0 0
        %1285 = vmatpush1.bf16.msra.mxu0 0
        %1286 = vmatprep.subr.bf16.mxu0 0
        %1287 = vmatpush1.bf16.msra.mxu0 0
        %1288 = vmatprep.subr.bf16.mxu0 0
        %1289 = vmatpush1.bf16.msra.mxu0 0
        %1290 = vmatprep.subr.bf16.mxu0 0
        %1291 = vmatpush1.bf16.msra.mxu0 0
        %1292 = vmatprep.subr.bf16.mxu0 0
        %1293 = vmatpush1.bf16.msra.mxu0 0
        %1294 = vmatprep.subr.bf16.mxu0 0
        %1295 = vmatpush1.bf16.msra.mxu0 0
        %1296 = vmatprep.mubr.bf16.mxu0 0
        %1297 = vmatmul.mubr.bf16.gmra.mrb[0].mxu0 %v1262
        %v1298 = vpop.f32.mrb[0].mxu0
        %v1299 = vadd.f32 0.0, %v1298
        %v1300 = vpop.f32.mrb[0].mxu0
        %v1301 = vpop.f32.mrb[0].mxu0
        %v1302 = vadd.f32 0.0, %v1301
        %v1303 = vpop.f32.mrb[0].mxu0
        %1304 = vdwg.mxu0
        %v1305 = vld [vmem:[#allocation3] sm:$0xff]
        %v1306 = vld [vmem:[#allocation3 + $0x8] sm:$0xff]
        %v1307 = vadd.f32 %v1305, %v1299
        %v1308 = vadd.f32 %v1306, %v1302
        %1309 = vst.msk [vmem:[#allocation3] sm:$0xff] %vm347, %v1307
        %1310 = vst.msk [vmem:[#allocation3 + $0x8] sm:$0xff] %vm347, %v1308
        %v1311 = vld [vmem:[#allocation2] sm:$0xe0]
        %v1312 = vld [vmem:[#allocation2 + $0x8] sm:$0x1f]
        %s1313 = scalar_lea.vmem [#allocation4], 320
        %v1314 = vld [vmem:[%s1313] sm:$0xf]
        %v1315 = vld [vmem:[%s1313 + $0x4] sm:$0xf]
        %v1316 = vld [vmem:[%s1313 + $0x8] sm:$0xf]
        %v1317 = vld [vmem:[%s1313 + $0xc] sm:$0xf]
        %v1318 = vld [vmem:[%s1313 + $0x10] sm:$0xf]
        %v1319 = vld [vmem:[%s1313 + $0x14] sm:$0xf]
        %v1320 = vld [vmem:[%s1313 + $0x18] sm:$0xf]
        %v1321 = vld [vmem:[%s1313 + $0x1c] sm:$0xf]
        %vm1324 = vcmask 1042432
        %v1325 = vrot.slane %v1311, 5
        %v1326 = vrot.slane %v1312, 5
        %v1327 = vsel %vm1324, %v1325, %v1326
        %v1336 = vunpack.c.l.b16 %v1314
        %v1337 = vunpack.c.l.b16 %v1315
        %v1338 = vunpack.c.l.b16 %v1316
        %v1339 = vunpack.c.l.b16 %v1317
        %v1340 = vunpack.c.l.b16 %v1318
        %v1341 = vunpack.c.l.b16 %v1319
        %v1342 = vunpack.c.l.b16 %v1320
        %v1343 = vunpack.c.l.b16 %v1321
        %v1344 = vpack.c.b16 %v1337, %v1336
        %v1345 = vpack.c.b16 %v1339, %v1338
        %v1346 = vpack.c.b16 %v1341, %v1340
        %v1347 = vpack.c.b16 %v1343, %v1342
        %v1353 = vsel %vm347, %v1327, 0
        %1355 = vmatprep.subr.bf16.mxu0 0
        %1356 = vmatpush1.bf16.msra.mxu0 %v1344
        %1357 = vmatprep.subr.bf16.mxu0 0
        %1358 = vmatpush1.bf16.msra.mxu0 %v1345
        %1359 = vmatprep.subr.bf16.mxu0 0
        %1360 = vmatpush1.bf16.msra.mxu0 %v1346
        %1361 = vmatprep.subr.bf16.mxu0 0
        %1362 = vmatpush1.bf16.msra.mxu0 %v1347
        %1363 = vmatprep.subr.bf16.mxu0 0
        %1364 = vmatpush1.bf16.msra.mxu0 0
        %1365 = vmatprep.subr.bf16.mxu0 0
        %1366 = vmatpush1.bf16.msra.mxu0 0
        %1367 = vmatprep.subr.bf16.mxu0 0
        %1368 = vmatpush1.bf16.msra.mxu0 0
        %1369 = vmatprep.subr.bf16.mxu0 0
        %1370 = vmatpush1.bf16.msra.mxu0 0
        %1371 = vmatprep.subr.bf16.mxu0 0
        %1372 = vmatpush1.bf16.msra.mxu0 0
        %1373 = vmatprep.subr.bf16.mxu0 0
        %1374 = vmatpush1.bf16.msra.mxu0 0
        %1375 = vmatprep.subr.bf16.mxu0 0
        %1376 = vmatpush1.bf16.msra.mxu0 0
        %1377 = vmatprep.subr.bf16.mxu0 0
        %1378 = vmatpush1.bf16.msra.mxu0 0
        %1379 = vmatprep.subr.bf16.mxu0 0
        %1380 = vmatpush1.bf16.msra.mxu0 0
        %1381 = vmatprep.subr.bf16.mxu0 0
        %1382 = vmatpush1.bf16.msra.mxu0 0
        %1383 = vmatprep.subr.bf16.mxu0 0
        %1384 = vmatpush1.bf16.msra.mxu0 0
        %1385 = vmatprep.subr.bf16.mxu0 0
        %1386 = vmatpush1.bf16.msra.mxu0 0
        %1387 = vmatprep.mubr.bf16.mxu0 0
        %1388 = vmatmul.mubr.bf16.gmra.mrb[0].mxu0 %v1353
        %v1389 = vpop.f32.mrb[0].mxu0
        %v1390 = vadd.f32 0.0, %v1389
        %v1391 = vpop.f32.mrb[0].mxu0
        %v1392 = vpop.f32.mrb[0].mxu0
        %v1393 = vadd.f32 0.0, %v1392
        %v1394 = vpop.f32.mrb[0].mxu0
        %1395 = vdwg.mxu0
        %v1396 = vld [vmem:[#allocation3] sm:$0xff]
        %v1397 = vld [vmem:[#allocation3 + $0x8] sm:$0xff]
        %v1398 = vadd.f32 %v1396, %v1390
        %v1399 = vadd.f32 %v1397, %v1393
        %1400 = vst.msk [vmem:[#allocation3] sm:$0xff] %vm347, %v1398
        %1401 = vst.msk [vmem:[#allocation3 + $0x8] sm:$0xff] %vm347, %v1399
        %v1402 = vld [vmem:[#allocation3] sm:$0xff]
        %v1403 = vld [vmem:[#allocation3 + $0x8] sm:$0xff]
        %v1404 = vld [vmem:[#allocation6] sm:$0x1]
        %v1406 = vlaneseq
        %v1407 = vshrl.u32 %v1406, 7
        %v1408 = vsub.s32 0, %v1407
        %v1409 = vrot.slane %v1404, %v1408
        %v1411 = vadd.f32 %v1402, %v1409
        %v1412 = vadd.f32 %v1403, %v1409
        %vm1413 = vcmp.gt.f32.partialorder %v1411, 0.0
        %vm1414 = vcmp.gt.f32.partialorder %v1412, 0.0
        %v1415 = vmul.f32 %v1411, 0.1
        %v1416 = vmul.f32 %v1412, 0.1
        %v1417 = vsel %vm1413, %v1411, %v1415
        %v1418 = vsel %vm1414, %v1412, %v1416
        %v1419 = vpack.c.bf16 %v1418, %v1417
        %v1421 = vunpack.c.l.b16 %v1419
        %v1422 = vunpack.c.h.b16 %v1419
        %v1423 = vpack.c.b16 %v1421, %v1421
        %v1424 = vpack.c.b16 %v1422, %v1422
        %vm1427 = vcmask 519168
        %1428 = vst.msk [vmem:[%s336] sm:$0xf] %vm1427, %v1423
        %1429 = vst.msk [vmem:[%s336 + $0x4] sm:$0xf] %vm1427, %v1424
        %s1430 = smul.u32 2, %s24
        %p1431 = scmp.lt.s32.totalorder %s23, 1
        %s1432 = scalar_select %p1431, %s23, 1
        %p1433 = scmp.lt.s32.totalorder %s1430, 1
        %s1434 = scalar_select %p1433, %s1430, 1
        %p1435 = scmp.lt.s32.totalorder %s22, 0
        %s1436 = scalar_select %p1435, %s22, 0
        %s1437 = sadd.s32 %s1436, %s1434
        %s1438 = smul.addr %s1432, 2
        %s1439 = sadd.s32 %s1437, %s1438
        %s1440 = smul.addr %s1439, 4
        %s1441 = scalar_lea.vmem %s4, %s1440
        // Predicated region
        $region45: #{_lambda_.6} parent=35 // pred_check
          %p1442 = pneg %p168
        $region46: #{_lambda_.6} parent=35 // pred_check_branch
          %1444 = sbr.rel (%p1442) target = $region48
        $region47: #{_lambda_.6} parent=35 // pred_region
          %s1445 = smul.u32 2, %s24
        $region48: #{_lambda_.6} parent=35 // pred_fallthru
          _
      $region36: #{_lambda_.6} parent=5 // pred_fallthru
        _
      %p1446 = scmp.le.s32.totalorder 2, %s12
      // Predicated region
      $region49: #{_lambda_.6} parent=5 // pred_check
        %p1447 = pneg %p1446
      $region50: #{_lambda_.6} parent=5 // pred_check_branch
        %1449 = sbr.rel (%p1447) target = $region52
      $region51: #{_lambda_.6} parent=5 // pred_region
        %s1450 = ssub.s32 %s12, 2
        // Predicated region
        $region53: #{_lambda_.6} parent=51 // pred_check
          %p1451 = pneg %p174
        $region54: #{_lambda_.6} parent=51 // pred_check_branch
          %1453 = sbr.rel (%p1451) target = $region56
        $region55: #{_lambda_.6} parent=51 // pred_region
          %s1454 = smul.u32 2, %s27
          %p1455 = scmp.lt.s32.totalorder %s26, 1
          %s1456 = scalar_select %p1455, %s26, 1
          %p1457 = scmp.lt.s32.totalorder %s1454, 1
          %s1458 = scalar_select %p1457, %s1454, 1
          %p1459 = scmp.lt.s32.totalorder %s25, 0
          %s1460 = scalar_select %p1459, %s25, 0
          %s1461 = sadd.s32 %s1460, %s1458
          %s1462 = smul.addr %s1456, 2
          %s1463 = sadd.s32 %s1461, %s1462
          %s1464 = smul.addr %s1463, 4
          %s1465 = scalar_lea.vmem %s4, %s1464
        $region56: #{_lambda_.6} parent=51 // pred_fallthru
          _
      $region52: #{_lambda_.6} parent=5 // pred_fallthru
        _
    $region6: #{_lambda_.6} parent=1 // loop_footer
      %s16 = sadd.s32 1, %s12
    $region7: #{_lambda_.6} parent=1 // loop_footer_branch
      %11 = sbr.rel target = $region3
    $region8: #{_lambda_.6} parent=1 // loop_exit
      _
    %1466 = vsyncpa [#allocation5], 1
    %s1467 = scalar_lea.sflag [#allocation5], 1
    %1468 = vsyncpa %s1467, 1
    %1469 = vsyncpa [#allocation7], 1

// kernel: _lambda_.5
$region0: #{_lambda_.5}
  #allocation0 [shape = 'u32[]', space=smem, size = 0x4, offset = 0x4, fixed_abs, tag = 'smem constant byte address 0x4 - core index']
  #allocation1 [shape = 'u32[144,128]{1,0:T(1,128)}', space=vmem, size = 0x12000, scoped, tag = 'internal scratch']
  #allocation2 [shape = 'bf16[80,4]{1,0:T(16,128)(2,1)}', space=vmem, size = 0x5000, scoped, tag = 'scratch operand']
  #allocation3 [shape = 'f32[64,16]{1,0:T(8,128)}', space=vmem, size = 0x8000, scoped, tag = 'scratch operand']
  %s0 = inlined_call_operand.vmem [shape: bf16[2,80,4], index: 0, kind: input, shape index: {}, may-alias: {0,1}]
  %s1 = inlined_call_operand.vmem [shape: bf16[2,80,4], index: 1, kind: input, shape index: {}, may-alias: {0,1}]
  %s2 = inlined_call_operand.hbm [shape: bf16[1,15,4,16], index: 2, kind: input, shape index: {}]
  %s3 = inlined_call_operand.hbm [shape: f32[1,1,16], index: 3, kind: input, shape index: {}]
  %s4 = inlined_call_operand.vmem [shape: bf16[2,64,16], index: 4, kind: output, shape index: {}]
  %s5 = sld [smem:[#allocation0]]
  $region57: #{_lambda_.5} parent=0
    _
  %s7 = ssub.s32 1, %s5
  %s8 = scalar_select 0, %s7, %s5
  $region1: #{_lambda_.5} parent=0
    #allocation4 [shape = 'u8[15360]{0}', space=vmem, size = 0x3c00, scoped, tag = 'input window, operand 2, single buffered']
    #allocation5 [shape = 's32[2]{0}', space=sflag, size = 0x8, scoped, tag = 'scoped memory for _lambda_.5']
    #allocation6 [shape = 'u8[512]{0}', space=vmem, size = 0x400, scoped, tag = 'input window, operand 3, single buffered']
    #allocation7 [shape = 's32[1]{0}', space=sflag, size = 0x4, scoped, tag = 'scoped memory for _lambda_.5']
    %9 = vsyncpa [#allocation5], 0
    %10 = vsyncpa [#allocation7], 0
    loop: start=0, step=1, limit=4
    $region2: #{_lambda_.5} parent=1 // loop_pre_header
      _
    $region3: #{_lambda_.5} parent=1 // loop_header
      %s12 = sphi 0, %s16
      %p13 = scmp.ge.s32.totalorder %s12, 4
      %s19 = sphi 0, %s38
      %s20 = sphi 0, %s34
      %s21 = sphi 0, %s30
      %s22 = sphi 0, %s19
      %s23 = sphi 0, %s20
      %s24 = sphi 0, %s21
      %s25 = sphi 0, %s22
      %s26 = sphi 0, %s23
      %s27 = sphi 0, %s24
      %s43 = sphi 0, %s45
      %s46 = sphi 0, %s43
      %s47 = sphi 0, %s46
      %s63 = sphi 0, %s47
      %s75 = sphi 0, %s77
      %s78 = sphi 0, %s75
      %s79 = sphi 0, %s78
      %s95 = sphi 0, %s79
      %s101 = sphi 0, %s103
      %s104 = sphi 0, %s101
      %s105 = sphi 0, %s104
      %s121 = sphi 0, %s105
      %s127 = sphi 0, %s129
      %s130 = sphi 0, %s127
      %s131 = sphi 0, %s130
      %s147 = sphi 0, %s131
      %s157 = sphi 0, %s159
      %s160 = sphi 0, %s157
      %s161 = sphi 0, %s160
      %s177 = sphi 0, %s161
    $region4: #{_lambda_.5} parent=1 // loop_header_branch
      %15 = sbr.rel (%p13) target = $region8
    $region5: #{_lambda_.5} parent=1 // loop_body
      %s17 = ssub.s32 %s12, 1
      %s18 = ssub.s32 %s12, 2
      %s28 = sadd.s32 1, %s21
      %p29 = scmp.ge.s32.totalorder %s28, 1
      %s30 = scalar_select %p29, 0, %s28
      %s31 = sadd.s32 1, %s20
      %s32 = scalar_select %p29, %s31, %s20
      %p33 = scmp.ge.s32.totalorder %s32, 2
      %s34 = scalar_select %p33, 0, %s32
      %s35 = sadd.s32 1, %s19
      %s36 = scalar_select %p33, %s35, %s19
      %p37 = scmp.ge.s32.totalorder %s36, 1
      %s38 = scalar_select %p37, 0, %s36
      %s39 = ssub.s32 %s20, %s34
      %s40 = ssub.s32 %s21, %s30
      %s41 = sor.u32 %s39, %s40
      %p42 = scmp.eq.s32.totalorder %s41, 0
      %s44 = sadd.s32 %s43, 1
      %s45 = scalar_select %p42, %s43, %s44
      %p48 = pneg %p42
      %p49 = scmp.eq.s32.totalorder %s12, 1
      %p50 = por %p48, %p49
      %p51 = scmp.ne.s32.totalorder %s43, %s46
      %p52 = scmp.eq.s32.totalorder %s12, 0
      %p53 = por %p51, %p52
      %p54 = scmp.ne.s32.totalorder %s43, %s46
      %p55 = scmp.eq.s32.totalorder %s17, 1
      %p56 = por %p54, %p55
      %p57 = scmp.ne.s32.totalorder %s46, %s47
      %p58 = scmp.eq.s32.totalorder %s17, 0
      %p59 = por %p57, %p58
      %p60 = scmp.ne.s32.totalorder %s46, %s47
      %p61 = scmp.eq.s32.totalorder %s18, 1
      %p62 = por %p60, %p61
      %p64 = scmp.ne.s32.totalorder %s47, %s63
      %p65 = scmp.eq.s32.totalorder %s18, 0
      %p66 = por %p64, %p65
      %s67 = sadd.s32 %s21, 1
      %s68 = smul.u32 %s67, 4
      %s69 = sadd.s32 %s30, 1
      %s70 = smul.u32 %s69, 4
      %s71 = ssub.s32 %s20, %s34
      %s72 = ssub.s32 %s68, %s70
      %s73 = sor.u32 %s71, %s72
      %p74 = scmp.eq.s32.totalorder %s73, 0
      %s76 = sadd.s32 %s75, 1
      %s77 = scalar_select %p74, %s75, %s76
      %p80 = pneg %p74
      %p81 = scmp.eq.s32.totalorder %s12, 1
      %p82 = por %p80, %p81
      %p83 = scmp.ne.s32.totalorder %s75, %s78
      %p84 = scmp.eq.s32.totalorder %s12, 0
      %p85 = por %p83, %p84
      %p86 = scmp.ne.s32.totalorder %s75, %s78
      %p87 = scmp.eq.s32.totalorder %s17, 1
      %p88 = por %p86, %p87
      %p89 = scmp.ne.s32.totalorder %s78, %s79
      %p90 = scmp.eq.s32.totalorder %s17, 0
      %p91 = por %p89, %p90
      %p92 = scmp.ne.s32.totalorder %s78, %s79
      %p93 = scmp.eq.s32.totalorder %s18, 1
      %p94 = por %p92, %p93
      %p96 = scmp.ne.s32.totalorder %s79, %s95
      %p97 = scmp.eq.s32.totalorder %s18, 0
      %p98 = por %p96, %p97
      %s99 = ssub.s32 %s19, %s38
      %p100 = scmp.eq.s32.totalorder %s99, 0
      %s102 = sadd.s32 %s101, 1
      %s103 = scalar_select %p100, %s101, %s102
      %p106 = pneg %p100
      %p107 = scmp.eq.s32.totalorder %s12, 1
      %p108 = por %p106, %p107
      %p109 = scmp.ne.s32.totalorder %s101, %s104
      %p110 = scmp.eq.s32.totalorder %s12, 0
      %p111 = por %p109, %p110
      %p112 = scmp.ne.s32.totalorder %s101, %s104
      %p113 = scmp.eq.s32.totalorder %s17, 1
      %p114 = por %p112, %p113
      %p115 = scmp.ne.s32.totalorder %s104, %s105
      %p116 = scmp.eq.s32.totalorder %s17, 0
      %p117 = por %p115, %p116
      %p118 = scmp.ne.s32.totalorder %s104, %s105
      %p119 = scmp.eq.s32.totalorder %s18, 1
      %p120 = por %p118, %p119
      %p122 = scmp.ne.s32.totalorder %s105, %s121
      %p123 = scmp.eq.s32.totalorder %s18, 0
      %p124 = por %p122, %p123
      %s125 = ssub.s32 %s19, %s38
      %p126 = scmp.eq.s32.totalorder %s125, 0
      %s128 = sadd.s32 %s127, 1
      %s129 = scalar_select %p126, %s127, %s128
      %p132 = pneg %p126
      %p133 = scmp.eq.s32.totalorder %s12, 1
      %p134 = por %p132, %p133
      %p135 = scmp.ne.s32.totalorder %s127, %s130
      %p136 = scmp.eq.s32.totalorder %s12, 0
      %p137 = por %p135, %p136
      %p138 = scmp.ne.s32.totalorder %s127, %s130
      %p139 = scmp.eq.s32.totalorder %s17, 1
      %p140 = por %p138, %p139
      %p141 = scmp.ne.s32.totalorder %s130, %s131
      %p142 = scmp.eq.s32.totalorder %s17, 0
      %p143 = por %p141, %p142
      %p144 = scmp.ne.s32.totalorder %s130, %s131
      %p145 = scmp.eq.s32.totalorder %s18, 1
      %p146 = por %p144, %p145
      %p148 = scmp.ne.s32.totalorder %s131, %s147
      %p149 = scmp.eq.s32.totalorder %s18, 0
      %p150 = por %p148, %p149
      %s151 = ssub.s32 %s20, %s34
      %s152 = ssub.s32 %s21, %s30
      %s153 = sor.u32 %s151, %s152
      %s154 = ssub.s32 %s19, %s38
      %s155 = sor.u32 %s153, %s154
      %p156 = scmp.eq.s32.totalorder %s155, 0
      %s158 = sadd.s32 %s157, 1
      %s159 = scalar_select %p156, %s157, %s158
      %p162 = pneg %p156
      %p163 = scmp.eq.s32.totalorder %s12, 1
      %p164 = por %p162, %p163
      %p165 = scmp.ne.s32.totalorder %s157, %s160
      %p166 = scmp.eq.s32.totalorder %s12, 0
      %p167 = por %p165, %p166
      %p168 = scmp.ne.s32.totalorder %s157, %s160
      %p169 = scmp.eq.s32.totalorder %s17, 1
      %p170 = por %p168, %p169
      %p171 = scmp.ne.s32.totalorder %s160, %s161
      %p172 = scmp.eq.s32.totalorder %s17, 0
      %p173 = por %p171, %p172
      %p174 = scmp.ne.s32.totalorder %s160, %s161
      %p175 = scmp.eq.s32.totalorder %s18, 1
      %p176 = por %p174, %p175
      %p178 = scmp.ne.s32.totalorder %s161, %s177
      %p179 = scmp.eq.s32.totalorder %s18, 0
      %p180 = por %p178, %p179
      %p181 = scmp.le.s32.totalorder 1, %s12
      %p182 = scmp.lt.s32.totalorder %s12, 3
      %p183 = pnand %p181, %p182
      %p184 = pneg %p183
      // Predicated region
      $region9: #{_lambda_.5} parent=5 // pred_check
        _
      $region10: #{_lambda_.5} parent=5 // pred_check_branch
        %186 = sbr.rel (%p183) target = $region12
      $region11: #{_lambda_.5} parent=5 // pred_region
        %s187 = ssub.s32 %s12, 1
        // Predicated region
        $region13: #{_lambda_.5} parent=11 // pred_check
          %p188 = pneg %p117
        $region14: #{_lambda_.5} parent=11 // pred_check_branch
          %190 = sbr.rel (%p188) target = $region16
        $region15: #{_lambda_.5} parent=11 // pred_region
          %s192 = ssub.s32 480, 480
          %193 = vsyncadd [#allocation5], %s192
          %s194 = smul.addr %s22, 15
          %s195 = smul.addr %s194, 32
          %s196 = scalar_lea.hbm %s2, %s195
          %s197 = sshll.u32 [#allocation4], 4
          %s198 = int_to_ptr.vmem [resolvable:$true] %s197
          %203 = dma.hbm_to_vmem [thread:$0]  %s196, 480, %s198, [#allocation5], 32, 32, 2
        $region16: #{_lambda_.5} parent=11 // pred_fallthru
          _
        // Predicated region
        $region17: #{_lambda_.5} parent=11 // pred_check
          %p204 = pneg %p143
        $region18: #{_lambda_.5} parent=11 // pred_check_branch
          %206 = sbr.rel (%p204) target = $region20
        $region19: #{_lambda_.5} parent=11 // pred_region
          %s208 = ssub.s32 16, 16
          %209 = vsyncadd [#allocation7], %s208
          %s210 = smul.addr %s22, 16
          %s211 = scalar_lea.hbm %s3, %s210
          %s213 = sshll.u32 [#allocation6], 4
          %s214 = int_to_ptr.vmem [resolvable:$true] %s213
          %216 = dma.hbm_to_vmem [thread:$0]  %s211, 16, %s214, [#allocation7]
        $region20: #{_lambda_.5} parent=11 // pred_fallthru
          _
      $region12: #{_lambda_.5} parent=5 // pred_fallthru
        _
      %p217 = scmp.lt.s32.totalorder %s12, 2
      // Predicated region
      $region21: #{_lambda_.5} parent=5 // pred_check
        %p218 = pneg %p217
      $region22: #{_lambda_.5} parent=5 // pred_check_branch
        %220 = sbr.rel (%p218) target = $region24
      $region23: #{_lambda_.5} parent=5 // pred_region
        // Predicated region
        $region25: #{_lambda_.5} parent=23 // pred_check
          %p221 = pneg %p53
        $region26: #{_lambda_.5} parent=23 // pred_check_branch
          %223 = sbr.rel (%p221) target = $region28
        $region27: #{_lambda_.5} parent=23 // pred_region
          %s224 = smul.u32 8, %s21
          %s225 = ssub.s32 10, %s224
          %p226 = scmp.lt.s32.totalorder %s225, 8
          %s227 = scalar_select %p226, %s225, 8
          %s228 = smul.u32 64, %s227
          %p229 = scmp.lt.s32.totalorder %s20, 1
          %s230 = scalar_select %p229, %s20, 1
          %p231 = scmp.lt.s32.totalorder %s224, 9
          %s232 = scalar_select %p231, %s224, 9
          %s233 = smul.addr %s230, 10
          %s234 = sadd.s32 %s232, %s233
          %s235 = smul.addr %s234, 4
          %s236 = scalar_lea.vmem %s0, %s235
          %s237 = smul.u32 8, %s21
          %s238 = ssub.s32 10, %s237
          %p239 = scmp.lt.s32.totalorder %s238, 8
          %s240 = scalar_select %p239, %s238, 8
          %s241 = smul.u32 64, %s240
        $region28: #{_lambda_.5} parent=23 // pred_fallthru
          _
        // Predicated region
        $region29: #{_lambda_.5} parent=23 // pred_check
          %p242 = pneg %p85
        $region30: #{_lambda_.5} parent=23 // pred_check_branch
          %244 = sbr.rel (%p242) target = $region32
        $region31: #{_lambda_.5} parent=23 // pred_region
          %s245 = sadd.s32 %s21, 1
          %s246 = smul.u32 %s245, 4
          %s247 = smul.u32 2, %s246
          %p248 = scmp.lt.s32.totalorder %s20, 1
          %s249 = scalar_select %p248, %s20, 1
          %p250 = scmp.lt.s32.totalorder %s247, 9
          %s251 = scalar_select %p250, %s247, 9
          %s252 = smul.addr %s249, 10
          %s253 = sadd.s32 %s251, %s252
          %s254 = smul.addr %s253, 4
          %s255 = scalar_lea.vmem %s1, %s254
          %s256 = sadd.s32 %s21, 1
          %s257 = smul.u32 %s256, 4
          %s258 = smul.u32 2, %s257
        $region32: #{_lambda_.5} parent=23 // pred_fallthru
          _
      $region24: #{_lambda_.5} parent=5 // pred_fallthru
        _
      %p259 = scmp.le.s32.totalorder 1, %s12
      %p260 = scmp.lt.s32.totalorder %s12, 3
      %p261 = pnand %p259, %p260
      %p262 = pneg %p261
      // Predicated region
      $region33: #{_lambda_.5} parent=5 // pred_check
        _
      $region34: #{_lambda_.5} parent=5 // pred_check_branch
        %264 = sbr.rel (%p261) target = $region36
      $region35: #{_lambda_.5} parent=5 // pred_region
        %s265 = ssub.s32 %s12, 1
        // Predicated region
        $region37: #{_lambda_.5} parent=35 // pred_check
          %p266 = pneg %p117
        $region38: #{_lambda_.5} parent=35 // pred_check_branch
          %268 = sbr.rel (%p266) target = $region40
        $region39: #{_lambda_.5} parent=35 // pred_region
          %269 = dma.done [#allocation5], 480
        $region40: #{_lambda_.5} parent=35 // pred_fallthru
          _
        // Predicated region
        $region41: #{_lambda_.5} parent=35 // pred_check
          %p270 = pneg %p143
        $region42: #{_lambda_.5} parent=35 // pred_check_branch
          %272 = sbr.rel (%p270) target = $region44
        $region43: #{_lambda_.5} parent=35 // pred_region
          %273 = dma.done [#allocation7], 16
        $region44: #{_lambda_.5} parent=35 // pred_fallthru
          _
        %s274 = smul.u32 8, %s24
        %s275 = ssub.s32 10, %s274
        %p276 = scmp.lt.s32.totalorder %s275, 8
        %s277 = scalar_select %p276, %s275, 8
        %s278 = smul.u32 64, %s277
        %p279 = scmp.lt.s32.totalorder %s23, 1
        %s280 = scalar_select %p279, %s23, 1
        %p281 = scmp.lt.s32.totalorder %s274, 9
        %s282 = scalar_select %p281, %s274, 9
        %s283 = smul.addr %s280, 10
        %s284 = sadd.s32 %s282, %s283
        %s285 = smul.addr %s284, 4
        %s286 = scalar_lea.vmem %s0, %s285
        %p287 = pneg %p59
        %p288 = pneg %p56
        %s289 = sadd.s32 %s24, 1
        %s290 = smul.u32 %s289, 4
        %s291 = smul.u32 2, %s290
        %p292 = scmp.lt.s32.totalorder %s23, 1
        %s293 = scalar_select %p292, %s23, 1
        %p294 = scmp.lt.s32.totalorder %s291, 9
        %s295 = scalar_select %p294, %s291, 9
        %s296 = smul.addr %s293, 10
        %s297 = sadd.s32 %s295, %s296
        %s298 = smul.addr %s297, 4
        %s299 = scalar_lea.vmem %s1, %s298
        %p300 = pneg %p91
        %p301 = pneg %p88
        %p302 = pneg %p117
        %p303 = pneg %p114
        %p304 = pneg %p143
        %p305 = pneg %p140
        %p306 = pneg %p173
        %p307 = pneg %p170
        %s308 = smul.u32 8, %s24
        %p309 = scmp.lt.s32.totalorder %s23, 1
        %s310 = scalar_select %p309, %s23, 1
        %p311 = scmp.lt.s32.totalorder %s308, 7
        %s312 = scalar_select %p311, %s308, 7
        %p313 = scmp.lt.s32.totalorder %s22, 0
        %s314 = scalar_select %p313, %s22, 0
        %s315 = sadd.s32 %s314, %s312
        %s316 = smul.addr %s310, 8
        %s317 = sadd.s32 %s315, %s316
        %s318 = smul.addr %s317, 4
        %s319 = scalar_lea.vmem %s4, %s318
        %s320 = smul.u32 8, %s24
        %s321 = ssub.s32 10, %s320
        %p322 = scmp.lt.s32.totalorder %s321, 8
        %s323 = scalar_select %p322, %s321, 8
        %s324 = smul.u32 64, %s323
        %p325 = scmp.lt.s32.totalorder %s23, 1
        %s326 = scalar_select %p325, %s23, 1
        %p327 = scmp.lt.s32.totalorder %s320, 9
        %s328 = scalar_select %p327, %s320, 9
        %s329 = smul.addr %s326, 10
        %s330 = sadd.s32 %s328, %s329
        %s331 = smul.addr %s330, 4
        %s332 = scalar_lea.vmem %s0, %s331
        %s333 = smul.u32 8, %s24
        %s334 = ssub.s32 10, %s333
        %p335 = scmp.lt.s32.totalorder %s334, 8
        %s336 = scalar_select %p335, %s334, 8
        %s337 = smul.u32 64, %s336
        %s338 = sadd.s32 %s24, 1
        %s339 = smul.u32 %s338, 4
        %s340 = smul.u32 2, %s339
        %p341 = scmp.lt.s32.totalorder %s23, 1
        %s342 = scalar_select %p341, %s23, 1
        %p343 = scmp.lt.s32.totalorder %s340, 9
        %s344 = scalar_select %p343, %s340, 9
        %s345 = smul.addr %s342, 10
        %s346 = sadd.s32 %s344, %s345
        %s347 = smul.addr %s346, 4
        %s348 = scalar_lea.vmem %s1, %s347
        %s349 = sadd.s32 %s24, 1
        %s350 = smul.u32 %s349, 4
        %s351 = smul.u32 2, %s350
        %s352 = smul.u32 8, %s24
        %p353 = scmp.lt.s32.totalorder %s23, 1
        %s354 = scalar_select %p353, %s23, 1
        %p355 = scmp.lt.s32.totalorder %s352, 7
        %s356 = scalar_select %p355, %s352, 7
        %p357 = scmp.lt.s32.totalorder %s22, 0
        %s358 = scalar_select %p357, %s22, 0
        %s359 = sadd.s32 %s358, %s356
        %s360 = smul.addr %s354, 8
        %s361 = sadd.s32 %s359, %s360
        %s362 = smul.addr %s361, 4
        %s363 = scalar_lea.vmem %s4, %s362
        %s364 = smul.u32 8, %s24
        %v366 = vld [vmem:[%s332] sm:$0xf]
        %v367 = vld [vmem:[%s332 + $0x4] sm:$0xf]
        %v368 = vld [vmem:[%s332 + $0x8] sm:$0xf]
        %v369 = vld [vmem:[%s332 + $0xc] sm:$0xf]
        %v370 = vld [vmem:[%s332 + $0x10] sm:$0xf]
        %v371 = vld [vmem:[%s332 + $0x14] sm:$0xf]
        %v372 = vld [vmem:[%s332 + $0x18] sm:$0xf]
        %v373 = vld [vmem:[%s332 + $0x1c] sm:$0xf]
        %v382 = vunpack.c.l.b16 %v366
        %v383 = vunpack.c.l.b16 %v367
        %v384 = vunpack.c.l.b16 %v368
        %v385 = vunpack.c.l.b16 %v369
        %v386 = vunpack.c.l.b16 %v370
        %v387 = vunpack.c.l.b16 %v371
        %v388 = vunpack.c.l.b16 %v372
        %v389 = vunpack.c.l.b16 %v373
        %v390 = vpack.c.b16 %v383, %v382
        %v391 = vpack.c.b16 %v385, %v384
        %v392 = vpack.c.b16 %v387, %v386
        %v393 = vpack.c.b16 %v389, %v388
        %vm398 = vcmask 31744
        %399 = vst.msk [vmem:[#allocation2] sm:$0xff] %vm398, %v390
        %400 = vst.msk [vmem:[#allocation2 + $0x8] sm:$0xff] %vm398, %v391
        %401 = vst.msk [vmem:[#allocation2 + $0x10] sm:$0xff] %vm398, %v392
        %402 = vst.msk [vmem:[#allocation2 + $0x18] sm:$0xff] %vm398, %v393
        %v403 = vld [vmem:[%s348] sm:$0xf]
        %v404 = vld [vmem:[%s348 + $0x4] sm:$0xf]
        %v407 = vunpack.c.l.b16 %v403
        %v408 = vunpack.c.l.b16 %v404
        %v409 = vpack.c.b16 %v408, %v407
        %411 = vst.msk [vmem:[#allocation2 + $0x20] sm:$0xff] %vm398, %v409
        %v412 = vld [vmem:[#allocation2] sm:$0xff]
        %v413 = vld [vmem:[#allocation2 + $0x8] sm:$0xff]
        %v414 = vld [vmem:[#allocation2 + $0x10] sm:$0xff]
        %v415 = vld [vmem:[#allocation2 + $0x18] sm:$0xff]
        %v416 = vld [vmem:[#allocation4] sm:$0x3]
        %v418 = vsel %vm398, %v412, 0
        %v421 = vsel %vm398, %v413, 0
        %v424 = vsel %vm398, %v414, 0
        %v427 = vsel %vm398, %v415, 0
        %vm429 = vcmask 1041408
        %v431 = vsel %vm429, %v416, 0
        %433 = vmatprep.subr.bf16.mxu0 0
        %434 = vmatpush1.bf16.msra.mxu0 %v431
        %435 = vmatprep.subr.bf16.mxu0 0
        %436 = vmatpush1.bf16.msra.mxu0 0
        %437 = vmatprep.subr.bf16.mxu0 0
        %438 = vmatpush1.bf16.msra.mxu0 0
        %439 = vmatprep.subr.bf16.mxu0 0
        %440 = vmatpush1.bf16.msra.mxu0 0
        %441 = vmatprep.subr.bf16.mxu0 0
        %442 = vmatpush1.bf16.msra.mxu0 0
        %443 = vmatprep.subr.bf16.mxu0 0
        %444 = vmatpush1.bf16.msra.mxu0 0
        %445 = vmatprep.subr.bf16.mxu0 0
        %446 = vmatpush1.bf16.msra.mxu0 0
        %447 = vmatprep.subr.bf16.mxu0 0
        %448 = vmatpush1.bf16.msra.mxu0 0
        %449 = vmatprep.subr.bf16.mxu0 0
        %450 = vmatpush1.bf16.msra.mxu0 0
        %451 = vmatprep.subr.bf16.mxu0 0
        %452 = vmatpush1.bf16.msra.mxu0 0
        %453 = vmatprep.subr.bf16.mxu0 0
        %454 = vmatpush1.bf16.msra.mxu0 0
        %455 = vmatprep.subr.bf16.mxu0 0
        %456 = vmatpush1.bf16.msra.mxu0 0
        %457 = vmatprep.subr.bf16.mxu0 0
        %458 = vmatpush1.bf16.msra.mxu0 0
        %459 = vmatprep.subr.bf16.mxu0 0
        %460 = vmatpush1.bf16.msra.mxu0 0
        %461 = vmatprep.subr.bf16.mxu0 0
        %462 = vmatpush1.bf16.msra.mxu0 0
        %463 = vmatprep.subr.bf16.mxu0 0
        %464 = vmatpush1.bf16.msra.mxu0 0
        %465 = vmatprep.mubr.bf16.mxu0 0
        %466 = vmatmul.mubr.bf16.gmra.mrb[0].mxu0 %v418
        %v467 = vpop.f32.mrb[0].mxu0
        %v468 = vadd.f32 0.0, %v467
        %v469 = vpop.f32.mrb[0].mxu0
        %v470 = vpop.f32.mrb[0].mxu0
        %v471 = vadd.f32 0.0, %v470
        %v472 = vpop.f32.mrb[0].mxu0
        %473 = vmatprep.mubr.bf16.mxu0 0
        %474 = vmatmul.mubr.bf16.gmra.mrb[0].mxu0 %v421
        %v475 = vpop.f32.mrb[0].mxu0
        %v476 = vadd.f32 0.0, %v475
        %v477 = vpop.f32.mrb[0].mxu0
        %v478 = vpop.f32.mrb[0].mxu0
        %v479 = vadd.f32 0.0, %v478
        %v480 = vpop.f32.mrb[0].mxu0
        %481 = vmatprep.mubr.bf16.mxu0 0
        %482 = vmatmul.mubr.bf16.gmra.mrb[0].mxu0 %v424
        %v483 = vpop.f32.mrb[0].mxu0
        %v484 = vadd.f32 0.0, %v483
        %v485 = vpop.f32.mrb[0].mxu0
        %v486 = vpop.f32.mrb[0].mxu0
        %v487 = vadd.f32 0.0, %v486
        %v488 = vpop.f32.mrb[0].mxu0
        %489 = vmatprep.mubr.bf16.mxu0 0
        %490 = vmatmul.mubr.bf16.gmra.mrb[0].mxu0 %v427
        %v491 = vpop.f32.mrb[0].mxu0
        %v492 = vadd.f32 0.0, %v491
        %v493 = vpop.f32.mrb[0].mxu0
        %v494 = vpop.f32.mrb[0].mxu0
        %v495 = vadd.f32 0.0, %v494
        %v496 = vpop.f32.mrb[0].mxu0
        %497 = vdwg.mxu0
        %vm498 = vcmask 130048
        %499 = vst.msk [vmem:[#allocation3] sm:$0xff] %vm498, %v468
        %500 = vst.msk [vmem:[#allocation3 + $0x8] sm:$0xff] %vm498, %v471
        %501 = vst.msk [vmem:[#allocation3 + $0x10] sm:$0xff] %vm498, %v476
        %502 = vst.msk [vmem:[#allocation3 + $0x18] sm:$0xff] %vm498, %v479
        %503 = vst.msk [vmem:[#allocation3 + $0x20] sm:$0xff] %vm498, %v484
        %504 = vst.msk [vmem:[#allocation3 + $0x28] sm:$0xff] %vm498, %v487
        %505 = vst.msk [vmem:[#allocation3 + $0x30] sm:$0xff] %vm498, %v492
        %506 = vst.msk [vmem:[#allocation3 + $0x38] sm:$0xff] %vm498, %v495
        %v507 = vld [vmem:[#allocation2] sm:$0xff]
        %v508 = vld [vmem:[#allocation2 + $0x8] sm:$0xff]
        %v509 = vld [vmem:[#allocation2 + $0x10] sm:$0xff]
        %v510 = vld [vmem:[#allocation2 + $0x18] sm:$0xff]
        %v511 = vld [vmem:[#allocation2 + $0x20] sm:$0x1]
        %s512 = scalar_lea.vmem [#allocation4], 2
        %v513 = vld [vmem:[%s512] sm:$0x3]
        %vm514 = vsmask.f32 7424
        %v516 = vshrl.u32 %v507, 16
        %v518 = vshll.u32 %v507, 16
        %v520 = vrot.slane %v518, 1
        %v521 = vor.u32 %v516, %v520
        %v523 = vshll.u32 %v508, 16
        %v525 = vrot.slane %v523, 1
        %v526 = vsel %vm514, %v521, %v525
        %v527 = vshrl.u32 %v508, 16
        %v529 = vor.u32 %v527, %v525
        %v531 = vshll.u32 %v509, 16
        %v533 = vrot.slane %v531, 1
        %v534 = vsel %vm514, %v529, %v533
        %v535 = vshrl.u32 %v509, 16
        %v537 = vor.u32 %v535, %v533
        %v539 = vshll.u32 %v510, 16
        %v541 = vrot.slane %v539, 1
        %v542 = vsel %vm514, %v537, %v541
        %v543 = vshrl.u32 %v510, 16
        %v545 = vor.u32 %v543, %v541
        %v547 = vshll.u32 %v511, 16
        %v549 = vrot.slane %v547, 1
        %v550 = vsel %vm514, %v545, %v549
        %v552 = vsel %vm398, %v526, 0
        %v555 = vsel %vm398, %v534, 0
        %v558 = vsel %vm398, %v542, 0
        %v561 = vsel %vm398, %v550, 0
        %v564 = vsel %vm429, %v513, 0
        %566 = vmatprep.subr.bf16.mxu0 0
        %567 = vmatpush1.bf16.msra.mxu0 %v564
        %568 = vmatprep.subr.bf16.mxu0 0
        %569 = vmatpush1.bf16.msra.mxu0 0
        %570 = vmatprep.subr.bf16.mxu0 0
        %571 = vmatpush1.bf16.msra.mxu0 0
        %572 = vmatprep.subr.bf16.mxu0 0
        %573 = vmatpush1.bf16.msra.mxu0 0
        %574 = vmatprep.subr.bf16.mxu0 0
        %575 = vmatpush1.bf16.msra.mxu0 0
        %576 = vmatprep.subr.bf16.mxu0 0
        %577 = vmatpush1.bf16.msra.mxu0 0
        %578 = vmatprep.subr.bf16.mxu0 0
        %579 = vmatpush1.bf16.msra.mxu0 0
        %580 = vmatprep.subr.bf16.mxu0 0
        %581 = vmatpush1.bf16.msra.mxu0 0
        %582 = vmatprep.subr.bf16.mxu0 0
        %583 = vmatpush1.bf16.msra.mxu0 0
        %584 = vmatprep.subr.bf16.mxu0 0
        %585 = vmatpush1.bf16.msra.mxu0 0
        %586 = vmatprep.subr.bf16.mxu0 0
        %587 = vmatpush1.bf16.msra.mxu0 0
        %588 = vmatprep.subr.bf16.mxu0 0
        %589 = vmatpush1.bf16.msra.mxu0 0
        %590 = vmatprep.subr.bf16.mxu0 0
        %591 = vmatpush1.bf16.msra.mxu0 0
        %592 = vmatprep.subr.bf16.mxu0 0
        %593 = vmatpush1.bf16.msra.mxu0 0
        %594 = vmatprep.subr.bf16.mxu0 0
        %595 = vmatpush1.bf16.msra.mxu0 0
        %596 = vmatprep.subr.bf16.mxu0 0
        %597 = vmatpush1.bf16.msra.mxu0 0
        %598 = vmatprep.mubr.bf16.mxu0 0
        %599 = vmatmul.mubr.bf16.gmra.mrb[0].mxu0 %v552
        %v600 = vpop.f32.mrb[0].mxu0
        %v601 = vadd.f32 0.0, %v600
        %v602 = vpop.f32.mrb[0].mxu0
        %v603 = vpop.f32.mrb[0].mxu0
        %v604 = vadd.f32 0.0, %v603
        %v605 = vpop.f32.mrb[0].mxu0
        %606 = vmatprep.mubr.bf16.mxu0 0
        %607 = vmatmul.mubr.bf16.gmra.mrb[0].mxu0 %v555
        %v608 = vpop.f32.mrb[0].mxu0
        %v609 = vadd.f32 0.0, %v608
        %v610 = vpop.f32.mrb[0].mxu0
        %v611 = vpop.f32.mrb[0].mxu0
        %v612 = vadd.f32 0.0, %v611
        %v613 = vpop.f32.mrb[0].mxu0
        %614 = vmatprep.mubr.bf16.mxu0 0
        %615 = vmatmul.mubr.bf16.gmra.mrb[0].mxu0 %v558
        %v616 = vpop.f32.mrb[0].mxu0
        %v617 = vadd.f32 0.0, %v616
        %v618 = vpop.f32.mrb[0].mxu0
        %v619 = vpop.f32.mrb[0].mxu0
        %v620 = vadd.f32 0.0, %v619
        %v621 = vpop.f32.mrb[0].mxu0
        %622 = vmatprep.mubr.bf16.mxu0 0
        %623 = vmatmul.mubr.bf16.gmra.mrb[0].mxu0 %v561
        %v624 = vpop.f32.mrb[0].mxu0
        %v625 = vadd.f32 0.0, %v624
        %v626 = vpop.f32.mrb[0].mxu0
        %v627 = vpop.f32.mrb[0].mxu0
        %v628 = vadd.f32 0.0, %v627
        %v629 = vpop.f32.mrb[0].mxu0
        %630 = vdwg.mxu0
        %v631 = vld [vmem:[#allocation3] sm:$0xff]
        %v632 = vld [vmem:[#allocation3 + $0x8] sm:$0xff]
        %v633 = vld [vmem:[#allocation3 + $0x10] sm:$0xff]
        %v634 = vld [vmem:[#allocation3 + $0x18] sm:$0xff]
        %v635 = vld [vmem:[#allocation3 + $0x20] sm:$0xff]
        %v636 = vld [vmem:[#allocation3 + $0x28] sm:$0xff]
        %v637 = vld [vmem:[#allocation3 + $0x30] sm:$0xff]
        %v638 = vld [vmem:[#allocation3 + $0x38] sm:$0xff]
        %v639 = vadd.f32 %v631, %v601
        %v640 = vadd.f32 %v632, %v604
        %v641 = vadd.f32 %v633, %v609
        %v642 = vadd.f32 %v634, %v612
        %v643 = vadd.f32 %v635, %v617
        %v644 = vadd.f32 %v636, %v620
        %v645 = vadd.f32 %v637, %v625
        %v646 = vadd.f32 %v638, %v628
        %647 = vst.msk [vmem:[#allocation3] sm:$0xff] %vm498, %v639
        %648 = vst.msk [vmem:[#allocation3 + $0x8] sm:$0xff] %vm498, %v640
        %649 = vst.msk [vmem:[#allocation3 + $0x10] sm:$0xff] %vm498, %v641
        %650 = vst.msk [vmem:[#allocation3 + $0x18] sm:$0xff] %vm498, %v642
        %651 = vst.msk [vmem:[#allocation3 + $0x20] sm:$0xff] %vm498, %v643
        %652 = vst.msk [vmem:[#allocation3 + $0x28] sm:$0xff] %vm498, %v644
        %653 = vst.msk [vmem:[#allocation3 + $0x30] sm:$0xff] %vm498, %v645
        %654 = vst.msk [vmem:[#allocation3 + $0x38] sm:$0xff] %vm498, %v646
        %v655 = vld [vmem:[#allocation2] sm:$0xfe]
        %v656 = vld [vmem:[#allocation2 + $0x8] sm:$0xff]
        %v657 = vld [vmem:[#allocation2 + $0x10] sm:$0xff]
        %v658 = vld [vmem:[#allocation2 + $0x18] sm:$0xff]
        %v659 = vld [vmem:[#allocation2 + $0x20] sm:$0x1]
        %s660 = scalar_lea.vmem [#allocation4], 4
        %v661 = vld [vmem:[%s660] sm:$0x3]
        %vm667 = vcmask 1046528
        %v668 = vrot.slane %v655, 1
        %v669 = vrot.slane %v656, 1
        %v670 = vsel %vm667, %v668, %v669
        %v671 = vrot.slane %v657, 1
        %v672 = vsel %vm667, %v669, %v671
        %v673 = vrot.slane %v658, 1
        %v674 = vsel %vm667, %v671, %v673
        %v675 = vrot.slane %v659, 1
        %v676 = vsel %vm667, %v673, %v675
        %v678 = vsel %vm398, %v670, 0
        %v681 = vsel %vm398, %v672, 0
        %v684 = vsel %vm398, %v674, 0
        %v687 = vsel %vm398, %v676, 0
        %v690 = vsel %vm429, %v661, 0
        %692 = vmatprep.subr.bf16.mxu0 0
        %693 = vmatpush1.bf16.msra.mxu0 %v690
        %694 = vmatprep.subr.bf16.mxu0 0
        %695 = vmatpush1.bf16.msra.mxu0 0
        %696 = vmatprep.subr.bf16.mxu0 0
        %697 = vmatpush1.bf16.msra.mxu0 0
        %698 = vmatprep.subr.bf16.mxu0 0
        %699 = vmatpush1.bf16.msra.mxu0 0
        %700 = vmatprep.subr.bf16.mxu0 0
        %701 = vmatpush1.bf16.msra.mxu0 0
        %702 = vmatprep.subr.bf16.mxu0 0
        %703 = vmatpush1.bf16.msra.mxu0 0
        %704 = vmatprep.subr.bf16.mxu0 0
        %705 = vmatpush1.bf16.msra.mxu0 0
        %706 = vmatprep.subr.bf16.mxu0 0
        %707 = vmatpush1.bf16.msra.mxu0 0
        %708 = vmatprep.subr.bf16.mxu0 0
        %709 = vmatpush1.bf16.msra.mxu0 0
        %710 = vmatprep.subr.bf16.mxu0 0
        %711 = vmatpush1.bf16.msra.mxu0 0
        %712 = vmatprep.subr.bf16.mxu0 0
        %713 = vmatpush1.bf16.msra.mxu0 0
        %714 = vmatprep.subr.bf16.mxu0 0
        %715 = vmatpush1.bf16.msra.mxu0 0
        %716 = vmatprep.subr.bf16.mxu0 0
        %717 = vmatpush1.bf16.msra.mxu0 0
        %718 = vmatprep.subr.bf16.mxu0 0
        %719 = vmatpush1.bf16.msra.mxu0 0
        %720 = vmatprep.subr.bf16.mxu0 0
        %721 = vmatpush1.bf16.msra.mxu0 0
        %722 = vmatprep.subr.bf16.mxu0 0
        %723 = vmatpush1.bf16.msra.mxu0 0
        %724 = vmatprep.mubr.bf16.mxu0 0
        %725 = vmatmul.mubr.bf16.gmra.mrb[0].mxu0 %v678
        %v726 = vpop.f32.mrb[0].mxu0
        %v727 = vadd.f32 0.0, %v726
        %v728 = vpop.f32.mrb[0].mxu0
        %v729 = vpop.f32.mrb[0].mxu0
        %v730 = vadd.f32 0.0, %v729
        %v731 = vpop.f32.mrb[0].mxu0
        %732 = vmatprep.mubr.bf16.mxu0 0
        %733 = vmatmul.mubr.bf16.gmra.mrb[0].mxu0 %v681
        %v734 = vpop.f32.mrb[0].mxu0
        %v735 = vadd.f32 0.0, %v734
        %v736 = vpop.f32.mrb[0].mxu0
        %v737 = vpop.f32.mrb[0].mxu0
        %v738 = vadd.f32 0.0, %v737
        %v739 = vpop.f32.mrb[0].mxu0
        %740 = vmatprep.mubr.bf16.mxu0 0
        %741 = vmatmul.mubr.bf16.gmra.mrb[0].mxu0 %v684
        %v742 = vpop.f32.mrb[0].mxu0
        %v743 = vadd.f32 0.0, %v742
        %v744 = vpop.f32.mrb[0].mxu0
        %v745 = vpop.f32.mrb[0].mxu0
        %v746 = vadd.f32 0.0, %v745
        %v747 = vpop.f32.mrb[0].mxu0
        %748 = vmatprep.mubr.bf16.mxu0 0
        %749 = vmatmul.mubr.bf16.gmra.mrb[0].mxu0 %v687
        %v750 = vpop.f32.mrb[0].mxu0
        %v751 = vadd.f32 0.0, %v750
        %v752 = vpop.f32.mrb[0].mxu0
        %v753 = vpop.f32.mrb[0].mxu0
        %v754 = vadd.f32 0.0, %v753
        %v755 = vpop.f32.mrb[0].mxu0
        %756 = vdwg.mxu0
        %v757 = vld [vmem:[#allocation3] sm:$0xff]
        %v758 = vld [vmem:[#allocation3 + $0x8] sm:$0xff]
        %v759 = vld [vmem:[#allocation3 + $0x10] sm:$0xff]
        %v760 = vld [vmem:[#allocation3 + $0x18] sm:$0xff]
        %v761 = vld [vmem:[#allocation3 + $0x20] sm:$0xff]
        %v762 = vld [vmem:[#allocation3 + $0x28] sm:$0xff]
        %v763 = vld [vmem:[#allocation3 + $0x30] sm:$0xff]
        %v764 = vld [vmem:[#allocation3 + $0x38] sm:$0xff]
        %v765 = vadd.f32 %v757, %v727
        %v766 = vadd.f32 %v758, %v730
        %v767 = vadd.f32 %v759, %v735
        %v768 = vadd.f32 %v760, %v738
        %v769 = vadd.f32 %v761, %v743
        %v770 = vadd.f32 %v762, %v746
        %v771 = vadd.f32 %v763, %v751
        %v772 = vadd.f32 %v764, %v754
        %773 = vst.msk [vmem:[#allocation3] sm:$0xff] %vm498, %v765
        %774 = vst.msk [vmem:[#allocation3 + $0x8] sm:$0xff] %vm498, %v766
        %775 = vst.msk [vmem:[#allocation3 + $0x10] sm:$0xff] %vm498, %v767
        %776 = vst.msk [vmem:[#allocation3 + $0x18] sm:$0xff] %vm498, %v768
        %777 = vst.msk [vmem:[#allocation3 + $0x20] sm:$0xff] %vm498, %v769
        %778 = vst.msk [vmem:[#allocation3 + $0x28] sm:$0xff] %vm498, %v770
        %779 = vst.msk [vmem:[#allocation3 + $0x30] sm:$0xff] %vm498, %v771
        %780 = vst.msk [vmem:[#allocation3 + $0x38] sm:$0xff] %vm498, %v772
        %v781 = vld [vmem:[#allocation2] sm:$0xfe]
        %v782 = vld [vmem:[#allocation2 + $0x8] sm:$0xff]
        %v783 = vld [vmem:[#allocation2 + $0x10] sm:$0xff]
        %v784 = vld [vmem:[#allocation2 + $0x18] sm:$0xff]
        %v785 = vld [vmem:[#allocation2 + $0x20] sm:$0x3]
        %s786 = scalar_lea.vmem [#allocation4], 6
        %v787 = vld [vmem:[%s786] sm:$0x3]
        %vm788 = vsmask.f32 6400
        %v790 = vshrl.u32 %v781, 16
        %v792 = vrot.slane %v790, 1
        %v793 = vshll.u32 %v781, 16
        %v795 = vrot.slane %v793, 2
        %v796 = vor.u32 %v792, %v795
        %v798 = vshrl.u32 %v782, 16
        %v800 = vrot.slane %v798, 1
        %v801 = vshll.u32 %v782, 16
        %v803 = vrot.slane %v801, 2
        %v804 = vor.u32 %v800, %v803
        %v805 = vsel %vm788, %v796, %v804
        %v807 = vshrl.u32 %v783, 16
        %v809 = vrot.slane %v807, 1
        %v810 = vshll.u32 %v783, 16
        %v812 = vrot.slane %v810, 2
        %v813 = vor.u32 %v809, %v812
        %v814 = vsel %vm788, %v804, %v813
        %v816 = vshrl.u32 %v784, 16
        %v818 = vrot.slane %v816, 1
        %v819 = vshll.u32 %v784, 16
        %v821 = vrot.slane %v819, 2
        %v822 = vor.u32 %v818, %v821
        %v823 = vsel %vm788, %v813, %v822
        %v825 = vshrl.u32 %v785, 16
        %v827 = vrot.slane %v825, 1
        %v828 = vshll.u32 %v785, 16
        %v830 = vrot.slane %v828, 2
        %v831 = vor.u32 %v827, %v830
        %v832 = vsel %vm788, %v822, %v831
        %v834 = vsel %vm398, %v805, 0
        %v837 = vsel %vm398, %v814, 0
        %v840 = vsel %vm398, %v823, 0
        %v843 = vsel %vm398, %v832, 0
        %v846 = vsel %vm429, %v787, 0
        %848 = vmatprep.subr.bf16.mxu0 0
        %849 = vmatpush1.bf16.msra.mxu0 %v846
        %850 = vmatprep.subr.bf16.mxu0 0
        %851 = vmatpush1.bf16.msra.mxu0 0
        %852 = vmatprep.subr.bf16.mxu0 0
        %853 = vmatpush1.bf16.msra.mxu0 0
        %854 = vmatprep.subr.bf16.mxu0 0
        %855 = vmatpush1.bf16.msra.mxu0 0
        %856 = vmatprep.subr.bf16.mxu0 0
        %857 = vmatpush1.bf16.msra.mxu0 0
        %858 = vmatprep.subr.bf16.mxu0 0
        %859 = vmatpush1.bf16.msra.mxu0 0
        %860 = vmatprep.subr.bf16.mxu0 0
        %861 = vmatpush1.bf16.msra.mxu0 0
        %862 = vmatprep.subr.bf16.mxu0 0
        %863 = vmatpush1.bf16.msra.mxu0 0
        %864 = vmatprep.subr.bf16.mxu0 0
        %865 = vmatpush1.bf16.msra.mxu0 0
        %866 = vmatprep.subr.bf16.mxu0 0
        %867 = vmatpush1.bf16.msra.mxu0 0
        %868 = vmatprep.subr.bf16.mxu0 0
        %869 = vmatpush1.bf16.msra.mxu0 0
        %870 = vmatprep.subr.bf16.mxu0 0
        %871 = vmatpush1.bf16.msra.mxu0 0
        %872 = vmatprep.subr.bf16.mxu0 0
        %873 = vmatpush1.bf16.msra.mxu0 0
        %874 = vmatprep.subr.bf16.mxu0 0
        %875 = vmatpush1.bf16.msra.mxu0 0
        %876 = vmatprep.subr.bf16.mxu0 0
        %877 = vmatpush1.bf16.msra.mxu0 0
        %878 = vmatprep.subr.bf16.mxu0 0
        %879 = vmatpush1.bf16.msra.mxu0 0
        %880 = vmatprep.mubr.bf16.mxu0 0
        %881 = vmatmul.mubr.bf16.gmra.mrb[0].mxu0 %v834
        %v882 = vpop.f32.mrb[0].mxu0
        %v883 = vadd.f32 0.0, %v882
        %v884 = vpop.f32.mrb[0].mxu0
        %v885 = vpop.f32.mrb[0].mxu0
        %v886 = vadd.f32 0.0, %v885
        %v887 = vpop.f32.mrb[0].mxu0
        %888 = vmatprep.mubr.bf16.mxu0 0
        %889 = vmatmul.mubr.bf16.gmra.mrb[0].mxu0 %v837
        %v890 = vpop.f32.mrb[0].mxu0
        %v891 = vadd.f32 0.0, %v890
        %v892 = vpop.f32.mrb[0].mxu0
        %v893 = vpop.f32.mrb[0].mxu0
        %v894 = vadd.f32 0.0, %v893
        %v895 = vpop.f32.mrb[0].mxu0
        %896 = vmatprep.mubr.bf16.mxu0 0
        %897 = vmatmul.mubr.bf16.gmra.mrb[0].mxu0 %v840
        %v898 = vpop.f32.mrb[0].mxu0
        %v899 = vadd.f32 0.0, %v898
        %v900 = vpop.f32.mrb[0].mxu0
        %v901 = vpop.f32.mrb[0].mxu0
        %v902 = vadd.f32 0.0, %v901
        %v903 = vpop.f32.mrb[0].mxu0
        %904 = vmatprep.mubr.bf16.mxu0 0
        %905 = vmatmul.mubr.bf16.gmra.mrb[0].mxu0 %v843
        %v906 = vpop.f32.mrb[0].mxu0
        %v907 = vadd.f32 0.0, %v906
        %v908 = vpop.f32.mrb[0].mxu0
        %v909 = vpop.f32.mrb[0].mxu0
        %v910 = vadd.f32 0.0, %v909
        %v911 = vpop.f32.mrb[0].mxu0
        %912 = vdwg.mxu0
        %v913 = vld [vmem:[#allocation3] sm:$0xff]
        %v914 = vld [vmem:[#allocation3 + $0x8] sm:$0xff]
        %v915 = vld [vmem:[#allocation3 + $0x10] sm:$0xff]
        %v916 = vld [vmem:[#allocation3 + $0x18] sm:$0xff]
        %v917 = vld [vmem:[#allocation3 + $0x20] sm:$0xff]
        %v918 = vld [vmem:[#allocation3 + $0x28] sm:$0xff]
        %v919 = vld [vmem:[#allocation3 + $0x30] sm:$0xff]
        %v920 = vld [vmem:[#allocation3 + $0x38] sm:$0xff]
        %v921 = vadd.f32 %v913, %v883
        %v922 = vadd.f32 %v914, %v886
        %v923 = vadd.f32 %v915, %v891
        %v924 = vadd.f32 %v916, %v894
        %v925 = vadd.f32 %v917, %v899
        %v926 = vadd.f32 %v918, %v902
        %v927 = vadd.f32 %v919, %v907
        %v928 = vadd.f32 %v920, %v910
        %929 = vst.msk [vmem:[#allocation3] sm:$0xff] %vm498, %v921
        %930 = vst.msk [vmem:[#allocation3 + $0x8] sm:$0xff] %vm498, %v922
        %931 = vst.msk [vmem:[#allocation3 + $0x10] sm:$0xff] %vm498, %v923
        %932 = vst.msk [vmem:[#allocation3 + $0x18] sm:$0xff] %vm498, %v924
        %933 = vst.msk [vmem:[#allocation3 + $0x20] sm:$0xff] %vm498, %v925
        %934 = vst.msk [vmem:[#allocation3 + $0x28] sm:$0xff] %vm498, %v926
        %935 = vst.msk [vmem:[#allocation3 + $0x30] sm:$0xff] %vm498, %v927
        %936 = vst.msk [vmem:[#allocation3 + $0x38] sm:$0xff] %vm498, %v928
        %v937 = vld [vmem:[#allocation2] sm:$0xfc]
        %v938 = vld [vmem:[#allocation2 + $0x8] sm:$0xff]
        %v939 = vld [vmem:[#allocation2 + $0x10] sm:$0xff]
        %v940 = vld [vmem:[#allocation2 + $0x18] sm:$0xff]
        %v941 = vld [vmem:[#allocation2 + $0x20] sm:$0x3]
        %s942 = scalar_lea.vmem [#allocation4], 8
        %v943 = vld [vmem:[%s942] sm:$0x3]
        %vm949 = vcmask 1045504
        %v950 = vrot.slane %v937, 2
        %v951 = vrot.slane %v938, 2
        %v952 = vsel %vm949, %v950, %v951
        %v953 = vrot.slane %v939, 2
        %v954 = vsel %vm949, %v951, %v953
        %v955 = vrot.slane %v940, 2
        %v956 = vsel %vm949, %v953, %v955
        %v957 = vrot.slane %v941, 2
        %v958 = vsel %vm949, %v955, %v957
        %v960 = vsel %vm398, %v952, 0
        %v963 = vsel %vm398, %v954, 0
        %v966 = vsel %vm398, %v956, 0
        %v969 = vsel %vm398, %v958, 0
        %v972 = vsel %vm429, %v943, 0
        %974 = vmatprep.subr.bf16.mxu0 0
        %975 = vmatpush1.bf16.msra.mxu0 %v972
        %976 = vmatprep.subr.bf16.mxu0 0
        %977 = vmatpush1.bf16.msra.mxu0 0
        %978 = vmatprep.subr.bf16.mxu0 0
        %979 = vmatpush1.bf16.msra.mxu0 0
        %980 = vmatprep.subr.bf16.mxu0 0
        %981 = vmatpush1.bf16.msra.mxu0 0
        %982 = vmatprep.subr.bf16.mxu0 0
        %983 = vmatpush1.bf16.msra.mxu0 0
        %984 = vmatprep.subr.bf16.mxu0 0
        %985 = vmatpush1.bf16.msra.mxu0 0
        %986 = vmatprep.subr.bf16.mxu0 0
        %987 = vmatpush1.bf16.msra.mxu0 0
        %988 = vmatprep.subr.bf16.mxu0 0
        %989 = vmatpush1.bf16.msra.mxu0 0
        %990 = vmatprep.subr.bf16.mxu0 0
        %991 = vmatpush1.bf16.msra.mxu0 0
        %992 = vmatprep.subr.bf16.mxu0 0
        %993 = vmatpush1.bf16.msra.mxu0 0
        %994 = vmatprep.subr.bf16.mxu0 0
        %995 = vmatpush1.bf16.msra.mxu0 0
        %996 = vmatprep.subr.bf16.mxu0 0
        %997 = vmatpush1.bf16.msra.mxu0 0
        %998 = vmatprep.subr.bf16.mxu0 0
        %999 = vmatpush1.bf16.msra.mxu0 0
        %1000 = vmatprep.subr.bf16.mxu0 0
        %1001 = vmatpush1.bf16.msra.mxu0 0
        %1002 = vmatprep.subr.bf16.mxu0 0
        %1003 = vmatpush1.bf16.msra.mxu0 0
        %1004 = vmatprep.subr.bf16.mxu0 0
        %1005 = vmatpush1.bf16.msra.mxu0 0
        %1006 = vmatprep.mubr.bf16.mxu0 0
        %1007 = vmatmul.mubr.bf16.gmra.mrb[0].mxu0 %v960
        %v1008 = vpop.f32.mrb[0].mxu0
        %v1009 = vadd.f32 0.0, %v1008
        %v1010 = vpop.f32.mrb[0].mxu0
        %v1011 = vpop.f32.mrb[0].mxu0
        %v1012 = vadd.f32 0.0, %v1011
        %v1013 = vpop.f32.mrb[0].mxu0
        %1014 = vmatprep.mubr.bf16.mxu0 0
        %1015 = vmatmul.mubr.bf16.gmra.mrb[0].mxu0 %v963
        %v1016 = vpop.f32.mrb[0].mxu0
        %v1017 = vadd.f32 0.0, %v1016
        %v1018 = vpop.f32.mrb[0].mxu0
        %v1019 = vpop.f32.mrb[0].mxu0
        %v1020 = vadd.f32 0.0, %v1019
        %v1021 = vpop.f32.mrb[0].mxu0
        %1022 = vmatprep.mubr.bf16.mxu0 0
        %1023 = vmatmul.mubr.bf16.gmra.mrb[0].mxu0 %v966
        %v1024 = vpop.f32.mrb[0].mxu0
        %v1025 = vadd.f32 0.0, %v1024
        %v1026 = vpop.f32.mrb[0].mxu0
        %v1027 = vpop.f32.mrb[0].mxu0
        %v1028 = vadd.f32 0.0, %v1027
        %v1029 = vpop.f32.mrb[0].mxu0
        %1030 = vmatprep.mubr.bf16.mxu0 0
        %1031 = vmatmul.mubr.bf16.gmra.mrb[0].mxu0 %v969
        %v1032 = vpop.f32.mrb[0].mxu0
        %v1033 = vadd.f32 0.0, %v1032
        %v1034 = vpop.f32.mrb[0].mxu0
        %v1035 = vpop.f32.mrb[0].mxu0
        %v1036 = vadd.f32 0.0, %v1035
        %v1037 = vpop.f32.mrb[0].mxu0
        %1038 = vdwg.mxu0
        %v1039 = vld [vmem:[#allocation3] sm:$0xff]
        %v1040 = vld [vmem:[#allocation3 + $0x8] sm:$0xff]
        %v1041 = vld [vmem:[#allocation3 + $0x10] sm:$0xff]
        %v1042 = vld [vmem:[#allocation3 + $0x18] sm:$0xff]
        %v1043 = vld [vmem:[#allocation3 + $0x20] sm:$0xff]
        %v1044 = vld [vmem:[#allocation3 + $0x28] sm:$0xff]
        %v1045 = vld [vmem:[#allocation3 + $0x30] sm:$0xff]
        %v1046 = vld [vmem:[#allocation3 + $0x38] sm:$0xff]
        %v1047 = vadd.f32 %v1039, %v1009
        %v1048 = vadd.f32 %v1040, %v1012
        %v1049 = vadd.f32 %v1041, %v1017
        %v1050 = vadd.f32 %v1042, %v1020
        %v1051 = vadd.f32 %v1043, %v1025
        %v1052 = vadd.f32 %v1044, %v1028
        %v1053 = vadd.f32 %v1045, %v1033
        %v1054 = vadd.f32 %v1046, %v1036
        %1055 = vst.msk [vmem:[#allocation3] sm:$0xff] %vm498, %v1047
        %1056 = vst.msk [vmem:[#allocation3 + $0x8] sm:$0xff] %vm498, %v1048
        %1057 = vst.msk [vmem:[#allocation3 + $0x10] sm:$0xff] %vm498, %v1049
        %1058 = vst.msk [vmem:[#allocation3 + $0x18] sm:$0xff] %vm498, %v1050
        %1059 = vst.msk [vmem:[#allocation3 + $0x20] sm:$0xff] %vm498, %v1051
        %1060 = vst.msk [vmem:[#allocation3 + $0x28] sm:$0xff] %vm498, %v1052
        %1061 = vst.msk [vmem:[#allocation3 + $0x30] sm:$0xff] %vm498, %v1053
        %1062 = vst.msk [vmem:[#allocation3 + $0x38] sm:$0xff] %vm498, %v1054
        %v1063 = vld [vmem:[#allocation2] sm:$0xfc]
        %v1064 = vld [vmem:[#allocation2 + $0x8] sm:$0xff]
        %v1065 = vld [vmem:[#allocation2 + $0x10] sm:$0xff]
        %v1066 = vld [vmem:[#allocation2 + $0x18] sm:$0xff]
        %v1067 = vld [vmem:[#allocation2 + $0x20] sm:$0x7]
        %s1068 = scalar_lea.vmem [#allocation4], 10
        %v1069 = vld [vmem:[%s1068] sm:$0x3]
        %vm1070 = vsmask.f32 5376
        %v1072 = vshrl.u32 %v1063, 16
        %v1074 = vrot.slane %v1072, 2
        %v1075 = vshll.u32 %v1063, 16
        %v1077 = vrot.slane %v1075, 3
        %v1078 = vor.u32 %v1074, %v1077
        %v1080 = vshrl.u32 %v1064, 16
        %v1082 = vrot.slane %v1080, 2
        %v1083 = vshll.u32 %v1064, 16
        %v1085 = vrot.slane %v1083, 3
        %v1086 = vor.u32 %v1082, %v1085
        %v1087 = vsel %vm1070, %v1078, %v1086
        %v1089 = vshrl.u32 %v1065, 16
        %v1091 = vrot.slane %v1089, 2
        %v1092 = vshll.u32 %v1065, 16
        %v1094 = vrot.slane %v1092, 3
        %v1095 = vor.u32 %v1091, %v1094
        %v1096 = vsel %vm1070, %v1086, %v1095
        %v1098 = vshrl.u32 %v1066, 16
        %v1100 = vrot.slane %v1098, 2
        %v1101 = vshll.u32 %v1066, 16
        %v1103 = vrot.slane %v1101, 3
        %v1104 = vor.u32 %v1100, %v1103
        %v1105 = vsel %vm1070, %v1095, %v1104
        %v1107 = vshrl.u32 %v1067, 16
        %v1109 = vrot.slane %v1107, 2
        %v1110 = vshll.u32 %v1067, 16
        %v1112 = vrot.slane %v1110, 3
        %v1113 = vor.u32 %v1109, %v1112
        %v1114 = vsel %vm1070, %v1104, %v1113
        %v1116 = vsel %vm398, %v1087, 0
        %v1119 = vsel %vm398, %v1096, 0
        %v1122 = vsel %vm398, %v1105, 0
        %v1125 = vsel %vm398, %v1114, 0
        %v1128 = vsel %vm429, %v1069, 0
        %1130 = vmatprep.subr.bf16.mxu0 0
        %1131 = vmatpush1.bf16.msra.mxu0 %v1128
        %1132 = vmatprep.subr.bf16.mxu0 0
        %1133 = vmatpush1.bf16.msra.mxu0 0
        %1134 = vmatprep.subr.bf16.mxu0 0
        %1135 = vmatpush1.bf16.msra.mxu0 0
        %1136 = vmatprep.subr.bf16.mxu0 0
        %1137 = vmatpush1.bf16.msra.mxu0 0
        %1138 = vmatprep.subr.bf16.mxu0 0
        %1139 = vmatpush1.bf16.msra.mxu0 0
        %1140 = vmatprep.subr.bf16.mxu0 0
        %1141 = vmatpush1.bf16.msra.mxu0 0
        %1142 = vmatprep.subr.bf16.mxu0 0
        %1143 = vmatpush1.bf16.msra.mxu0 0
        %1144 = vmatprep.subr.bf16.mxu0 0
        %1145 = vmatpush1.bf16.msra.mxu0 0
        %1146 = vmatprep.subr.bf16.mxu0 0
        %1147 = vmatpush1.bf16.msra.mxu0 0
        %1148 = vmatprep.subr.bf16.mxu0 0
        %1149 = vmatpush1.bf16.msra.mxu0 0
        %1150 = vmatprep.subr.bf16.mxu0 0
        %1151 = vmatpush1.bf16.msra.mxu0 0
        %1152 = vmatprep.subr.bf16.mxu0 0
        %1153 = vmatpush1.bf16.msra.mxu0 0
        %1154 = vmatprep.subr.bf16.mxu0 0
        %1155 = vmatpush1.bf16.msra.mxu0 0
        %1156 = vmatprep.subr.bf16.mxu0 0
        %1157 = vmatpush1.bf16.msra.mxu0 0
        %1158 = vmatprep.subr.bf16.mxu0 0
        %1159 = vmatpush1.bf16.msra.mxu0 0
        %1160 = vmatprep.subr.bf16.mxu0 0
        %1161 = vmatpush1.bf16.msra.mxu0 0
        %1162 = vmatprep.mubr.bf16.mxu0 0
        %1163 = vmatmul.mubr.bf16.gmra.mrb[0].mxu0 %v1116
        %v1164 = vpop.f32.mrb[0].mxu0
        %v1165 = vadd.f32 0.0, %v1164
        %v1166 = vpop.f32.mrb[0].mxu0
        %v1167 = vpop.f32.mrb[0].mxu0
        %v1168 = vadd.f32 0.0, %v1167
        %v1169 = vpop.f32.mrb[0].mxu0
        %1170 = vmatprep.mubr.bf16.mxu0 0
        %1171 = vmatmul.mubr.bf16.gmra.mrb[0].mxu0 %v1119
        %v1172 = vpop.f32.mrb[0].mxu0
        %v1173 = vadd.f32 0.0, %v1172
        %v1174 = vpop.f32.mrb[0].mxu0
        %v1175 = vpop.f32.mrb[0].mxu0
        %v1176 = vadd.f32 0.0, %v1175
        %v1177 = vpop.f32.mrb[0].mxu0
        %1178 = vmatprep.mubr.bf16.mxu0 0
        %1179 = vmatmul.mubr.bf16.gmra.mrb[0].mxu0 %v1122
        %v1180 = vpop.f32.mrb[0].mxu0
        %v1181 = vadd.f32 0.0, %v1180
        %v1182 = vpop.f32.mrb[0].mxu0
        %v1183 = vpop.f32.mrb[0].mxu0
        %v1184 = vadd.f32 0.0, %v1183
        %v1185 = vpop.f32.mrb[0].mxu0
        %1186 = vmatprep.mubr.bf16.mxu0 0
        %1187 = vmatmul.mubr.bf16.gmra.mrb[0].mxu0 %v1125
        %v1188 = vpop.f32.mrb[0].mxu0
        %v1189 = vadd.f32 0.0, %v1188
        %v1190 = vpop.f32.mrb[0].mxu0
        %v1191 = vpop.f32.mrb[0].mxu0
        %v1192 = vadd.f32 0.0, %v1191
        %v1193 = vpop.f32.mrb[0].mxu0
        %1194 = vdwg.mxu0
        %v1195 = vld [vmem:[#allocation3] sm:$0xff]
        %v1196 = vld [vmem:[#allocation3 + $0x8] sm:$0xff]
        %v1197 = vld [vmem:[#allocation3 + $0x10] sm:$0xff]
        %v1198 = vld [vmem:[#allocation3 + $0x18] sm:$0xff]
        %v1199 = vld [vmem:[#allocation3 + $0x20] sm:$0xff]
        %v1200 = vld [vmem:[#allocation3 + $0x28] sm:$0xff]
        %v1201 = vld [vmem:[#allocation3 + $0x30] sm:$0xff]
        %v1202 = vld [vmem:[#allocation3 + $0x38] sm:$0xff]
        %v1203 = vadd.f32 %v1195, %v1165
        %v1204 = vadd.f32 %v1196, %v1168
        %v1205 = vadd.f32 %v1197, %v1173
        %v1206 = vadd.f32 %v1198, %v1176
        %v1207 = vadd.f32 %v1199, %v1181
        %v1208 = vadd.f32 %v1200, %v1184
        %v1209 = vadd.f32 %v1201, %v1189
        %v1210 = vadd.f32 %v1202, %v1192
        %1211 = vst.msk [vmem:[#allocation3] sm:$0xff] %vm498, %v1203
        %1212 = vst.msk [vmem:[#allocation3 + $0x8] sm:$0xff] %vm498, %v1204
        %1213 = vst.msk [vmem:[#allocation3 + $0x10] sm:$0xff] %vm498, %v1205
        %1214 = vst.msk [vmem:[#allocation3 + $0x18] sm:$0xff] %vm498, %v1206
        %1215 = vst.msk [vmem:[#allocation3 + $0x20] sm:$0xff] %vm498, %v1207
        %1216 = vst.msk [vmem:[#allocation3 + $0x28] sm:$0xff] %vm498, %v1208
        %1217 = vst.msk [vmem:[#allocation3 + $0x30] sm:$0xff] %vm498, %v1209
        %1218 = vst.msk [vmem:[#allocation3 + $0x38] sm:$0xff] %vm498, %v1210
        %v1219 = vld [vmem:[#allocation2] sm:$0xf8]
        %v1220 = vld [vmem:[#allocation2 + $0x8] sm:$0xff]
        %v1221 = vld [vmem:[#allocation2 + $0x10] sm:$0xff]
        %v1222 = vld [vmem:[#allocation2 + $0x18] sm:$0xff]
        %v1223 = vld [vmem:[#allocation2 + $0x20] sm:$0x7]
        %s1224 = scalar_lea.vmem [#allocation4], 12
        %v1225 = vld [vmem:[%s1224] sm:$0x3]
        %vm1231 = vcmask 1044480
        %v1232 = vrot.slane %v1219, 3
        %v1233 = vrot.slane %v1220, 3
        %v1234 = vsel %vm1231, %v1232, %v1233
        %v1235 = vrot.slane %v1221, 3
        %v1236 = vsel %vm1231, %v1233, %v1235
        %v1237 = vrot.slane %v1222, 3
        %v1238 = vsel %vm1231, %v1235, %v1237
        %v1239 = vrot.slane %v1223, 3
        %v1240 = vsel %vm1231, %v1237, %v1239
        %v1242 = vsel %vm398, %v1234, 0
        %v1245 = vsel %vm398, %v1236, 0
        %v1248 = vsel %vm398, %v1238, 0
        %v1251 = vsel %vm398, %v1240, 0
        %v1254 = vsel %vm429, %v1225, 0
        %1256 = vmatprep.subr.bf16.mxu0 0
        %1257 = vmatpush1.bf16.msra.mxu0 %v1254
        %1258 = vmatprep.subr.bf16.mxu0 0
        %1259 = vmatpush1.bf16.msra.mxu0 0
        %1260 = vmatprep.subr.bf16.mxu0 0
        %1261 = vmatpush1.bf16.msra.mxu0 0
        %1262 = vmatprep.subr.bf16.mxu0 0
        %1263 = vmatpush1.bf16.msra.mxu0 0
        %1264 = vmatprep.subr.bf16.mxu0 0
        %1265 = vmatpush1.bf16.msra.mxu0 0
        %1266 = vmatprep.subr.bf16.mxu0 0
        %1267 = vmatpush1.bf16.msra.mxu0 0
        %1268 = vmatprep.subr.bf16.mxu0 0
        %1269 = vmatpush1.bf16.msra.mxu0 0
        %1270 = vmatprep.subr.bf16.mxu0 0
        %1271 = vmatpush1.bf16.msra.mxu0 0
        %1272 = vmatprep.subr.bf16.mxu0 0
        %1273 = vmatpush1.bf16.msra.mxu0 0
        %1274 = vmatprep.subr.bf16.mxu0 0
        %1275 = vmatpush1.bf16.msra.mxu0 0
        %1276 = vmatprep.subr.bf16.mxu0 0
        %1277 = vmatpush1.bf16.msra.mxu0 0
        %1278 = vmatprep.subr.bf16.mxu0 0
        %1279 = vmatpush1.bf16.msra.mxu0 0
        %1280 = vmatprep.subr.bf16.mxu0 0
        %1281 = vmatpush1.bf16.msra.mxu0 0
        %1282 = vmatprep.subr.bf16.mxu0 0
        %1283 = vmatpush1.bf16.msra.mxu0 0
        %1284 = vmatprep.subr.bf16.mxu0 0
        %1285 = vmatpush1.bf16.msra.mxu0 0
        %1286 = vmatprep.subr.bf16.mxu0 0
        %1287 = vmatpush1.bf16.msra.mxu0 0
        %1288 = vmatprep.mubr.bf16.mxu0 0
        %1289 = vmatmul.mubr.bf16.gmra.mrb[0].mxu0 %v1242
        %v1290 = vpop.f32.mrb[0].mxu0
        %v1291 = vadd.f32 0.0, %v1290
        %v1292 = vpop.f32.mrb[0].mxu0
        %v1293 = vpop.f32.mrb[0].mxu0
        %v1294 = vadd.f32 0.0, %v1293
        %v1295 = vpop.f32.mrb[0].mxu0
        %1296 = vmatprep.mubr.bf16.mxu0 0
        %1297 = vmatmul.mubr.bf16.gmra.mrb[0].mxu0 %v1245
        %v1298 = vpop.f32.mrb[0].mxu0
        %v1299 = vadd.f32 0.0, %v1298
        %v1300 = vpop.f32.mrb[0].mxu0
        %v1301 = vpop.f32.mrb[0].mxu0
        %v1302 = vadd.f32 0.0, %v1301
        %v1303 = vpop.f32.mrb[0].mxu0
        %1304 = vmatprep.mubr.bf16.mxu0 0
        %1305 = vmatmul.mubr.bf16.gmra.mrb[0].mxu0 %v1248
        %v1306 = vpop.f32.mrb[0].mxu0
        %v1307 = vadd.f32 0.0, %v1306
        %v1308 = vpop.f32.mrb[0].mxu0
        %v1309 = vpop.f32.mrb[0].mxu0
        %v1310 = vadd.f32 0.0, %v1309
        %v1311 = vpop.f32.mrb[0].mxu0
        %1312 = vmatprep.mubr.bf16.mxu0 0
        %1313 = vmatmul.mubr.bf16.gmra.mrb[0].mxu0 %v1251
        %v1314 = vpop.f32.mrb[0].mxu0
        %v1315 = vadd.f32 0.0, %v1314
        %v1316 = vpop.f32.mrb[0].mxu0
        %v1317 = vpop.f32.mrb[0].mxu0
        %v1318 = vadd.f32 0.0, %v1317
        %v1319 = vpop.f32.mrb[0].mxu0
        %1320 = vdwg.mxu0
        %v1321 = vld [vmem:[#allocation3] sm:$0xff]
        %v1322 = vld [vmem:[#allocation3 + $0x8] sm:$0xff]
        %v1323 = vld [vmem:[#allocation3 + $0x10] sm:$0xff]
        %v1324 = vld [vmem:[#allocation3 + $0x18] sm:$0xff]
        %v1325 = vld [vmem:[#allocation3 + $0x20] sm:$0xff]
        %v1326 = vld [vmem:[#allocation3 + $0x28] sm:$0xff]
        %v1327 = vld [vmem:[#allocation3 + $0x30] sm:$0xff]
        %v1328 = vld [vmem:[#allocation3 + $0x38] sm:$0xff]
        %v1329 = vadd.f32 %v1321, %v1291
        %v1330 = vadd.f32 %v1322, %v1294
        %v1331 = vadd.f32 %v1323, %v1299
        %v1332 = vadd.f32 %v1324, %v1302
        %v1333 = vadd.f32 %v1325, %v1307
        %v1334 = vadd.f32 %v1326, %v1310
        %v1335 = vadd.f32 %v1327, %v1315
        %v1336 = vadd.f32 %v1328, %v1318
        %1337 = vst.msk [vmem:[#allocation3] sm:$0xff] %vm498, %v1329
        %1338 = vst.msk [vmem:[#allocation3 + $0x8] sm:$0xff] %vm498, %v1330
        %1339 = vst.msk [vmem:[#allocation3 + $0x10] sm:$0xff] %vm498, %v1331
        %1340 = vst.msk [vmem:[#allocation3 + $0x18] sm:$0xff] %vm498, %v1332
        %1341 = vst.msk [vmem:[#allocation3 + $0x20] sm:$0xff] %vm498, %v1333
        %1342 = vst.msk [vmem:[#allocation3 + $0x28] sm:$0xff] %vm498, %v1334
        %1343 = vst.msk [vmem:[#allocation3 + $0x30] sm:$0xff] %vm498, %v1335
        %1344 = vst.msk [vmem:[#allocation3 + $0x38] sm:$0xff] %vm498, %v1336
        %v1345 = vld [vmem:[#allocation2] sm:$0xf8]
        %v1346 = vld [vmem:[#allocation2 + $0x8] sm:$0xff]
        %v1347 = vld [vmem:[#allocation2 + $0x10] sm:$0xff]
        %v1348 = vld [vmem:[#allocation2 + $0x18] sm:$0xff]
        %v1349 = vld [vmem:[#allocation2 + $0x20] sm:$0xf]
        %s1350 = scalar_lea.vmem [#allocation4], 14
        %v1351 = vld [vmem:[%s1350] sm:$0x3]
        %vm1352 = vsmask.f32 4352
        %v1354 = vshrl.u32 %v1345, 16
        %v1356 = vrot.slane %v1354, 3
        %v1357 = vshll.u32 %v1345, 16
        %v1359 = vrot.slane %v1357, 4
        %v1360 = vor.u32 %v1356, %v1359
        %v1362 = vshrl.u32 %v1346, 16
        %v1364 = vrot.slane %v1362, 3
        %v1365 = vshll.u32 %v1346, 16
        %v1367 = vrot.slane %v1365, 4
        %v1368 = vor.u32 %v1364, %v1367
        %v1369 = vsel %vm1352, %v1360, %v1368
        %v1371 = vshrl.u32 %v1347, 16
        %v1373 = vrot.slane %v1371, 3
        %v1374 = vshll.u32 %v1347, 16
        %v1376 = vrot.slane %v1374, 4
        %v1377 = vor.u32 %v1373, %v1376
        %v1378 = vsel %vm1352, %v1368, %v1377
        %v1380 = vshrl.u32 %v1348, 16
        %v1382 = vrot.slane %v1380, 3
        %v1383 = vshll.u32 %v1348, 16
        %v1385 = vrot.slane %v1383, 4
        %v1386 = vor.u32 %v1382, %v1385
        %v1387 = vsel %vm1352, %v1377, %v1386
        %v1389 = vshrl.u32 %v1349, 16
        %v1391 = vrot.slane %v1389, 3
        %v1392 = vshll.u32 %v1349, 16
        %v1394 = vrot.slane %v1392, 4
        %v1395 = vor.u32 %v1391, %v1394
        %v1396 = vsel %vm1352, %v1386, %v1395
        %v1398 = vsel %vm398, %v1369, 0
        %v1401 = vsel %vm398, %v1378, 0
        %v1404 = vsel %vm398, %v1387, 0
        %v1407 = vsel %vm398, %v1396, 0
        %v1410 = vsel %vm429, %v1351, 0
        %1412 = vmatprep.subr.bf16.mxu0 0
        %1413 = vmatpush1.bf16.msra.mxu0 %v1410
        %1414 = vmatprep.subr.bf16.mxu0 0
        %1415 = vmatpush1.bf16.msra.mxu0 0
        %1416 = vmatprep.subr.bf16.mxu0 0
        %1417 = vmatpush1.bf16.msra.mxu0 0
        %1418 = vmatprep.subr.bf16.mxu0 0
        %1419 = vmatpush1.bf16.msra.mxu0 0
        %1420 = vmatprep.subr.bf16.mxu0 0
        %1421 = vmatpush1.bf16.msra.mxu0 0
        %1422 = vmatprep.subr.bf16.mxu0 0
        %1423 = vmatpush1.bf16.msra.mxu0 0
        %1424 = vmatprep.subr.bf16.mxu0 0
        %1425 = vmatpush1.bf16.msra.mxu0 0
        %1426 = vmatprep.subr.bf16.mxu0 0
        %1427 = vmatpush1.bf16.msra.mxu0 0
        %1428 = vmatprep.subr.bf16.mxu0 0
        %1429 = vmatpush1.bf16.msra.mxu0 0
        %1430 = vmatprep.subr.bf16.mxu0 0
        %1431 = vmatpush1.bf16.msra.mxu0 0
        %1432 = vmatprep.subr.bf16.mxu0 0
        %1433 = vmatpush1.bf16.msra.mxu0 0
        %1434 = vmatprep.subr.bf16.mxu0 0
        %1435 = vmatpush1.bf16.msra.mxu0 0
        %1436 = vmatprep.subr.bf16.mxu0 0
        %1437 = vmatpush1.bf16.msra.mxu0 0
        %1438 = vmatprep.subr.bf16.mxu0 0
        %1439 = vmatpush1.bf16.msra.mxu0 0
        %1440 = vmatprep.subr.bf16.mxu0 0
        %1441 = vmatpush1.bf16.msra.mxu0 0
        %1442 = vmatprep.subr.bf16.mxu0 0
        %1443 = vmatpush1.bf16.msra.mxu0 0
        %1444 = vmatprep.mubr.bf16.mxu0 0
        %1445 = vmatmul.mubr.bf16.gmra.mrb[0].mxu0 %v1398
        %v1446 = vpop.f32.mrb[0].mxu0
        %v1447 = vadd.f32 0.0, %v1446
        %v1448 = vpop.f32.mrb[0].mxu0
        %v1449 = vpop.f32.mrb[0].mxu0
        %v1450 = vadd.f32 0.0, %v1449
        %v1451 = vpop.f32.mrb[0].mxu0
        %1452 = vmatprep.mubr.bf16.mxu0 0
        %1453 = vmatmul.mubr.bf16.gmra.mrb[0].mxu0 %v1401
        %v1454 = vpop.f32.mrb[0].mxu0
        %v1455 = vadd.f32 0.0, %v1454
        %v1456 = vpop.f32.mrb[0].mxu0
        %v1457 = vpop.f32.mrb[0].mxu0
        %v1458 = vadd.f32 0.0, %v1457
        %v1459 = vpop.f32.mrb[0].mxu0
        %1460 = vmatprep.mubr.bf16.mxu0 0
        %1461 = vmatmul.mubr.bf16.gmra.mrb[0].mxu0 %v1404
        %v1462 = vpop.f32.mrb[0].mxu0
        %v1463 = vadd.f32 0.0, %v1462
        %v1464 = vpop.f32.mrb[0].mxu0
        %v1465 = vpop.f32.mrb[0].mxu0
        %v1466 = vadd.f32 0.0, %v1465
        %v1467 = vpop.f32.mrb[0].mxu0
        %1468 = vmatprep.mubr.bf16.mxu0 0
        %1469 = vmatmul.mubr.bf16.gmra.mrb[0].mxu0 %v1407
        %v1470 = vpop.f32.mrb[0].mxu0
        %v1471 = vadd.f32 0.0, %v1470
        %v1472 = vpop.f32.mrb[0].mxu0
        %v1473 = vpop.f32.mrb[0].mxu0
        %v1474 = vadd.f32 0.0, %v1473
        %v1475 = vpop.f32.mrb[0].mxu0
        %1476 = vdwg.mxu0
        %v1477 = vld [vmem:[#allocation3] sm:$0xff]
        %v1478 = vld [vmem:[#allocation3 + $0x8] sm:$0xff]
        %v1479 = vld [vmem:[#allocation3 + $0x10] sm:$0xff]
        %v1480 = vld [vmem:[#allocation3 + $0x18] sm:$0xff]
        %v1481 = vld [vmem:[#allocation3 + $0x20] sm:$0xff]
        %v1482 = vld [vmem:[#allocation3 + $0x28] sm:$0xff]
        %v1483 = vld [vmem:[#allocation3 + $0x30] sm:$0xff]
        %v1484 = vld [vmem:[#allocation3 + $0x38] sm:$0xff]
        %v1485 = vadd.f32 %v1477, %v1447
        %v1486 = vadd.f32 %v1478, %v1450
        %v1487 = vadd.f32 %v1479, %v1455
        %v1488 = vadd.f32 %v1480, %v1458
        %v1489 = vadd.f32 %v1481, %v1463
        %v1490 = vadd.f32 %v1482, %v1466
        %v1491 = vadd.f32 %v1483, %v1471
        %v1492 = vadd.f32 %v1484, %v1474
        %1493 = vst.msk [vmem:[#allocation3] sm:$0xff] %vm498, %v1485
        %1494 = vst.msk [vmem:[#allocation3 + $0x8] sm:$0xff] %vm498, %v1486
        %1495 = vst.msk [vmem:[#allocation3 + $0x10] sm:$0xff] %vm498, %v1487
        %1496 = vst.msk [vmem:[#allocation3 + $0x18] sm:$0xff] %vm498, %v1488
        %1497 = vst.msk [vmem:[#allocation3 + $0x20] sm:$0xff] %vm498, %v1489
        %1498 = vst.msk [vmem:[#allocation3 + $0x28] sm:$0xff] %vm498, %v1490
        %1499 = vst.msk [vmem:[#allocation3 + $0x30] sm:$0xff] %vm498, %v1491
        %1500 = vst.msk [vmem:[#allocation3 + $0x38] sm:$0xff] %vm498, %v1492
        %v1501 = vld [vmem:[#allocation2] sm:$0xf0]
        %v1502 = vld [vmem:[#allocation2 + $0x8] sm:$0xff]
        %v1503 = vld [vmem:[#allocation2 + $0x10] sm:$0xff]
        %v1504 = vld [vmem:[#allocation2 + $0x18] sm:$0xff]
        %v1505 = vld [vmem:[#allocation2 + $0x20] sm:$0xf]
        %s1506 = scalar_lea.vmem [#allocation4], 16
        %v1507 = vld [vmem:[%s1506] sm:$0x3]
        %vm1513 = vcmask 1043456
        %v1514 = vrot.slane %v1501, 4
        %v1515 = vrot.slane %v1502, 4
        %v1516 = vsel %vm1513, %v1514, %v1515
        %v1517 = vrot.slane %v1503, 4
        %v1518 = vsel %vm1513, %v1515, %v1517
        %v1519 = vrot.slane %v1504, 4
        %v1520 = vsel %vm1513, %v1517, %v1519
        %v1521 = vrot.slane %v1505, 4
        %v1522 = vsel %vm1513, %v1519, %v1521
        %v1524 = vsel %vm398, %v1516, 0
        %v1527 = vsel %vm398, %v1518, 0
        %v1530 = vsel %vm398, %v1520, 0
        %v1533 = vsel %vm398, %v1522, 0
        %v1536 = vsel %vm429, %v1507, 0
        %1538 = vmatprep.subr.bf16.mxu0 0
        %1539 = vmatpush1.bf16.msra.mxu0 %v1536
        %1540 = vmatprep.subr.bf16.mxu0 0
        %1541 = vmatpush1.bf16.msra.mxu0 0
        %1542 = vmatprep.subr.bf16.mxu0 0
        %1543 = vmatpush1.bf16.msra.mxu0 0
        %1544 = vmatprep.subr.bf16.mxu0 0
        %1545 = vmatpush1.bf16.msra.mxu0 0
        %1546 = vmatprep.subr.bf16.mxu0 0
        %1547 = vmatpush1.bf16.msra.mxu0 0
        %1548 = vmatprep.subr.bf16.mxu0 0
        %1549 = vmatpush1.bf16.msra.mxu0 0
        %1550 = vmatprep.subr.bf16.mxu0 0
        %1551 = vmatpush1.bf16.msra.mxu0 0
        %1552 = vmatprep.subr.bf16.mxu0 0
        %1553 = vmatpush1.bf16.msra.mxu0 0
        %1554 = vmatprep.subr.bf16.mxu0 0
        %1555 = vmatpush1.bf16.msra.mxu0 0
        %1556 = vmatprep.subr.bf16.mxu0 0
        %1557 = vmatpush1.bf16.msra.mxu0 0
        %1558 = vmatprep.subr.bf16.mxu0 0
        %1559 = vmatpush1.bf16.msra.mxu0 0
        %1560 = vmatprep.subr.bf16.mxu0 0
        %1561 = vmatpush1.bf16.msra.mxu0 0
        %1562 = vmatprep.subr.bf16.mxu0 0
        %1563 = vmatpush1.bf16.msra.mxu0 0
        %1564 = vmatprep.subr.bf16.mxu0 0
        %1565 = vmatpush1.bf16.msra.mxu0 0
        %1566 = vmatprep.subr.bf16.mxu0 0
        %1567 = vmatpush1.bf16.msra.mxu0 0
        %1568 = vmatprep.subr.bf16.mxu0 0
        %1569 = vmatpush1.bf16.msra.mxu0 0
        %1570 = vmatprep.mubr.bf16.mxu0 0
        %1571 = vmatmul.mubr.bf16.gmra.mrb[0].mxu0 %v1524
        %v1572 = vpop.f32.mrb[0].mxu0
        %v1573 = vadd.f32 0.0, %v1572
        %v1574 = vpop.f32.mrb[0].mxu0
        %v1575 = vpop.f32.mrb[0].mxu0
        %v1576 = vadd.f32 0.0, %v1575
        %v1577 = vpop.f32.mrb[0].mxu0
        %1578 = vmatprep.mubr.bf16.mxu0 0
        %1579 = vmatmul.mubr.bf16.gmra.mrb[0].mxu0 %v1527
        %v1580 = vpop.f32.mrb[0].mxu0
        %v1581 = vadd.f32 0.0, %v1580
        %v1582 = vpop.f32.mrb[0].mxu0
        %v1583 = vpop.f32.mrb[0].mxu0
        %v1584 = vadd.f32 0.0, %v1583
        %v1585 = vpop.f32.mrb[0].mxu0
        %1586 = vmatprep.mubr.bf16.mxu0 0
        %1587 = vmatmul.mubr.bf16.gmra.mrb[0].mxu0 %v1530
        %v1588 = vpop.f32.mrb[0].mxu0
        %v1589 = vadd.f32 0.0, %v1588
        %v1590 = vpop.f32.mrb[0].mxu0
        %v1591 = vpop.f32.mrb[0].mxu0
        %v1592 = vadd.f32 0.0, %v1591
        %v1593 = vpop.f32.mrb[0].mxu0
        %1594 = vmatprep.mubr.bf16.mxu0 0
        %1595 = vmatmul.mubr.bf16.gmra.mrb[0].mxu0 %v1533
        %v1596 = vpop.f32.mrb[0].mxu0
        %v1597 = vadd.f32 0.0, %v1596
        %v1598 = vpop.f32.mrb[0].mxu0
        %v1599 = vpop.f32.mrb[0].mxu0
        %v1600 = vadd.f32 0.0, %v1599
        %v1601 = vpop.f32.mrb[0].mxu0
        %1602 = vdwg.mxu0
        %v1603 = vld [vmem:[#allocation3] sm:$0xff]
        %v1604 = vld [vmem:[#allocation3 + $0x8] sm:$0xff]
        %v1605 = vld [vmem:[#allocation3 + $0x10] sm:$0xff]
        %v1606 = vld [vmem:[#allocation3 + $0x18] sm:$0xff]
        %v1607 = vld [vmem:[#allocation3 + $0x20] sm:$0xff]
        %v1608 = vld [vmem:[#allocation3 + $0x28] sm:$0xff]
        %v1609 = vld [vmem:[#allocation3 + $0x30] sm:$0xff]
        %v1610 = vld [vmem:[#allocation3 + $0x38] sm:$0xff]
        %v1611 = vadd.f32 %v1603, %v1573
        %v1612 = vadd.f32 %v1604, %v1576
        %v1613 = vadd.f32 %v1605, %v1581
        %v1614 = vadd.f32 %v1606, %v1584
        %v1615 = vadd.f32 %v1607, %v1589
        %v1616 = vadd.f32 %v1608, %v1592
        %v1617 = vadd.f32 %v1609, %v1597
        %v1618 = vadd.f32 %v1610, %v1600
        %1619 = vst.msk [vmem:[#allocation3] sm:$0xff] %vm498, %v1611
        %1620 = vst.msk [vmem:[#allocation3 + $0x8] sm:$0xff] %vm498, %v1612
        %1621 = vst.msk [vmem:[#allocation3 + $0x10] sm:$0xff] %vm498, %v1613
        %1622 = vst.msk [vmem:[#allocation3 + $0x18] sm:$0xff] %vm498, %v1614
        %1623 = vst.msk [vmem:[#allocation3 + $0x20] sm:$0xff] %vm498, %v1615
        %1624 = vst.msk [vmem:[#allocation3 + $0x28] sm:$0xff] %vm498, %v1616
        %1625 = vst.msk [vmem:[#allocation3 + $0x30] sm:$0xff] %vm498, %v1617
        %1626 = vst.msk [vmem:[#allocation3 + $0x38] sm:$0xff] %vm498, %v1618
        %v1627 = vld [vmem:[#allocation2] sm:$0xf0]
        %v1628 = vld [vmem:[#allocation2 + $0x8] sm:$0xff]
        %v1629 = vld [vmem:[#allocation2 + $0x10] sm:$0xff]
        %v1630 = vld [vmem:[#allocation2 + $0x18] sm:$0xff]
        %v1631 = vld [vmem:[#allocation2 + $0x20] sm:$0x1f]
        %s1632 = scalar_lea.vmem [#allocation4], 18
        %v1633 = vld [vmem:[%s1632] sm:$0x3]
        %vm1634 = vsmask.f32 3328
        %v1636 = vshrl.u32 %v1627, 16
        %v1638 = vrot.slane %v1636, 4
        %v1639 = vshll.u32 %v1627, 16
        %v1641 = vrot.slane %v1639, 5
        %v1642 = vor.u32 %v1638, %v1641
        %v1644 = vshrl.u32 %v1628, 16
        %v1646 = vrot.slane %v1644, 4
        %v1647 = vshll.u32 %v1628, 16
        %v1649 = vrot.slane %v1647, 5
        %v1650 = vor.u32 %v1646, %v1649
        %v1651 = vsel %vm1634, %v1642, %v1650
        %v1653 = vshrl.u32 %v1629, 16
        %v1655 = vrot.slane %v1653, 4
        %v1656 = vshll.u32 %v1629, 16
        %v1658 = vrot.slane %v1656, 5
        %v1659 = vor.u32 %v1655, %v1658
        %v1660 = vsel %vm1634, %v1650, %v1659
        %v1662 = vshrl.u32 %v1630, 16
        %v1664 = vrot.slane %v1662, 4
        %v1665 = vshll.u32 %v1630, 16
        %v1667 = vrot.slane %v1665, 5
        %v1668 = vor.u32 %v1664, %v1667
        %v1669 = vsel %vm1634, %v1659, %v1668
        %v1671 = vshrl.u32 %v1631, 16
        %v1673 = vrot.slane %v1671, 4
        %v1674 = vshll.u32 %v1631, 16
        %v1676 = vrot.slane %v1674, 5
        %v1677 = vor.u32 %v1673, %v1676
        %v1678 = vsel %vm1634, %v1668, %v1677
        %v1680 = vsel %vm398, %v1651, 0
        %v1683 = vsel %vm398, %v1660, 0
        %v1686 = vsel %vm398, %v1669, 0
        %v1689 = vsel %vm398, %v1678, 0
        %v1692 = vsel %vm429, %v1633, 0
        %1694 = vmatprep.subr.bf16.mxu0 0
        %1695 = vmatpush1.bf16.msra.mxu0 %v1692
        %1696 = vmatprep.subr.bf16.mxu0 0
        %1697 = vmatpush1.bf16.msra.mxu0 0
        %1698 = vmatprep.subr.bf16.mxu0 0
        %1699 = vmatpush1.bf16.msra.mxu0 0
        %1700 = vmatprep.subr.bf16.mxu0 0
        %1701 = vmatpush1.bf16.msra.mxu0 0
        %1702 = vmatprep.subr.bf16.mxu0 0
        %1703 = vmatpush1.bf16.msra.mxu0 0
        %1704 = vmatprep.subr.bf16.mxu0 0
        %1705 = vmatpush1.bf16.msra.mxu0 0
        %1706 = vmatprep.subr.bf16.mxu0 0
        %1707 = vmatpush1.bf16.msra.mxu0 0
        %1708 = vmatprep.subr.bf16.mxu0 0
        %1709 = vmatpush1.bf16.msra.mxu0 0
        %1710 = vmatprep.subr.bf16.mxu0 0
        %1711 = vmatpush1.bf16.msra.mxu0 0
        %1712 = vmatprep.subr.bf16.mxu0 0
        %1713 = vmatpush1.bf16.msra.mxu0 0
        %1714 = vmatprep.subr.bf16.mxu0 0
        %1715 = vmatpush1.bf16.msra.mxu0 0
        %1716 = vmatprep.subr.bf16.mxu0 0
        %1717 = vmatpush1.bf16.msra.mxu0 0
        %1718 = vmatprep.subr.bf16.mxu0 0
        %1719 = vmatpush1.bf16.msra.mxu0 0
        %1720 = vmatprep.subr.bf16.mxu0 0
        %1721 = vmatpush1.bf16.msra.mxu0 0
        %1722 = vmatprep.subr.bf16.mxu0 0
        %1723 = vmatpush1.bf16.msra.mxu0 0
        %1724 = vmatprep.subr.bf16.mxu0 0
        %1725 = vmatpush1.bf16.msra.mxu0 0
        %1726 = vmatprep.mubr.bf16.mxu0 0
        %1727 = vmatmul.mubr.bf16.gmra.mrb[0].mxu0 %v1680
        %v1728 = vpop.f32.mrb[0].mxu0
        %v1729 = vadd.f32 0.0, %v1728
        %v1730 = vpop.f32.mrb[0].mxu0
        %v1731 = vpop.f32.mrb[0].mxu0
        %v1732 = vadd.f32 0.0, %v1731
        %v1733 = vpop.f32.mrb[0].mxu0
        %1734 = vmatprep.mubr.bf16.mxu0 0
        %1735 = vmatmul.mubr.bf16.gmra.mrb[0].mxu0 %v1683
        %v1736 = vpop.f32.mrb[0].mxu0
        %v1737 = vadd.f32 0.0, %v1736
        %v1738 = vpop.f32.mrb[0].mxu0
        %v1739 = vpop.f32.mrb[0].mxu0
        %v1740 = vadd.f32 0.0, %v1739
        %v1741 = vpop.f32.mrb[0].mxu0
        %1742 = vmatprep.mubr.bf16.mxu0 0
        %1743 = vmatmul.mubr.bf16.gmra.mrb[0].mxu0 %v1686
        %v1744 = vpop.f32.mrb[0].mxu0
        %v1745 = vadd.f32 0.0, %v1744
        %v1746 = vpop.f32.mrb[0].mxu0
        %v1747 = vpop.f32.mrb[0].mxu0
        %v1748 = vadd.f32 0.0, %v1747
        %v1749 = vpop.f32.mrb[0].mxu0
        %1750 = vmatprep.mubr.bf16.mxu0 0
        %1751 = vmatmul.mubr.bf16.gmra.mrb[0].mxu0 %v1689
        %v1752 = vpop.f32.mrb[0].mxu0
        %v1753 = vadd.f32 0.0, %v1752
        %v1754 = vpop.f32.mrb[0].mxu0
        %v1755 = vpop.f32.mrb[0].mxu0
        %v1756 = vadd.f32 0.0, %v1755
        %v1757 = vpop.f32.mrb[0].mxu0
        %1758 = vdwg.mxu0
        %v1759 = vld [vmem:[#allocation3] sm:$0xff]
        %v1760 = vld [vmem:[#allocation3 + $0x8] sm:$0xff]
        %v1761 = vld [vmem:[#allocation3 + $0x10] sm:$0xff]
        %v1762 = vld [vmem:[#allocation3 + $0x18] sm:$0xff]
        %v1763 = vld [vmem:[#allocation3 + $0x20] sm:$0xff]
        %v1764 = vld [vmem:[#allocation3 + $0x28] sm:$0xff]
        %v1765 = vld [vmem:[#allocation3 + $0x30] sm:$0xff]
        %v1766 = vld [vmem:[#allocation3 + $0x38] sm:$0xff]
        %v1767 = vadd.f32 %v1759, %v1729
        %v1768 = vadd.f32 %v1760, %v1732
        %v1769 = vadd.f32 %v1761, %v1737
        %v1770 = vadd.f32 %v1762, %v1740
        %v1771 = vadd.f32 %v1763, %v1745
        %v1772 = vadd.f32 %v1764, %v1748
        %v1773 = vadd.f32 %v1765, %v1753
        %v1774 = vadd.f32 %v1766, %v1756
        %1775 = vst.msk [vmem:[#allocation3] sm:$0xff] %vm498, %v1767
        %1776 = vst.msk [vmem:[#allocation3 + $0x8] sm:$0xff] %vm498, %v1768
        %1777 = vst.msk [vmem:[#allocation3 + $0x10] sm:$0xff] %vm498, %v1769
        %1778 = vst.msk [vmem:[#allocation3 + $0x18] sm:$0xff] %vm498, %v1770
        %1779 = vst.msk [vmem:[#allocation3 + $0x20] sm:$0xff] %vm498, %v1771
        %1780 = vst.msk [vmem:[#allocation3 + $0x28] sm:$0xff] %vm498, %v1772
        %1781 = vst.msk [vmem:[#allocation3 + $0x30] sm:$0xff] %vm498, %v1773
        %1782 = vst.msk [vmem:[#allocation3 + $0x38] sm:$0xff] %vm498, %v1774
        %v1783 = vld [vmem:[#allocation2] sm:$0xe0]
        %v1784 = vld [vmem:[#allocation2 + $0x8] sm:$0xff]
        %v1785 = vld [vmem:[#allocation2 + $0x10] sm:$0xff]
        %v1786 = vld [vmem:[#allocation2 + $0x18] sm:$0xff]
        %v1787 = vld [vmem:[#allocation2 + $0x20] sm:$0x1f]
        %s1788 = scalar_lea.vmem [#allocation4], 20
        %v1789 = vld [vmem:[%s1788] sm:$0x3]
        %vm1795 = vcmask 1042432
        %v1796 = vrot.slane %v1783, 5
        %v1797 = vrot.slane %v1784, 5
        %v1798 = vsel %vm1795, %v1796, %v1797
        %v1799 = vrot.slane %v1785, 5
        %v1800 = vsel %vm1795, %v1797, %v1799
        %v1801 = vrot.slane %v1786, 5
        %v1802 = vsel %vm1795, %v1799, %v1801
        %v1803 = vrot.slane %v1787, 5
        %v1804 = vsel %vm1795, %v1801, %v1803
        %v1806 = vsel %vm398, %v1798, 0
        %v1809 = vsel %vm398, %v1800, 0
        %v1812 = vsel %vm398, %v1802, 0
        %v1815 = vsel %vm398, %v1804, 0
        %v1818 = vsel %vm429, %v1789, 0
        %1820 = vmatprep.subr.bf16.mxu0 0
        %1821 = vmatpush1.bf16.msra.mxu0 %v1818
        %1822 = vmatprep.subr.bf16.mxu0 0
        %1823 = vmatpush1.bf16.msra.mxu0 0
        %1824 = vmatprep.subr.bf16.mxu0 0
        %1825 = vmatpush1.bf16.msra.mxu0 0
        %1826 = vmatprep.subr.bf16.mxu0 0
        %1827 = vmatpush1.bf16.msra.mxu0 0
        %1828 = vmatprep.subr.bf16.mxu0 0
        %1829 = vmatpush1.bf16.msra.mxu0 0
        %1830 = vmatprep.subr.bf16.mxu0 0
        %1831 = vmatpush1.bf16.msra.mxu0 0
        %1832 = vmatprep.subr.bf16.mxu0 0
        %1833 = vmatpush1.bf16.msra.mxu0 0
        %1834 = vmatprep.subr.bf16.mxu0 0
        %1835 = vmatpush1.bf16.msra.mxu0 0
        %1836 = vmatprep.subr.bf16.mxu0 0
        %1837 = vmatpush1.bf16.msra.mxu0 0
        %1838 = vmatprep.subr.bf16.mxu0 0
        %1839 = vmatpush1.bf16.msra.mxu0 0
        %1840 = vmatprep.subr.bf16.mxu0 0
        %1841 = vmatpush1.bf16.msra.mxu0 0
        %1842 = vmatprep.subr.bf16.mxu0 0
        %1843 = vmatpush1.bf16.msra.mxu0 0
        %1844 = vmatprep.subr.bf16.mxu0 0
        %1845 = vmatpush1.bf16.msra.mxu0 0
        %1846 = vmatprep.subr.bf16.mxu0 0
        %1847 = vmatpush1.bf16.msra.mxu0 0
        %1848 = vmatprep.subr.bf16.mxu0 0
        %1849 = vmatpush1.bf16.msra.mxu0 0
        %1850 = vmatprep.subr.bf16.mxu0 0
        %1851 = vmatpush1.bf16.msra.mxu0 0
        %1852 = vmatprep.mubr.bf16.mxu0 0
        %1853 = vmatmul.mubr.bf16.gmra.mrb[0].mxu0 %v1806
        %v1854 = vpop.f32.mrb[0].mxu0
        %v1855 = vadd.f32 0.0, %v1854
        %v1856 = vpop.f32.mrb[0].mxu0
        %v1857 = vpop.f32.mrb[0].mxu0
        %v1858 = vadd.f32 0.0, %v1857
        %v1859 = vpop.f32.mrb[0].mxu0
        %1860 = vmatprep.mubr.bf16.mxu0 0
        %1861 = vmatmul.mubr.bf16.gmra.mrb[0].mxu0 %v1809
        %v1862 = vpop.f32.mrb[0].mxu0
        %v1863 = vadd.f32 0.0, %v1862
        %v1864 = vpop.f32.mrb[0].mxu0
        %v1865 = vpop.f32.mrb[0].mxu0
        %v1866 = vadd.f32 0.0, %v1865
        %v1867 = vpop.f32.mrb[0].mxu0
        %1868 = vmatprep.mubr.bf16.mxu0 0
        %1869 = vmatmul.mubr.bf16.gmra.mrb[0].mxu0 %v1812
        %v1870 = vpop.f32.mrb[0].mxu0
        %v1871 = vadd.f32 0.0, %v1870
        %v1872 = vpop.f32.mrb[0].mxu0
        %v1873 = vpop.f32.mrb[0].mxu0
        %v1874 = vadd.f32 0.0, %v1873
        %v1875 = vpop.f32.mrb[0].mxu0
        %1876 = vmatprep.mubr.bf16.mxu0 0
        %1877 = vmatmul.mubr.bf16.gmra.mrb[0].mxu0 %v1815
        %v1878 = vpop.f32.mrb[0].mxu0
        %v1879 = vadd.f32 0.0, %v1878
        %v1880 = vpop.f32.mrb[0].mxu0
        %v1881 = vpop.f32.mrb[0].mxu0
        %v1882 = vadd.f32 0.0, %v1881
        %v1883 = vpop.f32.mrb[0].mxu0
        %1884 = vdwg.mxu0
        %v1885 = vld [vmem:[#allocation3] sm:$0xff]
        %v1886 = vld [vmem:[#allocation3 + $0x8] sm:$0xff]
        %v1887 = vld [vmem:[#allocation3 + $0x10] sm:$0xff]
        %v1888 = vld [vmem:[#allocation3 + $0x18] sm:$0xff]
        %v1889 = vld [vmem:[#allocation3 + $0x20] sm:$0xff]
        %v1890 = vld [vmem:[#allocation3 + $0x28] sm:$0xff]
        %v1891 = vld [vmem:[#allocation3 + $0x30] sm:$0xff]
        %v1892 = vld [vmem:[#allocation3 + $0x38] sm:$0xff]
        %v1893 = vadd.f32 %v1885, %v1855
        %v1894 = vadd.f32 %v1886, %v1858
        %v1895 = vadd.f32 %v1887, %v1863
        %v1896 = vadd.f32 %v1888, %v1866
        %v1897 = vadd.f32 %v1889, %v1871
        %v1898 = vadd.f32 %v1890, %v1874
        %v1899 = vadd.f32 %v1891, %v1879
        %v1900 = vadd.f32 %v1892, %v1882
        %1901 = vst.msk [vmem:[#allocation3] sm:$0xff] %vm498, %v1893
        %1902 = vst.msk [vmem:[#allocation3 + $0x8] sm:$0xff] %vm498, %v1894
        %1903 = vst.msk [vmem:[#allocation3 + $0x10] sm:$0xff] %vm498, %v1895
        %1904 = vst.msk [vmem:[#allocation3 + $0x18] sm:$0xff] %vm498, %v1896
        %1905 = vst.msk [vmem:[#allocation3 + $0x20] sm:$0xff] %vm498, %v1897
        %1906 = vst.msk [vmem:[#allocation3 + $0x28] sm:$0xff] %vm498, %v1898
        %1907 = vst.msk [vmem:[#allocation3 + $0x30] sm:$0xff] %vm498, %v1899
        %1908 = vst.msk [vmem:[#allocation3 + $0x38] sm:$0xff] %vm498, %v1900
        %v1909 = vld [vmem:[#allocation2] sm:$0xe0]
        %v1910 = vld [vmem:[#allocation2 + $0x8] sm:$0xff]
        %v1911 = vld [vmem:[#allocation2 + $0x10] sm:$0xff]
        %v1912 = vld [vmem:[#allocation2 + $0x18] sm:$0xff]
        %v1913 = vld [vmem:[#allocation2 + $0x20] sm:$0x3f]
        %s1914 = scalar_lea.vmem [#allocation4], 22
        %v1915 = vld [vmem:[%s1914] sm:$0x3]
        %vm1916 = vsmask.f32 2304
        %v1918 = vshrl.u32 %v1909, 16
        %v1920 = vrot.slane %v1918, 5
        %v1921 = vshll.u32 %v1909, 16
        %v1923 = vrot.slane %v1921, 6
        %v1924 = vor.u32 %v1920, %v1923
        %v1926 = vshrl.u32 %v1910, 16
        %v1928 = vrot.slane %v1926, 5
        %v1929 = vshll.u32 %v1910, 16
        %v1931 = vrot.slane %v1929, 6
        %v1932 = vor.u32 %v1928, %v1931
        %v1933 = vsel %vm1916, %v1924, %v1932
        %v1935 = vshrl.u32 %v1911, 16
        %v1937 = vrot.slane %v1935, 5
        %v1938 = vshll.u32 %v1911, 16
        %v1940 = vrot.slane %v1938, 6
        %v1941 = vor.u32 %v1937, %v1940
        %v1942 = vsel %vm1916, %v1932, %v1941
        %v1944 = vshrl.u32 %v1912, 16
        %v1946 = vrot.slane %v1944, 5
        %v1947 = vshll.u32 %v1912, 16
        %v1949 = vrot.slane %v1947, 6
        %v1950 = vor.u32 %v1946, %v1949
        %v1951 = vsel %vm1916, %v1941, %v1950
        %v1953 = vshrl.u32 %v1913, 16
        %v1955 = vrot.slane %v1953, 5
        %v1956 = vshll.u32 %v1913, 16
        %v1958 = vrot.slane %v1956, 6
        %v1959 = vor.u32 %v1955, %v1958
        %v1960 = vsel %vm1916, %v1950, %v1959
        %v1962 = vsel %vm398, %v1933, 0
        %v1965 = vsel %vm398, %v1942, 0
        %v1968 = vsel %vm398, %v1951, 0
        %v1971 = vsel %vm398, %v1960, 0
        %v1974 = vsel %vm429, %v1915, 0
        %1976 = vmatprep.subr.bf16.mxu0 0
        %1977 = vmatpush1.bf16.msra.mxu0 %v1974
        %1978 = vmatprep.subr.bf16.mxu0 0
        %1979 = vmatpush1.bf16.msra.mxu0 0
        %1980 = vmatprep.subr.bf16.mxu0 0
        %1981 = vmatpush1.bf16.msra.mxu0 0
        %1982 = vmatprep.subr.bf16.mxu0 0
        %1983 = vmatpush1.bf16.msra.mxu0 0
        %1984 = vmatprep.subr.bf16.mxu0 0
        %1985 = vmatpush1.bf16.msra.mxu0 0
        %1986 = vmatprep.subr.bf16.mxu0 0
        %1987 = vmatpush1.bf16.msra.mxu0 0
        %1988 = vmatprep.subr.bf16.mxu0 0
        %1989 = vmatpush1.bf16.msra.mxu0 0
        %1990 = vmatprep.subr.bf16.mxu0 0
        %1991 = vmatpush1.bf16.msra.mxu0 0
        %1992 = vmatprep.subr.bf16.mxu0 0
        %1993 = vmatpush1.bf16.msra.mxu0 0
        %1994 = vmatprep.subr.bf16.mxu0 0
        %1995 = vmatpush1.bf16.msra.mxu0 0
        %1996 = vmatprep.subr.bf16.mxu0 0
        %1997 = vmatpush1.bf16.msra.mxu0 0
        %1998 = vmatprep.subr.bf16.mxu0 0
        %1999 = vmatpush1.bf16.msra.mxu0 0
        %2000 = vmatprep.subr.bf16.mxu0 0
        %2001 = vmatpush1.bf16.msra.mxu0 0
        %2002 = vmatprep.subr.bf16.mxu0 0
        %2003 = vmatpush1.bf16.msra.mxu0 0
        %2004 = vmatprep.subr.bf16.mxu0 0
        %2005 = vmatpush1.bf16.msra.mxu0 0
        %2006 = vmatprep.subr.bf16.mxu0 0
        %2007 = vmatpush1.bf16.msra.mxu0 0
        %2008 = vmatprep.mubr.bf16.mxu0 0
        %2009 = vmatmul.mubr.bf16.gmra.mrb[0].mxu0 %v1962
        %v2010 = vpop.f32.mrb[0].mxu0
        %v2011 = vadd.f32 0.0, %v2010
        %v2012 = vpop.f32.mrb[0].mxu0
        %v2013 = vpop.f32.mrb[0].mxu0
        %v2014 = vadd.f32 0.0, %v2013
        %v2015 = vpop.f32.mrb[0].mxu0
        %2016 = vmatprep.mubr.bf16.mxu0 0
        %2017 = vmatmul.mubr.bf16.gmra.mrb[0].mxu0 %v1965
        %v2018 = vpop.f32.mrb[0].mxu0
        %v2019 = vadd.f32 0.0, %v2018
        %v2020 = vpop.f32.mrb[0].mxu0
        %v2021 = vpop.f32.mrb[0].mxu0
        %v2022 = vadd.f32 0.0, %v2021
        %v2023 = vpop.f32.mrb[0].mxu0
        %2024 = vmatprep.mubr.bf16.mxu0 0
        %2025 = vmatmul.mubr.bf16.gmra.mrb[0].mxu0 %v1968
        %v2026 = vpop.f32.mrb[0].mxu0
        %v2027 = vadd.f32 0.0, %v2026
        %v2028 = vpop.f32.mrb[0].mxu0
        %v2029 = vpop.f32.mrb[0].mxu0
        %v2030 = vadd.f32 0.0, %v2029
        %v2031 = vpop.f32.mrb[0].mxu0
        %2032 = vmatprep.mubr.bf16.mxu0 0
        %2033 = vmatmul.mubr.bf16.gmra.mrb[0].mxu0 %v1971
        %v2034 = vpop.f32.mrb[0].mxu0
        %v2035 = vadd.f32 0.0, %v2034
        %v2036 = vpop.f32.mrb[0].mxu0
        %v2037 = vpop.f32.mrb[0].mxu0
        %v2038 = vadd.f32 0.0, %v2037
        %v2039 = vpop.f32.mrb[0].mxu0
        %2040 = vdwg.mxu0
        %v2041 = vld [vmem:[#allocation3] sm:$0xff]
        %v2042 = vld [vmem:[#allocation3 + $0x8] sm:$0xff]
        %v2043 = vld [vmem:[#allocation3 + $0x10] sm:$0xff]
        %v2044 = vld [vmem:[#allocation3 + $0x18] sm:$0xff]
        %v2045 = vld [vmem:[#allocation3 + $0x20] sm:$0xff]
        %v2046 = vld [vmem:[#allocation3 + $0x28] sm:$0xff]
        %v2047 = vld [vmem:[#allocation3 + $0x30] sm:$0xff]
        %v2048 = vld [vmem:[#allocation3 + $0x38] sm:$0xff]
        %v2049 = vadd.f32 %v2041, %v2011
        %v2050 = vadd.f32 %v2042, %v2014
        %v2051 = vadd.f32 %v2043, %v2019
        %v2052 = vadd.f32 %v2044, %v2022
        %v2053 = vadd.f32 %v2045, %v2027
        %v2054 = vadd.f32 %v2046, %v2030
        %v2055 = vadd.f32 %v2047, %v2035
        %v2056 = vadd.f32 %v2048, %v2038
        %2057 = vst.msk [vmem:[#allocation3] sm:$0xff] %vm498, %v2049
        %2058 = vst.msk [vmem:[#allocation3 + $0x8] sm:$0xff] %vm498, %v2050
        %2059 = vst.msk [vmem:[#allocation3 + $0x10] sm:$0xff] %vm498, %v2051
        %2060 = vst.msk [vmem:[#allocation3 + $0x18] sm:$0xff] %vm498, %v2052
        %2061 = vst.msk [vmem:[#allocation3 + $0x20] sm:$0xff] %vm498, %v2053
        %2062 = vst.msk [vmem:[#allocation3 + $0x28] sm:$0xff] %vm498, %v2054
        %2063 = vst.msk [vmem:[#allocation3 + $0x30] sm:$0xff] %vm498, %v2055
        %2064 = vst.msk [vmem:[#allocation3 + $0x38] sm:$0xff] %vm498, %v2056
        %v2065 = vld [vmem:[#allocation2] sm:$0xc0]
        %v2066 = vld [vmem:[#allocation2 + $0x8] sm:$0xff]
        %v2067 = vld [vmem:[#allocation2 + $0x10] sm:$0xff]
        %v2068 = vld [vmem:[#allocation2 + $0x18] sm:$0xff]
        %v2069 = vld [vmem:[#allocation2 + $0x20] sm:$0x3f]
        %s2070 = scalar_lea.vmem [#allocation4], 24
        %v2071 = vld [vmem:[%s2070] sm:$0x3]
        %vm2077 = vcmask 1041408
        %v2078 = vrot.slane %v2065, 6
        %v2079 = vrot.slane %v2066, 6
        %v2080 = vsel %vm2077, %v2078, %v2079
        %v2081 = vrot.slane %v2067, 6
        %v2082 = vsel %vm2077, %v2079, %v2081
        %v2083 = vrot.slane %v2068, 6
        %v2084 = vsel %vm2077, %v2081, %v2083
        %v2085 = vrot.slane %v2069, 6
        %v2086 = vsel %vm2077, %v2083, %v2085
        %v2088 = vsel %vm398, %v2080, 0
        %v2091 = vsel %vm398, %v2082, 0
        %v2094 = vsel %vm398, %v2084, 0
        %v2097 = vsel %vm398, %v2086, 0
        %v2100 = vsel %vm429, %v2071, 0
        %2102 = vmatprep.subr.bf16.mxu0 0
        %2103 = vmatpush1.bf16.msra.mxu0 %v2100
        %2104 = vmatprep.subr.bf16.mxu0 0
        %2105 = vmatpush1.bf16.msra.mxu0 0
        %2106 = vmatprep.subr.bf16.mxu0 0
        %2107 = vmatpush1.bf16.msra.mxu0 0
        %2108 = vmatprep.subr.bf16.mxu0 0
        %2109 = vmatpush1.bf16.msra.mxu0 0
        %2110 = vmatprep.subr.bf16.mxu0 0
        %2111 = vmatpush1.bf16.msra.mxu0 0
        %2112 = vmatprep.subr.bf16.mxu0 0
        %2113 = vmatpush1.bf16.msra.mxu0 0
        %2114 = vmatprep.subr.bf16.mxu0 0
        %2115 = vmatpush1.bf16.msra.mxu0 0
        %2116 = vmatprep.subr.bf16.mxu0 0
        %2117 = vmatpush1.bf16.msra.mxu0 0
        %2118 = vmatprep.subr.bf16.mxu0 0
        %2119 = vmatpush1.bf16.msra.mxu0 0
        %2120 = vmatprep.subr.bf16.mxu0 0
        %2121 = vmatpush1.bf16.msra.mxu0 0
        %2122 = vmatprep.subr.bf16.mxu0 0
        %2123 = vmatpush1.bf16.msra.mxu0 0
        %2124 = vmatprep.subr.bf16.mxu0 0
        %2125 = vmatpush1.bf16.msra.mxu0 0
        %2126 = vmatprep.subr.bf16.mxu0 0
        %2127 = vmatpush1.bf16.msra.mxu0 0
        %2128 = vmatprep.subr.bf16.mxu0 0
        %2129 = vmatpush1.bf16.msra.mxu0 0
        %2130 = vmatprep.subr.bf16.mxu0 0
        %2131 = vmatpush1.bf16.msra.mxu0 0
        %2132 = vmatprep.subr.bf16.mxu0 0
        %2133 = vmatpush1.bf16.msra.mxu0 0
        %2134 = vmatprep.mubr.bf16.mxu0 0
        %2135 = vmatmul.mubr.bf16.gmra.mrb[0].mxu0 %v2088
        %v2136 = vpop.f32.mrb[0].mxu0
        %v2137 = vadd.f32 0.0, %v2136
        %v2138 = vpop.f32.mrb[0].mxu0
        %v2139 = vpop.f32.mrb[0].mxu0
        %v2140 = vadd.f32 0.0, %v2139
        %v2141 = vpop.f32.mrb[0].mxu0
        %2142 = vmatprep.mubr.bf16.mxu0 0
        %2143 = vmatmul.mubr.bf16.gmra.mrb[0].mxu0 %v2091
        %v2144 = vpop.f32.mrb[0].mxu0
        %v2145 = vadd.f32 0.0, %v2144
        %v2146 = vpop.f32.mrb[0].mxu0
        %v2147 = vpop.f32.mrb[0].mxu0
        %v2148 = vadd.f32 0.0, %v2147
        %v2149 = vpop.f32.mrb[0].mxu0
        %2150 = vmatprep.mubr.bf16.mxu0 0
        %2151 = vmatmul.mubr.bf16.gmra.mrb[0].mxu0 %v2094
        %v2152 = vpop.f32.mrb[0].mxu0
        %v2153 = vadd.f32 0.0, %v2152
        %v2154 = vpop.f32.mrb[0].mxu0
        %v2155 = vpop.f32.mrb[0].mxu0
        %v2156 = vadd.f32 0.0, %v2155
        %v2157 = vpop.f32.mrb[0].mxu0
        %2158 = vmatprep.mubr.bf16.mxu0 0
        %2159 = vmatmul.mubr.bf16.gmra.mrb[0].mxu0 %v2097
        %v2160 = vpop.f32.mrb[0].mxu0
        %v2161 = vadd.f32 0.0, %v2160
        %v2162 = vpop.f32.mrb[0].mxu0
        %v2163 = vpop.f32.mrb[0].mxu0
        %v2164 = vadd.f32 0.0, %v2163
        %v2165 = vpop.f32.mrb[0].mxu0
        %2166 = vdwg.mxu0
        %v2167 = vld [vmem:[#allocation3] sm:$0xff]
        %v2168 = vld [vmem:[#allocation3 + $0x8] sm:$0xff]
        %v2169 = vld [vmem:[#allocation3 + $0x10] sm:$0xff]
        %v2170 = vld [vmem:[#allocation3 + $0x18] sm:$0xff]
        %v2171 = vld [vmem:[#allocation3 + $0x20] sm:$0xff]
        %v2172 = vld [vmem:[#allocation3 + $0x28] sm:$0xff]
        %v2173 = vld [vmem:[#allocation3 + $0x30] sm:$0xff]
        %v2174 = vld [vmem:[#allocation3 + $0x38] sm:$0xff]
        %v2175 = vadd.f32 %v2167, %v2137
        %v2176 = vadd.f32 %v2168, %v2140
        %v2177 = vadd.f32 %v2169, %v2145
        %v2178 = vadd.f32 %v2170, %v2148
        %v2179 = vadd.f32 %v2171, %v2153
        %v2180 = vadd.f32 %v2172, %v2156
        %v2181 = vadd.f32 %v2173, %v2161
        %v2182 = vadd.f32 %v2174, %v2164
        %2183 = vst.msk [vmem:[#allocation3] sm:$0xff] %vm498, %v2175
        %2184 = vst.msk [vmem:[#allocation3 + $0x8] sm:$0xff] %vm498, %v2176
        %2185 = vst.msk [vmem:[#allocation3 + $0x10] sm:$0xff] %vm498, %v2177
        %2186 = vst.msk [vmem:[#allocation3 + $0x18] sm:$0xff] %vm498, %v2178
        %2187 = vst.msk [vmem:[#allocation3 + $0x20] sm:$0xff] %vm498, %v2179
        %2188 = vst.msk [vmem:[#allocation3 + $0x28] sm:$0xff] %vm498, %v2180
        %2189 = vst.msk [vmem:[#allocation3 + $0x30] sm:$0xff] %vm498, %v2181
        %2190 = vst.msk [vmem:[#allocation3 + $0x38] sm:$0xff] %vm498, %v2182
        %v2191 = vld [vmem:[#allocation2] sm:$0xc0]
        %v2192 = vld [vmem:[#allocation2 + $0x8] sm:$0xff]
        %v2193 = vld [vmem:[#allocation2 + $0x10] sm:$0xff]
        %v2194 = vld [vmem:[#allocation2 + $0x18] sm:$0xff]
        %v2195 = vld [vmem:[#allocation2 + $0x20] sm:$0x7f]
        %s2196 = scalar_lea.vmem [#allocation4], 26
        %v2197 = vld [vmem:[%s2196] sm:$0x3]
        %vm2198 = vsmask.f32 1280
        %v2200 = vshrl.u32 %v2191, 16
        %v2202 = vrot.slane %v2200, 6
        %v2203 = vshll.u32 %v2191, 16
        %v2205 = vrot.slane %v2203, 7
        %v2206 = vor.u32 %v2202, %v2205
        %v2208 = vshrl.u32 %v2192, 16
        %v2210 = vrot.slane %v2208, 6
        %v2211 = vshll.u32 %v2192, 16
        %v2213 = vrot.slane %v2211, 7
        %v2214 = vor.u32 %v2210, %v2213
        %v2215 = vsel %vm2198, %v2206, %v2214
        %v2217 = vshrl.u32 %v2193, 16
        %v2219 = vrot.slane %v2217, 6
        %v2220 = vshll.u32 %v2193, 16
        %v2222 = vrot.slane %v2220, 7
        %v2223 = vor.u32 %v2219, %v2222
        %v2224 = vsel %vm2198, %v2214, %v2223
        %v2226 = vshrl.u32 %v2194, 16
        %v2228 = vrot.slane %v2226, 6
        %v2229 = vshll.u32 %v2194, 16
        %v2231 = vrot.slane %v2229, 7
        %v2232 = vor.u32 %v2228, %v2231
        %v2233 = vsel %vm2198, %v2223, %v2232
        %v2235 = vshrl.u32 %v2195, 16
        %v2237 = vrot.slane %v2235, 6
        %v2238 = vshll.u32 %v2195, 16
        %v2240 = vrot.slane %v2238, 7
        %v2241 = vor.u32 %v2237, %v2240
        %v2242 = vsel %vm2198, %v2232, %v2241
        %v2244 = vsel %vm398, %v2215, 0
        %v2247 = vsel %vm398, %v2224, 0
        %v2250 = vsel %vm398, %v2233, 0
        %v2253 = vsel %vm398, %v2242, 0
        %v2256 = vsel %vm429, %v2197, 0
        %2258 = vmatprep.subr.bf16.mxu0 0
        %2259 = vmatpush1.bf16.msra.mxu0 %v2256
        %2260 = vmatprep.subr.bf16.mxu0 0
        %2261 = vmatpush1.bf16.msra.mxu0 0
        %2262 = vmatprep.subr.bf16.mxu0 0
        %2263 = vmatpush1.bf16.msra.mxu0 0
        %2264 = vmatprep.subr.bf16.mxu0 0
        %2265 = vmatpush1.bf16.msra.mxu0 0
        %2266 = vmatprep.subr.bf16.mxu0 0
        %2267 = vmatpush1.bf16.msra.mxu0 0
        %2268 = vmatprep.subr.bf16.mxu0 0
        %2269 = vmatpush1.bf16.msra.mxu0 0
        %2270 = vmatprep.subr.bf16.mxu0 0
        %2271 = vmatpush1.bf16.msra.mxu0 0
        %2272 = vmatprep.subr.bf16.mxu0 0
        %2273 = vmatpush1.bf16.msra.mxu0 0
        %2274 = vmatprep.subr.bf16.mxu0 0
        %2275 = vmatpush1.bf16.msra.mxu0 0
        %2276 = vmatprep.subr.bf16.mxu0 0
        %2277 = vmatpush1.bf16.msra.mxu0 0
        %2278 = vmatprep.subr.bf16.mxu0 0
        %2279 = vmatpush1.bf16.msra.mxu0 0
        %2280 = vmatprep.subr.bf16.mxu0 0
        %2281 = vmatpush1.bf16.msra.mxu0 0
        %2282 = vmatprep.subr.bf16.mxu0 0
        %2283 = vmatpush1.bf16.msra.mxu0 0
        %2284 = vmatprep.subr.bf16.mxu0 0
        %2285 = vmatpush1.bf16.msra.mxu0 0
        %2286 = vmatprep.subr.bf16.mxu0 0
        %2287 = vmatpush1.bf16.msra.mxu0 0
        %2288 = vmatprep.subr.bf16.mxu0 0
        %2289 = vmatpush1.bf16.msra.mxu0 0
        %2290 = vmatprep.mubr.bf16.mxu0 0
        %2291 = vmatmul.mubr.bf16.gmra.mrb[0].mxu0 %v2244
        %v2292 = vpop.f32.mrb[0].mxu0
        %v2293 = vadd.f32 0.0, %v2292
        %v2294 = vpop.f32.mrb[0].mxu0
        %v2295 = vpop.f32.mrb[0].mxu0
        %v2296 = vadd.f32 0.0, %v2295
        %v2297 = vpop.f32.mrb[0].mxu0
        %2298 = vmatprep.mubr.bf16.mxu0 0
        %2299 = vmatmul.mubr.bf16.gmra.mrb[0].mxu0 %v2247
        %v2300 = vpop.f32.mrb[0].mxu0
        %v2301 = vadd.f32 0.0, %v2300
        %v2302 = vpop.f32.mrb[0].mxu0
        %v2303 = vpop.f32.mrb[0].mxu0
        %v2304 = vadd.f32 0.0, %v2303
        %v2305 = vpop.f32.mrb[0].mxu0
        %2306 = vmatprep.mubr.bf16.mxu0 0
        %2307 = vmatmul.mubr.bf16.gmra.mrb[0].mxu0 %v2250
        %v2308 = vpop.f32.mrb[0].mxu0
        %v2309 = vadd.f32 0.0, %v2308
        %v2310 = vpop.f32.mrb[0].mxu0
        %v2311 = vpop.f32.mrb[0].mxu0
        %v2312 = vadd.f32 0.0, %v2311
        %v2313 = vpop.f32.mrb[0].mxu0
        %2314 = vmatprep.mubr.bf16.mxu0 0
        %2315 = vmatmul.mubr.bf16.gmra.mrb[0].mxu0 %v2253
        %v2316 = vpop.f32.mrb[0].mxu0
        %v2317 = vadd.f32 0.0, %v2316
        %v2318 = vpop.f32.mrb[0].mxu0
        %v2319 = vpop.f32.mrb[0].mxu0
        %v2320 = vadd.f32 0.0, %v2319
        %v2321 = vpop.f32.mrb[0].mxu0
        %2322 = vdwg.mxu0
        %v2323 = vld [vmem:[#allocation3] sm:$0xff]
        %v2324 = vld [vmem:[#allocation3 + $0x8] sm:$0xff]
        %v2325 = vld [vmem:[#allocation3 + $0x10] sm:$0xff]
        %v2326 = vld [vmem:[#allocation3 + $0x18] sm:$0xff]
        %v2327 = vld [vmem:[#allocation3 + $0x20] sm:$0xff]
        %v2328 = vld [vmem:[#allocation3 + $0x28] sm:$0xff]
        %v2329 = vld [vmem:[#allocation3 + $0x30] sm:$0xff]
        %v2330 = vld [vmem:[#allocation3 + $0x38] sm:$0xff]
        %v2331 = vadd.f32 %v2323, %v2293
        %v2332 = vadd.f32 %v2324, %v2296
        %v2333 = vadd.f32 %v2325, %v2301
        %v2334 = vadd.f32 %v2326, %v2304
        %v2335 = vadd.f32 %v2327, %v2309
        %v2336 = vadd.f32 %v2328, %v2312
        %v2337 = vadd.f32 %v2329, %v2317
        %v2338 = vadd.f32 %v2330, %v2320
        %2339 = vst.msk [vmem:[#allocation3] sm:$0xff] %vm498, %v2331
        %2340 = vst.msk [vmem:[#allocation3 + $0x8] sm:$0xff] %vm498, %v2332
        %2341 = vst.msk [vmem:[#allocation3 + $0x10] sm:$0xff] %vm498, %v2333
        %2342 = vst.msk [vmem:[#allocation3 + $0x18] sm:$0xff] %vm498, %v2334
        %2343 = vst.msk [vmem:[#allocation3 + $0x20] sm:$0xff] %vm498, %v2335
        %2344 = vst.msk [vmem:[#allocation3 + $0x28] sm:$0xff] %vm498, %v2336
        %2345 = vst.msk [vmem:[#allocation3 + $0x30] sm:$0xff] %vm498, %v2337
        %2346 = vst.msk [vmem:[#allocation3 + $0x38] sm:$0xff] %vm498, %v2338
        %v2347 = vld [vmem:[#allocation2] sm:$0x80]
        %v2348 = vld [vmem:[#allocation2 + $0x8] sm:$0xff]
        %v2349 = vld [vmem:[#allocation2 + $0x10] sm:$0xff]
        %v2350 = vld [vmem:[#allocation2 + $0x18] sm:$0xff]
        %v2351 = vld [vmem:[#allocation2 + $0x20] sm:$0x7f]
        %s2352 = scalar_lea.vmem [#allocation4], 28
        %v2353 = vld [vmem:[%s2352] sm:$0x3]
        %vm2359 = vcmask 1040384
        %v2360 = vrot.slane %v2347, 7
        %v2361 = vrot.slane %v2348, 7
        %v2362 = vsel %vm2359, %v2360, %v2361
        %v2363 = vrot.slane %v2349, 7
        %v2364 = vsel %vm2359, %v2361, %v2363
        %v2365 = vrot.slane %v2350, 7
        %v2366 = vsel %vm2359, %v2363, %v2365
        %v2367 = vrot.slane %v2351, 7
        %v2368 = vsel %vm2359, %v2365, %v2367
        %v2370 = vsel %vm398, %v2362, 0
        %v2373 = vsel %vm398, %v2364, 0
        %v2376 = vsel %vm398, %v2366, 0
        %v2379 = vsel %vm398, %v2368, 0
        %v2382 = vsel %vm429, %v2353, 0
        %2384 = vmatprep.subr.bf16.mxu0 0
        %2385 = vmatpush1.bf16.msra.mxu0 %v2382
        %2386 = vmatprep.subr.bf16.mxu0 0
        %2387 = vmatpush1.bf16.msra.mxu0 0
        %2388 = vmatprep.subr.bf16.mxu0 0
        %2389 = vmatpush1.bf16.msra.mxu0 0
        %2390 = vmatprep.subr.bf16.mxu0 0
        %2391 = vmatpush1.bf16.msra.mxu0 0
        %2392 = vmatprep.subr.bf16.mxu0 0
        %2393 = vmatpush1.bf16.msra.mxu0 0
        %2394 = vmatprep.subr.bf16.mxu0 0
        %2395 = vmatpush1.bf16.msra.mxu0 0
        %2396 = vmatprep.subr.bf16.mxu0 0
        %2397 = vmatpush1.bf16.msra.mxu0 0
        %2398 = vmatprep.subr.bf16.mxu0 0
        %2399 = vmatpush1.bf16.msra.mxu0 0
        %2400 = vmatprep.subr.bf16.mxu0 0
        %2401 = vmatpush1.bf16.msra.mxu0 0
        %2402 = vmatprep.subr.bf16.mxu0 0
        %2403 = vmatpush1.bf16.msra.mxu0 0
        %2404 = vmatprep.subr.bf16.mxu0 0
        %2405 = vmatpush1.bf16.msra.mxu0 0
        %2406 = vmatprep.subr.bf16.mxu0 0
        %2407 = vmatpush1.bf16.msra.mxu0 0
        %2408 = vmatprep.subr.bf16.mxu0 0
        %2409 = vmatpush1.bf16.msra.mxu0 0
        %2410 = vmatprep.subr.bf16.mxu0 0
        %2411 = vmatpush1.bf16.msra.mxu0 0
        %2412 = vmatprep.subr.bf16.mxu0 0
        %2413 = vmatpush1.bf16.msra.mxu0 0
        %2414 = vmatprep.subr.bf16.mxu0 0
        %2415 = vmatpush1.bf16.msra.mxu0 0
        %2416 = vmatprep.mubr.bf16.mxu0 0
        %2417 = vmatmul.mubr.bf16.gmra.mrb[0].mxu0 %v2370
        %v2418 = vpop.f32.mrb[0].mxu0
        %v2419 = vadd.f32 0.0, %v2418
        %v2420 = vpop.f32.mrb[0].mxu0
        %v2421 = vpop.f32.mrb[0].mxu0
        %v2422 = vadd.f32 0.0, %v2421
        %v2423 = vpop.f32.mrb[0].mxu0
        %2424 = vmatprep.mubr.bf16.mxu0 0
        %2425 = vmatmul.mubr.bf16.gmra.mrb[0].mxu0 %v2373
        %v2426 = vpop.f32.mrb[0].mxu0
        %v2427 = vadd.f32 0.0, %v2426
        %v2428 = vpop.f32.mrb[0].mxu0
        %v2429 = vpop.f32.mrb[0].mxu0
        %v2430 = vadd.f32 0.0, %v2429
        %v2431 = vpop.f32.mrb[0].mxu0
        %2432 = vmatprep.mubr.bf16.mxu0 0
        %2433 = vmatmul.mubr.bf16.gmra.mrb[0].mxu0 %v2376
        %v2434 = vpop.f32.mrb[0].mxu0
        %v2435 = vadd.f32 0.0, %v2434
        %v2436 = vpop.f32.mrb[0].mxu0
        %v2437 = vpop.f32.mrb[0].mxu0
        %v2438 = vadd.f32 0.0, %v2437
        %v2439 = vpop.f32.mrb[0].mxu0
        %2440 = vmatprep.mubr.bf16.mxu0 0
        %2441 = vmatmul.mubr.bf16.gmra.mrb[0].mxu0 %v2379
        %v2442 = vpop.f32.mrb[0].mxu0
        %v2443 = vadd.f32 0.0, %v2442
        %v2444 = vpop.f32.mrb[0].mxu0
        %v2445 = vpop.f32.mrb[0].mxu0
        %v2446 = vadd.f32 0.0, %v2445
        %v2447 = vpop.f32.mrb[0].mxu0
        %2448 = vdwg.mxu0
        %v2449 = vld [vmem:[#allocation3] sm:$0xff]
        %v2450 = vld [vmem:[#allocation3 + $0x8] sm:$0xff]
        %v2451 = vld [vmem:[#allocation3 + $0x10] sm:$0xff]
        %v2452 = vld [vmem:[#allocation3 + $0x18] sm:$0xff]
        %v2453 = vld [vmem:[#allocation3 + $0x20] sm:$0xff]
        %v2454 = vld [vmem:[#allocation3 + $0x28] sm:$0xff]
        %v2455 = vld [vmem:[#allocation3 + $0x30] sm:$0xff]
        %v2456 = vld [vmem:[#allocation3 + $0x38] sm:$0xff]
        %v2457 = vadd.f32 %v2449, %v2419
        %v2458 = vadd.f32 %v2450, %v2422
        %v2459 = vadd.f32 %v2451, %v2427
        %v2460 = vadd.f32 %v2452, %v2430
        %v2461 = vadd.f32 %v2453, %v2435
        %v2462 = vadd.f32 %v2454, %v2438
        %v2463 = vadd.f32 %v2455, %v2443
        %v2464 = vadd.f32 %v2456, %v2446
        %2465 = vst.msk [vmem:[#allocation3] sm:$0xff] %vm498, %v2457
        %2466 = vst.msk [vmem:[#allocation3 + $0x8] sm:$0xff] %vm498, %v2458
        %2467 = vst.msk [vmem:[#allocation3 + $0x10] sm:$0xff] %vm498, %v2459
        %2468 = vst.msk [vmem:[#allocation3 + $0x18] sm:$0xff] %vm498, %v2460
        %2469 = vst.msk [vmem:[#allocation3 + $0x20] sm:$0xff] %vm498, %v2461
        %2470 = vst.msk [vmem:[#allocation3 + $0x28] sm:$0xff] %vm498, %v2462
        %2471 = vst.msk [vmem:[#allocation3 + $0x30] sm:$0xff] %vm498, %v2463
        %2472 = vst.msk [vmem:[#allocation3 + $0x38] sm:$0xff] %vm498, %v2464
        %v2473 = vld [vmem:[#allocation3] sm:$0xff]
        %v2474 = vld [vmem:[#allocation3 + $0x8] sm:$0xff]
        %v2475 = vld [vmem:[#allocation3 + $0x10] sm:$0xff]
        %v2476 = vld [vmem:[#allocation3 + $0x18] sm:$0xff]
        %v2477 = vld [vmem:[#allocation3 + $0x20] sm:$0xff]
        %v2478 = vld [vmem:[#allocation3 + $0x28] sm:$0xff]
        %v2479 = vld [vmem:[#allocation3 + $0x30] sm:$0xff]
        %v2480 = vld [vmem:[#allocation3 + $0x38] sm:$0xff]
        %v2481 = vld [vmem:[#allocation6] sm:$0x1]
        %v2483 = vlaneseq
        %v2484 = vshrl.u32 %v2483, 7
        %v2485 = vsub.s32 0, %v2484
        %v2486 = vrot.slane %v2481, %v2485
        %v2488 = vadd.f32 %v2473, %v2486
        %v2489 = vadd.f32 %v2474, %v2486
        %v2490 = vadd.f32 %v2475, %v2486
        %v2491 = vadd.f32 %v2476, %v2486
        %v2492 = vadd.f32 %v2477, %v2486
        %v2493 = vadd.f32 %v2478, %v2486
        %v2494 = vadd.f32 %v2479, %v2486
        %v2495 = vadd.f32 %v2480, %v2486
        %v2496 = vpack.c.bf16 %v2489, %v2488
        %v2497 = vpack.c.bf16 %v2491, %v2490
        %v2498 = vpack.c.bf16 %v2493, %v2492
        %v2499 = vpack.c.bf16 %v2495, %v2494
        %v2504 = vunpack.c.l.b16 %v2496
        %v2505 = vunpack.c.h.b16 %v2496
        %v2506 = vunpack.c.l.b16 %v2497
        %v2507 = vunpack.c.h.b16 %v2497
        %v2508 = vunpack.c.l.b16 %v2498
        %v2509 = vunpack.c.h.b16 %v2498
        %v2510 = vunpack.c.l.b16 %v2499
        %v2511 = vunpack.c.h.b16 %v2499
        %v2512 = vpack.c.b16 %v2504, %v2504
        %v2513 = vpack.c.b16 %v2505, %v2505
        %v2514 = vpack.c.b16 %v2506, %v2506
        %v2515 = vpack.c.b16 %v2507, %v2507
        %v2516 = vpack.c.b16 %v2508, %v2508
        %v2517 = vpack.c.b16 %v2509, %v2509
        %v2518 = vpack.c.b16 %v2510, %v2510
        %v2519 = vpack.c.b16 %v2511, %v2511
        %vm2528 = vcmask 125952
        %2529 = vst.msk [vmem:[%s363] sm:$0xf] %vm2528, %v2512
        %2530 = vst.msk [vmem:[%s363 + $0x4] sm:$0xf] %vm2528, %v2513
        %2531 = vst.msk [vmem:[%s363 + $0x8] sm:$0xf] %vm2528, %v2514
        %2532 = vst.msk [vmem:[%s363 + $0xc] sm:$0xf] %vm2528, %v2515
        %2533 = vst.msk [vmem:[%s363 + $0x10] sm:$0xf] %vm2528, %v2516
        %2534 = vst.msk [vmem:[%s363 + $0x14] sm:$0xf] %vm2528, %v2517
        %2535 = vst.msk [vmem:[%s363 + $0x18] sm:$0xf] %vm2528, %v2518
        %2536 = vst.msk [vmem:[%s363 + $0x1c] sm:$0xf] %vm2528, %v2519
        %s2537 = smul.u32 8, %s24
        %p2538 = scmp.lt.s32.totalorder %s23, 1
        %s2539 = scalar_select %p2538, %s23, 1
        %p2540 = scmp.lt.s32.totalorder %s2537, 7
        %s2541 = scalar_select %p2540, %s2537, 7
        %p2542 = scmp.lt.s32.totalorder %s22, 0
        %s2543 = scalar_select %p2542, %s22, 0
        %s2544 = sadd.s32 %s2543, %s2541
        %s2545 = smul.addr %s2539, 8
        %s2546 = sadd.s32 %s2544, %s2545
        %s2547 = smul.addr %s2546, 4
        %s2548 = scalar_lea.vmem %s4, %s2547
        // Predicated region
        $region45: #{_lambda_.5} parent=35 // pred_check
          %p2549 = pneg %p170
        $region46: #{_lambda_.5} parent=35 // pred_check_branch
          %2551 = sbr.rel (%p2549) target = $region48
        $region47: #{_lambda_.5} parent=35 // pred_region
          %s2552 = smul.u32 8, %s24
        $region48: #{_lambda_.5} parent=35 // pred_fallthru
          _
      $region36: #{_lambda_.5} parent=5 // pred_fallthru
        _
      %p2553 = scmp.le.s32.totalorder 2, %s12
      // Predicated region
      $region49: #{_lambda_.5} parent=5 // pred_check
        %p2554 = pneg %p2553
      $region50: #{_lambda_.5} parent=5 // pred_check_branch
        %2556 = sbr.rel (%p2554) target = $region52
      $region51: #{_lambda_.5} parent=5 // pred_region
        %s2557 = ssub.s32 %s12, 2
        // Predicated region
        $region53: #{_lambda_.5} parent=51 // pred_check
          %p2558 = pneg %p176
        $region54: #{_lambda_.5} parent=51 // pred_check_branch
          %2560 = sbr.rel (%p2558) target = $region56
        $region55: #{_lambda_.5} parent=51 // pred_region
          %s2561 = smul.u32 8, %s27
          %p2562 = scmp.lt.s32.totalorder %s26, 1
          %s2563 = scalar_select %p2562, %s26, 1
          %p2564 = scmp.lt.s32.totalorder %s2561, 7
          %s2565 = scalar_select %p2564, %s2561, 7
          %p2566 = scmp.lt.s32.totalorder %s25, 0
          %s2567 = scalar_select %p2566, %s25, 0
          %s2568 = sadd.s32 %s2567, %s2565
          %s2569 = smul.addr %s2563, 8
          %s2570 = sadd.s32 %s2568, %s2569
          %s2571 = smul.addr %s2570, 4
          %s2572 = scalar_lea.vmem %s4, %s2571
        $region56: #{_lambda_.5} parent=51 // pred_fallthru
          _
      $region52: #{_lambda_.5} parent=5 // pred_fallthru
        _
    $region6: #{_lambda_.5} parent=1 // loop_footer
      %s16 = sadd.s32 1, %s12
    $region7: #{_lambda_.5} parent=1 // loop_footer_branch
      %11 = sbr.rel target = $region3
    $region8: #{_lambda_.5} parent=1 // loop_exit
      _
    %2573 = vsyncpa [#allocation5], 1
    %s2574 = scalar_lea.sflag [#allocation5], 1
    %2575 = vsyncpa %s2574, 1
    %2576 = vsyncpa [#allocation7], 1

// kernel: _lambda_.9
$region0: #{_lambda_.9}
  #allocation0 [shape = 'u32[]', space=smem, size = 0x4, offset = 0x4, fixed_abs, tag = 'smem constant byte address 0x4 - core index']
  #allocation1 [shape = 'u32[144,128]{1,0:T(1,128)}', space=vmem, size = 0x12000, scoped, tag = 'internal scratch']
  #allocation2 [shape = 'bf16[16,256]{1,0:T(16,128)(2,1)}', space=vmem, size = 0x2000, scoped, tag = 'scratch operand']
  #allocation3 [shape = 'f32[8,1]{1,0:T(8,128)}', space=vmem, size = 0x1000, scoped, tag = 'scratch operand']
  #allocation4 [shape = 'f32[1,1,1]{2,1,0:T(1,128)S(1)}', space=vmem, size = 0x200, scoped, tag = 'scoped memory for _lambda_.9']
  %s0 = inlined_call_operand.vmem [shape: bf16[2,16,256], index: 0, kind: input, shape index: {}, may-alias: {0,1}]
  %s1 = inlined_call_operand.vmem [shape: bf16[2,16,256], index: 1, kind: input, shape index: {}, may-alias: {0,1}]
  %s2 = inlined_call_operand.vmem [shape: bf16[1,3,256,1], index: 2, kind: input, shape index: {}]
  %s3 = inlined_call_operand.<no memory space> [shape: f32[1,1,1], index: 3, kind: input, shape index: {}]
  %s4 = inlined_call_operand.vmem [shape: bf16[2,8,1], index: 4, kind: output, shape index: {}]
  %s5 = sld [smem:[#allocation0]]
  $region49: #{_lambda_.9} parent=0
    _
  %s7 = ssub.s32 1, %s5
  %s8 = scalar_select 0, %s7, %s5
  %v9 = vstv %s3
  %10 = vst [vmem:[#allocation4] sm:$0x1] %v9
  loop: start=0, step=1, limit=4
  $region2: #{_lambda_.9} parent=0 // loop_pre_header
    _
  $region3: #{_lambda_.9} parent=0 // loop_header
    %s12 = sphi 0, %s16
    %p13 = scmp.ge.s32.totalorder %s12, 4
    %s19 = sphi 0, %s38
    %s20 = sphi 0, %s34
    %s21 = sphi 0, %s30
    %s22 = sphi 0, %s19
    %s23 = sphi 0, %s20
    %s24 = sphi 0, %s21
    %s25 = sphi 0, %s22
    %s26 = sphi 0, %s23
    %s27 = sphi 0, %s24
    %s43 = sphi 0, %s45
    %s46 = sphi 0, %s43
    %s47 = sphi 0, %s46
    %s63 = sphi 0, %s47
    %s73 = sphi 0, %s75
    %s76 = sphi 0, %s73
    %s77 = sphi 0, %s76
    %s93 = sphi 0, %s77
    %s99 = sphi 0, %s101
    %s102 = sphi 0, %s99
    %s103 = sphi 0, %s102
    %s119 = sphi 0, %s103
    %s125 = sphi 0, %s127
    %s128 = sphi 0, %s125
    %s129 = sphi 0, %s128
    %s145 = sphi 0, %s129
    %s155 = sphi 0, %s157
    %s158 = sphi 0, %s155
    %s159 = sphi 0, %s158
    %s175 = sphi 0, %s159
  $region4: #{_lambda_.9} parent=0 // loop_header_branch
    %15 = sbr.rel (%p13) target = $region8
  $region5: #{_lambda_.9} parent=0 // loop_body
    %s17 = ssub.s32 %s12, 1
    %s18 = ssub.s32 %s12, 2
    %s28 = sadd.s32 1, %s21
    %p29 = scmp.ge.s32.totalorder %s28, 1
    %s30 = scalar_select %p29, 0, %s28
    %s31 = sadd.s32 1, %s20
    %s32 = scalar_select %p29, %s31, %s20
    %p33 = scmp.ge.s32.totalorder %s32, 2
    %s34 = scalar_select %p33, 0, %s32
    %s35 = sadd.s32 1, %s19
    %s36 = scalar_select %p33, %s35, %s19
    %p37 = scmp.ge.s32.totalorder %s36, 1
    %s38 = scalar_select %p37, 0, %s36
    %s39 = ssub.s32 %s20, %s34
    %s40 = ssub.s32 %s21, %s30
    %s41 = sor.u32 %s39, %s40
    %p42 = scmp.eq.s32.totalorder %s41, 0
    %s44 = sadd.s32 %s43, 1
    %s45 = scalar_select %p42, %s43, %s44
    %p48 = pneg %p42
    %p49 = scmp.eq.s32.totalorder %s12, 1
    %p50 = por %p48, %p49
    %p51 = scmp.ne.s32.totalorder %s43, %s46
    %p52 = scmp.eq.s32.totalorder %s12, 0
    %p53 = por %p51, %p52
    %p54 = scmp.ne.s32.totalorder %s43, %s46
    %p55 = scmp.eq.s32.totalorder %s17, 1
    %p56 = por %p54, %p55
    %p57 = scmp.ne.s32.totalorder %s46, %s47
    %p58 = scmp.eq.s32.totalorder %s17, 0
    %p59 = por %p57, %p58
    %p60 = scmp.ne.s32.totalorder %s46, %s47
    %p61 = scmp.eq.s32.totalorder %s18, 1
    %p62 = por %p60, %p61
    %p64 = scmp.ne.s32.totalorder %s47, %s63
    %p65 = scmp.eq.s32.totalorder %s18, 0
    %p66 = por %p64, %p65
    %s67 = sadd.s32 %s21, 1
    %s68 = sadd.s32 %s30, 1
    %s69 = ssub.s32 %s20, %s34
    %s70 = ssub.s32 %s67, %s68
    %s71 = sor.u32 %s69, %s70
    %p72 = scmp.eq.s32.totalorder %s71, 0
    %s74 = sadd.s32 %s73, 1
    %s75 = scalar_select %p72, %s73, %s74
    %p78 = pneg %p72
    %p79 = scmp.eq.s32.totalorder %s12, 1
    %p80 = por %p78, %p79
    %p81 = scmp.ne.s32.totalorder %s73, %s76
    %p82 = scmp.eq.s32.totalorder %s12, 0
    %p83 = por %p81, %p82
    %p84 = scmp.ne.s32.totalorder %s73, %s76
    %p85 = scmp.eq.s32.totalorder %s17, 1
    %p86 = por %p84, %p85
    %p87 = scmp.ne.s32.totalorder %s76, %s77
    %p88 = scmp.eq.s32.totalorder %s17, 0
    %p89 = por %p87, %p88
    %p90 = scmp.ne.s32.totalorder %s76, %s77
    %p91 = scmp.eq.s32.totalorder %s18, 1
    %p92 = por %p90, %p91
    %p94 = scmp.ne.s32.totalorder %s77, %s93
    %p95 = scmp.eq.s32.totalorder %s18, 0
    %p96 = por %p94, %p95
    %s97 = ssub.s32 %s19, %s38
    %p98 = scmp.eq.s32.totalorder %s97, 0
    %s100 = sadd.s32 %s99, 1
    %s101 = scalar_select %p98, %s99, %s100
    %p104 = pneg %p98
    %p105 = scmp.eq.s32.totalorder %s12, 1
    %p106 = por %p104, %p105
    %p107 = scmp.ne.s32.totalorder %s99, %s102
    %p108 = scmp.eq.s32.totalorder %s12, 0
    %p109 = por %p107, %p108
    %p110 = scmp.ne.s32.totalorder %s99, %s102
    %p111 = scmp.eq.s32.totalorder %s17, 1
    %p112 = por %p110, %p111
    %p113 = scmp.ne.s32.totalorder %s102, %s103
    %p114 = scmp.eq.s32.totalorder %s17, 0
    %p115 = por %p113, %p114
    %p116 = scmp.ne.s32.totalorder %s102, %s103
    %p117 = scmp.eq.s32.totalorder %s18, 1
    %p118 = por %p116, %p117
    %p120 = scmp.ne.s32.totalorder %s103, %s119
    %p121 = scmp.eq.s32.totalorder %s18, 0
    %p122 = por %p120, %p121
    %s123 = ssub.s32 %s19, %s38
    %p124 = scmp.eq.s32.totalorder %s123, 0
    %s126 = sadd.s32 %s125, 1
    %s127 = scalar_select %p124, %s125, %s126
    %p130 = pneg %p124
    %p131 = scmp.eq.s32.totalorder %s12, 1
    %p132 = por %p130, %p131
    %p133 = scmp.ne.s32.totalorder %s125, %s128
    %p134 = scmp.eq.s32.totalorder %s12, 0
    %p135 = por %p133, %p134
    %p136 = scmp.ne.s32.totalorder %s125, %s128
    %p137 = scmp.eq.s32.totalorder %s17, 1
    %p138 = por %p136, %p137
    %p139 = scmp.ne.s32.totalorder %s128, %s129
    %p140 = scmp.eq.s32.totalorder %s17, 0
    %p141 = por %p139, %p140
    %p142 = scmp.ne.s32.totalorder %s128, %s129
    %p143 = scmp.eq.s32.totalorder %s18, 1
    %p144 = por %p142, %p143
    %p146 = scmp.ne.s32.totalorder %s129, %s145
    %p147 = scmp.eq.s32.totalorder %s18, 0
    %p148 = por %p146, %p147
    %s149 = ssub.s32 %s20, %s34
    %s150 = ssub.s32 %s21, %s30
    %s151 = sor.u32 %s149, %s150
    %s152 = ssub.s32 %s19, %s38
    %s153 = sor.u32 %s151, %s152
    %p154 = scmp.eq.s32.totalorder %s153, 0
    %s156 = sadd.s32 %s155, 1
    %s157 = scalar_select %p154, %s155, %s156
    %p160 = pneg %p154
    %p161 = scmp.eq.s32.totalorder %s12, 1
    %p162 = por %p160, %p161
    %p163 = scmp.ne.s32.totalorder %s155, %s158
    %p164 = scmp.eq.s32.totalorder %s12, 0
    %p165 = por %p163, %p164
    %p166 = scmp.ne.s32.totalorder %s155, %s158
    %p167 = scmp.eq.s32.totalorder %s17, 1
    %p168 = por %p166, %p167
    %p169 = scmp.ne.s32.totalorder %s158, %s159
    %p170 = scmp.eq.s32.totalorder %s17, 0
    %p171 = por %p169, %p170
    %p172 = scmp.ne.s32.totalorder %s158, %s159
    %p173 = scmp.eq.s32.totalorder %s18, 1
    %p174 = por %p172, %p173
    %p176 = scmp.ne.s32.totalorder %s159, %s175
    %p177 = scmp.eq.s32.totalorder %s18, 0
    %p178 = por %p176, %p177
    %p179 = scmp.le.s32.totalorder 1, %s12
    %p180 = scmp.lt.s32.totalorder %s12, 3
    %p181 = pnand %p179, %p180
    %p182 = pneg %p181
    // Predicated region
    $region9: #{_lambda_.9} parent=5 // pred_check
      _
    $region10: #{_lambda_.9} parent=5 // pred_check_branch
      %184 = sbr.rel (%p181) target = $region12
    $region11: #{_lambda_.9} parent=5 // pred_region
      %s185 = ssub.s32 %s12, 1
      // Predicated region
      $region13: #{_lambda_.9} parent=11 // pred_check
        %p186 = pneg %p115
      $region14: #{_lambda_.9} parent=11 // pred_check_branch
        %188 = sbr.rel (%p186) target = $region16
      $region15: #{_lambda_.9} parent=11 // pred_region
        %p189 = scmp.lt.s32.totalorder %s22, 0
        %s190 = scalar_select %p189, %s22, 0
        %s191 = smul.addr %s190, 96
        %s192 = smul.addr %s191, 4
        %s193 = scalar_lea.vmem %s2, %s192
      $region16: #{_lambda_.9} parent=11 // pred_fallthru
        _
      // Predicated region
      $region17: #{_lambda_.9} parent=11 // pred_check
        %p194 = pneg %p141
      $region18: #{_lambda_.9} parent=11 // pred_check_branch
        %196 = sbr.rel (%p194) target = $region20
      $region19: #{_lambda_.9} parent=11 // pred_region
        %p197 = scmp.lt.s32.totalorder %s22, 0
        %s198 = scalar_select %p197, %s22, 0
        %s199 = scalar_lea.vmem [#allocation4], %s198
      $region20: #{_lambda_.9} parent=11 // pred_fallthru
        _
    $region12: #{_lambda_.9} parent=5 // pred_fallthru
      _
    %p200 = scmp.lt.s32.totalorder %s12, 2
    // Predicated region
    $region21: #{_lambda_.9} parent=5 // pred_check
      %p201 = pneg %p200
    $region22: #{_lambda_.9} parent=5 // pred_check_branch
      %203 = sbr.rel (%p201) target = $region24
    $region23: #{_lambda_.9} parent=5 // pred_region
      // Predicated region
      $region25: #{_lambda_.9} parent=23 // pred_check
        %p204 = pneg %p53
      $region26: #{_lambda_.9} parent=23 // pred_check_branch
        %206 = sbr.rel (%p204) target = $region28
      $region27: #{_lambda_.9} parent=23 // pred_region
        %p207 = scmp.lt.s32.totalorder %s20, 1
        %s208 = scalar_select %p207, %s20, 1
        %p209 = scmp.lt.s32.totalorder %s21, 1
        %s210 = scalar_select %p209, %s21, 1
        %s211 = smul.addr %s210, 2
        %s212 = smul.addr %s208, 4
        %s213 = sadd.s32 %s211, %s212
        %s214 = smul.addr %s213, 4
        %s215 = scalar_lea.vmem %s0, %s214
      $region28: #{_lambda_.9} parent=23 // pred_fallthru
        _
      // Predicated region
      $region29: #{_lambda_.9} parent=23 // pred_check
        %p216 = pneg %p83
      $region30: #{_lambda_.9} parent=23 // pred_check_branch
        %218 = sbr.rel (%p216) target = $region32
      $region31: #{_lambda_.9} parent=23 // pred_region
        %s219 = sadd.s32 %s21, 1
        %p220 = scmp.lt.s32.totalorder %s20, 1
        %s221 = scalar_select %p220, %s20, 1
        %p222 = scmp.lt.s32.totalorder %s219, 1
        %s223 = scalar_select %p222, %s219, 1
        %s224 = smul.addr %s223, 2
        %s225 = smul.addr %s221, 4
        %s226 = sadd.s32 %s224, %s225
        %s227 = smul.addr %s226, 4
        %s228 = scalar_lea.vmem %s1, %s227
        %s229 = sadd.s32 %s21, 1
      $region32: #{_lambda_.9} parent=23 // pred_fallthru
        _
    $region24: #{_lambda_.9} parent=5 // pred_fallthru
      _
    %p230 = scmp.le.s32.totalorder 1, %s12
    %p231 = scmp.lt.s32.totalorder %s12, 3
    %p232 = pnand %p230, %p231
    %p233 = pneg %p232
    // Predicated region
    $region33: #{_lambda_.9} parent=5 // pred_check
      _
    $region34: #{_lambda_.9} parent=5 // pred_check_branch
      %235 = sbr.rel (%p232) target = $region36
    $region35: #{_lambda_.9} parent=5 // pred_region
      %s236 = ssub.s32 %s12, 1
      %p237 = scmp.lt.s32.totalorder %s23, 1
      %s238 = scalar_select %p237, %s23, 1
      %p239 = scmp.lt.s32.totalorder %s24, 1
      %s240 = scalar_select %p239, %s24, 1
      %s241 = smul.addr %s240, 2
      %s242 = smul.addr %s238, 4
      %s243 = sadd.s32 %s241, %s242
      %s244 = smul.addr %s243, 4
      %s245 = scalar_lea.vmem %s0, %s244
      %p246 = pneg %p59
      %p247 = pneg %p56
      %s248 = sadd.s32 %s24, 1
      %p249 = scmp.lt.s32.totalorder %s23, 1
      %s250 = scalar_select %p249, %s23, 1
      %p251 = scmp.lt.s32.totalorder %s248, 1
      %s252 = scalar_select %p251, %s248, 1
      %s253 = smul.addr %s252, 2
      %s254 = smul.addr %s250, 4
      %s255 = sadd.s32 %s253, %s254
      %s256 = smul.addr %s255, 4
      %s257 = scalar_lea.vmem %s1, %s256
      %p258 = pneg %p89
      %p259 = pneg %p86
      %p260 = scmp.lt.s32.totalorder %s22, 0
      %s261 = scalar_select %p260, %s22, 0
      %s262 = smul.addr %s261, 96
      %s263 = smul.addr %s262, 4
      %s264 = scalar_lea.vmem %s2, %s263
      %p265 = pneg %p115
      %p266 = pneg %p112
      %p267 = scmp.lt.s32.totalorder %s22, 0
      %s268 = scalar_select %p267, %s22, 0
      %s269 = scalar_lea.vmem [#allocation4], %s268
      %p270 = pneg %p141
      %p271 = pneg %p138
      %p272 = pneg %p171
      %p273 = pneg %p168
      %p274 = scmp.lt.s32.totalorder %s23, 1
      %s275 = scalar_select %p274, %s23, 1
      %p276 = scmp.lt.s32.totalorder %s24, 0
      %s277 = scalar_select %p276, %s24, 0
      %p278 = scmp.lt.s32.totalorder %s22, 0
      %s279 = scalar_select %p278, %s22, 0
      %s280 = sadd.s32 %s279, %s277
      %s281 = sadd.s32 %s280, %s275
      %s282 = smul.addr %s281, 4
      %s283 = scalar_lea.vmem %s4, %s282
      %p284 = scmp.lt.s32.totalorder %s23, 1
      %s285 = scalar_select %p284, %s23, 1
      %p286 = scmp.lt.s32.totalorder %s24, 1
      %s287 = scalar_select %p286, %s24, 1
      %s288 = smul.addr %s287, 2
      %s289 = smul.addr %s285, 4
      %s290 = sadd.s32 %s288, %s289
      %s291 = smul.addr %s290, 4
      %s292 = scalar_lea.vmem %s0, %s291
      %s293 = sadd.s32 %s24, 1
      %p294 = scmp.lt.s32.totalorder %s23, 1
      %s295 = scalar_select %p294, %s23, 1
      %p296 = scmp.lt.s32.totalorder %s293, 1
      %s297 = scalar_select %p296, %s293, 1
      %s298 = smul.addr %s297, 2
      %s299 = smul.addr %s295, 4
      %s300 = sadd.s32 %s298, %s299
      %s301 = smul.addr %s300, 4
      %s302 = scalar_lea.vmem %s1, %s301
      %s303 = sadd.s32 %s24, 1
      %p304 = scmp.lt.s32.totalorder %s22, 0
      %s305 = scalar_select %p304, %s22, 0
      %s306 = smul.addr %s305, 96
      %s307 = smul.addr %s306, 4
      %s308 = scalar_lea.vmem %s2, %s307
      %p309 = scmp.lt.s32.totalorder %s22, 0
      %s310 = scalar_select %p309, %s22, 0
      %s311 = scalar_lea.vmem [#allocation4], %s310
      %p312 = scmp.lt.s32.totalorder %s23, 1
      %s313 = scalar_select %p312, %s23, 1
      %p314 = scmp.lt.s32.totalorder %s24, 0
      %s315 = scalar_select %p314, %s24, 0
      %p316 = scmp.lt.s32.totalorder %s22, 0
      %s317 = scalar_select %p316, %s22, 0
      %s318 = sadd.s32 %s317, %s315
      %s319 = sadd.s32 %s318, %s313
      %s320 = smul.addr %s319, 4
      %s321 = scalar_lea.vmem %s4, %s320
      %v323 = vld [vmem:[%s292] sm:$0xff]
      %v325 = vunpack.c.l.b16 %v323
      %v326 = vunpack.c.h.b16 %v323
      %v327 = vpack.c.b16 %v325, %v325
      %v328 = vpack.c.b16 %v326, %v326
      %331 = vst [vmem:[#allocation2] sm:$0xf] %v327
      %332 = vst [vmem:[#allocation2 + $0x8] sm:$0xf] %v328
      %v333 = vld [vmem:[%s302] sm:$0xff]
      %v335 = vunpack.c.l.b16 %v333
      %v336 = vunpack.c.h.b16 %v333
      %v337 = vpack.c.b16 %v335, %v335
      %v338 = vpack.c.b16 %v336, %v336
      %341 = vst [vmem:[#allocation2] sm:$0xf0] %v337
      %342 = vst [vmem:[#allocation2 + $0x8] sm:$0xf0] %v338
      %v343 = vld [vmem:[#allocation2] sm:$0xf]
      %v344 = vld [vmem:[#allocation2 + $0x8] sm:$0xf]
      %v345 = vld [vmem:[%s308] sm:$0xf]
      %v346 = vld [vmem:[%s308 + $0x4] sm:$0xf]
      %v347 = vld [vmem:[%s308 + $0x8] sm:$0xf]
      %v348 = vld [vmem:[%s308 + $0xc] sm:$0xf]
      %v349 = vld [vmem:[%s308 + $0x10] sm:$0xf]
      %v350 = vld [vmem:[%s308 + $0x14] sm:$0xf]
      %v351 = vld [vmem:[%s308 + $0x18] sm:$0xf]
      %v352 = vld [vmem:[%s308 + $0x1c] sm:$0xf]
      %v353 = vld [vmem:[%s308 + $0x20] sm:$0xf]
      %v354 = vld [vmem:[%s308 + $0x24] sm:$0xf]
      %v355 = vld [vmem:[%s308 + $0x28] sm:$0xf]
      %v356 = vld [vmem:[%s308 + $0x2c] sm:$0xf]
      %v357 = vld [vmem:[%s308 + $0x30] sm:$0xf]
      %v358 = vld [vmem:[%s308 + $0x34] sm:$0xf]
      %v359 = vld [vmem:[%s308 + $0x38] sm:$0xf]
      %v360 = vld [vmem:[%s308 + $0x3c] sm:$0xf]
      %v361 = vld [vmem:[%s308 + $0x40] sm:$0xf]
      %v362 = vld [vmem:[%s308 + $0x44] sm:$0xf]
      %v363 = vld [vmem:[%s308 + $0x48] sm:$0xf]
      %v364 = vld [vmem:[%s308 + $0x4c] sm:$0xf]
      %v365 = vld [vmem:[%s308 + $0x50] sm:$0xf]
      %v366 = vld [vmem:[%s308 + $0x54] sm:$0xf]
      %v367 = vld [vmem:[%s308 + $0x58] sm:$0xf]
      %v368 = vld [vmem:[%s308 + $0x5c] sm:$0xf]
      %v369 = vld [vmem:[%s308 + $0x60] sm:$0xf]
      %v370 = vld [vmem:[%s308 + $0x64] sm:$0xf]
      %v371 = vld [vmem:[%s308 + $0x68] sm:$0xf]
      %v372 = vld [vmem:[%s308 + $0x6c] sm:$0xf]
      %v373 = vld [vmem:[%s308 + $0x70] sm:$0xf]
      %v374 = vld [vmem:[%s308 + $0x74] sm:$0xf]
      %v375 = vld [vmem:[%s308 + $0x78] sm:$0xf]
      %v376 = vld [vmem:[%s308 + $0x7c] sm:$0xf]
      %v409 = vunpack.c.l.b16 %v345
      %v410 = vunpack.c.l.b16 %v346
      %v411 = vunpack.c.l.b16 %v347
      %v412 = vunpack.c.l.b16 %v348
      %v413 = vunpack.c.l.b16 %v349
      %v414 = vunpack.c.l.b16 %v350
      %v415 = vunpack.c.l.b16 %v351
      %v416 = vunpack.c.l.b16 %v352
      %v417 = vunpack.c.l.b16 %v353
      %v418 = vunpack.c.l.b16 %v354
      %v419 = vunpack.c.l.b16 %v355
      %v420 = vunpack.c.l.b16 %v356
      %v421 = vunpack.c.l.b16 %v357
      %v422 = vunpack.c.l.b16 %v358
      %v423 = vunpack.c.l.b16 %v359
      %v424 = vunpack.c.l.b16 %v360
      %v425 = vunpack.c.l.b16 %v361
      %v426 = vunpack.c.l.b16 %v362
      %v427 = vunpack.c.l.b16 %v363
      %v428 = vunpack.c.l.b16 %v364
      %v429 = vunpack.c.l.b16 %v365
      %v430 = vunpack.c.l.b16 %v366
      %v431 = vunpack.c.l.b16 %v367
      %v432 = vunpack.c.l.b16 %v368
      %v433 = vunpack.c.l.b16 %v369
      %v434 = vunpack.c.l.b16 %v370
      %v435 = vunpack.c.l.b16 %v371
      %v436 = vunpack.c.l.b16 %v372
      %v437 = vunpack.c.l.b16 %v373
      %v438 = vunpack.c.l.b16 %v374
      %v439 = vunpack.c.l.b16 %v375
      %v440 = vunpack.c.l.b16 %v376
      %v441 = vpack.c.b16 %v410, %v409
      %v442 = vpack.c.b16 %v412, %v411
      %v443 = vpack.c.b16 %v414, %v413
      %v444 = vpack.c.b16 %v416, %v415
      %v445 = vpack.c.b16 %v418, %v417
      %v446 = vpack.c.b16 %v420, %v419
      %v447 = vpack.c.b16 %v422, %v421
      %v448 = vpack.c.b16 %v424, %v423
      %v449 = vpack.c.b16 %v426, %v425
      %v450 = vpack.c.b16 %v428, %v427
      %v451 = vpack.c.b16 %v430, %v429
      %v452 = vpack.c.b16 %v432, %v431
      %v453 = vpack.c.b16 %v434, %v433
      %v454 = vpack.c.b16 %v436, %v435
      %v455 = vpack.c.b16 %v438, %v437
      %v456 = vpack.c.b16 %v440, %v439
      %473 = vmatprep.subr.bf16.mxu0 0
      %474 = vmatpush1.bf16.msra.mxu0 %v441
      %475 = vmatprep.subr.bf16.mxu0 0
      %476 = vmatpush1.bf16.msra.mxu0 %v442
      %477 = vmatprep.subr.bf16.mxu0 0
      %478 = vmatpush1.bf16.msra.mxu0 %v443
      %479 = vmatprep.subr.bf16.mxu0 0
      %480 = vmatpush1.bf16.msra.mxu0 %v444
      %481 = vmatprep.subr.bf16.mxu0 0
      %482 = vmatpush1.bf16.msra.mxu0 %v445
      %483 = vmatprep.subr.bf16.mxu0 0
      %484 = vmatpush1.bf16.msra.mxu0 %v446
      %485 = vmatprep.subr.bf16.mxu0 0
      %486 = vmatpush1.bf16.msra.mxu0 %v447
      %487 = vmatprep.subr.bf16.mxu0 0
      %488 = vmatpush1.bf16.msra.mxu0 %v448
      %489 = vmatprep.subr.bf16.mxu0 0
      %490 = vmatpush1.bf16.msra.mxu0 %v449
      %491 = vmatprep.subr.bf16.mxu0 0
      %492 = vmatpush1.bf16.msra.mxu0 %v450
      %493 = vmatprep.subr.bf16.mxu0 0
      %494 = vmatpush1.bf16.msra.mxu0 %v451
      %495 = vmatprep.subr.bf16.mxu0 0
      %496 = vmatpush1.bf16.msra.mxu0 %v452
      %497 = vmatprep.subr.bf16.mxu0 0
      %498 = vmatpush1.bf16.msra.mxu0 %v453
      %499 = vmatprep.subr.bf16.mxu0 0
      %500 = vmatpush1.bf16.msra.mxu0 %v454
      %501 = vmatprep.subr.bf16.mxu0 0
      %502 = vmatpush1.bf16.msra.mxu0 %v455
      %503 = vmatprep.subr.bf16.mxu0 0
      %504 = vmatpush1.bf16.msra.mxu0 %v456
      %505 = vmatprep.mubr.bf16.mxu0 %v344
      %506 = vmatmul.mubr.bf16.gmra.mrb[0].mxu0 %v343
      %v507 = vpop.f32.mrb[0].mxu0
      %v508 = vadd.f32 0.0, %v507
      %v509 = vpop.f32.mrb[0].mxu0
      %v510 = vpop.f32.mrb[0].mxu0
      %v511 = vpop.f32.mrb[0].mxu0
      %512 = vdwg.mxu0
      %vm513 = vcmask 7168
      %514 = vst.msk [vmem:[#allocation3] sm:$0xff] %vm513, %v508
      %v515 = vld [vmem:[#allocation2] sm:$0x1f]
      %v516 = vld [vmem:[#allocation2 + $0x8] sm:$0x1f]
      %s517 = scalar_lea.vmem %s308, 128
      %v518 = vld [vmem:[%s517] sm:$0xf]
      %v519 = vld [vmem:[%s517 + $0x4] sm:$0xf]
      %v520 = vld [vmem:[%s517 + $0x8] sm:$0xf]
      %v521 = vld [vmem:[%s517 + $0xc] sm:$0xf]
      %v522 = vld [vmem:[%s517 + $0x10] sm:$0xf]
      %v523 = vld [vmem:[%s517 + $0x14] sm:$0xf]
      %v524 = vld [vmem:[%s517 + $0x18] sm:$0xf]
      %v525 = vld [vmem:[%s517 + $0x1c] sm:$0xf]
      %v526 = vld [vmem:[%s517 + $0x20] sm:$0xf]
      %v527 = vld [vmem:[%s517 + $0x24] sm:$0xf]
      %v528 = vld [vmem:[%s517 + $0x28] sm:$0xf]
      %v529 = vld [vmem:[%s517 + $0x2c] sm:$0xf]
      %v530 = vld [vmem:[%s517 + $0x30] sm:$0xf]
      %v531 = vld [vmem:[%s517 + $0x34] sm:$0xf]
      %v532 = vld [vmem:[%s517 + $0x38] sm:$0xf]
      %v533 = vld [vmem:[%s517 + $0x3c] sm:$0xf]
      %v534 = vld [vmem:[%s517 + $0x40] sm:$0xf]
      %v535 = vld [vmem:[%s517 + $0x44] sm:$0xf]
      %v536 = vld [vmem:[%s517 + $0x48] sm:$0xf]
      %v537 = vld [vmem:[%s517 + $0x4c] sm:$0xf]
      %v538 = vld [vmem:[%s517 + $0x50] sm:$0xf]
      %v539 = vld [vmem:[%s517 + $0x54] sm:$0xf]
      %v540 = vld [vmem:[%s517 + $0x58] sm:$0xf]
      %v541 = vld [vmem:[%s517 + $0x5c] sm:$0xf]
      %v542 = vld [vmem:[%s517 + $0x60] sm:$0xf]
      %v543 = vld [vmem:[%s517 + $0x64] sm:$0xf]
      %v544 = vld [vmem:[%s517 + $0x68] sm:$0xf]
      %v545 = vld [vmem:[%s517 + $0x6c] sm:$0xf]
      %v546 = vld [vmem:[%s517 + $0x70] sm:$0xf]
      %v547 = vld [vmem:[%s517 + $0x74] sm:$0xf]
      %v548 = vld [vmem:[%s517 + $0x78] sm:$0xf]
      %v549 = vld [vmem:[%s517 + $0x7c] sm:$0xf]
      %v551 = vshrl.u32 %v515, 16
      %v553 = vshll.u32 %v515, 16
      %v555 = vrot.slane %v553, 1
      %v556 = vor.u32 %v551, %v555
      %v558 = vshrl.u32 %v516, 16
      %v560 = vshll.u32 %v516, 16
      %v562 = vrot.slane %v560, 1
      %v563 = vor.u32 %v558, %v562
      %v598 = vunpack.c.l.b16 %v518
      %v599 = vunpack.c.l.b16 %v519
      %v600 = vunpack.c.l.b16 %v520
      %v601 = vunpack.c.l.b16 %v521
      %v602 = vunpack.c.l.b16 %v522
      %v603 = vunpack.c.l.b16 %v523
      %v604 = vunpack.c.l.b16 %v524
      %v605 = vunpack.c.l.b16 %v525
      %v606 = vunpack.c.l.b16 %v526
      %v607 = vunpack.c.l.b16 %v527
      %v608 = vunpack.c.l.b16 %v528
      %v609 = vunpack.c.l.b16 %v529
      %v610 = vunpack.c.l.b16 %v530
      %v611 = vunpack.c.l.b16 %v531
      %v612 = vunpack.c.l.b16 %v532
      %v613 = vunpack.c.l.b16 %v533
      %v614 = vunpack.c.l.b16 %v534
      %v615 = vunpack.c.l.b16 %v535
      %v616 = vunpack.c.l.b16 %v536
      %v617 = vunpack.c.l.b16 %v537
      %v618 = vunpack.c.l.b16 %v538
      %v619 = vunpack.c.l.b16 %v539
      %v620 = vunpack.c.l.b16 %v540
      %v621 = vunpack.c.l.b16 %v541
      %v622 = vunpack.c.l.b16 %v542
      %v623 = vunpack.c.l.b16 %v543
      %v624 = vunpack.c.l.b16 %v544
      %v625 = vunpack.c.l.b16 %v545
      %v626 = vunpack.c.l.b16 %v546
      %v627 = vunpack.c.l.b16 %v547
      %v628 = vunpack.c.l.b16 %v548
      %v629 = vunpack.c.l.b16 %v549
      %v630 = vpack.c.b16 %v599, %v598
      %v631 = vpack.c.b16 %v601, %v600
      %v632 = vpack.c.b16 %v603, %v602
      %v633 = vpack.c.b16 %v605, %v604
      %v634 = vpack.c.b16 %v607, %v606
      %v635 = vpack.c.b16 %v609, %v608
      %v636 = vpack.c.b16 %v611, %v610
      %v637 = vpack.c.b16 %v613, %v612
      %v638 = vpack.c.b16 %v615, %v614
      %v639 = vpack.c.b16 %v617, %v616
      %v640 = vpack.c.b16 %v619, %v618
      %v641 = vpack.c.b16 %v621, %v620
      %v642 = vpack.c.b16 %v623, %v622
      %v643 = vpack.c.b16 %v625, %v624
      %v644 = vpack.c.b16 %v627, %v626
      %v645 = vpack.c.b16 %v629, %v628
      %662 = vmatprep.subr.bf16.mxu0 0
      %663 = vmatpush1.bf16.msra.mxu0 %v630
      %664 = vmatprep.subr.bf16.mxu0 0
      %665 = vmatpush1.bf16.msra.mxu0 %v631
      %666 = vmatprep.subr.bf16.mxu0 0
      %667 = vmatpush1.bf16.msra.mxu0 %v632
      %668 = vmatprep.subr.bf16.mxu0 0
      %669 = vmatpush1.bf16.msra.mxu0 %v633
      %670 = vmatprep.subr.bf16.mxu0 0
      %671 = vmatpush1.bf16.msra.mxu0 %v634
      %672 = vmatprep.subr.bf16.mxu0 0
      %673 = vmatpush1.bf16.msra.mxu0 %v635
      %674 = vmatprep.subr.bf16.mxu0 0
      %675 = vmatpush1.bf16.msra.mxu0 %v636
      %676 = vmatprep.subr.bf16.mxu0 0
      %677 = vmatpush1.bf16.msra.mxu0 %v637
      %678 = vmatprep.subr.bf16.mxu0 0
      %679 = vmatpush1.bf16.msra.mxu0 %v638
      %680 = vmatprep.subr.bf16.mxu0 0
      %681 = vmatpush1.bf16.msra.mxu0 %v639
      %682 = vmatprep.subr.bf16.mxu0 0
      %683 = vmatpush1.bf16.msra.mxu0 %v640
      %684 = vmatprep.subr.bf16.mxu0 0
      %685 = vmatpush1.bf16.msra.mxu0 %v641
      %686 = vmatprep.subr.bf16.mxu0 0
      %687 = vmatpush1.bf16.msra.mxu0 %v642
      %688 = vmatprep.subr.bf16.mxu0 0
      %689 = vmatpush1.bf16.msra.mxu0 %v643
      %690 = vmatprep.subr.bf16.mxu0 0
      %691 = vmatpush1.bf16.msra.mxu0 %v644
      %692 = vmatprep.subr.bf16.mxu0 0
      %693 = vmatpush1.bf16.msra.mxu0 %v645
      %694 = vmatprep.mubr.bf16.mxu0 %v563
      %695 = vmatmul.mubr.bf16.gmra.mrb[0].mxu0 %v556
      %v696 = vpop.f32.mrb[0].mxu0
      %v697 = vadd.f32 0.0, %v696
      %v698 = vpop.f32.mrb[0].mxu0
      %v699 = vpop.f32.mrb[0].mxu0
      %v700 = vpop.f32.mrb[0].mxu0
      %701 = vdwg.mxu0
      %v702 = vld [vmem:[#allocation3] sm:$0xff]
      %v703 = vadd.f32 %v702, %v697
      %704 = vst.msk [vmem:[#allocation3] sm:$0xff] %vm513, %v703
      %v705 = vld [vmem:[#allocation2] sm:$0x1e]
      %v706 = vld [vmem:[#allocation2 + $0x8] sm:$0x1e]
      %s707 = scalar_lea.vmem %s308, 256
      %v708 = vld [vmem:[%s707] sm:$0xf]
      %v709 = vld [vmem:[%s707 + $0x4] sm:$0xf]
      %v710 = vld [vmem:[%s707 + $0x8] sm:$0xf]
      %v711 = vld [vmem:[%s707 + $0xc] sm:$0xf]
      %v712 = vld [vmem:[%s707 + $0x10] sm:$0xf]
      %v713 = vld [vmem:[%s707 + $0x14] sm:$0xf]
      %v714 = vld [vmem:[%s707 + $0x18] sm:$0xf]
      %v715 = vld [vmem:[%s707 + $0x1c] sm:$0xf]
      %v716 = vld [vmem:[%s707 + $0x20] sm:$0xf]
      %v717 = vld [vmem:[%s707 + $0x24] sm:$0xf]
      %v718 = vld [vmem:[%s707 + $0x28] sm:$0xf]
      %v719 = vld [vmem:[%s707 + $0x2c] sm:$0xf]
      %v720 = vld [vmem:[%s707 + $0x30] sm:$0xf]
      %v721 = vld [vmem:[%s707 + $0x34] sm:$0xf]
      %v722 = vld [vmem:[%s707 + $0x38] sm:$0xf]
      %v723 = vld [vmem:[%s707 + $0x3c] sm:$0xf]
      %v724 = vld [vmem:[%s707 + $0x40] sm:$0xf]
      %v725 = vld [vmem:[%s707 + $0x44] sm:$0xf]
      %v726 = vld [vmem:[%s707 + $0x48] sm:$0xf]
      %v727 = vld [vmem:[%s707 + $0x4c] sm:$0xf]
      %v728 = vld [vmem:[%s707 + $0x50] sm:$0xf]
      %v729 = vld [vmem:[%s707 + $0x54] sm:$0xf]
      %v730 = vld [vmem:[%s707 + $0x58] sm:$0xf]
      %v731 = vld [vmem:[%s707 + $0x5c] sm:$0xf]
      %v732 = vld [vmem:[%s707 + $0x60] sm:$0xf]
      %v733 = vld [vmem:[%s707 + $0x64] sm:$0xf]
      %v734 = vld [vmem:[%s707 + $0x68] sm:$0xf]
      %v735 = vld [vmem:[%s707 + $0x6c] sm:$0xf]
      %v736 = vld [vmem:[%s707 + $0x70] sm:$0xf]
      %v737 = vld [vmem:[%s707 + $0x74] sm:$0xf]
      %v738 = vld [vmem:[%s707 + $0x78] sm:$0xf]
      %v739 = vld [vmem:[%s707 + $0x7c] sm:$0xf]
      %v742 = vrot.slane %v705, 1
      %v743 = vrot.slane %v706, 1
      %v778 = vunpack.c.l.b16 %v708
      %v779 = vunpack.c.l.b16 %v709
      %v780 = vunpack.c.l.b16 %v710
      %v781 = vunpack.c.l.b16 %v711
      %v782 = vunpack.c.l.b16 %v712
      %v783 = vunpack.c.l.b16 %v713
      %v784 = vunpack.c.l.b16 %v714
      %v785 = vunpack.c.l.b16 %v715
      %v786 = vunpack.c.l.b16 %v716
      %v787 = vunpack.c.l.b16 %v717
      %v788 = vunpack.c.l.b16 %v718
      %v789 = vunpack.c.l.b16 %v719
      %v790 = vunpack.c.l.b16 %v720
      %v791 = vunpack.c.l.b16 %v721
      %v792 = vunpack.c.l.b16 %v722
      %v793 = vunpack.c.l.b16 %v723
      %v794 = vunpack.c.l.b16 %v724
      %v795 = vunpack.c.l.b16 %v725
      %v796 = vunpack.c.l.b16 %v726
      %v797 = vunpack.c.l.b16 %v727
      %v798 = vunpack.c.l.b16 %v728
      %v799 = vunpack.c.l.b16 %v729
      %v800 = vunpack.c.l.b16 %v730
      %v801 = vunpack.c.l.b16 %v731
      %v802 = vunpack.c.l.b16 %v732
      %v803 = vunpack.c.l.b16 %v733
      %v804 = vunpack.c.l.b16 %v734
      %v805 = vunpack.c.l.b16 %v735
      %v806 = vunpack.c.l.b16 %v736
      %v807 = vunpack.c.l.b16 %v737
      %v808 = vunpack.c.l.b16 %v738
      %v809 = vunpack.c.l.b16 %v739
      %v810 = vpack.c.b16 %v779, %v778
      %v811 = vpack.c.b16 %v781, %v780
      %v812 = vpack.c.b16 %v783, %v782
      %v813 = vpack.c.b16 %v785, %v784
      %v814 = vpack.c.b16 %v787, %v786
      %v815 = vpack.c.b16 %v789, %v788
      %v816 = vpack.c.b16 %v791, %v790
      %v817 = vpack.c.b16 %v793, %v792
      %v818 = vpack.c.b16 %v795, %v794
      %v819 = vpack.c.b16 %v797, %v796
      %v820 = vpack.c.b16 %v799, %v798
      %v821 = vpack.c.b16 %v801, %v800
      %v822 = vpack.c.b16 %v803, %v802
      %v823 = vpack.c.b16 %v805, %v804
      %v824 = vpack.c.b16 %v807, %v806
      %v825 = vpack.c.b16 %v809, %v808
      %842 = vmatprep.subr.bf16.mxu0 0
      %843 = vmatpush1.bf16.msra.mxu0 %v810
      %844 = vmatprep.subr.bf16.mxu0 0
      %845 = vmatpush1.bf16.msra.mxu0 %v811
      %846 = vmatprep.subr.bf16.mxu0 0
      %847 = vmatpush1.bf16.msra.mxu0 %v812
      %848 = vmatprep.subr.bf16.mxu0 0
      %849 = vmatpush1.bf16.msra.mxu0 %v813
      %850 = vmatprep.subr.bf16.mxu0 0
      %851 = vmatpush1.bf16.msra.mxu0 %v814
      %852 = vmatprep.subr.bf16.mxu0 0
      %853 = vmatpush1.bf16.msra.mxu0 %v815
      %854 = vmatprep.subr.bf16.mxu0 0
      %855 = vmatpush1.bf16.msra.mxu0 %v816
      %856 = vmatprep.subr.bf16.mxu0 0
      %857 = vmatpush1.bf16.msra.mxu0 %v817
      %858 = vmatprep.subr.bf16.mxu0 0
      %859 = vmatpush1.bf16.msra.mxu0 %v818
      %860 = vmatprep.subr.bf16.mxu0 0
      %861 = vmatpush1.bf16.msra.mxu0 %v819
      %862 = vmatprep.subr.bf16.mxu0 0
      %863 = vmatpush1.bf16.msra.mxu0 %v820
      %864 = vmatprep.subr.bf16.mxu0 0
      %865 = vmatpush1.bf16.msra.mxu0 %v821
      %866 = vmatprep.subr.bf16.mxu0 0
      %867 = vmatpush1.bf16.msra.mxu0 %v822
      %868 = vmatprep.subr.bf16.mxu0 0
      %869 = vmatpush1.bf16.msra.mxu0 %v823
      %870 = vmatprep.subr.bf16.mxu0 0
      %871 = vmatpush1.bf16.msra.mxu0 %v824
      %872 = vmatprep.subr.bf16.mxu0 0
      %873 = vmatpush1.bf16.msra.mxu0 %v825
      %874 = vmatprep.mubr.bf16.mxu0 %v743
      %875 = vmatmul.mubr.bf16.gmra.mrb[0].mxu0 %v742
      %v876 = vpop.f32.mrb[0].mxu0
      %v877 = vadd.f32 0.0, %v876
      %v878 = vpop.f32.mrb[0].mxu0
      %v879 = vpop.f32.mrb[0].mxu0
      %v880 = vpop.f32.mrb[0].mxu0
      %881 = vdwg.mxu0
      %v882 = vld [vmem:[#allocation3] sm:$0xff]
      %v883 = vadd.f32 %v882, %v877
      %884 = vst.msk [vmem:[#allocation3] sm:$0xff] %vm513, %v883
      %v885 = vld [vmem:[#allocation3] sm:$0xff]
      %v886 = vld [vmem:[%s311] sm:$0x1]
      %v888 = vlaneseq
      %v889 = vshrl.u32 %v888, 7
      %v890 = vsub.s32 0, %v889
      %v891 = vrot.slane %v886, %v890
      %v893 = vadd.f32 %v885, %v891
      %v894 = vpack.c.bf16 %v893, %v893
      %vm895 = vcmask 3072
      %896 = vst.msk [vmem:[%s321] sm:$0xf] %vm895, %v894
      %p897 = scmp.lt.s32.totalorder %s23, 1
      %s898 = scalar_select %p897, %s23, 1
      %p899 = scmp.lt.s32.totalorder %s24, 0
      %s900 = scalar_select %p899, %s24, 0
      %p901 = scmp.lt.s32.totalorder %s22, 0
      %s902 = scalar_select %p901, %s22, 0
      %s903 = sadd.s32 %s902, %s900
      %s904 = sadd.s32 %s903, %s898
      %s905 = smul.addr %s904, 4
      %s906 = scalar_lea.vmem %s4, %s905
      // Predicated region
      $region37: #{_lambda_.9} parent=35 // pred_check
        %p907 = pneg %p168
      $region38: #{_lambda_.9} parent=35 // pred_check_branch
        %909 = sbr.rel (%p907) target = $region40
      $region39: #{_lambda_.9} parent=35 // pred_region
        _
      $region40: #{_lambda_.9} parent=35 // pred_fallthru
        _
    $region36: #{_lambda_.9} parent=5 // pred_fallthru
      _
    %p910 = scmp.le.s32.totalorder 2, %s12
    // Predicated region
    $region41: #{_lambda_.9} parent=5 // pred_check
      %p911 = pneg %p910
    $region42: #{_lambda_.9} parent=5 // pred_check_branch
      %913 = sbr.rel (%p911) target = $region44
    $region43: #{_lambda_.9} parent=5 // pred_region
      %s914 = ssub.s32 %s12, 2
      // Predicated region
      $region45: #{_lambda_.9} parent=43 // pred_check
        %p915 = pneg %p174
      $region46: #{_lambda_.9} parent=43 // pred_check_branch
        %917 = sbr.rel (%p915) target = $region48
      $region47: #{_lambda_.9} parent=43 // pred_region
        %p918 = scmp.lt.s32.totalorder %s26, 1
        %s919 = scalar_select %p918, %s26, 1
        %p920 = scmp.lt.s32.totalorder %s27, 0
        %s921 = scalar_select %p920, %s27, 0
        %p922 = scmp.lt.s32.totalorder %s25, 0
        %s923 = scalar_select %p922, %s25, 0
        %s924 = sadd.s32 %s923, %s921
        %s925 = sadd.s32 %s924, %s919
        %s926 = smul.addr %s925, 4
        %s927 = scalar_lea.vmem %s4, %s926
      $region48: #{_lambda_.9} parent=43 // pred_fallthru
        _
    $region44: #{_lambda_.9} parent=5 // pred_fallthru
      _
  $region6: #{_lambda_.9} parent=0 // loop_footer
    %s16 = sadd.s32 1, %s12
  $region7: #{_lambda_.9} parent=0 // loop_footer_branch
    %11 = sbr.rel target = $region3
  $region8: #{_lambda_.9} parent=0 // loop_exit
    _

// kernel: _lambda_.8
$region0: #{_lambda_.8}
  #allocation0 [shape = 'u32[]', space=smem, size = 0x4, offset = 0x4, fixed_abs, tag = 'smem constant byte address 0x4 - core index']
  #allocation1 [shape = 'u32[144,128]{1,0:T(1,128)}', space=vmem, size = 0x12000, scoped, tag = 'internal scratch']
  #allocation2 [shape = 'bf16[16,256]{1,0:T(16,128)(2,1)}', space=vmem, size = 0x2000, scoped, tag = 'scratch operand']
  #allocation3 [shape = 'f32[8,256]{1,0:T(8,128)}', space=vmem, size = 0x2000, scoped, tag = 'scratch operand']
  %s0 = inlined_call_operand.vmem [shape: bf16[2,16,256], index: 0, kind: input, shape index: {}, may-alias: {0,1}]
  %s1 = inlined_call_operand.vmem [shape: bf16[2,16,256], index: 1, kind: input, shape index: {}, may-alias: {0,1}]
  %s2 = inlined_call_operand.vmem [shape: bf16[1,5,256,256], index: 2, kind: input, shape index: {}]
  %s3 = inlined_call_operand.vmem [shape: f32[1,1,256], index: 3, kind: input, shape index: {}]
  %s4 = inlined_call_operand.vmem [shape: bf16[2,8,256], index: 4, kind: output, shape index: {}]
  %s5 = sld [smem:[#allocation0]]
  $region49: #{_lambda_.8} parent=0
    _
  %s7 = ssub.s32 1, %s5
  %s8 = scalar_select 0, %s7, %s5
  loop: start=0, step=1, limit=4
  $region2: #{_lambda_.8} parent=0 // loop_pre_header
    _
  $region3: #{_lambda_.8} parent=0 // loop_header
    %s10 = sphi 0, %s14
    %p11 = scmp.ge.s32.totalorder %s10, 4
    %s17 = sphi 0, %s36
    %s18 = sphi 0, %s32
    %s19 = sphi 0, %s28
    %s20 = sphi 0, %s17
    %s21 = sphi 0, %s18
    %s22 = sphi 0, %s19
    %s23 = sphi 0, %s20
    %s24 = sphi 0, %s21
    %s25 = sphi 0, %s22
    %s41 = sphi 0, %s43
    %s44 = sphi 0, %s41
    %s45 = sphi 0, %s44
    %s61 = sphi 0, %s45
    %s71 = sphi 0, %s73
    %s74 = sphi 0, %s71
    %s75 = sphi 0, %s74
    %s91 = sphi 0, %s75
    %s97 = sphi 0, %s99
    %s100 = sphi 0, %s97
    %s101 = sphi 0, %s100
    %s117 = sphi 0, %s101
    %s123 = sphi 0, %s125
    %s126 = sphi 0, %s123
    %s127 = sphi 0, %s126
    %s143 = sphi 0, %s127
    %s153 = sphi 0, %s155
    %s156 = sphi 0, %s153
    %s157 = sphi 0, %s156
    %s173 = sphi 0, %s157
  $region4: #{_lambda_.8} parent=0 // loop_header_branch
    %13 = sbr.rel (%p11) target = $region8
  $region5: #{_lambda_.8} parent=0 // loop_body
    %s15 = ssub.s32 %s10, 1
    %s16 = ssub.s32 %s10, 2
    %s26 = sadd.s32 1, %s19
    %p27 = scmp.ge.s32.totalorder %s26, 1
    %s28 = scalar_select %p27, 0, %s26
    %s29 = sadd.s32 1, %s18
    %s30 = scalar_select %p27, %s29, %s18
    %p31 = scmp.ge.s32.totalorder %s30, 2
    %s32 = scalar_select %p31, 0, %s30
    %s33 = sadd.s32 1, %s17
    %s34 = scalar_select %p31, %s33, %s17
    %p35 = scmp.ge.s32.totalorder %s34, 1
    %s36 = scalar_select %p35, 0, %s34
    %s37 = ssub.s32 %s18, %s32
    %s38 = ssub.s32 %s19, %s28
    %s39 = sor.u32 %s37, %s38
    %p40 = scmp.eq.s32.totalorder %s39, 0
    %s42 = sadd.s32 %s41, 1
    %s43 = scalar_select %p40, %s41, %s42
    %p46 = pneg %p40
    %p47 = scmp.eq.s32.totalorder %s10, 1
    %p48 = por %p46, %p47
    %p49 = scmp.ne.s32.totalorder %s41, %s44
    %p50 = scmp.eq.s32.totalorder %s10, 0
    %p51 = por %p49, %p50
    %p52 = scmp.ne.s32.totalorder %s41, %s44
    %p53 = scmp.eq.s32.totalorder %s15, 1
    %p54 = por %p52, %p53
    %p55 = scmp.ne.s32.totalorder %s44, %s45
    %p56 = scmp.eq.s32.totalorder %s15, 0
    %p57 = por %p55, %p56
    %p58 = scmp.ne.s32.totalorder %s44, %s45
    %p59 = scmp.eq.s32.totalorder %s16, 1
    %p60 = por %p58, %p59
    %p62 = scmp.ne.s32.totalorder %s45, %s61
    %p63 = scmp.eq.s32.totalorder %s16, 0
    %p64 = por %p62, %p63
    %s65 = sadd.s32 %s19, 1
    %s66 = sadd.s32 %s28, 1
    %s67 = ssub.s32 %s18, %s32
    %s68 = ssub.s32 %s65, %s66
    %s69 = sor.u32 %s67, %s68
    %p70 = scmp.eq.s32.totalorder %s69, 0
    %s72 = sadd.s32 %s71, 1
    %s73 = scalar_select %p70, %s71, %s72
    %p76 = pneg %p70
    %p77 = scmp.eq.s32.totalorder %s10, 1
    %p78 = por %p76, %p77
    %p79 = scmp.ne.s32.totalorder %s71, %s74
    %p80 = scmp.eq.s32.totalorder %s10, 0
    %p81 = por %p79, %p80
    %p82 = scmp.ne.s32.totalorder %s71, %s74
    %p83 = scmp.eq.s32.totalorder %s15, 1
    %p84 = por %p82, %p83
    %p85 = scmp.ne.s32.totalorder %s74, %s75
    %p86 = scmp.eq.s32.totalorder %s15, 0
    %p87 = por %p85, %p86
    %p88 = scmp.ne.s32.totalorder %s74, %s75
    %p89 = scmp.eq.s32.totalorder %s16, 1
    %p90 = por %p88, %p89
    %p92 = scmp.ne.s32.totalorder %s75, %s91
    %p93 = scmp.eq.s32.totalorder %s16, 0
    %p94 = por %p92, %p93
    %s95 = ssub.s32 %s17, %s36
    %p96 = scmp.eq.s32.totalorder %s95, 0
    %s98 = sadd.s32 %s97, 1
    %s99 = scalar_select %p96, %s97, %s98
    %p102 = pneg %p96
    %p103 = scmp.eq.s32.totalorder %s10, 1
    %p104 = por %p102, %p103
    %p105 = scmp.ne.s32.totalorder %s97, %s100
    %p106 = scmp.eq.s32.totalorder %s10, 0
    %p107 = por %p105, %p106
    %p108 = scmp.ne.s32.totalorder %s97, %s100
    %p109 = scmp.eq.s32.totalorder %s15, 1
    %p110 = por %p108, %p109
    %p111 = scmp.ne.s32.totalorder %s100, %s101
    %p112 = scmp.eq.s32.totalorder %s15, 0
    %p113 = por %p111, %p112
    %p114 = scmp.ne.s32.totalorder %s100, %s101
    %p115 = scmp.eq.s32.totalorder %s16, 1
    %p116 = por %p114, %p115
    %p118 = scmp.ne.s32.totalorder %s101, %s117
    %p119 = scmp.eq.s32.totalorder %s16, 0
    %p120 = por %p118, %p119
    %s121 = ssub.s32 %s17, %s36
    %p122 = scmp.eq.s32.totalorder %s121, 0
    %s124 = sadd.s32 %s123, 1
    %s125 = scalar_select %p122, %s123, %s124
    %p128 = pneg %p122
    %p129 = scmp.eq.s32.totalorder %s10, 1
    %p130 = por %p128, %p129
    %p131 = scmp.ne.s32.totalorder %s123, %s126
    %p132 = scmp.eq.s32.totalorder %s10, 0
    %p133 = por %p131, %p132
    %p134 = scmp.ne.s32.totalorder %s123, %s126
    %p135 = scmp.eq.s32.totalorder %s15, 1
    %p136 = por %p134, %p135
    %p137 = scmp.ne.s32.totalorder %s126, %s127
    %p138 = scmp.eq.s32.totalorder %s15, 0
    %p139 = por %p137, %p138
    %p140 = scmp.ne.s32.totalorder %s126, %s127
    %p141 = scmp.eq.s32.totalorder %s16, 1
    %p142 = por %p140, %p141
    %p144 = scmp.ne.s32.totalorder %s127, %s143
    %p145 = scmp.eq.s32.totalorder %s16, 0
    %p146 = por %p144, %p145
    %s147 = ssub.s32 %s18, %s32
    %s148 = ssub.s32 %s19, %s28
    %s149 = sor.u32 %s147, %s148
    %s150 = ssub.s32 %s17, %s36
    %s151 = sor.u32 %s149, %s150
    %p152 = scmp.eq.s32.totalorder %s151, 0
    %s154 = sadd.s32 %s153, 1
    %s155 = scalar_select %p152, %s153, %s154
    %p158 = pneg %p152
    %p159 = scmp.eq.s32.totalorder %s10, 1
    %p160 = por %p158, %p159
    %p161 = scmp.ne.s32.totalorder %s153, %s156
    %p162 = scmp.eq.s32.totalorder %s10, 0
    %p163 = por %p161, %p162
    %p164 = scmp.ne.s32.totalorder %s153, %s156
    %p165 = scmp.eq.s32.totalorder %s15, 1
    %p166 = por %p164, %p165
    %p167 = scmp.ne.s32.totalorder %s156, %s157
    %p168 = scmp.eq.s32.totalorder %s15, 0
    %p169 = por %p167, %p168
    %p170 = scmp.ne.s32.totalorder %s156, %s157
    %p171 = scmp.eq.s32.totalorder %s16, 1
    %p172 = por %p170, %p171
    %p174 = scmp.ne.s32.totalorder %s157, %s173
    %p175 = scmp.eq.s32.totalorder %s16, 0
    %p176 = por %p174, %p175
    %p177 = scmp.le.s32.totalorder 1, %s10
    %p178 = scmp.lt.s32.totalorder %s10, 3
    %p179 = pnand %p177, %p178
    %p180 = pneg %p179
    // Predicated region
    $region9: #{_lambda_.8} parent=5 // pred_check
      _
    $region10: #{_lambda_.8} parent=5 // pred_check_branch
      %182 = sbr.rel (%p179) target = $region12
    $region11: #{_lambda_.8} parent=5 // pred_region
      %s183 = ssub.s32 %s10, 1
      // Predicated region
      $region13: #{_lambda_.8} parent=11 // pred_check
        %p184 = pneg %p113
      $region14: #{_lambda_.8} parent=11 // pred_check_branch
        %186 = sbr.rel (%p184) target = $region16
      $region15: #{_lambda_.8} parent=11 // pred_region
        %p187 = scmp.lt.s32.totalorder %s20, 0
        %s188 = scalar_select %p187, %s20, 0
        %s189 = smul.addr %s188, 320
        %s190 = smul.addr %s189, 4
        %s191 = scalar_lea.vmem %s2, %s190
      $region16: #{_lambda_.8} parent=11 // pred_fallthru
        _
      // Predicated region
      $region17: #{_lambda_.8} parent=11 // pred_check
        %p192 = pneg %p139
      $region18: #{_lambda_.8} parent=11 // pred_check_branch
        %194 = sbr.rel (%p192) target = $region20
      $region19: #{_lambda_.8} parent=11 // pred_region
        %p195 = scmp.lt.s32.totalorder %s20, 0
        %s196 = scalar_select %p195, %s20, 0
        %s197 = smul.addr %s196, 2
        %s198 = scalar_lea.vmem %s3, %s197
      $region20: #{_lambda_.8} parent=11 // pred_fallthru
        _
    $region12: #{_lambda_.8} parent=5 // pred_fallthru
      _
    %p199 = scmp.lt.s32.totalorder %s10, 2
    // Predicated region
    $region21: #{_lambda_.8} parent=5 // pred_check
      %p200 = pneg %p199
    $region22: #{_lambda_.8} parent=5 // pred_check_branch
      %202 = sbr.rel (%p200) target = $region24
    $region23: #{_lambda_.8} parent=5 // pred_region
      // Predicated region
      $region25: #{_lambda_.8} parent=23 // pred_check
        %p203 = pneg %p51
      $region26: #{_lambda_.8} parent=23 // pred_check_branch
        %205 = sbr.rel (%p203) target = $region28
      $region27: #{_lambda_.8} parent=23 // pred_region
        %p206 = scmp.lt.s32.totalorder %s18, 1
        %s207 = scalar_select %p206, %s18, 1
        %p208 = scmp.lt.s32.totalorder %s19, 1
        %s209 = scalar_select %p208, %s19, 1
        %s210 = smul.addr %s209, 2
        %s211 = smul.addr %s207, 4
        %s212 = sadd.s32 %s210, %s211
        %s213 = smul.addr %s212, 4
        %s214 = scalar_lea.vmem %s0, %s213
      $region28: #{_lambda_.8} parent=23 // pred_fallthru
        _
      // Predicated region
      $region29: #{_lambda_.8} parent=23 // pred_check
        %p215 = pneg %p81
      $region30: #{_lambda_.8} parent=23 // pred_check_branch
        %217 = sbr.rel (%p215) target = $region32
      $region31: #{_lambda_.8} parent=23 // pred_region
        %s218 = sadd.s32 %s19, 1
        %p219 = scmp.lt.s32.totalorder %s18, 1
        %s220 = scalar_select %p219, %s18, 1
        %p221 = scmp.lt.s32.totalorder %s218, 1
        %s222 = scalar_select %p221, %s218, 1
        %s223 = smul.addr %s222, 2
        %s224 = smul.addr %s220, 4
        %s225 = sadd.s32 %s223, %s224
        %s226 = smul.addr %s225, 4
        %s227 = scalar_lea.vmem %s1, %s226
        %s228 = sadd.s32 %s19, 1
      $region32: #{_lambda_.8} parent=23 // pred_fallthru
        _
    $region24: #{_lambda_.8} parent=5 // pred_fallthru
      _
    %p229 = scmp.le.s32.totalorder 1, %s10
    %p230 = scmp.lt.s32.totalorder %s10, 3
    %p231 = pnand %p229, %p230
    %p232 = pneg %p231
    // Predicated region
    $region33: #{_lambda_.8} parent=5 // pred_check
      _
    $region34: #{_lambda_.8} parent=5 // pred_check_branch
      %234 = sbr.rel (%p231) target = $region36
    $region35: #{_lambda_.8} parent=5 // pred_region
      %s235 = ssub.s32 %s10, 1
      %p236 = scmp.lt.s32.totalorder %s21, 1
      %s237 = scalar_select %p236, %s21, 1
      %p238 = scmp.lt.s32.totalorder %s22, 1
      %s239 = scalar_select %p238, %s22, 1
      %s240 = smul.addr %s239, 2
      %s241 = smul.addr %s237, 4
      %s242 = sadd.s32 %s240, %s241
      %s243 = smul.addr %s242, 4
      %s244 = scalar_lea.vmem %s0, %s243
      %p245 = pneg %p57
      %p246 = pneg %p54
      %s247 = sadd.s32 %s22, 1
      %p248 = scmp.lt.s32.totalorder %s21, 1
      %s249 = scalar_select %p248, %s21, 1
      %p250 = scmp.lt.s32.totalorder %s247, 1
      %s251 = scalar_select %p250, %s247, 1
      %s252 = smul.addr %s251, 2
      %s253 = smul.addr %s249, 4
      %s254 = sadd.s32 %s252, %s253
      %s255 = smul.addr %s254, 4
      %s256 = scalar_lea.vmem %s1, %s255
      %p257 = pneg %p87
      %p258 = pneg %p84
      %p259 = scmp.lt.s32.totalorder %s20, 0
      %s260 = scalar_select %p259, %s20, 0
      %s261 = smul.addr %s260, 320
      %s262 = smul.addr %s261, 4
      %s263 = scalar_lea.vmem %s2, %s262
      %p264 = pneg %p113
      %p265 = pneg %p110
      %p266 = scmp.lt.s32.totalorder %s20, 0
      %s267 = scalar_select %p266, %s20, 0
      %s268 = smul.addr %s267, 2
      %s269 = scalar_lea.vmem %s3, %s268
      %p270 = pneg %p139
      %p271 = pneg %p136
      %p272 = pneg %p169
      %p273 = pneg %p166
      %s274 = smul.u32 2, %s20
      %p275 = scmp.lt.s32.totalorder %s21, 1
      %s276 = scalar_select %p275, %s21, 1
      %p277 = scmp.lt.s32.totalorder %s22, 0
      %s278 = scalar_select %p277, %s22, 0
      %p279 = scmp.lt.s32.totalorder %s274, 1
      %s280 = scalar_select %p279, %s274, 1
      %s281 = smul.addr %s278, 2
      %s282 = sadd.s32 %s280, %s281
      %s283 = smul.addr %s276, 2
      %s284 = sadd.s32 %s282, %s283
      %s285 = smul.addr %s284, 4
      %s286 = scalar_lea.vmem %s4, %s285
      %p287 = scmp.lt.s32.totalorder %s21, 1
      %s288 = scalar_select %p287, %s21, 1
      %p289 = scmp.lt.s32.totalorder %s22, 1
      %s290 = scalar_select %p289, %s22, 1
      %s291 = smul.addr %s290, 2
      %s292 = smul.addr %s288, 4
      %s293 = sadd.s32 %s291, %s292
      %s294 = smul.addr %s293, 4
      %s295 = scalar_lea.vmem %s0, %s294
      %s296 = sadd.s32 %s22, 1
      %p297 = scmp.lt.s32.totalorder %s21, 1
      %s298 = scalar_select %p297, %s21, 1
      %p299 = scmp.lt.s32.totalorder %s296, 1
      %s300 = scalar_select %p299, %s296, 1
      %s301 = smul.addr %s300, 2
      %s302 = smul.addr %s298, 4
      %s303 = sadd.s32 %s301, %s302
      %s304 = smul.addr %s303, 4
      %s305 = scalar_lea.vmem %s1, %s304
      %s306 = sadd.s32 %s22, 1
      %p307 = scmp.lt.s32.totalorder %s20, 0
      %s308 = scalar_select %p307, %s20, 0
      %s309 = smul.addr %s308, 320
      %s310 = smul.addr %s309, 4
      %s311 = scalar_lea.vmem %s2, %s310
      %p312 = scmp.lt.s32.totalorder %s20, 0
      %s313 = scalar_select %p312, %s20, 0
      %s314 = smul.addr %s313, 2
      %s315 = scalar_lea.vmem %s3, %s314
      %s316 = smul.u32 2, %s20
      %p317 = scmp.lt.s32.totalorder %s21, 1
      %s318 = scalar_select %p317, %s21, 1
      %p319 = scmp.lt.s32.totalorder %s22, 0
      %s320 = scalar_select %p319, %s22, 0
      %p321 = scmp.lt.s32.totalorder %s316, 1
      %s322 = scalar_select %p321, %s316, 1
      %s323 = smul.addr %s320, 2
      %s324 = sadd.s32 %s322, %s323
      %s325 = smul.addr %s318, 2
      %s326 = sadd.s32 %s324, %s325
      %s327 = smul.addr %s326, 4
      %s328 = scalar_lea.vmem %s4, %s327
      %s329 = smul.u32 2, %s20
      %v330 = vld [vmem:[%s295] sm:$0xff]
      %v332 = vunpack.c.l.b16 %v330
      %v333 = vunpack.c.h.b16 %v330
      %v334 = vpack.c.b16 %v332, %v332
      %v335 = vpack.c.b16 %v333, %v333
      %338 = vst [vmem:[#allocation2] sm:$0xf] %v334
      %339 = vst [vmem:[#allocation2 + $0x8] sm:$0xf] %v335
      %v340 = vld [vmem:[%s305] sm:$0xff]
      %v342 = vunpack.c.l.b16 %v340
      %v343 = vunpack.c.h.b16 %v340
      %v344 = vpack.c.b16 %v342, %v342
      %v345 = vpack.c.b16 %v343, %v343
      %348 = vst [vmem:[#allocation2] sm:$0xf0] %v344
      %349 = vst [vmem:[#allocation2 + $0x8] sm:$0xf0] %v345
      %v350 = vld [vmem:[#allocation2] sm:$0xf]
      %v351 = vld [vmem:[#allocation2 + $0x8] sm:$0xf]
      %v352 = vld [vmem:[%s311] sm:$0xff]
      %v353 = vld [vmem:[%s311 + $0x8] sm:$0xff]
      %v354 = vld [vmem:[%s311 + $0x10] sm:$0xff]
      %v355 = vld [vmem:[%s311 + $0x18] sm:$0xff]
      %v356 = vld [vmem:[%s311 + $0x20] sm:$0xff]
      %v357 = vld [vmem:[%s311 + $0x28] sm:$0xff]
      %v358 = vld [vmem:[%s311 + $0x30] sm:$0xff]
      %v359 = vld [vmem:[%s311 + $0x38] sm:$0xff]
      %v360 = vld [vmem:[%s311 + $0x40] sm:$0xff]
      %v361 = vld [vmem:[%s311 + $0x48] sm:$0xff]
      %v362 = vld [vmem:[%s311 + $0x50] sm:$0xff]
      %v363 = vld [vmem:[%s311 + $0x58] sm:$0xff]
      %v364 = vld [vmem:[%s311 + $0x60] sm:$0xff]
      %v365 = vld [vmem:[%s311 + $0x68] sm:$0xff]
      %v366 = vld [vmem:[%s311 + $0x70] sm:$0xff]
      %v367 = vld [vmem:[%s311 + $0x78] sm:$0xff]
      %v368 = vld [vmem:[%s311 + $0x80] sm:$0xff]
      %v369 = vld [vmem:[%s311 + $0x88] sm:$0xff]
      %v370 = vld [vmem:[%s311 + $0x90] sm:$0xff]
      %v371 = vld [vmem:[%s311 + $0x98] sm:$0xff]
      %v372 = vld [vmem:[%s311 + $0xa0] sm:$0xff]
      %v373 = vld [vmem:[%s311 + $0xa8] sm:$0xff]
      %v374 = vld [vmem:[%s311 + $0xb0] sm:$0xff]
      %v375 = vld [vmem:[%s311 + $0xb8] sm:$0xff]
      %v376 = vld [vmem:[%s311 + $0xc0] sm:$0xff]
      %v377 = vld [vmem:[%s311 + $0xc8] sm:$0xff]
      %v378 = vld [vmem:[%s311 + $0xd0] sm:$0xff]
      %v379 = vld [vmem:[%s311 + $0xd8] sm:$0xff]
      %v380 = vld [vmem:[%s311 + $0xe0] sm:$0xff]
      %v381 = vld [vmem:[%s311 + $0xe8] sm:$0xff]
      %v382 = vld [vmem:[%s311 + $0xf0] sm:$0xff]
      %v383 = vld [vmem:[%s311 + $0xf8] sm:$0xff]
      %v416 = vunpack.c.l.b16 %v352
      %v417 = vunpack.c.h.b16 %v352
      %v418 = vunpack.c.l.b16 %v353
      %v419 = vunpack.c.h.b16 %v353
      %v420 = vunpack.c.l.b16 %v354
      %v421 = vunpack.c.h.b16 %v354
      %v422 = vunpack.c.l.b16 %v355
      %v423 = vunpack.c.h.b16 %v355
      %v424 = vunpack.c.l.b16 %v356
      %v425 = vunpack.c.h.b16 %v356
      %v426 = vunpack.c.l.b16 %v357
      %v427 = vunpack.c.h.b16 %v357
      %v428 = vunpack.c.l.b16 %v358
      %v429 = vunpack.c.h.b16 %v358
      %v430 = vunpack.c.l.b16 %v359
      %v431 = vunpack.c.h.b16 %v359
      %v432 = vunpack.c.l.b16 %v360
      %v433 = vunpack.c.h.b16 %v360
      %v434 = vunpack.c.l.b16 %v361
      %v435 = vunpack.c.h.b16 %v361
      %v436 = vunpack.c.l.b16 %v362
      %v437 = vunpack.c.h.b16 %v362
      %v438 = vunpack.c.l.b16 %v363
      %v439 = vunpack.c.h.b16 %v363
      %v440 = vunpack.c.l.b16 %v364
      %v441 = vunpack.c.h.b16 %v364
      %v442 = vunpack.c.l.b16 %v365
      %v443 = vunpack.c.h.b16 %v365
      %v444 = vunpack.c.l.b16 %v366
      %v445 = vunpack.c.h.b16 %v366
      %v446 = vunpack.c.l.b16 %v367
      %v447 = vunpack.c.h.b16 %v367
      %v448 = vunpack.c.l.b16 %v368
      %v449 = vunpack.c.h.b16 %v368
      %v450 = vunpack.c.l.b16 %v369
      %v451 = vunpack.c.h.b16 %v369
      %v452 = vunpack.c.l.b16 %v370
      %v453 = vunpack.c.h.b16 %v370
      %v454 = vunpack.c.l.b16 %v371
      %v455 = vunpack.c.h.b16 %v371
      %v456 = vunpack.c.l.b16 %v372
      %v457 = vunpack.c.h.b16 %v372
      %v458 = vunpack.c.l.b16 %v373
      %v459 = vunpack.c.h.b16 %v373
      %v460 = vunpack.c.l.b16 %v374
      %v461 = vunpack.c.h.b16 %v374
      %v462 = vunpack.c.l.b16 %v375
      %v463 = vunpack.c.h.b16 %v375
      %v464 = vunpack.c.l.b16 %v376
      %v465 = vunpack.c.h.b16 %v376
      %v466 = vunpack.c.l.b16 %v377
      %v467 = vunpack.c.h.b16 %v377
      %v468 = vunpack.c.l.b16 %v378
      %v469 = vunpack.c.h.b16 %v378
      %v470 = vunpack.c.l.b16 %v379
      %v471 = vunpack.c.h.b16 %v379
      %v472 = vunpack.c.l.b16 %v380
      %v473 = vunpack.c.h.b16 %v380
      %v474 = vunpack.c.l.b16 %v381
      %v475 = vunpack.c.h.b16 %v381
      %v476 = vunpack.c.l.b16 %v382
      %v477 = vunpack.c.h.b16 %v382
      %v478 = vunpack.c.l.b16 %v383
      %v479 = vunpack.c.h.b16 %v383
      %v480 = vpack.c.b16 %v418, %v416
      %v481 = vpack.c.b16 %v419, %v417
      %v482 = vpack.c.b16 %v422, %v420
      %v483 = vpack.c.b16 %v423, %v421
      %v484 = vpack.c.b16 %v426, %v424
      %v485 = vpack.c.b16 %v427, %v425
      %v486 = vpack.c.b16 %v430, %v428
      %v487 = vpack.c.b16 %v431, %v429
      %v488 = vpack.c.b16 %v434, %v432
      %v489 = vpack.c.b16 %v435, %v433
      %v490 = vpack.c.b16 %v438, %v436
      %v491 = vpack.c.b16 %v439, %v437
      %v492 = vpack.c.b16 %v442, %v440
      %v493 = vpack.c.b16 %v443, %v441
      %v494 = vpack.c.b16 %v446, %v444
      %v495 = vpack.c.b16 %v447, %v445
      %v496 = vpack.c.b16 %v450, %v448
      %v497 = vpack.c.b16 %v451, %v449
      %v498 = vpack.c.b16 %v454, %v452
      %v499 = vpack.c.b16 %v455, %v453
      %v500 = vpack.c.b16 %v458, %v456
      %v501 = vpack.c.b16 %v459, %v457
      %v502 = vpack.c.b16 %v462, %v460
      %v503 = vpack.c.b16 %v463, %v461
      %v504 = vpack.c.b16 %v466, %v464
      %v505 = vpack.c.b16 %v467, %v465
      %v506 = vpack.c.b16 %v470, %v468
      %v507 = vpack.c.b16 %v471, %v469
      %v508 = vpack.c.b16 %v474, %v472
      %v509 = vpack.c.b16 %v475, %v473
      %v510 = vpack.c.b16 %v478, %v476
      %v511 = vpack.c.b16 %v479, %v477
      %544 = vmatprep.subr.bf16.mxu0 %v481
      %545 = vmatpush1.bf16.msra.mxu0 %v480
      %546 = vmatprep.subr.bf16.mxu0 %v483
      %547 = vmatpush1.bf16.msra.mxu0 %v482
      %548 = vmatprep.subr.bf16.mxu0 %v485
      %549 = vmatpush1.bf16.msra.mxu0 %v484
      %550 = vmatprep.subr.bf16.mxu0 %v487
      %551 = vmatpush1.bf16.msra.mxu0 %v486
      %552 = vmatprep.subr.bf16.mxu0 %v489
      %553 = vmatpush1.bf16.msra.mxu0 %v488
      %554 = vmatprep.subr.bf16.mxu0 %v491
      %555 = vmatpush1.bf16.msra.mxu0 %v490
      %556 = vmatprep.subr.bf16.mxu0 %v493
      %557 = vmatpush1.bf16.msra.mxu0 %v492
      %558 = vmatprep.subr.bf16.mxu0 %v495
      %559 = vmatpush1.bf16.msra.mxu0 %v494
      %560 = vmatprep.subr.bf16.mxu0 %v497
      %561 = vmatpush1.bf16.msra.mxu0 %v496
      %562 = vmatprep.subr.bf16.mxu0 %v499
      %563 = vmatpush1.bf16.msra.mxu0 %v498
      %564 = vmatprep.subr.bf16.mxu0 %v501
      %565 = vmatpush1.bf16.msra.mxu0 %v500
      %566 = vmatprep.subr.bf16.mxu0 %v503
      %567 = vmatpush1.bf16.msra.mxu0 %v502
      %568 = vmatprep.subr.bf16.mxu0 %v505
      %569 = vmatpush1.bf16.msra.mxu0 %v504
      %570 = vmatprep.subr.bf16.mxu0 %v507
      %571 = vmatpush1.bf16.msra.mxu0 %v506
      %572 = vmatprep.subr.bf16.mxu0 %v509
      %573 = vmatpush1.bf16.msra.mxu0 %v508
      %574 = vmatprep.subr.bf16.mxu0 %v511
      %575 = vmatpush1.bf16.msra.mxu0 %v510
      %576 = vmatprep.mubr.bf16.mxu0 %v351
      %577 = vmatmul.mubr.bf16.gmra.mrb[0].mxu0 %v350
      %v578 = vpop.f32.mrb[0].mxu0
      %v579 = vadd.f32 0.0, %v578
      %v580 = vpop.f32.mrb[0].mxu0
      %v581 = vadd.f32 0.0, %v580
      %v582 = vpop.f32.mrb[0].mxu0
      %v583 = vpop.f32.mrb[0].mxu0
      %584 = vdwg.mxu0
      %585 = vst [vmem:[#allocation3] sm:$0xff] %v579
      %586 = vst [vmem:[#allocation3 + $0x8] sm:$0xff] %v581
      %v587 = vld [vmem:[#allocation2] sm:$0x1f]
      %v588 = vld [vmem:[#allocation2 + $0x8] sm:$0x1f]
      %s589 = scalar_lea.vmem %s311, 256
      %v590 = vld [vmem:[%s589] sm:$0xff]
      %v591 = vld [vmem:[%s589 + $0x8] sm:$0xff]
      %v592 = vld [vmem:[%s589 + $0x10] sm:$0xff]
      %v593 = vld [vmem:[%s589 + $0x18] sm:$0xff]
      %v594 = vld [vmem:[%s589 + $0x20] sm:$0xff]
      %v595 = vld [vmem:[%s589 + $0x28] sm:$0xff]
      %v596 = vld [vmem:[%s589 + $0x30] sm:$0xff]
      %v597 = vld [vmem:[%s589 + $0x38] sm:$0xff]
      %v598 = vld [vmem:[%s589 + $0x40] sm:$0xff]
      %v599 = vld [vmem:[%s589 + $0x48] sm:$0xff]
      %v600 = vld [vmem:[%s589 + $0x50] sm:$0xff]
      %v601 = vld [vmem:[%s589 + $0x58] sm:$0xff]
      %v602 = vld [vmem:[%s589 + $0x60] sm:$0xff]
      %v603 = vld [vmem:[%s589 + $0x68] sm:$0xff]
      %v604 = vld [vmem:[%s589 + $0x70] sm:$0xff]
      %v605 = vld [vmem:[%s589 + $0x78] sm:$0xff]
      %v606 = vld [vmem:[%s589 + $0x80] sm:$0xff]
      %v607 = vld [vmem:[%s589 + $0x88] sm:$0xff]
      %v608 = vld [vmem:[%s589 + $0x90] sm:$0xff]
      %v609 = vld [vmem:[%s589 + $0x98] sm:$0xff]
      %v610 = vld [vmem:[%s589 + $0xa0] sm:$0xff]
      %v611 = vld [vmem:[%s589 + $0xa8] sm:$0xff]
      %v612 = vld [vmem:[%s589 + $0xb0] sm:$0xff]
      %v613 = vld [vmem:[%s589 + $0xb8] sm:$0xff]
      %v614 = vld [vmem:[%s589 + $0xc0] sm:$0xff]
      %v615 = vld [vmem:[%s589 + $0xc8] sm:$0xff]
      %v616 = vld [vmem:[%s589 + $0xd0] sm:$0xff]
      %v617 = vld [vmem:[%s589 + $0xd8] sm:$0xff]
      %v618 = vld [vmem:[%s589 + $0xe0] sm:$0xff]
      %v619 = vld [vmem:[%s589 + $0xe8] sm:$0xff]
      %v620 = vld [vmem:[%s589 + $0xf0] sm:$0xff]
      %v621 = vld [vmem:[%s589 + $0xf8] sm:$0xff]
      %v623 = vshrl.u32 %v587, 16
      %v625 = vshll.u32 %v587, 16
      %v627 = vrot.slane %v625, 1
      %v628 = vor.u32 %v623, %v627
      %v630 = vshrl.u32 %v588, 16
      %v632 = vshll.u32 %v588, 16
      %v634 = vrot.slane %v632, 1
      %v635 = vor.u32 %v630, %v634
      %v670 = vunpack.c.l.b16 %v590
      %v671 = vunpack.c.h.b16 %v590
      %v672 = vunpack.c.l.b16 %v591
      %v673 = vunpack.c.h.b16 %v591
      %v674 = vunpack.c.l.b16 %v592
      %v675 = vunpack.c.h.b16 %v592
      %v676 = vunpack.c.l.b16 %v593
      %v677 = vunpack.c.h.b16 %v593
      %v678 = vunpack.c.l.b16 %v594
      %v679 = vunpack.c.h.b16 %v594
      %v680 = vunpack.c.l.b16 %v595
      %v681 = vunpack.c.h.b16 %v595
      %v682 = vunpack.c.l.b16 %v596
      %v683 = vunpack.c.h.b16 %v596
      %v684 = vunpack.c.l.b16 %v597
      %v685 = vunpack.c.h.b16 %v597
      %v686 = vunpack.c.l.b16 %v598
      %v687 = vunpack.c.h.b16 %v598
      %v688 = vunpack.c.l.b16 %v599
      %v689 = vunpack.c.h.b16 %v599
      %v690 = vunpack.c.l.b16 %v600
      %v691 = vunpack.c.h.b16 %v600
      %v692 = vunpack.c.l.b16 %v601
      %v693 = vunpack.c.h.b16 %v601
      %v694 = vunpack.c.l.b16 %v602
      %v695 = vunpack.c.h.b16 %v602
      %v696 = vunpack.c.l.b16 %v603
      %v697 = vunpack.c.h.b16 %v603
      %v698 = vunpack.c.l.b16 %v604
      %v699 = vunpack.c.h.b16 %v604
      %v700 = vunpack.c.l.b16 %v605
      %v701 = vunpack.c.h.b16 %v605
      %v702 = vunpack.c.l.b16 %v606
      %v703 = vunpack.c.h.b16 %v606
      %v704 = vunpack.c.l.b16 %v607
      %v705 = vunpack.c.h.b16 %v607
      %v706 = vunpack.c.l.b16 %v608
      %v707 = vunpack.c.h.b16 %v608
      %v708 = vunpack.c.l.b16 %v609
      %v709 = vunpack.c.h.b16 %v609
      %v710 = vunpack.c.l.b16 %v610
      %v711 = vunpack.c.h.b16 %v610
      %v712 = vunpack.c.l.b16 %v611
      %v713 = vunpack.c.h.b16 %v611
      %v714 = vunpack.c.l.b16 %v612
      %v715 = vunpack.c.h.b16 %v612
      %v716 = vunpack.c.l.b16 %v613
      %v717 = vunpack.c.h.b16 %v613
      %v718 = vunpack.c.l.b16 %v614
      %v719 = vunpack.c.h.b16 %v614
      %v720 = vunpack.c.l.b16 %v615
      %v721 = vunpack.c.h.b16 %v615
      %v722 = vunpack.c.l.b16 %v616
      %v723 = vunpack.c.h.b16 %v616
      %v724 = vunpack.c.l.b16 %v617
      %v725 = vunpack.c.h.b16 %v617
      %v726 = vunpack.c.l.b16 %v618
      %v727 = vunpack.c.h.b16 %v618
      %v728 = vunpack.c.l.b16 %v619
      %v729 = vunpack.c.h.b16 %v619
      %v730 = vunpack.c.l.b16 %v620
      %v731 = vunpack.c.h.b16 %v620
      %v732 = vunpack.c.l.b16 %v621
      %v733 = vunpack.c.h.b16 %v621
      %v734 = vpack.c.b16 %v672, %v670
      %v735 = vpack.c.b16 %v673, %v671
      %v736 = vpack.c.b16 %v676, %v674
      %v737 = vpack.c.b16 %v677, %v675
      %v738 = vpack.c.b16 %v680, %v678
      %v739 = vpack.c.b16 %v681, %v679
      %v740 = vpack.c.b16 %v684, %v682
      %v741 = vpack.c.b16 %v685, %v683
      %v742 = vpack.c.b16 %v688, %v686
      %v743 = vpack.c.b16 %v689, %v687
      %v744 = vpack.c.b16 %v692, %v690
      %v745 = vpack.c.b16 %v693, %v691
      %v746 = vpack.c.b16 %v696, %v694
      %v747 = vpack.c.b16 %v697, %v695
      %v748 = vpack.c.b16 %v700, %v698
      %v749 = vpack.c.b16 %v701, %v699
      %v750 = vpack.c.b16 %v704, %v702
      %v751 = vpack.c.b16 %v705, %v703
      %v752 = vpack.c.b16 %v708, %v706
      %v753 = vpack.c.b16 %v709, %v707
      %v754 = vpack.c.b16 %v712, %v710
      %v755 = vpack.c.b16 %v713, %v711
      %v756 = vpack.c.b16 %v716, %v714
      %v757 = vpack.c.b16 %v717, %v715
      %v758 = vpack.c.b16 %v720, %v718
      %v759 = vpack.c.b16 %v721, %v719
      %v760 = vpack.c.b16 %v724, %v722
      %v761 = vpack.c.b16 %v725, %v723
      %v762 = vpack.c.b16 %v728, %v726
      %v763 = vpack.c.b16 %v729, %v727
      %v764 = vpack.c.b16 %v732, %v730
      %v765 = vpack.c.b16 %v733, %v731
      %798 = vmatprep.subr.bf16.mxu0 %v735
      %799 = vmatpush1.bf16.msra.mxu0 %v734
      %800 = vmatprep.subr.bf16.mxu0 %v737
      %801 = vmatpush1.bf16.msra.mxu0 %v736
      %802 = vmatprep.subr.bf16.mxu0 %v739
      %803 = vmatpush1.bf16.msra.mxu0 %v738
      %804 = vmatprep.subr.bf16.mxu0 %v741
      %805 = vmatpush1.bf16.msra.mxu0 %v740
      %806 = vmatprep.subr.bf16.mxu0 %v743
      %807 = vmatpush1.bf16.msra.mxu0 %v742
      %808 = vmatprep.subr.bf16.mxu0 %v745
      %809 = vmatpush1.bf16.msra.mxu0 %v744
      %810 = vmatprep.subr.bf16.mxu0 %v747
      %811 = vmatpush1.bf16.msra.mxu0 %v746
      %812 = vmatprep.subr.bf16.mxu0 %v749
      %813 = vmatpush1.bf16.msra.mxu0 %v748
      %814 = vmatprep.subr.bf16.mxu0 %v751
      %815 = vmatpush1.bf16.msra.mxu0 %v750
      %816 = vmatprep.subr.bf16.mxu0 %v753
      %817 = vmatpush1.bf16.msra.mxu0 %v752
      %818 = vmatprep.subr.bf16.mxu0 %v755
      %819 = vmatpush1.bf16.msra.mxu0 %v754
      %820 = vmatprep.subr.bf16.mxu0 %v757
      %821 = vmatpush1.bf16.msra.mxu0 %v756
      %822 = vmatprep.subr.bf16.mxu0 %v759
      %823 = vmatpush1.bf16.msra.mxu0 %v758
      %824 = vmatprep.subr.bf16.mxu0 %v761
      %825 = vmatpush1.bf16.msra.mxu0 %v760
      %826 = vmatprep.subr.bf16.mxu0 %v763
      %827 = vmatpush1.bf16.msra.mxu0 %v762
      %828 = vmatprep.subr.bf16.mxu0 %v765
      %829 = vmatpush1.bf16.msra.mxu0 %v764
      %830 = vmatprep.mubr.bf16.mxu0 %v635
      %831 = vmatmul.mubr.bf16.gmra.mrb[0].mxu0 %v628
      %v832 = vpop.f32.mrb[0].mxu0
      %v833 = vadd.f32 0.0, %v832
      %v834 = vpop.f32.mrb[0].mxu0
      %v835 = vadd.f32 0.0, %v834
      %v836 = vpop.f32.mrb[0].mxu0
      %v837 = vpop.f32.mrb[0].mxu0
      %838 = vdwg.mxu0
      %v839 = vld [vmem:[#allocation3] sm:$0xff]
      %v840 = vld [vmem:[#allocation3 + $0x8] sm:$0xff]
      %v841 = vadd.f32 %v839, %v833
      %v842 = vadd.f32 %v840, %v835
      %843 = vst [vmem:[#allocation3] sm:$0xff] %v841
      %844 = vst [vmem:[#allocation3 + $0x8] sm:$0xff] %v842
      %v845 = vld [vmem:[#allocation2] sm:$0x1e]
      %v846 = vld [vmem:[#allocation2 + $0x8] sm:$0x1e]
      %s847 = scalar_lea.vmem %s311, 512
      %v848 = vld [vmem:[%s847] sm:$0xff]
      %v849 = vld [vmem:[%s847 + $0x8] sm:$0xff]
      %v850 = vld [vmem:[%s847 + $0x10] sm:$0xff]
      %v851 = vld [vmem:[%s847 + $0x18] sm:$0xff]
      %v852 = vld [vmem:[%s847 + $0x20] sm:$0xff]
      %v853 = vld [vmem:[%s847 + $0x28] sm:$0xff]
      %v854 = vld [vmem:[%s847 + $0x30] sm:$0xff]
      %v855 = vld [vmem:[%s847 + $0x38] sm:$0xff]
      %v856 = vld [vmem:[%s847 + $0x40] sm:$0xff]
      %v857 = vld [vmem:[%s847 + $0x48] sm:$0xff]
      %v858 = vld [vmem:[%s847 + $0x50] sm:$0xff]
      %v859 = vld [vmem:[%s847 + $0x58] sm:$0xff]
      %v860 = vld [vmem:[%s847 + $0x60] sm:$0xff]
      %v861 = vld [vmem:[%s847 + $0x68] sm:$0xff]
      %v862 = vld [vmem:[%s847 + $0x70] sm:$0xff]
      %v863 = vld [vmem:[%s847 + $0x78] sm:$0xff]
      %v864 = vld [vmem:[%s847 + $0x80] sm:$0xff]
      %v865 = vld [vmem:[%s847 + $0x88] sm:$0xff]
      %v866 = vld [vmem:[%s847 + $0x90] sm:$0xff]
      %v867 = vld [vmem:[%s847 + $0x98] sm:$0xff]
      %v868 = vld [vmem:[%s847 + $0xa0] sm:$0xff]
      %v869 = vld [vmem:[%s847 + $0xa8] sm:$0xff]
      %v870 = vld [vmem:[%s847 + $0xb0] sm:$0xff]
      %v871 = vld [vmem:[%s847 + $0xb8] sm:$0xff]
      %v872 = vld [vmem:[%s847 + $0xc0] sm:$0xff]
      %v873 = vld [vmem:[%s847 + $0xc8] sm:$0xff]
      %v874 = vld [vmem:[%s847 + $0xd0] sm:$0xff]
      %v875 = vld [vmem:[%s847 + $0xd8] sm:$0xff]
      %v876 = vld [vmem:[%s847 + $0xe0] sm:$0xff]
      %v877 = vld [vmem:[%s847 + $0xe8] sm:$0xff]
      %v878 = vld [vmem:[%s847 + $0xf0] sm:$0xff]
      %v879 = vld [vmem:[%s847 + $0xf8] sm:$0xff]
      %v882 = vrot.slane %v845, 1
      %v883 = vrot.slane %v846, 1
      %v918 = vunpack.c.l.b16 %v848
      %v919 = vunpack.c.h.b16 %v848
      %v920 = vunpack.c.l.b16 %v849
      %v921 = vunpack.c.h.b16 %v849
      %v922 = vunpack.c.l.b16 %v850
      %v923 = vunpack.c.h.b16 %v850
      %v924 = vunpack.c.l.b16 %v851
      %v925 = vunpack.c.h.b16 %v851
      %v926 = vunpack.c.l.b16 %v852
      %v927 = vunpack.c.h.b16 %v852
      %v928 = vunpack.c.l.b16 %v853
      %v929 = vunpack.c.h.b16 %v853
      %v930 = vunpack.c.l.b16 %v854
      %v931 = vunpack.c.h.b16 %v854
      %v932 = vunpack.c.l.b16 %v855
      %v933 = vunpack.c.h.b16 %v855
      %v934 = vunpack.c.l.b16 %v856
      %v935 = vunpack.c.h.b16 %v856
      %v936 = vunpack.c.l.b16 %v857
      %v937 = vunpack.c.h.b16 %v857
      %v938 = vunpack.c.l.b16 %v858
      %v939 = vunpack.c.h.b16 %v858
      %v940 = vunpack.c.l.b16 %v859
      %v941 = vunpack.c.h.b16 %v859
      %v942 = vunpack.c.l.b16 %v860
      %v943 = vunpack.c.h.b16 %v860
      %v944 = vunpack.c.l.b16 %v861
      %v945 = vunpack.c.h.b16 %v861
      %v946 = vunpack.c.l.b16 %v862
      %v947 = vunpack.c.h.b16 %v862
      %v948 = vunpack.c.l.b16 %v863
      %v949 = vunpack.c.h.b16 %v863
      %v950 = vunpack.c.l.b16 %v864
      %v951 = vunpack.c.h.b16 %v864
      %v952 = vunpack.c.l.b16 %v865
      %v953 = vunpack.c.h.b16 %v865
      %v954 = vunpack.c.l.b16 %v866
      %v955 = vunpack.c.h.b16 %v866
      %v956 = vunpack.c.l.b16 %v867
      %v957 = vunpack.c.h.b16 %v867
      %v958 = vunpack.c.l.b16 %v868
      %v959 = vunpack.c.h.b16 %v868
      %v960 = vunpack.c.l.b16 %v869
      %v961 = vunpack.c.h.b16 %v869
      %v962 = vunpack.c.l.b16 %v870
      %v963 = vunpack.c.h.b16 %v870
      %v964 = vunpack.c.l.b16 %v871
      %v965 = vunpack.c.h.b16 %v871
      %v966 = vunpack.c.l.b16 %v872
      %v967 = vunpack.c.h.b16 %v872
      %v968 = vunpack.c.l.b16 %v873
      %v969 = vunpack.c.h.b16 %v873
      %v970 = vunpack.c.l.b16 %v874
      %v971 = vunpack.c.h.b16 %v874
      %v972 = vunpack.c.l.b16 %v875
      %v973 = vunpack.c.h.b16 %v875
      %v974 = vunpack.c.l.b16 %v876
      %v975 = vunpack.c.h.b16 %v876
      %v976 = vunpack.c.l.b16 %v877
      %v977 = vunpack.c.h.b16 %v877
      %v978 = vunpack.c.l.b16 %v878
      %v979 = vunpack.c.h.b16 %v878
      %v980 = vunpack.c.l.b16 %v879
      %v981 = vunpack.c.h.b16 %v879
      %v982 = vpack.c.b16 %v920, %v918
      %v983 = vpack.c.b16 %v921, %v919
      %v984 = vpack.c.b16 %v924, %v922
      %v985 = vpack.c.b16 %v925, %v923
      %v986 = vpack.c.b16 %v928, %v926
      %v987 = vpack.c.b16 %v929, %v927
      %v988 = vpack.c.b16 %v932, %v930
      %v989 = vpack.c.b16 %v933, %v931
      %v990 = vpack.c.b16 %v936, %v934
      %v991 = vpack.c.b16 %v937, %v935
      %v992 = vpack.c.b16 %v940, %v938
      %v993 = vpack.c.b16 %v941, %v939
      %v994 = vpack.c.b16 %v944, %v942
      %v995 = vpack.c.b16 %v945, %v943
      %v996 = vpack.c.b16 %v948, %v946
      %v997 = vpack.c.b16 %v949, %v947
      %v998 = vpack.c.b16 %v952, %v950
      %v999 = vpack.c.b16 %v953, %v951
      %v1000 = vpack.c.b16 %v956, %v954
      %v1001 = vpack.c.b16 %v957, %v955
      %v1002 = vpack.c.b16 %v960, %v958
      %v1003 = vpack.c.b16 %v961, %v959
      %v1004 = vpack.c.b16 %v964, %v962
      %v1005 = vpack.c.b16 %v965, %v963
      %v1006 = vpack.c.b16 %v968, %v966
      %v1007 = vpack.c.b16 %v969, %v967
      %v1008 = vpack.c.b16 %v972, %v970
      %v1009 = vpack.c.b16 %v973, %v971
      %v1010 = vpack.c.b16 %v976, %v974
      %v1011 = vpack.c.b16 %v977, %v975
      %v1012 = vpack.c.b16 %v980, %v978
      %v1013 = vpack.c.b16 %v981, %v979
      %1046 = vmatprep.subr.bf16.mxu0 %v983
      %1047 = vmatpush1.bf16.msra.mxu0 %v982
      %1048 = vmatprep.subr.bf16.mxu0 %v985
      %1049 = vmatpush1.bf16.msra.mxu0 %v984
      %1050 = vmatprep.subr.bf16.mxu0 %v987
      %1051 = vmatpush1.bf16.msra.mxu0 %v986
      %1052 = vmatprep.subr.bf16.mxu0 %v989
      %1053 = vmatpush1.bf16.msra.mxu0 %v988
      %1054 = vmatprep.subr.bf16.mxu0 %v991
      %1055 = vmatpush1.bf16.msra.mxu0 %v990
      %1056 = vmatprep.subr.bf16.mxu0 %v993
      %1057 = vmatpush1.bf16.msra.mxu0 %v992
      %1058 = vmatprep.subr.bf16.mxu0 %v995
      %1059 = vmatpush1.bf16.msra.mxu0 %v994
      %1060 = vmatprep.subr.bf16.mxu0 %v997
      %1061 = vmatpush1.bf16.msra.mxu0 %v996
      %1062 = vmatprep.subr.bf16.mxu0 %v999
      %1063 = vmatpush1.bf16.msra.mxu0 %v998
      %1064 = vmatprep.subr.bf16.mxu0 %v1001
      %1065 = vmatpush1.bf16.msra.mxu0 %v1000
      %1066 = vmatprep.subr.bf16.mxu0 %v1003
      %1067 = vmatpush1.bf16.msra.mxu0 %v1002
      %1068 = vmatprep.subr.bf16.mxu0 %v1005
      %1069 = vmatpush1.bf16.msra.mxu0 %v1004
      %1070 = vmatprep.subr.bf16.mxu0 %v1007
      %1071 = vmatpush1.bf16.msra.mxu0 %v1006
      %1072 = vmatprep.subr.bf16.mxu0 %v1009
      %1073 = vmatpush1.bf16.msra.mxu0 %v1008
      %1074 = vmatprep.subr.bf16.mxu0 %v1011
      %1075 = vmatpush1.bf16.msra.mxu0 %v1010
      %1076 = vmatprep.subr.bf16.mxu0 %v1013
      %1077 = vmatpush1.bf16.msra.mxu0 %v1012
      %1078 = vmatprep.mubr.bf16.mxu0 %v883
      %1079 = vmatmul.mubr.bf16.gmra.mrb[0].mxu0 %v882
      %v1080 = vpop.f32.mrb[0].mxu0
      %v1081 = vadd.f32 0.0, %v1080
      %v1082 = vpop.f32.mrb[0].mxu0
      %v1083 = vadd.f32 0.0, %v1082
      %v1084 = vpop.f32.mrb[0].mxu0
      %v1085 = vpop.f32.mrb[0].mxu0
      %1086 = vdwg.mxu0
      %v1087 = vld [vmem:[#allocation3] sm:$0xff]
      %v1088 = vld [vmem:[#allocation3 + $0x8] sm:$0xff]
      %v1089 = vadd.f32 %v1087, %v1081
      %v1090 = vadd.f32 %v1088, %v1083
      %1091 = vst [vmem:[#allocation3] sm:$0xff] %v1089
      %1092 = vst [vmem:[#allocation3 + $0x8] sm:$0xff] %v1090
      %v1093 = vld [vmem:[#allocation2] sm:$0x3e]
      %v1094 = vld [vmem:[#allocation2 + $0x8] sm:$0x3e]
      %s1095 = scalar_lea.vmem %s311, 768
      %v1096 = vld [vmem:[%s1095] sm:$0xff]
      %v1097 = vld [vmem:[%s1095 + $0x8] sm:$0xff]
      %v1098 = vld [vmem:[%s1095 + $0x10] sm:$0xff]
      %v1099 = vld [vmem:[%s1095 + $0x18] sm:$0xff]
      %v1100 = vld [vmem:[%s1095 + $0x20] sm:$0xff]
      %v1101 = vld [vmem:[%s1095 + $0x28] sm:$0xff]
      %v1102 = vld [vmem:[%s1095 + $0x30] sm:$0xff]
      %v1103 = vld [vmem:[%s1095 + $0x38] sm:$0xff]
      %v1104 = vld [vmem:[%s1095 + $0x40] sm:$0xff]
      %v1105 = vld [vmem:[%s1095 + $0x48] sm:$0xff]
      %v1106 = vld [vmem:[%s1095 + $0x50] sm:$0xff]
      %v1107 = vld [vmem:[%s1095 + $0x58] sm:$0xff]
      %v1108 = vld [vmem:[%s1095 + $0x60] sm:$0xff]
      %v1109 = vld [vmem:[%s1095 + $0x68] sm:$0xff]
      %v1110 = vld [vmem:[%s1095 + $0x70] sm:$0xff]
      %v1111 = vld [vmem:[%s1095 + $0x78] sm:$0xff]
      %v1112 = vld [vmem:[%s1095 + $0x80] sm:$0xff]
      %v1113 = vld [vmem:[%s1095 + $0x88] sm:$0xff]
      %v1114 = vld [vmem:[%s1095 + $0x90] sm:$0xff]
      %v1115 = vld [vmem:[%s1095 + $0x98] sm:$0xff]
      %v1116 = vld [vmem:[%s1095 + $0xa0] sm:$0xff]
      %v1117 = vld [vmem:[%s1095 + $0xa8] sm:$0xff]
      %v1118 = vld [vmem:[%s1095 + $0xb0] sm:$0xff]
      %v1119 = vld [vmem:[%s1095 + $0xb8] sm:$0xff]
      %v1120 = vld [vmem:[%s1095 + $0xc0] sm:$0xff]
      %v1121 = vld [vmem:[%s1095 + $0xc8] sm:$0xff]
      %v1122 = vld [vmem:[%s1095 + $0xd0] sm:$0xff]
      %v1123 = vld [vmem:[%s1095 + $0xd8] sm:$0xff]
      %v1124 = vld [vmem:[%s1095 + $0xe0] sm:$0xff]
      %v1125 = vld [vmem:[%s1095 + $0xe8] sm:$0xff]
      %v1126 = vld [vmem:[%s1095 + $0xf0] sm:$0xff]
      %v1127 = vld [vmem:[%s1095 + $0xf8] sm:$0xff]
      %v1129 = vshrl.u32 %v1093, 16
      %v1131 = vrot.slane %v1129, 1
      %v1132 = vshll.u32 %v1093, 16
      %v1134 = vrot.slane %v1132, 2
      %v1135 = vor.u32 %v1131, %v1134
      %v1137 = vshrl.u32 %v1094, 16
      %v1139 = vrot.slane %v1137, 1
      %v1140 = vshll.u32 %v1094, 16
      %v1142 = vrot.slane %v1140, 2
      %v1143 = vor.u32 %v1139, %v1142
      %v1178 = vunpack.c.l.b16 %v1096
      %v1179 = vunpack.c.h.b16 %v1096
      %v1180 = vunpack.c.l.b16 %v1097
      %v1181 = vunpack.c.h.b16 %v1097
      %v1182 = vunpack.c.l.b16 %v1098
      %v1183 = vunpack.c.h.b16 %v1098
      %v1184 = vunpack.c.l.b16 %v1099
      %v1185 = vunpack.c.h.b16 %v1099
      %v1186 = vunpack.c.l.b16 %v1100
      %v1187 = vunpack.c.h.b16 %v1100
      %v1188 = vunpack.c.l.b16 %v1101
      %v1189 = vunpack.c.h.b16 %v1101
      %v1190 = vunpack.c.l.b16 %v1102
      %v1191 = vunpack.c.h.b16 %v1102
      %v1192 = vunpack.c.l.b16 %v1103
      %v1193 = vunpack.c.h.b16 %v1103
      %v1194 = vunpack.c.l.b16 %v1104
      %v1195 = vunpack.c.h.b16 %v1104
      %v1196 = vunpack.c.l.b16 %v1105
      %v1197 = vunpack.c.h.b16 %v1105
      %v1198 = vunpack.c.l.b16 %v1106
      %v1199 = vunpack.c.h.b16 %v1106
      %v1200 = vunpack.c.l.b16 %v1107
      %v1201 = vunpack.c.h.b16 %v1107
      %v1202 = vunpack.c.l.b16 %v1108
      %v1203 = vunpack.c.h.b16 %v1108
      %v1204 = vunpack.c.l.b16 %v1109
      %v1205 = vunpack.c.h.b16 %v1109
      %v1206 = vunpack.c.l.b16 %v1110
      %v1207 = vunpack.c.h.b16 %v1110
      %v1208 = vunpack.c.l.b16 %v1111
      %v1209 = vunpack.c.h.b16 %v1111
      %v1210 = vunpack.c.l.b16 %v1112
      %v1211 = vunpack.c.h.b16 %v1112
      %v1212 = vunpack.c.l.b16 %v1113
      %v1213 = vunpack.c.h.b16 %v1113
      %v1214 = vunpack.c.l.b16 %v1114
      %v1215 = vunpack.c.h.b16 %v1114
      %v1216 = vunpack.c.l.b16 %v1115
      %v1217 = vunpack.c.h.b16 %v1115
      %v1218 = vunpack.c.l.b16 %v1116
      %v1219 = vunpack.c.h.b16 %v1116
      %v1220 = vunpack.c.l.b16 %v1117
      %v1221 = vunpack.c.h.b16 %v1117
      %v1222 = vunpack.c.l.b16 %v1118
      %v1223 = vunpack.c.h.b16 %v1118
      %v1224 = vunpack.c.l.b16 %v1119
      %v1225 = vunpack.c.h.b16 %v1119
      %v1226 = vunpack.c.l.b16 %v1120
      %v1227 = vunpack.c.h.b16 %v1120
      %v1228 = vunpack.c.l.b16 %v1121
      %v1229 = vunpack.c.h.b16 %v1121
      %v1230 = vunpack.c.l.b16 %v1122
      %v1231 = vunpack.c.h.b16 %v1122
      %v1232 = vunpack.c.l.b16 %v1123
      %v1233 = vunpack.c.h.b16 %v1123
      %v1234 = vunpack.c.l.b16 %v1124
      %v1235 = vunpack.c.h.b16 %v1124
      %v1236 = vunpack.c.l.b16 %v1125
      %v1237 = vunpack.c.h.b16 %v1125
      %v1238 = vunpack.c.l.b16 %v1126
      %v1239 = vunpack.c.h.b16 %v1126
      %v1240 = vunpack.c.l.b16 %v1127
      %v1241 = vunpack.c.h.b16 %v1127
      %v1242 = vpack.c.b16 %v1180, %v1178
      %v1243 = vpack.c.b16 %v1181, %v1179
      %v1244 = vpack.c.b16 %v1184, %v1182
      %v1245 = vpack.c.b16 %v1185, %v1183
      %v1246 = vpack.c.b16 %v1188, %v1186
      %v1247 = vpack.c.b16 %v1189, %v1187
      %v1248 = vpack.c.b16 %v1192, %v1190
      %v1249 = vpack.c.b16 %v1193, %v1191
      %v1250 = vpack.c.b16 %v1196, %v1194
      %v1251 = vpack.c.b16 %v1197, %v1195
      %v1252 = vpack.c.b16 %v1200, %v1198
      %v1253 = vpack.c.b16 %v1201, %v1199
      %v1254 = vpack.c.b16 %v1204, %v1202
      %v1255 = vpack.c.b16 %v1205, %v1203
      %v1256 = vpack.c.b16 %v1208, %v1206
      %v1257 = vpack.c.b16 %v1209, %v1207
      %v1258 = vpack.c.b16 %v1212, %v1210
      %v1259 = vpack.c.b16 %v1213, %v1211
      %v1260 = vpack.c.b16 %v1216, %v1214
      %v1261 = vpack.c.b16 %v1217, %v1215
      %v1262 = vpack.c.b16 %v1220, %v1218
      %v1263 = vpack.c.b16 %v1221, %v1219
      %v1264 = vpack.c.b16 %v1224, %v1222
      %v1265 = vpack.c.b16 %v1225, %v1223
      %v1266 = vpack.c.b16 %v1228, %v1226
      %v1267 = vpack.c.b16 %v1229, %v1227
      %v1268 = vpack.c.b16 %v1232, %v1230
      %v1269 = vpack.c.b16 %v1233, %v1231
      %v1270 = vpack.c.b16 %v1236, %v1234
      %v1271 = vpack.c.b16 %v1237, %v1235
      %v1272 = vpack.c.b16 %v1240, %v1238
      %v1273 = vpack.c.b16 %v1241, %v1239
      %1306 = vmatprep.subr.bf16.mxu0 %v1243
      %1307 = vmatpush1.bf16.msra.mxu0 %v1242
      %1308 = vmatprep.subr.bf16.mxu0 %v1245
      %1309 = vmatpush1.bf16.msra.mxu0 %v1244
      %1310 = vmatprep.subr.bf16.mxu0 %v1247
      %1311 = vmatpush1.bf16.msra.mxu0 %v1246
      %1312 = vmatprep.subr.bf16.mxu0 %v1249
      %1313 = vmatpush1.bf16.msra.mxu0 %v1248
      %1314 = vmatprep.subr.bf16.mxu0 %v1251
      %1315 = vmatpush1.bf16.msra.mxu0 %v1250
      %1316 = vmatprep.subr.bf16.mxu0 %v1253
      %1317 = vmatpush1.bf16.msra.mxu0 %v1252
      %1318 = vmatprep.subr.bf16.mxu0 %v1255
      %1319 = vmatpush1.bf16.msra.mxu0 %v1254
      %1320 = vmatprep.subr.bf16.mxu0 %v1257
      %1321 = vmatpush1.bf16.msra.mxu0 %v1256
      %1322 = vmatprep.subr.bf16.mxu0 %v1259
      %1323 = vmatpush1.bf16.msra.mxu0 %v1258
      %1324 = vmatprep.subr.bf16.mxu0 %v1261
      %1325 = vmatpush1.bf16.msra.mxu0 %v1260
      %1326 = vmatprep.subr.bf16.mxu0 %v1263
      %1327 = vmatpush1.bf16.msra.mxu0 %v1262
      %1328 = vmatprep.subr.bf16.mxu0 %v1265
      %1329 = vmatpush1.bf16.msra.mxu0 %v1264
      %1330 = vmatprep.subr.bf16.mxu0 %v1267
      %1331 = vmatpush1.bf16.msra.mxu0 %v1266
      %1332 = vmatprep.subr.bf16.mxu0 %v1269
      %1333 = vmatpush1.bf16.msra.mxu0 %v1268
      %1334 = vmatprep.subr.bf16.mxu0 %v1271
      %1335 = vmatpush1.bf16.msra.mxu0 %v1270
      %1336 = vmatprep.subr.bf16.mxu0 %v1273
      %1337 = vmatpush1.bf16.msra.mxu0 %v1272
      %1338 = vmatprep.mubr.bf16.mxu0 %v1143
      %1339 = vmatmul.mubr.bf16.gmra.mrb[0].mxu0 %v1135
      %v1340 = vpop.f32.mrb[0].mxu0
      %v1341 = vadd.f32 0.0, %v1340
      %v1342 = vpop.f32.mrb[0].mxu0
      %v1343 = vadd.f32 0.0, %v1342
      %v1344 = vpop.f32.mrb[0].mxu0
      %v1345 = vpop.f32.mrb[0].mxu0
      %1346 = vdwg.mxu0
      %v1347 = vld [vmem:[#allocation3] sm:$0xff]
      %v1348 = vld [vmem:[#allocation3 + $0x8] sm:$0xff]
      %v1349 = vadd.f32 %v1347, %v1341
      %v1350 = vadd.f32 %v1348, %v1343
      %1351 = vst [vmem:[#allocation3] sm:$0xff] %v1349
      %1352 = vst [vmem:[#allocation3 + $0x8] sm:$0xff] %v1350
      %v1353 = vld [vmem:[#allocation2] sm:$0x3c]
      %v1354 = vld [vmem:[#allocation2 + $0x8] sm:$0x3c]
      %s1355 = scalar_lea.vmem %s311, 1024
      %v1356 = vld [vmem:[%s1355] sm:$0xff]
      %v1357 = vld [vmem:[%s1355 + $0x8] sm:$0xff]
      %v1358 = vld [vmem:[%s1355 + $0x10] sm:$0xff]
      %v1359 = vld [vmem:[%s1355 + $0x18] sm:$0xff]
      %v1360 = vld [vmem:[%s1355 + $0x20] sm:$0xff]
      %v1361 = vld [vmem:[%s1355 + $0x28] sm:$0xff]
      %v1362 = vld [vmem:[%s1355 + $0x30] sm:$0xff]
      %v1363 = vld [vmem:[%s1355 + $0x38] sm:$0xff]
      %v1364 = vld [vmem:[%s1355 + $0x40] sm:$0xff]
      %v1365 = vld [vmem:[%s1355 + $0x48] sm:$0xff]
      %v1366 = vld [vmem:[%s1355 + $0x50] sm:$0xff]
      %v1367 = vld [vmem:[%s1355 + $0x58] sm:$0xff]
      %v1368 = vld [vmem:[%s1355 + $0x60] sm:$0xff]
      %v1369 = vld [vmem:[%s1355 + $0x68] sm:$0xff]
      %v1370 = vld [vmem:[%s1355 + $0x70] sm:$0xff]
      %v1371 = vld [vmem:[%s1355 + $0x78] sm:$0xff]
      %v1372 = vld [vmem:[%s1355 + $0x80] sm:$0xff]
      %v1373 = vld [vmem:[%s1355 + $0x88] sm:$0xff]
      %v1374 = vld [vmem:[%s1355 + $0x90] sm:$0xff]
      %v1375 = vld [vmem:[%s1355 + $0x98] sm:$0xff]
      %v1376 = vld [vmem:[%s1355 + $0xa0] sm:$0xff]
      %v1377 = vld [vmem:[%s1355 + $0xa8] sm:$0xff]
      %v1378 = vld [vmem:[%s1355 + $0xb0] sm:$0xff]
      %v1379 = vld [vmem:[%s1355 + $0xb8] sm:$0xff]
      %v1380 = vld [vmem:[%s1355 + $0xc0] sm:$0xff]
      %v1381 = vld [vmem:[%s1355 + $0xc8] sm:$0xff]
      %v1382 = vld [vmem:[%s1355 + $0xd0] sm:$0xff]
      %v1383 = vld [vmem:[%s1355 + $0xd8] sm:$0xff]
      %v1384 = vld [vmem:[%s1355 + $0xe0] sm:$0xff]
      %v1385 = vld [vmem:[%s1355 + $0xe8] sm:$0xff]
      %v1386 = vld [vmem:[%s1355 + $0xf0] sm:$0xff]
      %v1387 = vld [vmem:[%s1355 + $0xf8] sm:$0xff]
      %v1390 = vrot.slane %v1353, 2
      %v1391 = vrot.slane %v1354, 2
      %v1426 = vunpack.c.l.b16 %v1356
      %v1427 = vunpack.c.h.b16 %v1356
      %v1428 = vunpack.c.l.b16 %v1357
      %v1429 = vunpack.c.h.b16 %v1357
      %v1430 = vunpack.c.l.b16 %v1358
      %v1431 = vunpack.c.h.b16 %v1358
      %v1432 = vunpack.c.l.b16 %v1359
      %v1433 = vunpack.c.h.b16 %v1359
      %v1434 = vunpack.c.l.b16 %v1360
      %v1435 = vunpack.c.h.b16 %v1360
      %v1436 = vunpack.c.l.b16 %v1361
      %v1437 = vunpack.c.h.b16 %v1361
      %v1438 = vunpack.c.l.b16 %v1362
      %v1439 = vunpack.c.h.b16 %v1362
      %v1440 = vunpack.c.l.b16 %v1363
      %v1441 = vunpack.c.h.b16 %v1363
      %v1442 = vunpack.c.l.b16 %v1364
      %v1443 = vunpack.c.h.b16 %v1364
      %v1444 = vunpack.c.l.b16 %v1365
      %v1445 = vunpack.c.h.b16 %v1365
      %v1446 = vunpack.c.l.b16 %v1366
      %v1447 = vunpack.c.h.b16 %v1366
      %v1448 = vunpack.c.l.b16 %v1367
      %v1449 = vunpack.c.h.b16 %v1367
      %v1450 = vunpack.c.l.b16 %v1368
      %v1451 = vunpack.c.h.b16 %v1368
      %v1452 = vunpack.c.l.b16 %v1369
      %v1453 = vunpack.c.h.b16 %v1369
      %v1454 = vunpack.c.l.b16 %v1370
      %v1455 = vunpack.c.h.b16 %v1370
      %v1456 = vunpack.c.l.b16 %v1371
      %v1457 = vunpack.c.h.b16 %v1371
      %v1458 = vunpack.c.l.b16 %v1372
      %v1459 = vunpack.c.h.b16 %v1372
      %v1460 = vunpack.c.l.b16 %v1373
      %v1461 = vunpack.c.h.b16 %v1373
      %v1462 = vunpack.c.l.b16 %v1374
      %v1463 = vunpack.c.h.b16 %v1374
      %v1464 = vunpack.c.l.b16 %v1375
      %v1465 = vunpack.c.h.b16 %v1375
      %v1466 = vunpack.c.l.b16 %v1376
      %v1467 = vunpack.c.h.b16 %v1376
      %v1468 = vunpack.c.l.b16 %v1377
      %v1469 = vunpack.c.h.b16 %v1377
      %v1470 = vunpack.c.l.b16 %v1378
      %v1471 = vunpack.c.h.b16 %v1378
      %v1472 = vunpack.c.l.b16 %v1379
      %v1473 = vunpack.c.h.b16 %v1379
      %v1474 = vunpack.c.l.b16 %v1380
      %v1475 = vunpack.c.h.b16 %v1380
      %v1476 = vunpack.c.l.b16 %v1381
      %v1477 = vunpack.c.h.b16 %v1381
      %v1478 = vunpack.c.l.b16 %v1382
      %v1479 = vunpack.c.h.b16 %v1382
      %v1480 = vunpack.c.l.b16 %v1383
      %v1481 = vunpack.c.h.b16 %v1383
      %v1482 = vunpack.c.l.b16 %v1384
      %v1483 = vunpack.c.h.b16 %v1384
      %v1484 = vunpack.c.l.b16 %v1385
      %v1485 = vunpack.c.h.b16 %v1385
      %v1486 = vunpack.c.l.b16 %v1386
      %v1487 = vunpack.c.h.b16 %v1386
      %v1488 = vunpack.c.l.b16 %v1387
      %v1489 = vunpack.c.h.b16 %v1387
      %v1490 = vpack.c.b16 %v1428, %v1426
      %v1491 = vpack.c.b16 %v1429, %v1427
      %v1492 = vpack.c.b16 %v1432, %v1430
      %v1493 = vpack.c.b16 %v1433, %v1431
      %v1494 = vpack.c.b16 %v1436, %v1434
      %v1495 = vpack.c.b16 %v1437, %v1435
      %v1496 = vpack.c.b16 %v1440, %v1438
      %v1497 = vpack.c.b16 %v1441, %v1439
      %v1498 = vpack.c.b16 %v1444, %v1442
      %v1499 = vpack.c.b16 %v1445, %v1443
      %v1500 = vpack.c.b16 %v1448, %v1446
      %v1501 = vpack.c.b16 %v1449, %v1447
      %v1502 = vpack.c.b16 %v1452, %v1450
      %v1503 = vpack.c.b16 %v1453, %v1451
      %v1504 = vpack.c.b16 %v1456, %v1454
      %v1505 = vpack.c.b16 %v1457, %v1455
      %v1506 = vpack.c.b16 %v1460, %v1458
      %v1507 = vpack.c.b16 %v1461, %v1459
      %v1508 = vpack.c.b16 %v1464, %v1462
      %v1509 = vpack.c.b16 %v1465, %v1463
      %v1510 = vpack.c.b16 %v1468, %v1466
      %v1511 = vpack.c.b16 %v1469, %v1467
      %v1512 = vpack.c.b16 %v1472, %v1470
      %v1513 = vpack.c.b16 %v1473, %v1471
      %v1514 = vpack.c.b16 %v1476, %v1474
      %v1515 = vpack.c.b16 %v1477, %v1475
      %v1516 = vpack.c.b16 %v1480, %v1478
      %v1517 = vpack.c.b16 %v1481, %v1479
      %v1518 = vpack.c.b16 %v1484, %v1482
      %v1519 = vpack.c.b16 %v1485, %v1483
      %v1520 = vpack.c.b16 %v1488, %v1486
      %v1521 = vpack.c.b16 %v1489, %v1487
      %1554 = vmatprep.subr.bf16.mxu0 %v1491
      %1555 = vmatpush1.bf16.msra.mxu0 %v1490
      %1556 = vmatprep.subr.bf16.mxu0 %v1493
      %1557 = vmatpush1.bf16.msra.mxu0 %v1492
      %1558 = vmatprep.subr.bf16.mxu0 %v1495
      %1559 = vmatpush1.bf16.msra.mxu0 %v1494
      %1560 = vmatprep.subr.bf16.mxu0 %v1497
      %1561 = vmatpush1.bf16.msra.mxu0 %v1496
      %1562 = vmatprep.subr.bf16.mxu0 %v1499
      %1563 = vmatpush1.bf16.msra.mxu0 %v1498
      %1564 = vmatprep.subr.bf16.mxu0 %v1501
      %1565 = vmatpush1.bf16.msra.mxu0 %v1500
      %1566 = vmatprep.subr.bf16.mxu0 %v1503
      %1567 = vmatpush1.bf16.msra.mxu0 %v1502
      %1568 = vmatprep.subr.bf16.mxu0 %v1505
      %1569 = vmatpush1.bf16.msra.mxu0 %v1504
      %1570 = vmatprep.subr.bf16.mxu0 %v1507
      %1571 = vmatpush1.bf16.msra.mxu0 %v1506
      %1572 = vmatprep.subr.bf16.mxu0 %v1509
      %1573 = vmatpush1.bf16.msra.mxu0 %v1508
      %1574 = vmatprep.subr.bf16.mxu0 %v1511
      %1575 = vmatpush1.bf16.msra.mxu0 %v1510
      %1576 = vmatprep.subr.bf16.mxu0 %v1513
      %1577 = vmatpush1.bf16.msra.mxu0 %v1512
      %1578 = vmatprep.subr.bf16.mxu0 %v1515
      %1579 = vmatpush1.bf16.msra.mxu0 %v1514
      %1580 = vmatprep.subr.bf16.mxu0 %v1517
      %1581 = vmatpush1.bf16.msra.mxu0 %v1516
      %1582 = vmatprep.subr.bf16.mxu0 %v1519
      %1583 = vmatpush1.bf16.msra.mxu0 %v1518
      %1584 = vmatprep.subr.bf16.mxu0 %v1521
      %1585 = vmatpush1.bf16.msra.mxu0 %v1520
      %1586 = vmatprep.mubr.bf16.mxu0 %v1391
      %1587 = vmatmul.mubr.bf16.gmra.mrb[0].mxu0 %v1390
      %v1588 = vpop.f32.mrb[0].mxu0
      %v1589 = vadd.f32 0.0, %v1588
      %v1590 = vpop.f32.mrb[0].mxu0
      %v1591 = vadd.f32 0.0, %v1590
      %v1592 = vpop.f32.mrb[0].mxu0
      %v1593 = vpop.f32.mrb[0].mxu0
      %1594 = vdwg.mxu0
      %v1595 = vld [vmem:[#allocation3] sm:$0xff]
      %v1596 = vld [vmem:[#allocation3 + $0x8] sm:$0xff]
      %v1597 = vadd.f32 %v1595, %v1589
      %v1598 = vadd.f32 %v1596, %v1591
      %1599 = vst [vmem:[#allocation3] sm:$0xff] %v1597
      %1600 = vst [vmem:[#allocation3 + $0x8] sm:$0xff] %v1598
      %v1601 = vld [vmem:[#allocation3] sm:$0xff]
      %v1602 = vld [vmem:[#allocation3 + $0x8] sm:$0xff]
      %v1603 = vld [vmem:[%s315] sm:$0x3]
      %v1605 = vlaneseq
      %v1606 = vshrl.u32 %v1605, 7
      %v1607 = vsub.s32 0, %v1606
      %v1608 = vrot.slane %v1603, %v1607
      %v1609 = vlaneseq
      %v1610 = vshrl.u32 %v1609, 7
      %v1611 = vsub.s32 1, %v1610
      %v1612 = vrot.slane %v1603, %v1611
      %v1615 = vadd.f32 %v1601, %v1608
      %v1616 = vadd.f32 %v1602, %v1612
      %vm1617 = vcmp.gt.f32.partialorder %v1615, 0.0
      %vm1618 = vcmp.gt.f32.partialorder %v1616, 0.0
      %v1619 = vmul.f32 %v1615, 0.1
      %v1620 = vmul.f32 %v1616, 0.1
      %v1621 = vsel %vm1617, %v1615, %v1619
      %v1622 = vsel %vm1618, %v1616, %v1620
      %v1623 = vpack.c.bf16 %v1621, %v1621
      %v1624 = vpack.c.bf16 %v1622, %v1622
      %v1627 = vunpack.c.l.b16 %v1623
      %v1628 = vunpack.c.l.b16 %v1624
      %v1629 = vpack.c.b16 %v1628, %v1627
      %1631 = vst [vmem:[%s328] sm:$0xff] %v1629
      %s1632 = smul.u32 2, %s20
      %p1633 = scmp.lt.s32.totalorder %s21, 1
      %s1634 = scalar_select %p1633, %s21, 1
      %p1635 = scmp.lt.s32.totalorder %s22, 0
      %s1636 = scalar_select %p1635, %s22, 0
      %p1637 = scmp.lt.s32.totalorder %s1632, 1
      %s1638 = scalar_select %p1637, %s1632, 1
      %s1639 = smul.addr %s1636, 2
      %s1640 = sadd.s32 %s1638, %s1639
      %s1641 = smul.addr %s1634, 2
      %s1642 = sadd.s32 %s1640, %s1641
      %s1643 = smul.addr %s1642, 4
      %s1644 = scalar_lea.vmem %s4, %s1643
      // Predicated region
      $region37: #{_lambda_.8} parent=35 // pred_check
        %p1645 = pneg %p166
      $region38: #{_lambda_.8} parent=35 // pred_check_branch
        %1647 = sbr.rel (%p1645) target = $region40
      $region39: #{_lambda_.8} parent=35 // pred_region
        %s1648 = smul.u32 2, %s20
      $region40: #{_lambda_.8} parent=35 // pred_fallthru
        _
    $region36: #{_lambda_.8} parent=5 // pred_fallthru
      _
    %p1649 = scmp.le.s32.totalorder 2, %s10
    // Predicated region
    $region41: #{_lambda_.8} parent=5 // pred_check
      %p1650 = pneg %p1649
    $region42: #{_lambda_.8} parent=5 // pred_check_branch
      %1652 = sbr.rel (%p1650) target = $region44
    $region43: #{_lambda_.8} parent=5 // pred_region
      %s1653 = ssub.s32 %s10, 2
      // Predicated region
      $region45: #{_lambda_.8} parent=43 // pred_check
        %p1654 = pneg %p172
      $region46: #{_lambda_.8} parent=43 // pred_check_branch
        %1656 = sbr.rel (%p1654) target = $region48
      $region47: #{_lambda_.8} parent=43 // pred_region
        %s1657 = smul.u32 2, %s23
        %p1658 = scmp.lt.s32.totalorder %s24, 1
        %s1659 = scalar_select %p1658, %s24, 1
        %p1660 = scmp.lt.s32.totalorder %s25, 0
        %s1661 = scalar_select %p1660, %s25, 0
        %p1662 = scmp.lt.s32.totalorder %s1657, 1
        %s1663 = scalar_select %p1662, %s1657, 1
        %s1664 = smul.addr %s1661, 2
        %s1665 = sadd.s32 %s1663, %s1664
        %s1666 = smul.addr %s1659, 2
        %s1667 = sadd.s32 %s1665, %s1666
        %s1668 = smul.addr %s1667, 4
        %s1669 = scalar_lea.vmem %s4, %s1668
      $region48: #{_lambda_.8} parent=43 // pred_fallthru
        _
    $region44: #{_lambda_.8} parent=5 // pred_fallthru
      _
  $region6: #{_lambda_.8} parent=0 // loop_footer
    %s14 = sadd.s32 1, %s10
  $region7: #{_lambda_.8} parent=0 // loop_footer_branch
    %9 = sbr.rel target = $region3
  $region8: #{_lambda_.8} parent=0 // loop_exit
    _

// kernel: _lambda_.7
$region0: #{_lambda_.7}
  #allocation0 [shape = 'u32[]', space=smem, size = 0x4, offset = 0x4, fixed_abs, tag = 'smem constant byte address 0x4 - core index']
  #allocation1 [shape = 'u32[144,128]{1,0:T(1,128)}', space=vmem, size = 0x12000, scoped, tag = 'internal scratch']
  #allocation2 [shape = 'bf16[32,256]{1,0:T(16,128)(2,1)}', space=vmem, size = 0x4000, scoped, tag = 'scratch operand']
  #allocation3 [shape = 'f32[16,256]{1,0:T(8,128)}', space=vmem, size = 0x4000, scoped, tag = 'scratch operand']
  %s0 = inlined_call_operand.vmem [shape: bf16[2,32,256], index: 0, kind: input, shape index: {}, may-alias: {0,1}]
  %s1 = inlined_call_operand.vmem [shape: bf16[2,32,256], index: 1, kind: input, shape index: {}, may-alias: {0,1}]
  %s2 = inlined_call_operand.vmem [shape: bf16[1,11,256,256], index: 2, kind: input, shape index: {}]
  %s3 = inlined_call_operand.vmem [shape: f32[1,1,256], index: 3, kind: input, shape index: {}]
  %s4 = inlined_call_operand.vmem [shape: bf16[2,16,256], index: 4, kind: output, shape index: {}]
  %s5 = sld [smem:[#allocation0]]
  $region49: #{_lambda_.7} parent=0
    _
  %s7 = ssub.s32 1, %s5
  %s8 = scalar_select 0, %s7, %s5
  loop: start=0, step=1, limit=4
  $region2: #{_lambda_.7} parent=0 // loop_pre_header
    _
  $region3: #{_lambda_.7} parent=0 // loop_header
    %s10 = sphi 0, %s14
    %p11 = scmp.ge.s32.totalorder %s10, 4
    %s17 = sphi 0, %s36
    %s18 = sphi 0, %s32
    %s19 = sphi 0, %s28
    %s20 = sphi 0, %s17
    %s21 = sphi 0, %s18
    %s22 = sphi 0, %s19
    %s23 = sphi 0, %s20
    %s24 = sphi 0, %s21
    %s25 = sphi 0, %s22
    %s41 = sphi 0, %s43
    %s44 = sphi 0, %s41
    %s45 = sphi 0, %s44
    %s61 = sphi 0, %s45
    %s71 = sphi 0, %s73
    %s74 = sphi 0, %s71
    %s75 = sphi 0, %s74
    %s91 = sphi 0, %s75
    %s97 = sphi 0, %s99
    %s100 = sphi 0, %s97
    %s101 = sphi 0, %s100
    %s117 = sphi 0, %s101
    %s123 = sphi 0, %s125
    %s126 = sphi 0, %s123
    %s127 = sphi 0, %s126
    %s143 = sphi 0, %s127
    %s153 = sphi 0, %s155
    %s156 = sphi 0, %s153
    %s157 = sphi 0, %s156
    %s173 = sphi 0, %s157
  $region4: #{_lambda_.7} parent=0 // loop_header_branch
    %13 = sbr.rel (%p11) target = $region8
  $region5: #{_lambda_.7} parent=0 // loop_body
    %s15 = ssub.s32 %s10, 1
    %s16 = ssub.s32 %s10, 2
    %s26 = sadd.s32 1, %s19
    %p27 = scmp.ge.s32.totalorder %s26, 1
    %s28 = scalar_select %p27, 0, %s26
    %s29 = sadd.s32 1, %s18
    %s30 = scalar_select %p27, %s29, %s18
    %p31 = scmp.ge.s32.totalorder %s30, 2
    %s32 = scalar_select %p31, 0, %s30
    %s33 = sadd.s32 1, %s17
    %s34 = scalar_select %p31, %s33, %s17
    %p35 = scmp.ge.s32.totalorder %s34, 1
    %s36 = scalar_select %p35, 0, %s34
    %s37 = ssub.s32 %s18, %s32
    %s38 = ssub.s32 %s19, %s28
    %s39 = sor.u32 %s37, %s38
    %p40 = scmp.eq.s32.totalorder %s39, 0
    %s42 = sadd.s32 %s41, 1
    %s43 = scalar_select %p40, %s41, %s42
    %p46 = pneg %p40
    %p47 = scmp.eq.s32.totalorder %s10, 1
    %p48 = por %p46, %p47
    %p49 = scmp.ne.s32.totalorder %s41, %s44
    %p50 = scmp.eq.s32.totalorder %s10, 0
    %p51 = por %p49, %p50
    %p52 = scmp.ne.s32.totalorder %s41, %s44
    %p53 = scmp.eq.s32.totalorder %s15, 1
    %p54 = por %p52, %p53
    %p55 = scmp.ne.s32.totalorder %s44, %s45
    %p56 = scmp.eq.s32.totalorder %s15, 0
    %p57 = por %p55, %p56
    %p58 = scmp.ne.s32.totalorder %s44, %s45
    %p59 = scmp.eq.s32.totalorder %s16, 1
    %p60 = por %p58, %p59
    %p62 = scmp.ne.s32.totalorder %s45, %s61
    %p63 = scmp.eq.s32.totalorder %s16, 0
    %p64 = por %p62, %p63
    %s65 = sadd.s32 %s19, 1
    %s66 = sadd.s32 %s28, 1
    %s67 = ssub.s32 %s18, %s32
    %s68 = ssub.s32 %s65, %s66
    %s69 = sor.u32 %s67, %s68
    %p70 = scmp.eq.s32.totalorder %s69, 0
    %s72 = sadd.s32 %s71, 1
    %s73 = scalar_select %p70, %s71, %s72
    %p76 = pneg %p70
    %p77 = scmp.eq.s32.totalorder %s10, 1
    %p78 = por %p76, %p77
    %p79 = scmp.ne.s32.totalorder %s71, %s74
    %p80 = scmp.eq.s32.totalorder %s10, 0
    %p81 = por %p79, %p80
    %p82 = scmp.ne.s32.totalorder %s71, %s74
    %p83 = scmp.eq.s32.totalorder %s15, 1
    %p84 = por %p82, %p83
    %p85 = scmp.ne.s32.totalorder %s74, %s75
    %p86 = scmp.eq.s32.totalorder %s15, 0
    %p87 = por %p85, %p86
    %p88 = scmp.ne.s32.totalorder %s74, %s75
    %p89 = scmp.eq.s32.totalorder %s16, 1
    %p90 = por %p88, %p89
    %p92 = scmp.ne.s32.totalorder %s75, %s91
    %p93 = scmp.eq.s32.totalorder %s16, 0
    %p94 = por %p92, %p93
    %s95 = ssub.s32 %s17, %s36
    %p96 = scmp.eq.s32.totalorder %s95, 0
    %s98 = sadd.s32 %s97, 1
    %s99 = scalar_select %p96, %s97, %s98
    %p102 = pneg %p96
    %p103 = scmp.eq.s32.totalorder %s10, 1
    %p104 = por %p102, %p103
    %p105 = scmp.ne.s32.totalorder %s97, %s100
    %p106 = scmp.eq.s32.totalorder %s10, 0
    %p107 = por %p105, %p106
    %p108 = scmp.ne.s32.totalorder %s97, %s100
    %p109 = scmp.eq.s32.totalorder %s15, 1
    %p110 = por %p108, %p109
    %p111 = scmp.ne.s32.totalorder %s100, %s101
    %p112 = scmp.eq.s32.totalorder %s15, 0
    %p113 = por %p111, %p112
    %p114 = scmp.ne.s32.totalorder %s100, %s101
    %p115 = scmp.eq.s32.totalorder %s16, 1
    %p116 = por %p114, %p115
    %p118 = scmp.ne.s32.totalorder %s101, %s117
    %p119 = scmp.eq.s32.totalorder %s16, 0
    %p120 = por %p118, %p119
    %s121 = ssub.s32 %s17, %s36
    %p122 = scmp.eq.s32.totalorder %s121, 0
    %s124 = sadd.s32 %s123, 1
    %s125 = scalar_select %p122, %s123, %s124
    %p128 = pneg %p122
    %p129 = scmp.eq.s32.totalorder %s10, 1
    %p130 = por %p128, %p129
    %p131 = scmp.ne.s32.totalorder %s123, %s126
    %p132 = scmp.eq.s32.totalorder %s10, 0
    %p133 = por %p131, %p132
    %p134 = scmp.ne.s32.totalorder %s123, %s126
    %p135 = scmp.eq.s32.totalorder %s15, 1
    %p136 = por %p134, %p135
    %p137 = scmp.ne.s32.totalorder %s126, %s127
    %p138 = scmp.eq.s32.totalorder %s15, 0
    %p139 = por %p137, %p138
    %p140 = scmp.ne.s32.totalorder %s126, %s127
    %p141 = scmp.eq.s32.totalorder %s16, 1
    %p142 = por %p140, %p141
    %p144 = scmp.ne.s32.totalorder %s127, %s143
    %p145 = scmp.eq.s32.totalorder %s16, 0
    %p146 = por %p144, %p145
    %s147 = ssub.s32 %s18, %s32
    %s148 = ssub.s32 %s19, %s28
    %s149 = sor.u32 %s147, %s148
    %s150 = ssub.s32 %s17, %s36
    %s151 = sor.u32 %s149, %s150
    %p152 = scmp.eq.s32.totalorder %s151, 0
    %s154 = sadd.s32 %s153, 1
    %s155 = scalar_select %p152, %s153, %s154
    %p158 = pneg %p152
    %p159 = scmp.eq.s32.totalorder %s10, 1
    %p160 = por %p158, %p159
    %p161 = scmp.ne.s32.totalorder %s153, %s156
    %p162 = scmp.eq.s32.totalorder %s10, 0
    %p163 = por %p161, %p162
    %p164 = scmp.ne.s32.totalorder %s153, %s156
    %p165 = scmp.eq.s32.totalorder %s15, 1
    %p166 = por %p164, %p165
    %p167 = scmp.ne.s32.totalorder %s156, %s157
    %p168 = scmp.eq.s32.totalorder %s15, 0
    %p169 = por %p167, %p168
    %p170 = scmp.ne.s32.totalorder %s156, %s157
    %p171 = scmp.eq.s32.totalorder %s16, 1
    %p172 = por %p170, %p171
    %p174 = scmp.ne.s32.totalorder %s157, %s173
    %p175 = scmp.eq.s32.totalorder %s16, 0
    %p176 = por %p174, %p175
    %p177 = scmp.le.s32.totalorder 1, %s10
    %p178 = scmp.lt.s32.totalorder %s10, 3
    %p179 = pnand %p177, %p178
    %p180 = pneg %p179
    // Predicated region
    $region9: #{_lambda_.7} parent=5 // pred_check
      _
    $region10: #{_lambda_.7} parent=5 // pred_check_branch
      %182 = sbr.rel (%p179) target = $region12
    $region11: #{_lambda_.7} parent=5 // pred_region
      %s183 = ssub.s32 %s10, 1
      // Predicated region
      $region13: #{_lambda_.7} parent=11 // pred_check
        %p184 = pneg %p113
      $region14: #{_lambda_.7} parent=11 // pred_check_branch
        %186 = sbr.rel (%p184) target = $region16
      $region15: #{_lambda_.7} parent=11 // pred_region
        %p187 = scmp.lt.s32.totalorder %s20, 0
        %s188 = scalar_select %p187, %s20, 0
        %s189 = smul.addr %s188, 704
        %s190 = smul.addr %s189, 4
        %s191 = scalar_lea.vmem %s2, %s190
      $region16: #{_lambda_.7} parent=11 // pred_fallthru
        _
      // Predicated region
      $region17: #{_lambda_.7} parent=11 // pred_check
        %p192 = pneg %p139
      $region18: #{_lambda_.7} parent=11 // pred_check_branch
        %194 = sbr.rel (%p192) target = $region20
      $region19: #{_lambda_.7} parent=11 // pred_region
        %p195 = scmp.lt.s32.totalorder %s20, 0
        %s196 = scalar_select %p195, %s20, 0
        %s197 = smul.addr %s196, 2
        %s198 = scalar_lea.vmem %s3, %s197
      $region20: #{_lambda_.7} parent=11 // pred_fallthru
        _
    $region12: #{_lambda_.7} parent=5 // pred_fallthru
      _
    %p199 = scmp.lt.s32.totalorder %s10, 2
    // Predicated region
    $region21: #{_lambda_.7} parent=5 // pred_check
      %p200 = pneg %p199
    $region22: #{_lambda_.7} parent=5 // pred_check_branch
      %202 = sbr.rel (%p200) target = $region24
    $region23: #{_lambda_.7} parent=5 // pred_region
      // Predicated region
      $region25: #{_lambda_.7} parent=23 // pred_check
        %p203 = pneg %p51
      $region26: #{_lambda_.7} parent=23 // pred_check_branch
        %205 = sbr.rel (%p203) target = $region28
      $region27: #{_lambda_.7} parent=23 // pred_region
        %s206 = smul.u32 2, %s19
        %p207 = scmp.lt.s32.totalorder %s18, 1
        %s208 = scalar_select %p207, %s18, 1
        %p209 = scmp.lt.s32.totalorder %s206, 3
        %s210 = scalar_select %p209, %s206, 3
        %s211 = smul.addr %s210, 2
        %s212 = smul.addr %s208, 8
        %s213 = sadd.s32 %s211, %s212
        %s214 = smul.addr %s213, 4
        %s215 = scalar_lea.vmem %s0, %s214
        %s216 = smul.u32 2, %s19
      $region28: #{_lambda_.7} parent=23 // pred_fallthru
        _
      // Predicated region
      $region29: #{_lambda_.7} parent=23 // pred_check
        %p217 = pneg %p81
      $region30: #{_lambda_.7} parent=23 // pred_check_branch
        %219 = sbr.rel (%p217) target = $region32
      $region31: #{_lambda_.7} parent=23 // pred_region
        %s220 = sadd.s32 %s19, 1
        %s221 = smul.u32 2, %s220
        %p222 = scmp.lt.s32.totalorder %s18, 1
        %s223 = scalar_select %p222, %s18, 1
        %p224 = scmp.lt.s32.totalorder %s221, 3
        %s225 = scalar_select %p224, %s221, 3
        %s226 = smul.addr %s225, 2
        %s227 = smul.addr %s223, 8
        %s228 = sadd.s32 %s226, %s227
        %s229 = smul.addr %s228, 4
        %s230 = scalar_lea.vmem %s1, %s229
        %s231 = sadd.s32 %s19, 1
        %s232 = smul.u32 2, %s231
      $region32: #{_lambda_.7} parent=23 // pred_fallthru
        _
    $region24: #{_lambda_.7} parent=5 // pred_fallthru
      _
    %p233 = scmp.le.s32.totalorder 1, %s10
    %p234 = scmp.lt.s32.totalorder %s10, 3
    %p235 = pnand %p233, %p234
    %p236 = pneg %p235
    // Predicated region
    $region33: #{_lambda_.7} parent=5 // pred_check
      _
    $region34: #{_lambda_.7} parent=5 // pred_check_branch
      %238 = sbr.rel (%p235) target = $region36
    $region35: #{_lambda_.7} parent=5 // pred_region
      %s239 = ssub.s32 %s10, 1
      %s240 = smul.u32 2, %s22
      %p241 = scmp.lt.s32.totalorder %s21, 1
      %s242 = scalar_select %p241, %s21, 1
      %p243 = scmp.lt.s32.totalorder %s240, 3
      %s244 = scalar_select %p243, %s240, 3
      %s245 = smul.addr %s244, 2
      %s246 = smul.addr %s242, 8
      %s247 = sadd.s32 %s245, %s246
      %s248 = smul.addr %s247, 4
      %s249 = scalar_lea.vmem %s0, %s248
      %p250 = pneg %p57
      %p251 = pneg %p54
      %s252 = sadd.s32 %s22, 1
      %s253 = smul.u32 2, %s252
      %p254 = scmp.lt.s32.totalorder %s21, 1
      %s255 = scalar_select %p254, %s21, 1
      %p256 = scmp.lt.s32.totalorder %s253, 3
      %s257 = scalar_select %p256, %s253, 3
      %s258 = smul.addr %s257, 2
      %s259 = smul.addr %s255, 8
      %s260 = sadd.s32 %s258, %s259
      %s261 = smul.addr %s260, 4
      %s262 = scalar_lea.vmem %s1, %s261
      %p263 = pneg %p87
      %p264 = pneg %p84
      %p265 = scmp.lt.s32.totalorder %s20, 0
      %s266 = scalar_select %p265, %s20, 0
      %s267 = smul.addr %s266, 704
      %s268 = smul.addr %s267, 4
      %s269 = scalar_lea.vmem %s2, %s268
      %p270 = pneg %p113
      %p271 = pneg %p110
      %p272 = scmp.lt.s32.totalorder %s20, 0
      %s273 = scalar_select %p272, %s20, 0
      %s274 = smul.addr %s273, 2
      %s275 = scalar_lea.vmem %s3, %s274
      %p276 = pneg %p139
      %p277 = pneg %p136
      %p278 = pneg %p169
      %p279 = pneg %p166
      %s280 = smul.u32 2, %s22
      %s281 = smul.u32 2, %s20
      %p282 = scmp.lt.s32.totalorder %s21, 1
      %s283 = scalar_select %p282, %s21, 1
      %p284 = scmp.lt.s32.totalorder %s280, 1
      %s285 = scalar_select %p284, %s280, 1
      %p286 = scmp.lt.s32.totalorder %s281, 1
      %s287 = scalar_select %p286, %s281, 1
      %s288 = smul.addr %s285, 2
      %s289 = sadd.s32 %s287, %s288
      %s290 = smul.addr %s283, 4
      %s291 = sadd.s32 %s289, %s290
      %s292 = smul.addr %s291, 4
      %s293 = scalar_lea.vmem %s4, %s292
      %s294 = smul.u32 2, %s22
      %p295 = scmp.lt.s32.totalorder %s21, 1
      %s296 = scalar_select %p295, %s21, 1
      %p297 = scmp.lt.s32.totalorder %s294, 3
      %s298 = scalar_select %p297, %s294, 3
      %s299 = smul.addr %s298, 2
      %s300 = smul.addr %s296, 8
      %s301 = sadd.s32 %s299, %s300
      %s302 = smul.addr %s301, 4
      %s303 = scalar_lea.vmem %s0, %s302
      %s304 = smul.u32 2, %s22
      %s305 = sadd.s32 %s22, 1
      %s306 = smul.u32 2, %s305
      %p307 = scmp.lt.s32.totalorder %s21, 1
      %s308 = scalar_select %p307, %s21, 1
      %p309 = scmp.lt.s32.totalorder %s306, 3
      %s310 = scalar_select %p309, %s306, 3
      %s311 = smul.addr %s310, 2
      %s312 = smul.addr %s308, 8
      %s313 = sadd.s32 %s311, %s312
      %s314 = smul.addr %s313, 4
      %s315 = scalar_lea.vmem %s1, %s314
      %s316 = sadd.s32 %s22, 1
      %s317 = smul.u32 2, %s316
      %p318 = scmp.lt.s32.totalorder %s20, 0
      %s319 = scalar_select %p318, %s20, 0
      %s320 = smul.addr %s319, 704
      %s321 = smul.addr %s320, 4
      %s322 = scalar_lea.vmem %s2, %s321
      %p323 = scmp.lt.s32.totalorder %s20, 0
      %s324 = scalar_select %p323, %s20, 0
      %s325 = smul.addr %s324, 2
      %s326 = scalar_lea.vmem %s3, %s325
      %s327 = smul.u32 2, %s22
      %s328 = smul.u32 2, %s20
      %p329 = scmp.lt.s32.totalorder %s21, 1
      %s330 = scalar_select %p329, %s21, 1
      %p331 = scmp.lt.s32.totalorder %s327, 1
      %s332 = scalar_select %p331, %s327, 1
      %p333 = scmp.lt.s32.totalorder %s328, 1
      %s334 = scalar_select %p333, %s328, 1
      %s335 = smul.addr %s332, 2
      %s336 = sadd.s32 %s334, %s335
      %s337 = smul.addr %s330, 4
      %s338 = sadd.s32 %s336, %s337
      %s339 = smul.addr %s338, 4
      %s340 = scalar_lea.vmem %s4, %s339
      %s341 = smul.u32 2, %s22
      %s342 = smul.u32 2, %s20
      %v343 = vld [vmem:[%s303] sm:$0xff]
      %v344 = vld [vmem:[%s303 + $0x8] sm:$0xff]
      %v347 = vunpack.c.l.b16 %v343
      %v348 = vunpack.c.h.b16 %v343
      %v349 = vunpack.c.l.b16 %v344
      %v350 = vunpack.c.h.b16 %v344
      %v351 = vpack.c.b16 %v349, %v347
      %v352 = vpack.c.b16 %v350, %v348
      %355 = vst [vmem:[#allocation2] sm:$0xff] %v351
      %356 = vst [vmem:[#allocation2 + $0x8] sm:$0xff] %v352
      %v357 = vld [vmem:[%s315] sm:$0xff]
      %v358 = vld [vmem:[%s315 + $0x8] sm:$0xff]
      %v361 = vunpack.c.l.b16 %v357
      %v362 = vunpack.c.h.b16 %v357
      %v363 = vunpack.c.l.b16 %v358
      %v364 = vunpack.c.h.b16 %v358
      %v365 = vpack.c.b16 %v363, %v361
      %v366 = vpack.c.b16 %v364, %v362
      %369 = vst [vmem:[#allocation2 + $0x10] sm:$0xff] %v365
      %370 = vst [vmem:[#allocation2 + $0x18] sm:$0xff] %v366
      %v371 = vld [vmem:[#allocation2] sm:$0xff]
      %v372 = vld [vmem:[#allocation2 + $0x8] sm:$0xff]
      %v373 = vld [vmem:[%s322] sm:$0xff]
      %v374 = vld [vmem:[%s322 + $0x8] sm:$0xff]
      %v375 = vld [vmem:[%s322 + $0x10] sm:$0xff]
      %v376 = vld [vmem:[%s322 + $0x18] sm:$0xff]
      %v377 = vld [vmem:[%s322 + $0x20] sm:$0xff]
      %v378 = vld [vmem:[%s322 + $0x28] sm:$0xff]
      %v379 = vld [vmem:[%s322 + $0x30] sm:$0xff]
      %v380 = vld [vmem:[%s322 + $0x38] sm:$0xff]
      %v381 = vld [vmem:[%s322 + $0x40] sm:$0xff]
      %v382 = vld [vmem:[%s322 + $0x48] sm:$0xff]
      %v383 = vld [vmem:[%s322 + $0x50] sm:$0xff]
      %v384 = vld [vmem:[%s322 + $0x58] sm:$0xff]
      %v385 = vld [vmem:[%s322 + $0x60] sm:$0xff]
      %v386 = vld [vmem:[%s322 + $0x68] sm:$0xff]
      %v387 = vld [vmem:[%s322 + $0x70] sm:$0xff]
      %v388 = vld [vmem:[%s322 + $0x78] sm:$0xff]
      %v389 = vld [vmem:[%s322 + $0x80] sm:$0xff]
      %v390 = vld [vmem:[%s322 + $0x88] sm:$0xff]
      %v391 = vld [vmem:[%s322 + $0x90] sm:$0xff]
      %v392 = vld [vmem:[%s322 + $0x98] sm:$0xff]
      %v393 = vld [vmem:[%s322 + $0xa0] sm:$0xff]
      %v394 = vld [vmem:[%s322 + $0xa8] sm:$0xff]
      %v395 = vld [vmem:[%s322 + $0xb0] sm:$0xff]
      %v396 = vld [vmem:[%s322 + $0xb8] sm:$0xff]
      %v397 = vld [vmem:[%s322 + $0xc0] sm:$0xff]
      %v398 = vld [vmem:[%s322 + $0xc8] sm:$0xff]
      %v399 = vld [vmem:[%s322 + $0xd0] sm:$0xff]
      %v400 = vld [vmem:[%s322 + $0xd8] sm:$0xff]
      %v401 = vld [vmem:[%s322 + $0xe0] sm:$0xff]
      %v402 = vld [vmem:[%s322 + $0xe8] sm:$0xff]
      %v403 = vld [vmem:[%s322 + $0xf0] sm:$0xff]
      %v404 = vld [vmem:[%s322 + $0xf8] sm:$0xff]
      %v437 = vunpack.c.l.b16 %v373
      %v438 = vunpack.c.h.b16 %v373
      %v439 = vunpack.c.l.b16 %v374
      %v440 = vunpack.c.h.b16 %v374
      %v441 = vunpack.c.l.b16 %v375
      %v442 = vunpack.c.h.b16 %v375
      %v443 = vunpack.c.l.b16 %v376
      %v444 = vunpack.c.h.b16 %v376
      %v445 = vunpack.c.l.b16 %v377
      %v446 = vunpack.c.h.b16 %v377
      %v447 = vunpack.c.l.b16 %v378
      %v448 = vunpack.c.h.b16 %v378
      %v449 = vunpack.c.l.b16 %v379
      %v450 = vunpack.c.h.b16 %v379
      %v451 = vunpack.c.l.b16 %v380
      %v452 = vunpack.c.h.b16 %v380
      %v453 = vunpack.c.l.b16 %v381
      %v454 = vunpack.c.h.b16 %v381
      %v455 = vunpack.c.l.b16 %v382
      %v456 = vunpack.c.h.b16 %v382
      %v457 = vunpack.c.l.b16 %v383
      %v458 = vunpack.c.h.b16 %v383
      %v459 = vunpack.c.l.b16 %v384
      %v460 = vunpack.c.h.b16 %v384
      %v461 = vunpack.c.l.b16 %v385
      %v462 = vunpack.c.h.b16 %v385
      %v463 = vunpack.c.l.b16 %v386
      %v464 = vunpack.c.h.b16 %v386
      %v465 = vunpack.c.l.b16 %v387
      %v466 = vunpack.c.h.b16 %v387
      %v467 = vunpack.c.l.b16 %v388
      %v468 = vunpack.c.h.b16 %v388
      %v469 = vunpack.c.l.b16 %v389
      %v470 = vunpack.c.h.b16 %v389
      %v471 = vunpack.c.l.b16 %v390
      %v472 = vunpack.c.h.b16 %v390
      %v473 = vunpack.c.l.b16 %v391
      %v474 = vunpack.c.h.b16 %v391
      %v475 = vunpack.c.l.b16 %v392
      %v476 = vunpack.c.h.b16 %v392
      %v477 = vunpack.c.l.b16 %v393
      %v478 = vunpack.c.h.b16 %v393
      %v479 = vunpack.c.l.b16 %v394
      %v480 = vunpack.c.h.b16 %v394
      %v481 = vunpack.c.l.b16 %v395
      %v482 = vunpack.c.h.b16 %v395
      %v483 = vunpack.c.l.b16 %v396
      %v484 = vunpack.c.h.b16 %v396
      %v485 = vunpack.c.l.b16 %v397
      %v486 = vunpack.c.h.b16 %v397
      %v487 = vunpack.c.l.b16 %v398
      %v488 = vunpack.c.h.b16 %v398
      %v489 = vunpack.c.l.b16 %v399
      %v490 = vunpack.c.h.b16 %v399
      %v491 = vunpack.c.l.b16 %v400
      %v492 = vunpack.c.h.b16 %v400
      %v493 = vunpack.c.l.b16 %v401
      %v494 = vunpack.c.h.b16 %v401
      %v495 = vunpack.c.l.b16 %v402
      %v496 = vunpack.c.h.b16 %v402
      %v497 = vunpack.c.l.b16 %v403
      %v498 = vunpack.c.h.b16 %v403
      %v499 = vunpack.c.l.b16 %v404
      %v500 = vunpack.c.h.b16 %v404
      %v501 = vpack.c.b16 %v439, %v437
      %v502 = vpack.c.b16 %v440, %v438
      %v503 = vpack.c.b16 %v443, %v441
      %v504 = vpack.c.b16 %v444, %v442
      %v505 = vpack.c.b16 %v447, %v445
      %v506 = vpack.c.b16 %v448, %v446
      %v507 = vpack.c.b16 %v451, %v449
      %v508 = vpack.c.b16 %v452, %v450
      %v509 = vpack.c.b16 %v455, %v453
      %v510 = vpack.c.b16 %v456, %v454
      %v511 = vpack.c.b16 %v459, %v457
      %v512 = vpack.c.b16 %v460, %v458
      %v513 = vpack.c.b16 %v463, %v461
      %v514 = vpack.c.b16 %v464, %v462
      %v515 = vpack.c.b16 %v467, %v465
      %v516 = vpack.c.b16 %v468, %v466
      %v517 = vpack.c.b16 %v471, %v469
      %v518 = vpack.c.b16 %v472, %v470
      %v519 = vpack.c.b16 %v475, %v473
      %v520 = vpack.c.b16 %v476, %v474
      %v521 = vpack.c.b16 %v479, %v477
      %v522 = vpack.c.b16 %v480, %v478
      %v523 = vpack.c.b16 %v483, %v481
      %v524 = vpack.c.b16 %v484, %v482
      %v525 = vpack.c.b16 %v487, %v485
      %v526 = vpack.c.b16 %v488, %v486
      %v527 = vpack.c.b16 %v491, %v489
      %v528 = vpack.c.b16 %v492, %v490
      %v529 = vpack.c.b16 %v495, %v493
      %v530 = vpack.c.b16 %v496, %v494
      %v531 = vpack.c.b16 %v499, %v497
      %v532 = vpack.c.b16 %v500, %v498
      %565 = vmatprep.subr.bf16.mxu0 %v502
      %566 = vmatpush1.bf16.msra.mxu0 %v501
      %567 = vmatprep.subr.bf16.mxu0 %v504
      %568 = vmatpush1.bf16.msra.mxu0 %v503
      %569 = vmatprep.subr.bf16.mxu0 %v506
      %570 = vmatpush1.bf16.msra.mxu0 %v505
      %571 = vmatprep.subr.bf16.mxu0 %v508
      %572 = vmatpush1.bf16.msra.mxu0 %v507
      %573 = vmatprep.subr.bf16.mxu0 %v510
      %574 = vmatpush1.bf16.msra.mxu0 %v509
      %575 = vmatprep.subr.bf16.mxu0 %v512
      %576 = vmatpush1.bf16.msra.mxu0 %v511
      %577 = vmatprep.subr.bf16.mxu0 %v514
      %578 = vmatpush1.bf16.msra.mxu0 %v513
      %579 = vmatprep.subr.bf16.mxu0 %v516
      %580 = vmatpush1.bf16.msra.mxu0 %v515
      %581 = vmatprep.subr.bf16.mxu0 %v518
      %582 = vmatpush1.bf16.msra.mxu0 %v517
      %583 = vmatprep.subr.bf16.mxu0 %v520
      %584 = vmatpush1.bf16.msra.mxu0 %v519
      %585 = vmatprep.subr.bf16.mxu0 %v522
      %586 = vmatpush1.bf16.msra.mxu0 %v521
      %587 = vmatprep.subr.bf16.mxu0 %v524
      %588 = vmatpush1.bf16.msra.mxu0 %v523
      %589 = vmatprep.subr.bf16.mxu0 %v526
      %590 = vmatpush1.bf16.msra.mxu0 %v525
      %591 = vmatprep.subr.bf16.mxu0 %v528
      %592 = vmatpush1.bf16.msra.mxu0 %v527
      %593 = vmatprep.subr.bf16.mxu0 %v530
      %594 = vmatpush1.bf16.msra.mxu0 %v529
      %595 = vmatprep.subr.bf16.mxu0 %v532
      %596 = vmatpush1.bf16.msra.mxu0 %v531
      %597 = vmatprep.mubr.bf16.mxu0 %v372
      %598 = vmatmul.mubr.bf16.gmra.mrb[0].mxu0 %v371
      %v599 = vpop.f32.mrb[0].mxu0
      %v600 = vadd.f32 0.0, %v599
      %v601 = vpop.f32.mrb[0].mxu0
      %v602 = vadd.f32 0.0, %v601
      %v603 = vpop.f32.mrb[0].mxu0
      %v604 = vadd.f32 0.0, %v603
      %v605 = vpop.f32.mrb[0].mxu0
      %v606 = vadd.f32 0.0, %v605
      %607 = vdwg.mxu0
      %608 = vst [vmem:[#allocation3] sm:$0xff] %v600
      %609 = vst [vmem:[#allocation3 + $0x8] sm:$0xff] %v602
      %610 = vst [vmem:[#allocation3 + $0x10] sm:$0xff] %v604
      %611 = vst [vmem:[#allocation3 + $0x18] sm:$0xff] %v606
      %v612 = vld [vmem:[#allocation2] sm:$0xff]
      %v613 = vld [vmem:[#allocation2 + $0x8] sm:$0xff]
      %v614 = vld [vmem:[#allocation2 + $0x10] sm:$0x1]
      %v615 = vld [vmem:[#allocation2 + $0x18] sm:$0x1]
      %s616 = scalar_lea.vmem %s322, 256
      %v617 = vld [vmem:[%s616] sm:$0xff]
      %v618 = vld [vmem:[%s616 + $0x8] sm:$0xff]
      %v619 = vld [vmem:[%s616 + $0x10] sm:$0xff]
      %v620 = vld [vmem:[%s616 + $0x18] sm:$0xff]
      %v621 = vld [vmem:[%s616 + $0x20] sm:$0xff]
      %v622 = vld [vmem:[%s616 + $0x28] sm:$0xff]
      %v623 = vld [vmem:[%s616 + $0x30] sm:$0xff]
      %v624 = vld [vmem:[%s616 + $0x38] sm:$0xff]
      %v625 = vld [vmem:[%s616 + $0x40] sm:$0xff]
      %v626 = vld [vmem:[%s616 + $0x48] sm:$0xff]
      %v627 = vld [vmem:[%s616 + $0x50] sm:$0xff]
      %v628 = vld [vmem:[%s616 + $0x58] sm:$0xff]
      %v629 = vld [vmem:[%s616 + $0x60] sm:$0xff]
      %v630 = vld [vmem:[%s616 + $0x68] sm:$0xff]
      %v631 = vld [vmem:[%s616 + $0x70] sm:$0xff]
      %v632 = vld [vmem:[%s616 + $0x78] sm:$0xff]
      %v633 = vld [vmem:[%s616 + $0x80] sm:$0xff]
      %v634 = vld [vmem:[%s616 + $0x88] sm:$0xff]
      %v635 = vld [vmem:[%s616 + $0x90] sm:$0xff]
      %v636 = vld [vmem:[%s616 + $0x98] sm:$0xff]
      %v637 = vld [vmem:[%s616 + $0xa0] sm:$0xff]
      %v638 = vld [vmem:[%s616 + $0xa8] sm:$0xff]
      %v639 = vld [vmem:[%s616 + $0xb0] sm:$0xff]
      %v640 = vld [vmem:[%s616 + $0xb8] sm:$0xff]
      %v641 = vld [vmem:[%s616 + $0xc0] sm:$0xff]
      %v642 = vld [vmem:[%s616 + $0xc8] sm:$0xff]
      %v643 = vld [vmem:[%s616 + $0xd0] sm:$0xff]
      %v644 = vld [vmem:[%s616 + $0xd8] sm:$0xff]
      %v645 = vld [vmem:[%s616 + $0xe0] sm:$0xff]
      %v646 = vld [vmem:[%s616 + $0xe8] sm:$0xff]
      %v647 = vld [vmem:[%s616 + $0xf0] sm:$0xff]
      %v648 = vld [vmem:[%s616 + $0xf8] sm:$0xff]
      %vm649 = vsmask.f32 7424
      %v651 = vshrl.u32 %v612, 16
      %v653 = vshll.u32 %v612, 16
      %v655 = vrot.slane %v653, 1
      %v656 = vor.u32 %v651, %v655
      %v658 = vshll.u32 %v614, 16
      %v660 = vrot.slane %v658, 1
      %v661 = vsel %vm649, %v656, %v660
      %v663 = vshrl.u32 %v613, 16
      %v665 = vshll.u32 %v613, 16
      %v667 = vrot.slane %v665, 1
      %v668 = vor.u32 %v663, %v667
      %v670 = vshll.u32 %v615, 16
      %v672 = vrot.slane %v670, 1
      %v673 = vsel %vm649, %v668, %v672
      %v708 = vunpack.c.l.b16 %v617
      %v709 = vunpack.c.h.b16 %v617
      %v710 = vunpack.c.l.b16 %v618
      %v711 = vunpack.c.h.b16 %v618
      %v712 = vunpack.c.l.b16 %v619
      %v713 = vunpack.c.h.b16 %v619
      %v714 = vunpack.c.l.b16 %v620
      %v715 = vunpack.c.h.b16 %v620
      %v716 = vunpack.c.l.b16 %v621
      %v717 = vunpack.c.h.b16 %v621
      %v718 = vunpack.c.l.b16 %v622
      %v719 = vunpack.c.h.b16 %v622
      %v720 = vunpack.c.l.b16 %v623
      %v721 = vunpack.c.h.b16 %v623
      %v722 = vunpack.c.l.b16 %v624
      %v723 = vunpack.c.h.b16 %v624
      %v724 = vunpack.c.l.b16 %v625
      %v725 = vunpack.c.h.b16 %v625
      %v726 = vunpack.c.l.b16 %v626
      %v727 = vunpack.c.h.b16 %v626
      %v728 = vunpack.c.l.b16 %v627
      %v729 = vunpack.c.h.b16 %v627
      %v730 = vunpack.c.l.b16 %v628
      %v731 = vunpack.c.h.b16 %v628
      %v732 = vunpack.c.l.b16 %v629
      %v733 = vunpack.c.h.b16 %v629
      %v734 = vunpack.c.l.b16 %v630
      %v735 = vunpack.c.h.b16 %v630
      %v736 = vunpack.c.l.b16 %v631
      %v737 = vunpack.c.h.b16 %v631
      %v738 = vunpack.c.l.b16 %v632
      %v739 = vunpack.c.h.b16 %v632
      %v740 = vunpack.c.l.b16 %v633
      %v741 = vunpack.c.h.b16 %v633
      %v742 = vunpack.c.l.b16 %v634
      %v743 = vunpack.c.h.b16 %v634
      %v744 = vunpack.c.l.b16 %v635
      %v745 = vunpack.c.h.b16 %v635
      %v746 = vunpack.c.l.b16 %v636
      %v747 = vunpack.c.h.b16 %v636
      %v748 = vunpack.c.l.b16 %v637
      %v749 = vunpack.c.h.b16 %v637
      %v750 = vunpack.c.l.b16 %v638
      %v751 = vunpack.c.h.b16 %v638
      %v752 = vunpack.c.l.b16 %v639
      %v753 = vunpack.c.h.b16 %v639
      %v754 = vunpack.c.l.b16 %v640
      %v755 = vunpack.c.h.b16 %v640
      %v756 = vunpack.c.l.b16 %v641
      %v757 = vunpack.c.h.b16 %v641
      %v758 = vunpack.c.l.b16 %v642
      %v759 = vunpack.c.h.b16 %v642
      %v760 = vunpack.c.l.b16 %v643
      %v761 = vunpack.c.h.b16 %v643
      %v762 = vunpack.c.l.b16 %v644
      %v763 = vunpack.c.h.b16 %v644
      %v764 = vunpack.c.l.b16 %v645
      %v765 = vunpack.c.h.b16 %v645
      %v766 = vunpack.c.l.b16 %v646
      %v767 = vunpack.c.h.b16 %v646
      %v768 = vunpack.c.l.b16 %v647
      %v769 = vunpack.c.h.b16 %v647
      %v770 = vunpack.c.l.b16 %v648
      %v771 = vunpack.c.h.b16 %v648
      %v772 = vpack.c.b16 %v710, %v708
      %v773 = vpack.c.b16 %v711, %v709
      %v774 = vpack.c.b16 %v714, %v712
      %v775 = vpack.c.b16 %v715, %v713
      %v776 = vpack.c.b16 %v718, %v716
      %v777 = vpack.c.b16 %v719, %v717
      %v778 = vpack.c.b16 %v722, %v720
      %v779 = vpack.c.b16 %v723, %v721
      %v780 = vpack.c.b16 %v726, %v724
      %v781 = vpack.c.b16 %v727, %v725
      %v782 = vpack.c.b16 %v730, %v728
      %v783 = vpack.c.b16 %v731, %v729
      %v784 = vpack.c.b16 %v734, %v732
      %v785 = vpack.c.b16 %v735, %v733
      %v786 = vpack.c.b16 %v738, %v736
      %v787 = vpack.c.b16 %v739, %v737
      %v788 = vpack.c.b16 %v742, %v740
      %v789 = vpack.c.b16 %v743, %v741
      %v790 = vpack.c.b16 %v746, %v744
      %v791 = vpack.c.b16 %v747, %v745
      %v792 = vpack.c.b16 %v750, %v748
      %v793 = vpack.c.b16 %v751, %v749
      %v794 = vpack.c.b16 %v754, %v752
      %v795 = vpack.c.b16 %v755, %v753
      %v796 = vpack.c.b16 %v758, %v756
      %v797 = vpack.c.b16 %v759, %v757
      %v798 = vpack.c.b16 %v762, %v760
      %v799 = vpack.c.b16 %v763, %v761
      %v800 = vpack.c.b16 %v766, %v764
      %v801 = vpack.c.b16 %v767, %v765
      %v802 = vpack.c.b16 %v770, %v768
      %v803 = vpack.c.b16 %v771, %v769
      %836 = vmatprep.subr.bf16.mxu0 %v773
      %837 = vmatpush1.bf16.msra.mxu0 %v772
      %838 = vmatprep.subr.bf16.mxu0 %v775
      %839 = vmatpush1.bf16.msra.mxu0 %v774
      %840 = vmatprep.subr.bf16.mxu0 %v777
      %841 = vmatpush1.bf16.msra.mxu0 %v776
      %842 = vmatprep.subr.bf16.mxu0 %v779
      %843 = vmatpush1.bf16.msra.mxu0 %v778
      %844 = vmatprep.subr.bf16.mxu0 %v781
      %845 = vmatpush1.bf16.msra.mxu0 %v780
      %846 = vmatprep.subr.bf16.mxu0 %v783
      %847 = vmatpush1.bf16.msra.mxu0 %v782
      %848 = vmatprep.subr.bf16.mxu0 %v785
      %849 = vmatpush1.bf16.msra.mxu0 %v784
      %850 = vmatprep.subr.bf16.mxu0 %v787
      %851 = vmatpush1.bf16.msra.mxu0 %v786
      %852 = vmatprep.subr.bf16.mxu0 %v789
      %853 = vmatpush1.bf16.msra.mxu0 %v788
      %854 = vmatprep.subr.bf16.mxu0 %v791
      %855 = vmatpush1.bf16.msra.mxu0 %v790
      %856 = vmatprep.subr.bf16.mxu0 %v793
      %857 = vmatpush1.bf16.msra.mxu0 %v792
      %858 = vmatprep.subr.bf16.mxu0 %v795
      %859 = vmatpush1.bf16.msra.mxu0 %v794
      %860 = vmatprep.subr.bf16.mxu0 %v797
      %861 = vmatpush1.bf16.msra.mxu0 %v796
      %862 = vmatprep.subr.bf16.mxu0 %v799
      %863 = vmatpush1.bf16.msra.mxu0 %v798
      %864 = vmatprep.subr.bf16.mxu0 %v801
      %865 = vmatpush1.bf16.msra.mxu0 %v800
      %866 = vmatprep.subr.bf16.mxu0 %v803
      %867 = vmatpush1.bf16.msra.mxu0 %v802
      %868 = vmatprep.mubr.bf16.mxu0 %v673
      %869 = vmatmul.mubr.bf16.gmra.mrb[0].mxu0 %v661
      %v870 = vpop.f32.mrb[0].mxu0
      %v871 = vadd.f32 0.0, %v870
      %v872 = vpop.f32.mrb[0].mxu0
      %v873 = vadd.f32 0.0, %v872
      %v874 = vpop.f32.mrb[0].mxu0
      %v875 = vadd.f32 0.0, %v874
      %v876 = vpop.f32.mrb[0].mxu0
      %v877 = vadd.f32 0.0, %v876
      %878 = vdwg.mxu0
      %v879 = vld [vmem:[#allocation3] sm:$0xff]
      %v880 = vld [vmem:[#allocation3 + $0x8] sm:$0xff]
      %v881 = vld [vmem:[#allocation3 + $0x10] sm:$0xff]
      %v882 = vld [vmem:[#allocation3 + $0x18] sm:$0xff]
      %v883 = vadd.f32 %v879, %v871
      %v884 = vadd.f32 %v880, %v873
      %v885 = vadd.f32 %v881, %v875
      %v886 = vadd.f32 %v882, %v877
      %887 = vst [vmem:[#allocation3] sm:$0xff] %v883
      %888 = vst [vmem:[#allocation3 + $0x8] sm:$0xff] %v884
      %889 = vst [vmem:[#allocation3 + $0x10] sm:$0xff] %v885
      %890 = vst [vmem:[#allocation3 + $0x18] sm:$0xff] %v886
      %v891 = vld [vmem:[#allocation2] sm:$0xfe]
      %v892 = vld [vmem:[#allocation2 + $0x8] sm:$0xfe]
      %v893 = vld [vmem:[#allocation2 + $0x10] sm:$0x1]
      %v894 = vld [vmem:[#allocation2 + $0x18] sm:$0x1]
      %s895 = scalar_lea.vmem %s322, 512
      %v896 = vld [vmem:[%s895] sm:$0xff]
      %v897 = vld [vmem:[%s895 + $0x8] sm:$0xff]
      %v898 = vld [vmem:[%s895 + $0x10] sm:$0xff]
      %v899 = vld [vmem:[%s895 + $0x18] sm:$0xff]
      %v900 = vld [vmem:[%s895 + $0x20] sm:$0xff]
      %v901 = vld [vmem:[%s895 + $0x28] sm:$0xff]
      %v902 = vld [vmem:[%s895 + $0x30] sm:$0xff]
      %v903 = vld [vmem:[%s895 + $0x38] sm:$0xff]
      %v904 = vld [vmem:[%s895 + $0x40] sm:$0xff]
      %v905 = vld [vmem:[%s895 + $0x48] sm:$0xff]
      %v906 = vld [vmem:[%s895 + $0x50] sm:$0xff]
      %v907 = vld [vmem:[%s895 + $0x58] sm:$0xff]
      %v908 = vld [vmem:[%s895 + $0x60] sm:$0xff]
      %v909 = vld [vmem:[%s895 + $0x68] sm:$0xff]
      %v910 = vld [vmem:[%s895 + $0x70] sm:$0xff]
      %v911 = vld [vmem:[%s895 + $0x78] sm:$0xff]
      %v912 = vld [vmem:[%s895 + $0x80] sm:$0xff]
      %v913 = vld [vmem:[%s895 + $0x88] sm:$0xff]
      %v914 = vld [vmem:[%s895 + $0x90] sm:$0xff]
      %v915 = vld [vmem:[%s895 + $0x98] sm:$0xff]
      %v916 = vld [vmem:[%s895 + $0xa0] sm:$0xff]
      %v917 = vld [vmem:[%s895 + $0xa8] sm:$0xff]
      %v918 = vld [vmem:[%s895 + $0xb0] sm:$0xff]
      %v919 = vld [vmem:[%s895 + $0xb8] sm:$0xff]
      %v920 = vld [vmem:[%s895 + $0xc0] sm:$0xff]
      %v921 = vld [vmem:[%s895 + $0xc8] sm:$0xff]
      %v922 = vld [vmem:[%s895 + $0xd0] sm:$0xff]
      %v923 = vld [vmem:[%s895 + $0xd8] sm:$0xff]
      %v924 = vld [vmem:[%s895 + $0xe0] sm:$0xff]
      %v925 = vld [vmem:[%s895 + $0xe8] sm:$0xff]
      %v926 = vld [vmem:[%s895 + $0xf0] sm:$0xff]
      %v927 = vld [vmem:[%s895 + $0xf8] sm:$0xff]
      %vm932 = vcmask 1046528
      %v933 = vrot.slane %v891, 1
      %v934 = vrot.slane %v893, 1
      %v935 = vsel %vm932, %v933, %v934
      %v936 = vrot.slane %v892, 1
      %v937 = vrot.slane %v894, 1
      %v938 = vsel %vm932, %v936, %v937
      %v973 = vunpack.c.l.b16 %v896
      %v974 = vunpack.c.h.b16 %v896
      %v975 = vunpack.c.l.b16 %v897
      %v976 = vunpack.c.h.b16 %v897
      %v977 = vunpack.c.l.b16 %v898
      %v978 = vunpack.c.h.b16 %v898
      %v979 = vunpack.c.l.b16 %v899
      %v980 = vunpack.c.h.b16 %v899
      %v981 = vunpack.c.l.b16 %v900
      %v982 = vunpack.c.h.b16 %v900
      %v983 = vunpack.c.l.b16 %v901
      %v984 = vunpack.c.h.b16 %v901
      %v985 = vunpack.c.l.b16 %v902
      %v986 = vunpack.c.h.b16 %v902
      %v987 = vunpack.c.l.b16 %v903
      %v988 = vunpack.c.h.b16 %v903
      %v989 = vunpack.c.l.b16 %v904
      %v990 = vunpack.c.h.b16 %v904
      %v991 = vunpack.c.l.b16 %v905
      %v992 = vunpack.c.h.b16 %v905
      %v993 = vunpack.c.l.b16 %v906
      %v994 = vunpack.c.h.b16 %v906
      %v995 = vunpack.c.l.b16 %v907
      %v996 = vunpack.c.h.b16 %v907
      %v997 = vunpack.c.l.b16 %v908
      %v998 = vunpack.c.h.b16 %v908
      %v999 = vunpack.c.l.b16 %v909
      %v1000 = vunpack.c.h.b16 %v909
      %v1001 = vunpack.c.l.b16 %v910
      %v1002 = vunpack.c.h.b16 %v910
      %v1003 = vunpack.c.l.b16 %v911
      %v1004 = vunpack.c.h.b16 %v911
      %v1005 = vunpack.c.l.b16 %v912
      %v1006 = vunpack.c.h.b16 %v912
      %v1007 = vunpack.c.l.b16 %v913
      %v1008 = vunpack.c.h.b16 %v913
      %v1009 = vunpack.c.l.b16 %v914
      %v1010 = vunpack.c.h.b16 %v914
      %v1011 = vunpack.c.l.b16 %v915
      %v1012 = vunpack.c.h.b16 %v915
      %v1013 = vunpack.c.l.b16 %v916
      %v1014 = vunpack.c.h.b16 %v916
      %v1015 = vunpack.c.l.b16 %v917
      %v1016 = vunpack.c.h.b16 %v917
      %v1017 = vunpack.c.l.b16 %v918
      %v1018 = vunpack.c.h.b16 %v918
      %v1019 = vunpack.c.l.b16 %v919
      %v1020 = vunpack.c.h.b16 %v919
      %v1021 = vunpack.c.l.b16 %v920
      %v1022 = vunpack.c.h.b16 %v920
      %v1023 = vunpack.c.l.b16 %v921
      %v1024 = vunpack.c.h.b16 %v921
      %v1025 = vunpack.c.l.b16 %v922
      %v1026 = vunpack.c.h.b16 %v922
      %v1027 = vunpack.c.l.b16 %v923
      %v1028 = vunpack.c.h.b16 %v923
      %v1029 = vunpack.c.l.b16 %v924
      %v1030 = vunpack.c.h.b16 %v924
      %v1031 = vunpack.c.l.b16 %v925
      %v1032 = vunpack.c.h.b16 %v925
      %v1033 = vunpack.c.l.b16 %v926
      %v1034 = vunpack.c.h.b16 %v926
      %v1035 = vunpack.c.l.b16 %v927
      %v1036 = vunpack.c.h.b16 %v927
      %v1037 = vpack.c.b16 %v975, %v973
      %v1038 = vpack.c.b16 %v976, %v974
      %v1039 = vpack.c.b16 %v979, %v977
      %v1040 = vpack.c.b16 %v980, %v978
      %v1041 = vpack.c.b16 %v983, %v981
      %v1042 = vpack.c.b16 %v984, %v982
      %v1043 = vpack.c.b16 %v987, %v985
      %v1044 = vpack.c.b16 %v988, %v986
      %v1045 = vpack.c.b16 %v991, %v989
      %v1046 = vpack.c.b16 %v992, %v990
      %v1047 = vpack.c.b16 %v995, %v993
      %v1048 = vpack.c.b16 %v996, %v994
      %v1049 = vpack.c.b16 %v999, %v997
      %v1050 = vpack.c.b16 %v1000, %v998
      %v1051 = vpack.c.b16 %v1003, %v1001
      %v1052 = vpack.c.b16 %v1004, %v1002
      %v1053 = vpack.c.b16 %v1007, %v1005
      %v1054 = vpack.c.b16 %v1008, %v1006
      %v1055 = vpack.c.b16 %v1011, %v1009
      %v1056 = vpack.c.b16 %v1012, %v1010
      %v1057 = vpack.c.b16 %v1015, %v1013
      %v1058 = vpack.c.b16 %v1016, %v1014
      %v1059 = vpack.c.b16 %v1019, %v1017
      %v1060 = vpack.c.b16 %v1020, %v1018
      %v1061 = vpack.c.b16 %v1023, %v1021
      %v1062 = vpack.c.b16 %v1024, %v1022
      %v1063 = vpack.c.b16 %v1027, %v1025
      %v1064 = vpack.c.b16 %v1028, %v1026
      %v1065 = vpack.c.b16 %v1031, %v1029
      %v1066 = vpack.c.b16 %v1032, %v1030
      %v1067 = vpack.c.b16 %v1035, %v1033
      %v1068 = vpack.c.b16 %v1036, %v1034
      %1101 = vmatprep.subr.bf16.mxu0 %v1038
      %1102 = vmatpush1.bf16.msra.mxu0 %v1037
      %1103 = vmatprep.subr.bf16.mxu0 %v1040
      %1104 = vmatpush1.bf16.msra.mxu0 %v1039
      %1105 = vmatprep.subr.bf16.mxu0 %v1042
      %1106 = vmatpush1.bf16.msra.mxu0 %v1041
      %1107 = vmatprep.subr.bf16.mxu0 %v1044
      %1108 = vmatpush1.bf16.msra.mxu0 %v1043
      %1109 = vmatprep.subr.bf16.mxu0 %v1046
      %1110 = vmatpush1.bf16.msra.mxu0 %v1045
      %1111 = vmatprep.subr.bf16.mxu0 %v1048
      %1112 = vmatpush1.bf16.msra.mxu0 %v1047
      %1113 = vmatprep.subr.bf16.mxu0 %v1050
      %1114 = vmatpush1.bf16.msra.mxu0 %v1049
      %1115 = vmatprep.subr.bf16.mxu0 %v1052
      %1116 = vmatpush1.bf16.msra.mxu0 %v1051
      %1117 = vmatprep.subr.bf16.mxu0 %v1054
      %1118 = vmatpush1.bf16.msra.mxu0 %v1053
      %1119 = vmatprep.subr.bf16.mxu0 %v1056
      %1120 = vmatpush1.bf16.msra.mxu0 %v1055
      %1121 = vmatprep.subr.bf16.mxu0 %v1058
      %1122 = vmatpush1.bf16.msra.mxu0 %v1057
      %1123 = vmatprep.subr.bf16.mxu0 %v1060
      %1124 = vmatpush1.bf16.msra.mxu0 %v1059
      %1125 = vmatprep.subr.bf16.mxu0 %v1062
      %1126 = vmatpush1.bf16.msra.mxu0 %v1061
      %1127 = vmatprep.subr.bf16.mxu0 %v1064
      %1128 = vmatpush1.bf16.msra.mxu0 %v1063
      %1129 = vmatprep.subr.bf16.mxu0 %v1066
      %1130 = vmatpush1.bf16.msra.mxu0 %v1065
      %1131 = vmatprep.subr.bf16.mxu0 %v1068
      %1132 = vmatpush1.bf16.msra.mxu0 %v1067
      %1133 = vmatprep.mubr.bf16.mxu0 %v938
      %1134 = vmatmul.mubr.bf16.gmra.mrb[0].mxu0 %v935
      %v1135 = vpop.f32.mrb[0].mxu0
      %v1136 = vadd.f32 0.0, %v1135
      %v1137 = vpop.f32.mrb[0].mxu0
      %v1138 = vadd.f32 0.0, %v1137
      %v1139 = vpop.f32.mrb[0].mxu0
      %v1140 = vadd.f32 0.0, %v1139
      %v1141 = vpop.f32.mrb[0].mxu0
      %v1142 = vadd.f32 0.0, %v1141
      %1143 = vdwg.mxu0
      %v1144 = vld [vmem:[#allocation3] sm:$0xff]
      %v1145 = vld [vmem:[#allocation3 + $0x8] sm:$0xff]
      %v1146 = vld [vmem:[#allocation3 + $0x10] sm:$0xff]
      %v1147 = vld [vmem:[#allocation3 + $0x18] sm:$0xff]
      %v1148 = vadd.f32 %v1144, %v1136
      %v1149 = vadd.f32 %v1145, %v1138
      %v1150 = vadd.f32 %v1146, %v1140
      %v1151 = vadd.f32 %v1147, %v1142
      %1152 = vst [vmem:[#allocation3] sm:$0xff] %v1148
      %1153 = vst [vmem:[#allocation3 + $0x8] sm:$0xff] %v1149
      %1154 = vst [vmem:[#allocation3 + $0x10] sm:$0xff] %v1150
      %1155 = vst [vmem:[#allocation3 + $0x18] sm:$0xff] %v1151
      %v1156 = vld [vmem:[#allocation2] sm:$0xfe]
      %v1157 = vld [vmem:[#allocation2 + $0x8] sm:$0xfe]
      %v1158 = vld [vmem:[#allocation2 + $0x10] sm:$0x3]
      %v1159 = vld [vmem:[#allocation2 + $0x18] sm:$0x3]
      %s1160 = scalar_lea.vmem %s322, 768
      %v1161 = vld [vmem:[%s1160] sm:$0xff]
      %v1162 = vld [vmem:[%s1160 + $0x8] sm:$0xff]
      %v1163 = vld [vmem:[%s1160 + $0x10] sm:$0xff]
      %v1164 = vld [vmem:[%s1160 + $0x18] sm:$0xff]
      %v1165 = vld [vmem:[%s1160 + $0x20] sm:$0xff]
      %v1166 = vld [vmem:[%s1160 + $0x28] sm:$0xff]
      %v1167 = vld [vmem:[%s1160 + $0x30] sm:$0xff]
      %v1168 = vld [vmem:[%s1160 + $0x38] sm:$0xff]
      %v1169 = vld [vmem:[%s1160 + $0x40] sm:$0xff]
      %v1170 = vld [vmem:[%s1160 + $0x48] sm:$0xff]
      %v1171 = vld [vmem:[%s1160 + $0x50] sm:$0xff]
      %v1172 = vld [vmem:[%s1160 + $0x58] sm:$0xff]
      %v1173 = vld [vmem:[%s1160 + $0x60] sm:$0xff]
      %v1174 = vld [vmem:[%s1160 + $0x68] sm:$0xff]
      %v1175 = vld [vmem:[%s1160 + $0x70] sm:$0xff]
      %v1176 = vld [vmem:[%s1160 + $0x78] sm:$0xff]
      %v1177 = vld [vmem:[%s1160 + $0x80] sm:$0xff]
      %v1178 = vld [vmem:[%s1160 + $0x88] sm:$0xff]
      %v1179 = vld [vmem:[%s1160 + $0x90] sm:$0xff]
      %v1180 = vld [vmem:[%s1160 + $0x98] sm:$0xff]
      %v1181 = vld [vmem:[%s1160 + $0xa0] sm:$0xff]
      %v1182 = vld [vmem:[%s1160 + $0xa8] sm:$0xff]
      %v1183 = vld [vmem:[%s1160 + $0xb0] sm:$0xff]
      %v1184 = vld [vmem:[%s1160 + $0xb8] sm:$0xff]
      %v1185 = vld [vmem:[%s1160 + $0xc0] sm:$0xff]
      %v1186 = vld [vmem:[%s1160 + $0xc8] sm:$0xff]
      %v1187 = vld [vmem:[%s1160 + $0xd0] sm:$0xff]
      %v1188 = vld [vmem:[%s1160 + $0xd8] sm:$0xff]
      %v1189 = vld [vmem:[%s1160 + $0xe0] sm:$0xff]
      %v1190 = vld [vmem:[%s1160 + $0xe8] sm:$0xff]
      %v1191 = vld [vmem:[%s1160 + $0xf0] sm:$0xff]
      %v1192 = vld [vmem:[%s1160 + $0xf8] sm:$0xff]
      %vm1193 = vsmask.f32 6400
      %v1195 = vshrl.u32 %v1156, 16
      %v1197 = vrot.slane %v1195, 1
      %v1198 = vshll.u32 %v1156, 16
      %v1200 = vrot.slane %v1198, 2
      %v1201 = vor.u32 %v1197, %v1200
      %v1203 = vshrl.u32 %v1158, 16
      %v1205 = vrot.slane %v1203, 1
      %v1206 = vshll.u32 %v1158, 16
      %v1208 = vrot.slane %v1206, 2
      %v1209 = vor.u32 %v1205, %v1208
      %v1210 = vsel %vm1193, %v1201, %v1209
      %v1212 = vshrl.u32 %v1157, 16
      %v1214 = vrot.slane %v1212, 1
      %v1215 = vshll.u32 %v1157, 16
      %v1217 = vrot.slane %v1215, 2
      %v1218 = vor.u32 %v1214, %v1217
      %v1220 = vshrl.u32 %v1159, 16
      %v1222 = vrot.slane %v1220, 1
      %v1223 = vshll.u32 %v1159, 16
      %v1225 = vrot.slane %v1223, 2
      %v1226 = vor.u32 %v1222, %v1225
      %v1227 = vsel %vm1193, %v1218, %v1226
      %v1262 = vunpack.c.l.b16 %v1161
      %v1263 = vunpack.c.h.b16 %v1161
      %v1264 = vunpack.c.l.b16 %v1162
      %v1265 = vunpack.c.h.b16 %v1162
      %v1266 = vunpack.c.l.b16 %v1163
      %v1267 = vunpack.c.h.b16 %v1163
      %v1268 = vunpack.c.l.b16 %v1164
      %v1269 = vunpack.c.h.b16 %v1164
      %v1270 = vunpack.c.l.b16 %v1165
      %v1271 = vunpack.c.h.b16 %v1165
      %v1272 = vunpack.c.l.b16 %v1166
      %v1273 = vunpack.c.h.b16 %v1166
      %v1274 = vunpack.c.l.b16 %v1167
      %v1275 = vunpack.c.h.b16 %v1167
      %v1276 = vunpack.c.l.b16 %v1168
      %v1277 = vunpack.c.h.b16 %v1168
      %v1278 = vunpack.c.l.b16 %v1169
      %v1279 = vunpack.c.h.b16 %v1169
      %v1280 = vunpack.c.l.b16 %v1170
      %v1281 = vunpack.c.h.b16 %v1170
      %v1282 = vunpack.c.l.b16 %v1171
      %v1283 = vunpack.c.h.b16 %v1171
      %v1284 = vunpack.c.l.b16 %v1172
      %v1285 = vunpack.c.h.b16 %v1172
      %v1286 = vunpack.c.l.b16 %v1173
      %v1287 = vunpack.c.h.b16 %v1173
      %v1288 = vunpack.c.l.b16 %v1174
      %v1289 = vunpack.c.h.b16 %v1174
      %v1290 = vunpack.c.l.b16 %v1175
      %v1291 = vunpack.c.h.b16 %v1175
      %v1292 = vunpack.c.l.b16 %v1176
      %v1293 = vunpack.c.h.b16 %v1176
      %v1294 = vunpack.c.l.b16 %v1177
      %v1295 = vunpack.c.h.b16 %v1177
      %v1296 = vunpack.c.l.b16 %v1178
      %v1297 = vunpack.c.h.b16 %v1178
      %v1298 = vunpack.c.l.b16 %v1179
      %v1299 = vunpack.c.h.b16 %v1179
      %v1300 = vunpack.c.l.b16 %v1180
      %v1301 = vunpack.c.h.b16 %v1180
      %v1302 = vunpack.c.l.b16 %v1181
      %v1303 = vunpack.c.h.b16 %v1181
      %v1304 = vunpack.c.l.b16 %v1182
      %v1305 = vunpack.c.h.b16 %v1182
      %v1306 = vunpack.c.l.b16 %v1183
      %v1307 = vunpack.c.h.b16 %v1183
      %v1308 = vunpack.c.l.b16 %v1184
      %v1309 = vunpack.c.h.b16 %v1184
      %v1310 = vunpack.c.l.b16 %v1185
      %v1311 = vunpack.c.h.b16 %v1185
      %v1312 = vunpack.c.l.b16 %v1186
      %v1313 = vunpack.c.h.b16 %v1186
      %v1314 = vunpack.c.l.b16 %v1187
      %v1315 = vunpack.c.h.b16 %v1187
      %v1316 = vunpack.c.l.b16 %v1188
      %v1317 = vunpack.c.h.b16 %v1188
      %v1318 = vunpack.c.l.b16 %v1189
      %v1319 = vunpack.c.h.b16 %v1189
      %v1320 = vunpack.c.l.b16 %v1190
      %v1321 = vunpack.c.h.b16 %v1190
      %v1322 = vunpack.c.l.b16 %v1191
      %v1323 = vunpack.c.h.b16 %v1191
      %v1324 = vunpack.c.l.b16 %v1192
      %v1325 = vunpack.c.h.b16 %v1192
      %v1326 = vpack.c.b16 %v1264, %v1262
      %v1327 = vpack.c.b16 %v1265, %v1263
      %v1328 = vpack.c.b16 %v1268, %v1266
      %v1329 = vpack.c.b16 %v1269, %v1267
      %v1330 = vpack.c.b16 %v1272, %v1270
      %v1331 = vpack.c.b16 %v1273, %v1271
      %v1332 = vpack.c.b16 %v1276, %v1274
      %v1333 = vpack.c.b16 %v1277, %v1275
      %v1334 = vpack.c.b16 %v1280, %v1278
      %v1335 = vpack.c.b16 %v1281, %v1279
      %v1336 = vpack.c.b16 %v1284, %v1282
      %v1337 = vpack.c.b16 %v1285, %v1283
      %v1338 = vpack.c.b16 %v1288, %v1286
      %v1339 = vpack.c.b16 %v1289, %v1287
      %v1340 = vpack.c.b16 %v1292, %v1290
      %v1341 = vpack.c.b16 %v1293, %v1291
      %v1342 = vpack.c.b16 %v1296, %v1294
      %v1343 = vpack.c.b16 %v1297, %v1295
      %v1344 = vpack.c.b16 %v1300, %v1298
      %v1345 = vpack.c.b16 %v1301, %v1299
      %v1346 = vpack.c.b16 %v1304, %v1302
      %v1347 = vpack.c.b16 %v1305, %v1303
      %v1348 = vpack.c.b16 %v1308, %v1306
      %v1349 = vpack.c.b16 %v1309, %v1307
      %v1350 = vpack.c.b16 %v1312, %v1310
      %v1351 = vpack.c.b16 %v1313, %v1311
      %v1352 = vpack.c.b16 %v1316, %v1314
      %v1353 = vpack.c.b16 %v1317, %v1315
      %v1354 = vpack.c.b16 %v1320, %v1318
      %v1355 = vpack.c.b16 %v1321, %v1319
      %v1356 = vpack.c.b16 %v1324, %v1322
      %v1357 = vpack.c.b16 %v1325, %v1323
      %1390 = vmatprep.subr.bf16.mxu0 %v1327
      %1391 = vmatpush1.bf16.msra.mxu0 %v1326
      %1392 = vmatprep.subr.bf16.mxu0 %v1329
      %1393 = vmatpush1.bf16.msra.mxu0 %v1328
      %1394 = vmatprep.subr.bf16.mxu0 %v1331
      %1395 = vmatpush1.bf16.msra.mxu0 %v1330
      %1396 = vmatprep.subr.bf16.mxu0 %v1333
      %1397 = vmatpush1.bf16.msra.mxu0 %v1332
      %1398 = vmatprep.subr.bf16.mxu0 %v1335
      %1399 = vmatpush1.bf16.msra.mxu0 %v1334
      %1400 = vmatprep.subr.bf16.mxu0 %v1337
      %1401 = vmatpush1.bf16.msra.mxu0 %v1336
      %1402 = vmatprep.subr.bf16.mxu0 %v1339
      %1403 = vmatpush1.bf16.msra.mxu0 %v1338
      %1404 = vmatprep.subr.bf16.mxu0 %v1341
      %1405 = vmatpush1.bf16.msra.mxu0 %v1340
      %1406 = vmatprep.subr.bf16.mxu0 %v1343
      %1407 = vmatpush1.bf16.msra.mxu0 %v1342
      %1408 = vmatprep.subr.bf16.mxu0 %v1345
      %1409 = vmatpush1.bf16.msra.mxu0 %v1344
      %1410 = vmatprep.subr.bf16.mxu0 %v1347
      %1411 = vmatpush1.bf16.msra.mxu0 %v1346
      %1412 = vmatprep.subr.bf16.mxu0 %v1349
      %1413 = vmatpush1.bf16.msra.mxu0 %v1348
      %1414 = vmatprep.subr.bf16.mxu0 %v1351
      %1415 = vmatpush1.bf16.msra.mxu0 %v1350
      %1416 = vmatprep.subr.bf16.mxu0 %v1353
      %1417 = vmatpush1.bf16.msra.mxu0 %v1352
      %1418 = vmatprep.subr.bf16.mxu0 %v1355
      %1419 = vmatpush1.bf16.msra.mxu0 %v1354
      %1420 = vmatprep.subr.bf16.mxu0 %v1357
      %1421 = vmatpush1.bf16.msra.mxu0 %v1356
      %1422 = vmatprep.mubr.bf16.mxu0 %v1227
      %1423 = vmatmul.mubr.bf16.gmra.mrb[0].mxu0 %v1210
      %v1424 = vpop.f32.mrb[0].mxu0
      %v1425 = vadd.f32 0.0, %v1424
      %v1426 = vpop.f32.mrb[0].mxu0
      %v1427 = vadd.f32 0.0, %v1426
      %v1428 = vpop.f32.mrb[0].mxu0
      %v1429 = vadd.f32 0.0, %v1428
      %v1430 = vpop.f32.mrb[0].mxu0
      %v1431 = vadd.f32 0.0, %v1430
      %1432 = vdwg.mxu0
      %v1433 = vld [vmem:[#allocation3] sm:$0xff]
      %v1434 = vld [vmem:[#allocation3 + $0x8] sm:$0xff]
      %v1435 = vld [vmem:[#allocation3 + $0x10] sm:$0xff]
      %v1436 = vld [vmem:[#allocation3 + $0x18] sm:$0xff]
      %v1437 = vadd.f32 %v1433, %v1425
      %v1438 = vadd.f32 %v1434, %v1427
      %v1439 = vadd.f32 %v1435, %v1429
      %v1440 = vadd.f32 %v1436, %v1431
      %1441 = vst [vmem:[#allocation3] sm:$0xff] %v1437
      %1442 = vst [vmem:[#allocation3 + $0x8] sm:$0xff] %v1438
      %1443 = vst [vmem:[#allocation3 + $0x10] sm:$0xff] %v1439
      %1444 = vst [vmem:[#allocation3 + $0x18] sm:$0xff] %v1440
      %v1445 = vld [vmem:[#allocation2] sm:$0xfc]
      %v1446 = vld [vmem:[#allocation2 + $0x8] sm:$0xfc]
      %v1447 = vld [vmem:[#allocation2 + $0x10] sm:$0x3]
      %v1448 = vld [vmem:[#allocation2 + $0x18] sm:$0x3]
      %s1449 = scalar_lea.vmem %s322, 1024
      %v1450 = vld [vmem:[%s1449] sm:$0xff]
      %v1451 = vld [vmem:[%s1449 + $0x8] sm:$0xff]
      %v1452 = vld [vmem:[%s1449 + $0x10] sm:$0xff]
      %v1453 = vld [vmem:[%s1449 + $0x18] sm:$0xff]
      %v1454 = vld [vmem:[%s1449 + $0x20] sm:$0xff]
      %v1455 = vld [vmem:[%s1449 + $0x28] sm:$0xff]
      %v1456 = vld [vmem:[%s1449 + $0x30] sm:$0xff]
      %v1457 = vld [vmem:[%s1449 + $0x38] sm:$0xff]
      %v1458 = vld [vmem:[%s1449 + $0x40] sm:$0xff]
      %v1459 = vld [vmem:[%s1449 + $0x48] sm:$0xff]
      %v1460 = vld [vmem:[%s1449 + $0x50] sm:$0xff]
      %v1461 = vld [vmem:[%s1449 + $0x58] sm:$0xff]
      %v1462 = vld [vmem:[%s1449 + $0x60] sm:$0xff]
      %v1463 = vld [vmem:[%s1449 + $0x68] sm:$0xff]
      %v1464 = vld [vmem:[%s1449 + $0x70] sm:$0xff]
      %v1465 = vld [vmem:[%s1449 + $0x78] sm:$0xff]
      %v1466 = vld [vmem:[%s1449 + $0x80] sm:$0xff]
      %v1467 = vld [vmem:[%s1449 + $0x88] sm:$0xff]
      %v1468 = vld [vmem:[%s1449 + $0x90] sm:$0xff]
      %v1469 = vld [vmem:[%s1449 + $0x98] sm:$0xff]
      %v1470 = vld [vmem:[%s1449 + $0xa0] sm:$0xff]
      %v1471 = vld [vmem:[%s1449 + $0xa8] sm:$0xff]
      %v1472 = vld [vmem:[%s1449 + $0xb0] sm:$0xff]
      %v1473 = vld [vmem:[%s1449 + $0xb8] sm:$0xff]
      %v1474 = vld [vmem:[%s1449 + $0xc0] sm:$0xff]
      %v1475 = vld [vmem:[%s1449 + $0xc8] sm:$0xff]
      %v1476 = vld [vmem:[%s1449 + $0xd0] sm:$0xff]
      %v1477 = vld [vmem:[%s1449 + $0xd8] sm:$0xff]
      %v1478 = vld [vmem:[%s1449 + $0xe0] sm:$0xff]
      %v1479 = vld [vmem:[%s1449 + $0xe8] sm:$0xff]
      %v1480 = vld [vmem:[%s1449 + $0xf0] sm:$0xff]
      %v1481 = vld [vmem:[%s1449 + $0xf8] sm:$0xff]
      %vm1486 = vcmask 1045504
      %v1487 = vrot.slane %v1445, 2
      %v1488 = vrot.slane %v1447, 2
      %v1489 = vsel %vm1486, %v1487, %v1488
      %v1490 = vrot.slane %v1446, 2
      %v1491 = vrot.slane %v1448, 2
      %v1492 = vsel %vm1486, %v1490, %v1491
      %v1527 = vunpack.c.l.b16 %v1450
      %v1528 = vunpack.c.h.b16 %v1450
      %v1529 = vunpack.c.l.b16 %v1451
      %v1530 = vunpack.c.h.b16 %v1451
      %v1531 = vunpack.c.l.b16 %v1452
      %v1532 = vunpack.c.h.b16 %v1452
      %v1533 = vunpack.c.l.b16 %v1453
      %v1534 = vunpack.c.h.b16 %v1453
      %v1535 = vunpack.c.l.b16 %v1454
      %v1536 = vunpack.c.h.b16 %v1454
      %v1537 = vunpack.c.l.b16 %v1455
      %v1538 = vunpack.c.h.b16 %v1455
      %v1539 = vunpack.c.l.b16 %v1456
      %v1540 = vunpack.c.h.b16 %v1456
      %v1541 = vunpack.c.l.b16 %v1457
      %v1542 = vunpack.c.h.b16 %v1457
      %v1543 = vunpack.c.l.b16 %v1458
      %v1544 = vunpack.c.h.b16 %v1458
      %v1545 = vunpack.c.l.b16 %v1459
      %v1546 = vunpack.c.h.b16 %v1459
      %v1547 = vunpack.c.l.b16 %v1460
      %v1548 = vunpack.c.h.b16 %v1460
      %v1549 = vunpack.c.l.b16 %v1461
      %v1550 = vunpack.c.h.b16 %v1461
      %v1551 = vunpack.c.l.b16 %v1462
      %v1552 = vunpack.c.h.b16 %v1462
      %v1553 = vunpack.c.l.b16 %v1463
      %v1554 = vunpack.c.h.b16 %v1463
      %v1555 = vunpack.c.l.b16 %v1464
      %v1556 = vunpack.c.h.b16 %v1464
      %v1557 = vunpack.c.l.b16 %v1465
      %v1558 = vunpack.c.h.b16 %v1465
      %v1559 = vunpack.c.l.b16 %v1466
      %v1560 = vunpack.c.h.b16 %v1466
      %v1561 = vunpack.c.l.b16 %v1467
      %v1562 = vunpack.c.h.b16 %v1467
      %v1563 = vunpack.c.l.b16 %v1468
      %v1564 = vunpack.c.h.b16 %v1468
      %v1565 = vunpack.c.l.b16 %v1469
      %v1566 = vunpack.c.h.b16 %v1469
      %v1567 = vunpack.c.l.b16 %v1470
      %v1568 = vunpack.c.h.b16 %v1470
      %v1569 = vunpack.c.l.b16 %v1471
      %v1570 = vunpack.c.h.b16 %v1471
      %v1571 = vunpack.c.l.b16 %v1472
      %v1572 = vunpack.c.h.b16 %v1472
      %v1573 = vunpack.c.l.b16 %v1473
      %v1574 = vunpack.c.h.b16 %v1473
      %v1575 = vunpack.c.l.b16 %v1474
      %v1576 = vunpack.c.h.b16 %v1474
      %v1577 = vunpack.c.l.b16 %v1475
      %v1578 = vunpack.c.h.b16 %v1475
      %v1579 = vunpack.c.l.b16 %v1476
      %v1580 = vunpack.c.h.b16 %v1476
      %v1581 = vunpack.c.l.b16 %v1477
      %v1582 = vunpack.c.h.b16 %v1477
      %v1583 = vunpack.c.l.b16 %v1478
      %v1584 = vunpack.c.h.b16 %v1478
      %v1585 = vunpack.c.l.b16 %v1479
      %v1586 = vunpack.c.h.b16 %v1479
      %v1587 = vunpack.c.l.b16 %v1480
      %v1588 = vunpack.c.h.b16 %v1480
      %v1589 = vunpack.c.l.b16 %v1481
      %v1590 = vunpack.c.h.b16 %v1481
      %v1591 = vpack.c.b16 %v1529, %v1527
      %v1592 = vpack.c.b16 %v1530, %v1528
      %v1593 = vpack.c.b16 %v1533, %v1531
      %v1594 = vpack.c.b16 %v1534, %v1532
      %v1595 = vpack.c.b16 %v1537, %v1535
      %v1596 = vpack.c.b16 %v1538, %v1536
      %v1597 = vpack.c.b16 %v1541, %v1539
      %v1598 = vpack.c.b16 %v1542, %v1540
      %v1599 = vpack.c.b16 %v1545, %v1543
      %v1600 = vpack.c.b16 %v1546, %v1544
      %v1601 = vpack.c.b16 %v1549, %v1547
      %v1602 = vpack.c.b16 %v1550, %v1548
      %v1603 = vpack.c.b16 %v1553, %v1551
      %v1604 = vpack.c.b16 %v1554, %v1552
      %v1605 = vpack.c.b16 %v1557, %v1555
      %v1606 = vpack.c.b16 %v1558, %v1556
      %v1607 = vpack.c.b16 %v1561, %v1559
      %v1608 = vpack.c.b16 %v1562, %v1560
      %v1609 = vpack.c.b16 %v1565, %v1563
      %v1610 = vpack.c.b16 %v1566, %v1564
      %v1611 = vpack.c.b16 %v1569, %v1567
      %v1612 = vpack.c.b16 %v1570, %v1568
      %v1613 = vpack.c.b16 %v1573, %v1571
      %v1614 = vpack.c.b16 %v1574, %v1572
      %v1615 = vpack.c.b16 %v1577, %v1575
      %v1616 = vpack.c.b16 %v1578, %v1576
      %v1617 = vpack.c.b16 %v1581, %v1579
      %v1618 = vpack.c.b16 %v1582, %v1580
      %v1619 = vpack.c.b16 %v1585, %v1583
      %v1620 = vpack.c.b16 %v1586, %v1584
      %v1621 = vpack.c.b16 %v1589, %v1587
      %v1622 = vpack.c.b16 %v1590, %v1588
      %1655 = vmatprep.subr.bf16.mxu0 %v1592
      %1656 = vmatpush1.bf16.msra.mxu0 %v1591
      %1657 = vmatprep.subr.bf16.mxu0 %v1594
      %1658 = vmatpush1.bf16.msra.mxu0 %v1593
      %1659 = vmatprep.subr.bf16.mxu0 %v1596
      %1660 = vmatpush1.bf16.msra.mxu0 %v1595
      %1661 = vmatprep.subr.bf16.mxu0 %v1598
      %1662 = vmatpush1.bf16.msra.mxu0 %v1597
      %1663 = vmatprep.subr.bf16.mxu0 %v1600
      %1664 = vmatpush1.bf16.msra.mxu0 %v1599
      %1665 = vmatprep.subr.bf16.mxu0 %v1602
      %1666 = vmatpush1.bf16.msra.mxu0 %v1601
      %1667 = vmatprep.subr.bf16.mxu0 %v1604
      %1668 = vmatpush1.bf16.msra.mxu0 %v1603
      %1669 = vmatprep.subr.bf16.mxu0 %v1606
      %1670 = vmatpush1.bf16.msra.mxu0 %v1605
      %1671 = vmatprep.subr.bf16.mxu0 %v1608
      %1672 = vmatpush1.bf16.msra.mxu0 %v1607
      %1673 = vmatprep.subr.bf16.mxu0 %v1610
      %1674 = vmatpush1.bf16.msra.mxu0 %v1609
      %1675 = vmatprep.subr.bf16.mxu0 %v1612
      %1676 = vmatpush1.bf16.msra.mxu0 %v1611
      %1677 = vmatprep.subr.bf16.mxu0 %v1614
      %1678 = vmatpush1.bf16.msra.mxu0 %v1613
      %1679 = vmatprep.subr.bf16.mxu0 %v1616
      %1680 = vmatpush1.bf16.msra.mxu0 %v1615
      %1681 = vmatprep.subr.bf16.mxu0 %v1618
      %1682 = vmatpush1.bf16.msra.mxu0 %v1617
      %1683 = vmatprep.subr.bf16.mxu0 %v1620
      %1684 = vmatpush1.bf16.msra.mxu0 %v1619
      %1685 = vmatprep.subr.bf16.mxu0 %v1622
      %1686 = vmatpush1.bf16.msra.mxu0 %v1621
      %1687 = vmatprep.mubr.bf16.mxu0 %v1492
      %1688 = vmatmul.mubr.bf16.gmra.mrb[0].mxu0 %v1489
      %v1689 = vpop.f32.mrb[0].mxu0
      %v1690 = vadd.f32 0.0, %v1689
      %v1691 = vpop.f32.mrb[0].mxu0
      %v1692 = vadd.f32 0.0, %v1691
      %v1693 = vpop.f32.mrb[0].mxu0
      %v1694 = vadd.f32 0.0, %v1693
      %v1695 = vpop.f32.mrb[0].mxu0
      %v1696 = vadd.f32 0.0, %v1695
      %1697 = vdwg.mxu0
      %v1698 = vld [vmem:[#allocation3] sm:$0xff]
      %v1699 = vld [vmem:[#allocation3 + $0x8] sm:$0xff]
      %v1700 = vld [vmem:[#allocation3 + $0x10] sm:$0xff]
      %v1701 = vld [vmem:[#allocation3 + $0x18] sm:$0xff]
      %v1702 = vadd.f32 %v1698, %v1690
      %v1703 = vadd.f32 %v1699, %v1692
      %v1704 = vadd.f32 %v1700, %v1694
      %v1705 = vadd.f32 %v1701, %v1696
      %1706 = vst [vmem:[#allocation3] sm:$0xff] %v1702
      %1707 = vst [vmem:[#allocation3 + $0x8] sm:$0xff] %v1703
      %1708 = vst [vmem:[#allocation3 + $0x10] sm:$0xff] %v1704
      %1709 = vst [vmem:[#allocation3 + $0x18] sm:$0xff] %v1705
      %v1710 = vld [vmem:[#allocation2] sm:$0xfc]
      %v1711 = vld [vmem:[#allocation2 + $0x8] sm:$0xfc]
      %v1712 = vld [vmem:[#allocation2 + $0x10] sm:$0x7]
      %v1713 = vld [vmem:[#allocation2 + $0x18] sm:$0x7]
      %s1714 = scalar_lea.vmem %s322, 1280
      %v1715 = vld [vmem:[%s1714] sm:$0xff]
      %v1716 = vld [vmem:[%s1714 + $0x8] sm:$0xff]
      %v1717 = vld [vmem:[%s1714 + $0x10] sm:$0xff]
      %v1718 = vld [vmem:[%s1714 + $0x18] sm:$0xff]
      %v1719 = vld [vmem:[%s1714 + $0x20] sm:$0xff]
      %v1720 = vld [vmem:[%s1714 + $0x28] sm:$0xff]
      %v1721 = vld [vmem:[%s1714 + $0x30] sm:$0xff]
      %v1722 = vld [vmem:[%s1714 + $0x38] sm:$0xff]
      %v1723 = vld [vmem:[%s1714 + $0x40] sm:$0xff]
      %v1724 = vld [vmem:[%s1714 + $0x48] sm:$0xff]
      %v1725 = vld [vmem:[%s1714 + $0x50] sm:$0xff]
      %v1726 = vld [vmem:[%s1714 + $0x58] sm:$0xff]
      %v1727 = vld [vmem:[%s1714 + $0x60] sm:$0xff]
      %v1728 = vld [vmem:[%s1714 + $0x68] sm:$0xff]
      %v1729 = vld [vmem:[%s1714 + $0x70] sm:$0xff]
      %v1730 = vld [vmem:[%s1714 + $0x78] sm:$0xff]
      %v1731 = vld [vmem:[%s1714 + $0x80] sm:$0xff]
      %v1732 = vld [vmem:[%s1714 + $0x88] sm:$0xff]
      %v1733 = vld [vmem:[%s1714 + $0x90] sm:$0xff]
      %v1734 = vld [vmem:[%s1714 + $0x98] sm:$0xff]
      %v1735 = vld [vmem:[%s1714 + $0xa0] sm:$0xff]
      %v1736 = vld [vmem:[%s1714 + $0xa8] sm:$0xff]
      %v1737 = vld [vmem:[%s1714 + $0xb0] sm:$0xff]
      %v1738 = vld [vmem:[%s1714 + $0xb8] sm:$0xff]
      %v1739 = vld [vmem:[%s1714 + $0xc0] sm:$0xff]
      %v1740 = vld [vmem:[%s1714 + $0xc8] sm:$0xff]
      %v1741 = vld [vmem:[%s1714 + $0xd0] sm:$0xff]
      %v1742 = vld [vmem:[%s1714 + $0xd8] sm:$0xff]
      %v1743 = vld [vmem:[%s1714 + $0xe0] sm:$0xff]
      %v1744 = vld [vmem:[%s1714 + $0xe8] sm:$0xff]
      %v1745 = vld [vmem:[%s1714 + $0xf0] sm:$0xff]
      %v1746 = vld [vmem:[%s1714 + $0xf8] sm:$0xff]
      %vm1747 = vsmask.f32 5376
      %v1749 = vshrl.u32 %v1710, 16
      %v1751 = vrot.slane %v1749, 2
      %v1752 = vshll.u32 %v1710, 16
      %v1754 = vrot.slane %v1752, 3
      %v1755 = vor.u32 %v1751, %v1754
      %v1757 = vshrl.u32 %v1712, 16
      %v1759 = vrot.slane %v1757, 2
      %v1760 = vshll.u32 %v1712, 16
      %v1762 = vrot.slane %v1760, 3
      %v1763 = vor.u32 %v1759, %v1762
      %v1764 = vsel %vm1747, %v1755, %v1763
      %v1766 = vshrl.u32 %v1711, 16
      %v1768 = vrot.slane %v1766, 2
      %v1769 = vshll.u32 %v1711, 16
      %v1771 = vrot.slane %v1769, 3
      %v1772 = vor.u32 %v1768, %v1771
      %v1774 = vshrl.u32 %v1713, 16
      %v1776 = vrot.slane %v1774, 2
      %v1777 = vshll.u32 %v1713, 16
      %v1779 = vrot.slane %v1777, 3
      %v1780 = vor.u32 %v1776, %v1779
      %v1781 = vsel %vm1747, %v1772, %v1780
      %v1816 = vunpack.c.l.b16 %v1715
      %v1817 = vunpack.c.h.b16 %v1715
      %v1818 = vunpack.c.l.b16 %v1716
      %v1819 = vunpack.c.h.b16 %v1716
      %v1820 = vunpack.c.l.b16 %v1717
      %v1821 = vunpack.c.h.b16 %v1717
      %v1822 = vunpack.c.l.b16 %v1718
      %v1823 = vunpack.c.h.b16 %v1718
      %v1824 = vunpack.c.l.b16 %v1719
      %v1825 = vunpack.c.h.b16 %v1719
      %v1826 = vunpack.c.l.b16 %v1720
      %v1827 = vunpack.c.h.b16 %v1720
      %v1828 = vunpack.c.l.b16 %v1721
      %v1829 = vunpack.c.h.b16 %v1721
      %v1830 = vunpack.c.l.b16 %v1722
      %v1831 = vunpack.c.h.b16 %v1722
      %v1832 = vunpack.c.l.b16 %v1723
      %v1833 = vunpack.c.h.b16 %v1723
      %v1834 = vunpack.c.l.b16 %v1724
      %v1835 = vunpack.c.h.b16 %v1724
      %v1836 = vunpack.c.l.b16 %v1725
      %v1837 = vunpack.c.h.b16 %v1725
      %v1838 = vunpack.c.l.b16 %v1726
      %v1839 = vunpack.c.h.b16 %v1726
      %v1840 = vunpack.c.l.b16 %v1727
      %v1841 = vunpack.c.h.b16 %v1727
      %v1842 = vunpack.c.l.b16 %v1728
      %v1843 = vunpack.c.h.b16 %v1728
      %v1844 = vunpack.c.l.b16 %v1729
      %v1845 = vunpack.c.h.b16 %v1729
      %v1846 = vunpack.c.l.b16 %v1730
      %v1847 = vunpack.c.h.b16 %v1730
      %v1848 = vunpack.c.l.b16 %v1731
      %v1849 = vunpack.c.h.b16 %v1731
      %v1850 = vunpack.c.l.b16 %v1732
      %v1851 = vunpack.c.h.b16 %v1732
      %v1852 = vunpack.c.l.b16 %v1733
      %v1853 = vunpack.c.h.b16 %v1733
      %v1854 = vunpack.c.l.b16 %v1734
      %v1855 = vunpack.c.h.b16 %v1734
      %v1856 = vunpack.c.l.b16 %v1735
      %v1857 = vunpack.c.h.b16 %v1735
      %v1858 = vunpack.c.l.b16 %v1736
      %v1859 = vunpack.c.h.b16 %v1736
      %v1860 = vunpack.c.l.b16 %v1737
      %v1861 = vunpack.c.h.b16 %v1737
      %v1862 = vunpack.c.l.b16 %v1738
      %v1863 = vunpack.c.h.b16 %v1738
      %v1864 = vunpack.c.l.b16 %v1739
      %v1865 = vunpack.c.h.b16 %v1739
      %v1866 = vunpack.c.l.b16 %v1740
      %v1867 = vunpack.c.h.b16 %v1740
      %v1868 = vunpack.c.l.b16 %v1741
      %v1869 = vunpack.c.h.b16 %v1741
      %v1870 = vunpack.c.l.b16 %v1742
      %v1871 = vunpack.c.h.b16 %v1742
      %v1872 = vunpack.c.l.b16 %v1743
      %v1873 = vunpack.c.h.b16 %v1743
      %v1874 = vunpack.c.l.b16 %v1744
      %v1875 = vunpack.c.h.b16 %v1744
      %v1876 = vunpack.c.l.b16 %v1745
      %v1877 = vunpack.c.h.b16 %v1745
      %v1878 = vunpack.c.l.b16 %v1746
      %v1879 = vunpack.c.h.b16 %v1746
      %v1880 = vpack.c.b16 %v1818, %v1816
      %v1881 = vpack.c.b16 %v1819, %v1817
      %v1882 = vpack.c.b16 %v1822, %v1820
      %v1883 = vpack.c.b16 %v1823, %v1821
      %v1884 = vpack.c.b16 %v1826, %v1824
      %v1885 = vpack.c.b16 %v1827, %v1825
      %v1886 = vpack.c.b16 %v1830, %v1828
      %v1887 = vpack.c.b16 %v1831, %v1829
      %v1888 = vpack.c.b16 %v1834, %v1832
      %v1889 = vpack.c.b16 %v1835, %v1833
      %v1890 = vpack.c.b16 %v1838, %v1836
      %v1891 = vpack.c.b16 %v1839, %v1837
      %v1892 = vpack.c.b16 %v1842, %v1840
      %v1893 = vpack.c.b16 %v1843, %v1841
      %v1894 = vpack.c.b16 %v1846, %v1844
      %v1895 = vpack.c.b16 %v1847, %v1845
      %v1896 = vpack.c.b16 %v1850, %v1848
      %v1897 = vpack.c.b16 %v1851, %v1849
      %v1898 = vpack.c.b16 %v1854, %v1852
      %v1899 = vpack.c.b16 %v1855, %v1853
      %v1900 = vpack.c.b16 %v1858, %v1856
      %v1901 = vpack.c.b16 %v1859, %v1857
      %v1902 = vpack.c.b16 %v1862, %v1860
      %v1903 = vpack.c.b16 %v1863, %v1861
      %v1904 = vpack.c.b16 %v1866, %v1864
      %v1905 = vpack.c.b16 %v1867, %v1865
      %v1906 = vpack.c.b16 %v1870, %v1868
      %v1907 = vpack.c.b16 %v1871, %v1869
      %v1908 = vpack.c.b16 %v1874, %v1872
      %v1909 = vpack.c.b16 %v1875, %v1873
      %v1910 = vpack.c.b16 %v1878, %v1876
      %v1911 = vpack.c.b16 %v1879, %v1877
      %1944 = vmatprep.subr.bf16.mxu0 %v1881
      %1945 = vmatpush1.bf16.msra.mxu0 %v1880
      %1946 = vmatprep.subr.bf16.mxu0 %v1883
      %1947 = vmatpush1.bf16.msra.mxu0 %v1882
      %1948 = vmatprep.subr.bf16.mxu0 %v1885
      %1949 = vmatpush1.bf16.msra.mxu0 %v1884
      %1950 = vmatprep.subr.bf16.mxu0 %v1887
      %1951 = vmatpush1.bf16.msra.mxu0 %v1886
      %1952 = vmatprep.subr.bf16.mxu0 %v1889
      %1953 = vmatpush1.bf16.msra.mxu0 %v1888
      %1954 = vmatprep.subr.bf16.mxu0 %v1891
      %1955 = vmatpush1.bf16.msra.mxu0 %v1890
      %1956 = vmatprep.subr.bf16.mxu0 %v1893
      %1957 = vmatpush1.bf16.msra.mxu0 %v1892
      %1958 = vmatprep.subr.bf16.mxu0 %v1895
      %1959 = vmatpush1.bf16.msra.mxu0 %v1894
      %1960 = vmatprep.subr.bf16.mxu0 %v1897
      %1961 = vmatpush1.bf16.msra.mxu0 %v1896
      %1962 = vmatprep.subr.bf16.mxu0 %v1899
      %1963 = vmatpush1.bf16.msra.mxu0 %v1898
      %1964 = vmatprep.subr.bf16.mxu0 %v1901
      %1965 = vmatpush1.bf16.msra.mxu0 %v1900
      %1966 = vmatprep.subr.bf16.mxu0 %v1903
      %1967 = vmatpush1.bf16.msra.mxu0 %v1902
      %1968 = vmatprep.subr.bf16.mxu0 %v1905
      %1969 = vmatpush1.bf16.msra.mxu0 %v1904
      %1970 = vmatprep.subr.bf16.mxu0 %v1907
      %1971 = vmatpush1.bf16.msra.mxu0 %v1906
      %1972 = vmatprep.subr.bf16.mxu0 %v1909
      %1973 = vmatpush1.bf16.msra.mxu0 %v1908
      %1974 = vmatprep.subr.bf16.mxu0 %v1911
      %1975 = vmatpush1.bf16.msra.mxu0 %v1910
      %1976 = vmatprep.mubr.bf16.mxu0 %v1781
      %1977 = vmatmul.mubr.bf16.gmra.mrb[0].mxu0 %v1764
      %v1978 = vpop.f32.mrb[0].mxu0
      %v1979 = vadd.f32 0.0, %v1978
      %v1980 = vpop.f32.mrb[0].mxu0
      %v1981 = vadd.f32 0.0, %v1980
      %v1982 = vpop.f32.mrb[0].mxu0
      %v1983 = vadd.f32 0.0, %v1982
      %v1984 = vpop.f32.mrb[0].mxu0
      %v1985 = vadd.f32 0.0, %v1984
      %1986 = vdwg.mxu0
      %v1987 = vld [vmem:[#allocation3] sm:$0xff]
      %v1988 = vld [vmem:[#allocation3 + $0x8] sm:$0xff]
      %v1989 = vld [vmem:[#allocation3 + $0x10] sm:$0xff]
      %v1990 = vld [vmem:[#allocation3 + $0x18] sm:$0xff]
      %v1991 = vadd.f32 %v1987, %v1979
      %v1992 = vadd.f32 %v1988, %v1981
      %v1993 = vadd.f32 %v1989, %v1983
      %v1994 = vadd.f32 %v1990, %v1985
      %1995 = vst [vmem:[#allocation3] sm:$0xff] %v1991
      %1996 = vst [vmem:[#allocation3 + $0x8] sm:$0xff] %v1992
      %1997 = vst [vmem:[#allocation3 + $0x10] sm:$0xff] %v1993
      %1998 = vst [vmem:[#allocation3 + $0x18] sm:$0xff] %v1994
      %v1999 = vld [vmem:[#allocation2] sm:$0xf8]
      %v2000 = vld [vmem:[#allocation2 + $0x8] sm:$0xf8]
      %v2001 = vld [vmem:[#allocation2 + $0x10] sm:$0x7]
      %v2002 = vld [vmem:[#allocation2 + $0x18] sm:$0x7]
      %s2003 = scalar_lea.vmem %s322, 1536
      %v2004 = vld [vmem:[%s2003] sm:$0xff]
      %v2005 = vld [vmem:[%s2003 + $0x8] sm:$0xff]
      %v2006 = vld [vmem:[%s2003 + $0x10] sm:$0xff]
      %v2007 = vld [vmem:[%s2003 + $0x18] sm:$0xff]
      %v2008 = vld [vmem:[%s2003 + $0x20] sm:$0xff]
      %v2009 = vld [vmem:[%s2003 + $0x28] sm:$0xff]
      %v2010 = vld [vmem:[%s2003 + $0x30] sm:$0xff]
      %v2011 = vld [vmem:[%s2003 + $0x38] sm:$0xff]
      %v2012 = vld [vmem:[%s2003 + $0x40] sm:$0xff]
      %v2013 = vld [vmem:[%s2003 + $0x48] sm:$0xff]
      %v2014 = vld [vmem:[%s2003 + $0x50] sm:$0xff]
      %v2015 = vld [vmem:[%s2003 + $0x58] sm:$0xff]
      %v2016 = vld [vmem:[%s2003 + $0x60] sm:$0xff]
      %v2017 = vld [vmem:[%s2003 + $0x68] sm:$0xff]
      %v2018 = vld [vmem:[%s2003 + $0x70] sm:$0xff]
      %v2019 = vld [vmem:[%s2003 + $0x78] sm:$0xff]
      %v2020 = vld [vmem:[%s2003 + $0x80] sm:$0xff]
      %v2021 = vld [vmem:[%s2003 + $0x88] sm:$0xff]
      %v2022 = vld [vmem:[%s2003 + $0x90] sm:$0xff]
      %v2023 = vld [vmem:[%s2003 + $0x98] sm:$0xff]
      %v2024 = vld [vmem:[%s2003 + $0xa0] sm:$0xff]
      %v2025 = vld [vmem:[%s2003 + $0xa8] sm:$0xff]
      %v2026 = vld [vmem:[%s2003 + $0xb0] sm:$0xff]
      %v2027 = vld [vmem:[%s2003 + $0xb8] sm:$0xff]
      %v2028 = vld [vmem:[%s2003 + $0xc0] sm:$0xff]
      %v2029 = vld [vmem:[%s2003 + $0xc8] sm:$0xff]
      %v2030 = vld [vmem:[%s2003 + $0xd0] sm:$0xff]
      %v2031 = vld [vmem:[%s2003 + $0xd8] sm:$0xff]
      %v2032 = vld [vmem:[%s2003 + $0xe0] sm:$0xff]
      %v2033 = vld [vmem:[%s2003 + $0xe8] sm:$0xff]
      %v2034 = vld [vmem:[%s2003 + $0xf0] sm:$0xff]
      %v2035 = vld [vmem:[%s2003 + $0xf8] sm:$0xff]
      %vm2040 = vcmask 1044480
      %v2041 = vrot.slane %v1999, 3
      %v2042 = vrot.slane %v2001, 3
      %v2043 = vsel %vm2040, %v2041, %v2042
      %v2044 = vrot.slane %v2000, 3
      %v2045 = vrot.slane %v2002, 3
      %v2046 = vsel %vm2040, %v2044, %v2045
      %v2081 = vunpack.c.l.b16 %v2004
      %v2082 = vunpack.c.h.b16 %v2004
      %v2083 = vunpack.c.l.b16 %v2005
      %v2084 = vunpack.c.h.b16 %v2005
      %v2085 = vunpack.c.l.b16 %v2006
      %v2086 = vunpack.c.h.b16 %v2006
      %v2087 = vunpack.c.l.b16 %v2007
      %v2088 = vunpack.c.h.b16 %v2007
      %v2089 = vunpack.c.l.b16 %v2008
      %v2090 = vunpack.c.h.b16 %v2008
      %v2091 = vunpack.c.l.b16 %v2009
      %v2092 = vunpack.c.h.b16 %v2009
      %v2093 = vunpack.c.l.b16 %v2010
      %v2094 = vunpack.c.h.b16 %v2010
      %v2095 = vunpack.c.l.b16 %v2011
      %v2096 = vunpack.c.h.b16 %v2011
      %v2097 = vunpack.c.l.b16 %v2012
      %v2098 = vunpack.c.h.b16 %v2012
      %v2099 = vunpack.c.l.b16 %v2013
      %v2100 = vunpack.c.h.b16 %v2013
      %v2101 = vunpack.c.l.b16 %v2014
      %v2102 = vunpack.c.h.b16 %v2014
      %v2103 = vunpack.c.l.b16 %v2015
      %v2104 = vunpack.c.h.b16 %v2015
      %v2105 = vunpack.c.l.b16 %v2016
      %v2106 = vunpack.c.h.b16 %v2016
      %v2107 = vunpack.c.l.b16 %v2017
      %v2108 = vunpack.c.h.b16 %v2017
      %v2109 = vunpack.c.l.b16 %v2018
      %v2110 = vunpack.c.h.b16 %v2018
      %v2111 = vunpack.c.l.b16 %v2019
      %v2112 = vunpack.c.h.b16 %v2019
      %v2113 = vunpack.c.l.b16 %v2020
      %v2114 = vunpack.c.h.b16 %v2020
      %v2115 = vunpack.c.l.b16 %v2021
      %v2116 = vunpack.c.h.b16 %v2021
      %v2117 = vunpack.c.l.b16 %v2022
      %v2118 = vunpack.c.h.b16 %v2022
      %v2119 = vunpack.c.l.b16 %v2023
      %v2120 = vunpack.c.h.b16 %v2023
      %v2121 = vunpack.c.l.b16 %v2024
      %v2122 = vunpack.c.h.b16 %v2024
      %v2123 = vunpack.c.l.b16 %v2025
      %v2124 = vunpack.c.h.b16 %v2025
      %v2125 = vunpack.c.l.b16 %v2026
      %v2126 = vunpack.c.h.b16 %v2026
      %v2127 = vunpack.c.l.b16 %v2027
      %v2128 = vunpack.c.h.b16 %v2027
      %v2129 = vunpack.c.l.b16 %v2028
      %v2130 = vunpack.c.h.b16 %v2028
      %v2131 = vunpack.c.l.b16 %v2029
      %v2132 = vunpack.c.h.b16 %v2029
      %v2133 = vunpack.c.l.b16 %v2030
      %v2134 = vunpack.c.h.b16 %v2030
      %v2135 = vunpack.c.l.b16 %v2031
      %v2136 = vunpack.c.h.b16 %v2031
      %v2137 = vunpack.c.l.b16 %v2032
      %v2138 = vunpack.c.h.b16 %v2032
      %v2139 = vunpack.c.l.b16 %v2033
      %v2140 = vunpack.c.h.b16 %v2033
      %v2141 = vunpack.c.l.b16 %v2034
      %v2142 = vunpack.c.h.b16 %v2034
      %v2143 = vunpack.c.l.b16 %v2035
      %v2144 = vunpack.c.h.b16 %v2035
      %v2145 = vpack.c.b16 %v2083, %v2081
      %v2146 = vpack.c.b16 %v2084, %v2082
      %v2147 = vpack.c.b16 %v2087, %v2085
      %v2148 = vpack.c.b16 %v2088, %v2086
      %v2149 = vpack.c.b16 %v2091, %v2089
      %v2150 = vpack.c.b16 %v2092, %v2090
      %v2151 = vpack.c.b16 %v2095, %v2093
      %v2152 = vpack.c.b16 %v2096, %v2094
      %v2153 = vpack.c.b16 %v2099, %v2097
      %v2154 = vpack.c.b16 %v2100, %v2098
      %v2155 = vpack.c.b16 %v2103, %v2101
      %v2156 = vpack.c.b16 %v2104, %v2102
      %v2157 = vpack.c.b16 %v2107, %v2105
      %v2158 = vpack.c.b16 %v2108, %v2106
      %v2159 = vpack.c.b16 %v2111, %v2109
      %v2160 = vpack.c.b16 %v2112, %v2110
      %v2161 = vpack.c.b16 %v2115, %v2113
      %v2162 = vpack.c.b16 %v2116, %v2114
      %v2163 = vpack.c.b16 %v2119, %v2117
      %v2164 = vpack.c.b16 %v2120, %v2118
      %v2165 = vpack.c.b16 %v2123, %v2121
      %v2166 = vpack.c.b16 %v2124, %v2122
      %v2167 = vpack.c.b16 %v2127, %v2125
      %v2168 = vpack.c.b16 %v2128, %v2126
      %v2169 = vpack.c.b16 %v2131, %v2129
      %v2170 = vpack.c.b16 %v2132, %v2130
      %v2171 = vpack.c.b16 %v2135, %v2133
      %v2172 = vpack.c.b16 %v2136, %v2134
      %v2173 = vpack.c.b16 %v2139, %v2137
      %v2174 = vpack.c.b16 %v2140, %v2138
      %v2175 = vpack.c.b16 %v2143, %v2141
      %v2176 = vpack.c.b16 %v2144, %v2142
      %2209 = vmatprep.subr.bf16.mxu0 %v2146
      %2210 = vmatpush1.bf16.msra.mxu0 %v2145
      %2211 = vmatprep.subr.bf16.mxu0 %v2148
      %2212 = vmatpush1.bf16.msra.mxu0 %v2147
      %2213 = vmatprep.subr.bf16.mxu0 %v2150
      %2214 = vmatpush1.bf16.msra.mxu0 %v2149
      %2215 = vmatprep.subr.bf16.mxu0 %v2152
      %2216 = vmatpush1.bf16.msra.mxu0 %v2151
      %2217 = vmatprep.subr.bf16.mxu0 %v2154
      %2218 = vmatpush1.bf16.msra.mxu0 %v2153
      %2219 = vmatprep.subr.bf16.mxu0 %v2156
      %2220 = vmatpush1.bf16.msra.mxu0 %v2155
      %2221 = vmatprep.subr.bf16.mxu0 %v2158
      %2222 = vmatpush1.bf16.msra.mxu0 %v2157
      %2223 = vmatprep.subr.bf16.mxu0 %v2160
      %2224 = vmatpush1.bf16.msra.mxu0 %v2159
      %2225 = vmatprep.subr.bf16.mxu0 %v2162
      %2226 = vmatpush1.bf16.msra.mxu0 %v2161
      %2227 = vmatprep.subr.bf16.mxu0 %v2164
      %2228 = vmatpush1.bf16.msra.mxu0 %v2163
      %2229 = vmatprep.subr.bf16.mxu0 %v2166
      %2230 = vmatpush1.bf16.msra.mxu0 %v2165
      %2231 = vmatprep.subr.bf16.mxu0 %v2168
      %2232 = vmatpush1.bf16.msra.mxu0 %v2167
      %2233 = vmatprep.subr.bf16.mxu0 %v2170
      %2234 = vmatpush1.bf16.msra.mxu0 %v2169
      %2235 = vmatprep.subr.bf16.mxu0 %v2172
      %2236 = vmatpush1.bf16.msra.mxu0 %v2171
      %2237 = vmatprep.subr.bf16.mxu0 %v2174
      %2238 = vmatpush1.bf16.msra.mxu0 %v2173
      %2239 = vmatprep.subr.bf16.mxu0 %v2176
      %2240 = vmatpush1.bf16.msra.mxu0 %v2175
      %2241 = vmatprep.mubr.bf16.mxu0 %v2046
      %2242 = vmatmul.mubr.bf16.gmra.mrb[0].mxu0 %v2043
      %v2243 = vpop.f32.mrb[0].mxu0
      %v2244 = vadd.f32 0.0, %v2243
      %v2245 = vpop.f32.mrb[0].mxu0
      %v2246 = vadd.f32 0.0, %v2245
      %v2247 = vpop.f32.mrb[0].mxu0
      %v2248 = vadd.f32 0.0, %v2247
      %v2249 = vpop.f32.mrb[0].mxu0
      %v2250 = vadd.f32 0.0, %v2249
      %2251 = vdwg.mxu0
      %v2252 = vld [vmem:[#allocation3] sm:$0xff]
      %v2253 = vld [vmem:[#allocation3 + $0x8] sm:$0xff]
      %v2254 = vld [vmem:[#allocation3 + $0x10] sm:$0xff]
      %v2255 = vld [vmem:[#allocation3 + $0x18] sm:$0xff]
      %v2256 = vadd.f32 %v2252, %v2244
      %v2257 = vadd.f32 %v2253, %v2246
      %v2258 = vadd.f32 %v2254, %v2248
      %v2259 = vadd.f32 %v2255, %v2250
      %2260 = vst [vmem:[#allocation3] sm:$0xff] %v2256
      %2261 = vst [vmem:[#allocation3 + $0x8] sm:$0xff] %v2257
      %2262 = vst [vmem:[#allocation3 + $0x10] sm:$0xff] %v2258
      %2263 = vst [vmem:[#allocation3 + $0x18] sm:$0xff] %v2259
      %v2264 = vld [vmem:[#allocation2] sm:$0xf8]
      %v2265 = vld [vmem:[#allocation2 + $0x8] sm:$0xf8]
      %v2266 = vld [vmem:[#allocation2 + $0x10] sm:$0xf]
      %v2267 = vld [vmem:[#allocation2 + $0x18] sm:$0xf]
      %s2268 = scalar_lea.vmem %s322, 1792
      %v2269 = vld [vmem:[%s2268] sm:$0xff]
      %v2270 = vld [vmem:[%s2268 + $0x8] sm:$0xff]
      %v2271 = vld [vmem:[%s2268 + $0x10] sm:$0xff]
      %v2272 = vld [vmem:[%s2268 + $0x18] sm:$0xff]
      %v2273 = vld [vmem:[%s2268 + $0x20] sm:$0xff]
      %v2274 = vld [vmem:[%s2268 + $0x28] sm:$0xff]
      %v2275 = vld [vmem:[%s2268 + $0x30] sm:$0xff]
      %v2276 = vld [vmem:[%s2268 + $0x38] sm:$0xff]
      %v2277 = vld [vmem:[%s2268 + $0x40] sm:$0xff]
      %v2278 = vld [vmem:[%s2268 + $0x48] sm:$0xff]
      %v2279 = vld [vmem:[%s2268 + $0x50] sm:$0xff]
      %v2280 = vld [vmem:[%s2268 + $0x58] sm:$0xff]
      %v2281 = vld [vmem:[%s2268 + $0x60] sm:$0xff]
      %v2282 = vld [vmem:[%s2268 + $0x68] sm:$0xff]
      %v2283 = vld [vmem:[%s2268 + $0x70] sm:$0xff]
      %v2284 = vld [vmem:[%s2268 + $0x78] sm:$0xff]
      %v2285 = vld [vmem:[%s2268 + $0x80] sm:$0xff]
      %v2286 = vld [vmem:[%s2268 + $0x88] sm:$0xff]
      %v2287 = vld [vmem:[%s2268 + $0x90] sm:$0xff]
      %v2288 = vld [vmem:[%s2268 + $0x98] sm:$0xff]
      %v2289 = vld [vmem:[%s2268 + $0xa0] sm:$0xff]
      %v2290 = vld [vmem:[%s2268 + $0xa8] sm:$0xff]
      %v2291 = vld [vmem:[%s2268 + $0xb0] sm:$0xff]
      %v2292 = vld [vmem:[%s2268 + $0xb8] sm:$0xff]
      %v2293 = vld [vmem:[%s2268 + $0xc0] sm:$0xff]
      %v2294 = vld [vmem:[%s2268 + $0xc8] sm:$0xff]
      %v2295 = vld [vmem:[%s2268 + $0xd0] sm:$0xff]
      %v2296 = vld [vmem:[%s2268 + $0xd8] sm:$0xff]
      %v2297 = vld [vmem:[%s2268 + $0xe0] sm:$0xff]
      %v2298 = vld [vmem:[%s2268 + $0xe8] sm:$0xff]
      %v2299 = vld [vmem:[%s2268 + $0xf0] sm:$0xff]
      %v2300 = vld [vmem:[%s2268 + $0xf8] sm:$0xff]
      %vm2301 = vsmask.f32 4352
      %v2303 = vshrl.u32 %v2264, 16
      %v2305 = vrot.slane %v2303, 3
      %v2306 = vshll.u32 %v2264, 16
      %v2308 = vrot.slane %v2306, 4
      %v2309 = vor.u32 %v2305, %v2308
      %v2311 = vshrl.u32 %v2266, 16
      %v2313 = vrot.slane %v2311, 3
      %v2314 = vshll.u32 %v2266, 16
      %v2316 = vrot.slane %v2314, 4
      %v2317 = vor.u32 %v2313, %v2316
      %v2318 = vsel %vm2301, %v2309, %v2317
      %v2320 = vshrl.u32 %v2265, 16
      %v2322 = vrot.slane %v2320, 3
      %v2323 = vshll.u32 %v2265, 16
      %v2325 = vrot.slane %v2323, 4
      %v2326 = vor.u32 %v2322, %v2325
      %v2328 = vshrl.u32 %v2267, 16
      %v2330 = vrot.slane %v2328, 3
      %v2331 = vshll.u32 %v2267, 16
      %v2333 = vrot.slane %v2331, 4
      %v2334 = vor.u32 %v2330, %v2333
      %v2335 = vsel %vm2301, %v2326, %v2334
      %v2370 = vunpack.c.l.b16 %v2269
      %v2371 = vunpack.c.h.b16 %v2269
      %v2372 = vunpack.c.l.b16 %v2270
      %v2373 = vunpack.c.h.b16 %v2270
      %v2374 = vunpack.c.l.b16 %v2271
      %v2375 = vunpack.c.h.b16 %v2271
      %v2376 = vunpack.c.l.b16 %v2272
      %v2377 = vunpack.c.h.b16 %v2272
      %v2378 = vunpack.c.l.b16 %v2273
      %v2379 = vunpack.c.h.b16 %v2273
      %v2380 = vunpack.c.l.b16 %v2274
      %v2381 = vunpack.c.h.b16 %v2274
      %v2382 = vunpack.c.l.b16 %v2275
      %v2383 = vunpack.c.h.b16 %v2275
      %v2384 = vunpack.c.l.b16 %v2276
      %v2385 = vunpack.c.h.b16 %v2276
      %v2386 = vunpack.c.l.b16 %v2277
      %v2387 = vunpack.c.h.b16 %v2277
      %v2388 = vunpack.c.l.b16 %v2278
      %v2389 = vunpack.c.h.b16 %v2278
      %v2390 = vunpack.c.l.b16 %v2279
      %v2391 = vunpack.c.h.b16 %v2279
      %v2392 = vunpack.c.l.b16 %v2280
      %v2393 = vunpack.c.h.b16 %v2280
      %v2394 = vunpack.c.l.b16 %v2281
      %v2395 = vunpack.c.h.b16 %v2281
      %v2396 = vunpack.c.l.b16 %v2282
      %v2397 = vunpack.c.h.b16 %v2282
      %v2398 = vunpack.c.l.b16 %v2283
      %v2399 = vunpack.c.h.b16 %v2283
      %v2400 = vunpack.c.l.b16 %v2284
      %v2401 = vunpack.c.h.b16 %v2284
      %v2402 = vunpack.c.l.b16 %v2285
      %v2403 = vunpack.c.h.b16 %v2285
      %v2404 = vunpack.c.l.b16 %v2286
      %v2405 = vunpack.c.h.b16 %v2286
      %v2406 = vunpack.c.l.b16 %v2287
      %v2407 = vunpack.c.h.b16 %v2287
      %v2408 = vunpack.c.l.b16 %v2288
      %v2409 = vunpack.c.h.b16 %v2288
      %v2410 = vunpack.c.l.b16 %v2289
      %v2411 = vunpack.c.h.b16 %v2289
      %v2412 = vunpack.c.l.b16 %v2290
      %v2413 = vunpack.c.h.b16 %v2290
      %v2414 = vunpack.c.l.b16 %v2291
      %v2415 = vunpack.c.h.b16 %v2291
      %v2416 = vunpack.c.l.b16 %v2292
      %v2417 = vunpack.c.h.b16 %v2292
      %v2418 = vunpack.c.l.b16 %v2293
      %v2419 = vunpack.c.h.b16 %v2293
      %v2420 = vunpack.c.l.b16 %v2294
      %v2421 = vunpack.c.h.b16 %v2294
      %v2422 = vunpack.c.l.b16 %v2295
      %v2423 = vunpack.c.h.b16 %v2295
      %v2424 = vunpack.c.l.b16 %v2296
      %v2425 = vunpack.c.h.b16 %v2296
      %v2426 = vunpack.c.l.b16 %v2297
      %v2427 = vunpack.c.h.b16 %v2297
      %v2428 = vunpack.c.l.b16 %v2298
      %v2429 = vunpack.c.h.b16 %v2298
      %v2430 = vunpack.c.l.b16 %v2299
      %v2431 = vunpack.c.h.b16 %v2299
      %v2432 = vunpack.c.l.b16 %v2300
      %v2433 = vunpack.c.h.b16 %v2300
      %v2434 = vpack.c.b16 %v2372, %v2370
      %v2435 = vpack.c.b16 %v2373, %v2371
      %v2436 = vpack.c.b16 %v2376, %v2374
      %v2437 = vpack.c.b16 %v2377, %v2375
      %v2438 = vpack.c.b16 %v2380, %v2378
      %v2439 = vpack.c.b16 %v2381, %v2379
      %v2440 = vpack.c.b16 %v2384, %v2382
      %v2441 = vpack.c.b16 %v2385, %v2383
      %v2442 = vpack.c.b16 %v2388, %v2386
      %v2443 = vpack.c.b16 %v2389, %v2387
      %v2444 = vpack.c.b16 %v2392, %v2390
      %v2445 = vpack.c.b16 %v2393, %v2391
      %v2446 = vpack.c.b16 %v2396, %v2394
      %v2447 = vpack.c.b16 %v2397, %v2395
      %v2448 = vpack.c.b16 %v2400, %v2398
      %v2449 = vpack.c.b16 %v2401, %v2399
      %v2450 = vpack.c.b16 %v2404, %v2402
      %v2451 = vpack.c.b16 %v2405, %v2403
      %v2452 = vpack.c.b16 %v2408, %v2406
      %v2453 = vpack.c.b16 %v2409, %v2407
      %v2454 = vpack.c.b16 %v2412, %v2410
      %v2455 = vpack.c.b16 %v2413, %v2411
      %v2456 = vpack.c.b16 %v2416, %v2414
      %v2457 = vpack.c.b16 %v2417, %v2415
      %v2458 = vpack.c.b16 %v2420, %v2418
      %v2459 = vpack.c.b16 %v2421, %v2419
      %v2460 = vpack.c.b16 %v2424, %v2422
      %v2461 = vpack.c.b16 %v2425, %v2423
      %v2462 = vpack.c.b16 %v2428, %v2426
      %v2463 = vpack.c.b16 %v2429, %v2427
      %v2464 = vpack.c.b16 %v2432, %v2430
      %v2465 = vpack.c.b16 %v2433, %v2431
      %2498 = vmatprep.subr.bf16.mxu0 %v2435
      %2499 = vmatpush1.bf16.msra.mxu0 %v2434
      %2500 = vmatprep.subr.bf16.mxu0 %v2437
      %2501 = vmatpush1.bf16.msra.mxu0 %v2436
      %2502 = vmatprep.subr.bf16.mxu0 %v2439
      %2503 = vmatpush1.bf16.msra.mxu0 %v2438
      %2504 = vmatprep.subr.bf16.mxu0 %v2441
      %2505 = vmatpush1.bf16.msra.mxu0 %v2440
      %2506 = vmatprep.subr.bf16.mxu0 %v2443
      %2507 = vmatpush1.bf16.msra.mxu0 %v2442
      %2508 = vmatprep.subr.bf16.mxu0 %v2445
      %2509 = vmatpush1.bf16.msra.mxu0 %v2444
      %2510 = vmatprep.subr.bf16.mxu0 %v2447
      %2511 = vmatpush1.bf16.msra.mxu0 %v2446
      %2512 = vmatprep.subr.bf16.mxu0 %v2449
      %2513 = vmatpush1.bf16.msra.mxu0 %v2448
      %2514 = vmatprep.subr.bf16.mxu0 %v2451
      %2515 = vmatpush1.bf16.msra.mxu0 %v2450
      %2516 = vmatprep.subr.bf16.mxu0 %v2453
      %2517 = vmatpush1.bf16.msra.mxu0 %v2452
      %2518 = vmatprep.subr.bf16.mxu0 %v2455
      %2519 = vmatpush1.bf16.msra.mxu0 %v2454
      %2520 = vmatprep.subr.bf16.mxu0 %v2457
      %2521 = vmatpush1.bf16.msra.mxu0 %v2456
      %2522 = vmatprep.subr.bf16.mxu0 %v2459
      %2523 = vmatpush1.bf16.msra.mxu0 %v2458
      %2524 = vmatprep.subr.bf16.mxu0 %v2461
      %2525 = vmatpush1.bf16.msra.mxu0 %v2460
      %2526 = vmatprep.subr.bf16.mxu0 %v2463
      %2527 = vmatpush1.bf16.msra.mxu0 %v2462
      %2528 = vmatprep.subr.bf16.mxu0 %v2465
      %2529 = vmatpush1.bf16.msra.mxu0 %v2464
      %2530 = vmatprep.mubr.bf16.mxu0 %v2335
      %2531 = vmatmul.mubr.bf16.gmra.mrb[0].mxu0 %v2318
      %v2532 = vpop.f32.mrb[0].mxu0
      %v2533 = vadd.f32 0.0, %v2532
      %v2534 = vpop.f32.mrb[0].mxu0
      %v2535 = vadd.f32 0.0, %v2534
      %v2536 = vpop.f32.mrb[0].mxu0
      %v2537 = vadd.f32 0.0, %v2536
      %v2538 = vpop.f32.mrb[0].mxu0
      %v2539 = vadd.f32 0.0, %v2538
      %2540 = vdwg.mxu0
      %v2541 = vld [vmem:[#allocation3] sm:$0xff]
      %v2542 = vld [vmem:[#allocation3 + $0x8] sm:$0xff]
      %v2543 = vld [vmem:[#allocation3 + $0x10] sm:$0xff]
      %v2544 = vld [vmem:[#allocation3 + $0x18] sm:$0xff]
      %v2545 = vadd.f32 %v2541, %v2533
      %v2546 = vadd.f32 %v2542, %v2535
      %v2547 = vadd.f32 %v2543, %v2537
      %v2548 = vadd.f32 %v2544, %v2539
      %2549 = vst [vmem:[#allocation3] sm:$0xff] %v2545
      %2550 = vst [vmem:[#allocation3 + $0x8] sm:$0xff] %v2546
      %2551 = vst [vmem:[#allocation3 + $0x10] sm:$0xff] %v2547
      %2552 = vst [vmem:[#allocation3 + $0x18] sm:$0xff] %v2548
      %v2553 = vld [vmem:[#allocation2] sm:$0xf0]
      %v2554 = vld [vmem:[#allocation2 + $0x8] sm:$0xf0]
      %v2555 = vld [vmem:[#allocation2 + $0x10] sm:$0xf]
      %v2556 = vld [vmem:[#allocation2 + $0x18] sm:$0xf]
      %s2557 = scalar_lea.vmem %s322, 2048
      %v2558 = vld [vmem:[%s2557] sm:$0xff]
      %v2559 = vld [vmem:[%s2557 + $0x8] sm:$0xff]
      %v2560 = vld [vmem:[%s2557 + $0x10] sm:$0xff]
      %v2561 = vld [vmem:[%s2557 + $0x18] sm:$0xff]
      %v2562 = vld [vmem:[%s2557 + $0x20] sm:$0xff]
      %v2563 = vld [vmem:[%s2557 + $0x28] sm:$0xff]
      %v2564 = vld [vmem:[%s2557 + $0x30] sm:$0xff]
      %v2565 = vld [vmem:[%s2557 + $0x38] sm:$0xff]
      %v2566 = vld [vmem:[%s2557 + $0x40] sm:$0xff]
      %v2567 = vld [vmem:[%s2557 + $0x48] sm:$0xff]
      %v2568 = vld [vmem:[%s2557 + $0x50] sm:$0xff]
      %v2569 = vld [vmem:[%s2557 + $0x58] sm:$0xff]
      %v2570 = vld [vmem:[%s2557 + $0x60] sm:$0xff]
      %v2571 = vld [vmem:[%s2557 + $0x68] sm:$0xff]
      %v2572 = vld [vmem:[%s2557 + $0x70] sm:$0xff]
      %v2573 = vld [vmem:[%s2557 + $0x78] sm:$0xff]
      %v2574 = vld [vmem:[%s2557 + $0x80] sm:$0xff]
      %v2575 = vld [vmem:[%s2557 + $0x88] sm:$0xff]
      %v2576 = vld [vmem:[%s2557 + $0x90] sm:$0xff]
      %v2577 = vld [vmem:[%s2557 + $0x98] sm:$0xff]
      %v2578 = vld [vmem:[%s2557 + $0xa0] sm:$0xff]
      %v2579 = vld [vmem:[%s2557 + $0xa8] sm:$0xff]
      %v2580 = vld [vmem:[%s2557 + $0xb0] sm:$0xff]
      %v2581 = vld [vmem:[%s2557 + $0xb8] sm:$0xff]
      %v2582 = vld [vmem:[%s2557 + $0xc0] sm:$0xff]
      %v2583 = vld [vmem:[%s2557 + $0xc8] sm:$0xff]
      %v2584 = vld [vmem:[%s2557 + $0xd0] sm:$0xff]
      %v2585 = vld [vmem:[%s2557 + $0xd8] sm:$0xff]
      %v2586 = vld [vmem:[%s2557 + $0xe0] sm:$0xff]
      %v2587 = vld [vmem:[%s2557 + $0xe8] sm:$0xff]
      %v2588 = vld [vmem:[%s2557 + $0xf0] sm:$0xff]
      %v2589 = vld [vmem:[%s2557 + $0xf8] sm:$0xff]
      %vm2594 = vcmask 1043456
      %v2595 = vrot.slane %v2553, 4
      %v2596 = vrot.slane %v2555, 4
      %v2597 = vsel %vm2594, %v2595, %v2596
      %v2598 = vrot.slane %v2554, 4
      %v2599 = vrot.slane %v2556, 4
      %v2600 = vsel %vm2594, %v2598, %v2599
      %v2635 = vunpack.c.l.b16 %v2558
      %v2636 = vunpack.c.h.b16 %v2558
      %v2637 = vunpack.c.l.b16 %v2559
      %v2638 = vunpack.c.h.b16 %v2559
      %v2639 = vunpack.c.l.b16 %v2560
      %v2640 = vunpack.c.h.b16 %v2560
      %v2641 = vunpack.c.l.b16 %v2561
      %v2642 = vunpack.c.h.b16 %v2561
      %v2643 = vunpack.c.l.b16 %v2562
      %v2644 = vunpack.c.h.b16 %v2562
      %v2645 = vunpack.c.l.b16 %v2563
      %v2646 = vunpack.c.h.b16 %v2563
      %v2647 = vunpack.c.l.b16 %v2564
      %v2648 = vunpack.c.h.b16 %v2564
      %v2649 = vunpack.c.l.b16 %v2565
      %v2650 = vunpack.c.h.b16 %v2565
      %v2651 = vunpack.c.l.b16 %v2566
      %v2652 = vunpack.c.h.b16 %v2566
      %v2653 = vunpack.c.l.b16 %v2567
      %v2654 = vunpack.c.h.b16 %v2567
      %v2655 = vunpack.c.l.b16 %v2568
      %v2656 = vunpack.c.h.b16 %v2568
      %v2657 = vunpack.c.l.b16 %v2569
      %v2658 = vunpack.c.h.b16 %v2569
      %v2659 = vunpack.c.l.b16 %v2570
      %v2660 = vunpack.c.h.b16 %v2570
      %v2661 = vunpack.c.l.b16 %v2571
      %v2662 = vunpack.c.h.b16 %v2571
      %v2663 = vunpack.c.l.b16 %v2572
      %v2664 = vunpack.c.h.b16 %v2572
      %v2665 = vunpack.c.l.b16 %v2573
      %v2666 = vunpack.c.h.b16 %v2573
      %v2667 = vunpack.c.l.b16 %v2574
      %v2668 = vunpack.c.h.b16 %v2574
      %v2669 = vunpack.c.l.b16 %v2575
      %v2670 = vunpack.c.h.b16 %v2575
      %v2671 = vunpack.c.l.b16 %v2576
      %v2672 = vunpack.c.h.b16 %v2576
      %v2673 = vunpack.c.l.b16 %v2577
      %v2674 = vunpack.c.h.b16 %v2577
      %v2675 = vunpack.c.l.b16 %v2578
      %v2676 = vunpack.c.h.b16 %v2578
      %v2677 = vunpack.c.l.b16 %v2579
      %v2678 = vunpack.c.h.b16 %v2579
      %v2679 = vunpack.c.l.b16 %v2580
      %v2680 = vunpack.c.h.b16 %v2580
      %v2681 = vunpack.c.l.b16 %v2581
      %v2682 = vunpack.c.h.b16 %v2581
      %v2683 = vunpack.c.l.b16 %v2582
      %v2684 = vunpack.c.h.b16 %v2582
      %v2685 = vunpack.c.l.b16 %v2583
      %v2686 = vunpack.c.h.b16 %v2583
      %v2687 = vunpack.c.l.b16 %v2584
      %v2688 = vunpack.c.h.b16 %v2584
      %v2689 = vunpack.c.l.b16 %v2585
      %v2690 = vunpack.c.h.b16 %v2585
      %v2691 = vunpack.c.l.b16 %v2586
      %v2692 = vunpack.c.h.b16 %v2586
      %v2693 = vunpack.c.l.b16 %v2587
      %v2694 = vunpack.c.h.b16 %v2587
      %v2695 = vunpack.c.l.b16 %v2588
      %v2696 = vunpack.c.h.b16 %v2588
      %v2697 = vunpack.c.l.b16 %v2589
      %v2698 = vunpack.c.h.b16 %v2589
      %v2699 = vpack.c.b16 %v2637, %v2635
      %v2700 = vpack.c.b16 %v2638, %v2636
      %v2701 = vpack.c.b16 %v2641, %v2639
      %v2702 = vpack.c.b16 %v2642, %v2640
      %v2703 = vpack.c.b16 %v2645, %v2643
      %v2704 = vpack.c.b16 %v2646, %v2644
      %v2705 = vpack.c.b16 %v2649, %v2647
      %v2706 = vpack.c.b16 %v2650, %v2648
      %v2707 = vpack.c.b16 %v2653, %v2651
      %v2708 = vpack.c.b16 %v2654, %v2652
      %v2709 = vpack.c.b16 %v2657, %v2655
      %v2710 = vpack.c.b16 %v2658, %v2656
      %v2711 = vpack.c.b16 %v2661, %v2659
      %v2712 = vpack.c.b16 %v2662, %v2660
      %v2713 = vpack.c.b16 %v2665, %v2663
      %v2714 = vpack.c.b16 %v2666, %v2664
      %v2715 = vpack.c.b16 %v2669, %v2667
      %v2716 = vpack.c.b16 %v2670, %v2668
      %v2717 = vpack.c.b16 %v2673, %v2671
      %v2718 = vpack.c.b16 %v2674, %v2672
      %v2719 = vpack.c.b16 %v2677, %v2675
      %v2720 = vpack.c.b16 %v2678, %v2676
      %v2721 = vpack.c.b16 %v2681, %v2679
      %v2722 = vpack.c.b16 %v2682, %v2680
      %v2723 = vpack.c.b16 %v2685, %v2683
      %v2724 = vpack.c.b16 %v2686, %v2684
      %v2725 = vpack.c.b16 %v2689, %v2687
      %v2726 = vpack.c.b16 %v2690, %v2688
      %v2727 = vpack.c.b16 %v2693, %v2691
      %v2728 = vpack.c.b16 %v2694, %v2692
      %v2729 = vpack.c.b16 %v2697, %v2695
      %v2730 = vpack.c.b16 %v2698, %v2696
      %2763 = vmatprep.subr.bf16.mxu0 %v2700
      %2764 = vmatpush1.bf16.msra.mxu0 %v2699
      %2765 = vmatprep.subr.bf16.mxu0 %v2702
      %2766 = vmatpush1.bf16.msra.mxu0 %v2701
      %2767 = vmatprep.subr.bf16.mxu0 %v2704
      %2768 = vmatpush1.bf16.msra.mxu0 %v2703
      %2769 = vmatprep.subr.bf16.mxu0 %v2706
      %2770 = vmatpush1.bf16.msra.mxu0 %v2705
      %2771 = vmatprep.subr.bf16.mxu0 %v2708
      %2772 = vmatpush1.bf16.msra.mxu0 %v2707
      %2773 = vmatprep.subr.bf16.mxu0 %v2710
      %2774 = vmatpush1.bf16.msra.mxu0 %v2709
      %2775 = vmatprep.subr.bf16.mxu0 %v2712
      %2776 = vmatpush1.bf16.msra.mxu0 %v2711
      %2777 = vmatprep.subr.bf16.mxu0 %v2714
      %2778 = vmatpush1.bf16.msra.mxu0 %v2713
      %2779 = vmatprep.subr.bf16.mxu0 %v2716
      %2780 = vmatpush1.bf16.msra.mxu0 %v2715
      %2781 = vmatprep.subr.bf16.mxu0 %v2718
      %2782 = vmatpush1.bf16.msra.mxu0 %v2717
      %2783 = vmatprep.subr.bf16.mxu0 %v2720
      %2784 = vmatpush1.bf16.msra.mxu0 %v2719
      %2785 = vmatprep.subr.bf16.mxu0 %v2722
      %2786 = vmatpush1.bf16.msra.mxu0 %v2721
      %2787 = vmatprep.subr.bf16.mxu0 %v2724
      %2788 = vmatpush1.bf16.msra.mxu0 %v2723
      %2789 = vmatprep.subr.bf16.mxu0 %v2726
      %2790 = vmatpush1.bf16.msra.mxu0 %v2725
      %2791 = vmatprep.subr.bf16.mxu0 %v2728
      %2792 = vmatpush1.bf16.msra.mxu0 %v2727
      %2793 = vmatprep.subr.bf16.mxu0 %v2730
      %2794 = vmatpush1.bf16.msra.mxu0 %v2729
      %2795 = vmatprep.mubr.bf16.mxu0 %v2600
      %2796 = vmatmul.mubr.bf16.gmra.mrb[0].mxu0 %v2597
      %v2797 = vpop.f32.mrb[0].mxu0
      %v2798 = vadd.f32 0.0, %v2797
      %v2799 = vpop.f32.mrb[0].mxu0
      %v2800 = vadd.f32 0.0, %v2799
      %v2801 = vpop.f32.mrb[0].mxu0
      %v2802 = vadd.f32 0.0, %v2801
      %v2803 = vpop.f32.mrb[0].mxu0
      %v2804 = vadd.f32 0.0, %v2803
      %2805 = vdwg.mxu0
      %v2806 = vld [vmem:[#allocation3] sm:$0xff]
      %v2807 = vld [vmem:[#allocation3 + $0x8] sm:$0xff]
      %v2808 = vld [vmem:[#allocation3 + $0x10] sm:$0xff]
      %v2809 = vld [vmem:[#allocation3 + $0x18] sm:$0xff]
      %v2810 = vadd.f32 %v2806, %v2798
      %v2811 = vadd.f32 %v2807, %v2800
      %v2812 = vadd.f32 %v2808, %v2802
      %v2813 = vadd.f32 %v2809, %v2804
      %2814 = vst [vmem:[#allocation3] sm:$0xff] %v2810
      %2815 = vst [vmem:[#allocation3 + $0x8] sm:$0xff] %v2811
      %2816 = vst [vmem:[#allocation3 + $0x10] sm:$0xff] %v2812
      %2817 = vst [vmem:[#allocation3 + $0x18] sm:$0xff] %v2813
      %v2818 = vld [vmem:[#allocation2] sm:$0xf0]
      %v2819 = vld [vmem:[#allocation2 + $0x8] sm:$0xf0]
      %v2820 = vld [vmem:[#allocation2 + $0x10] sm:$0x1f]
      %v2821 = vld [vmem:[#allocation2 + $0x18] sm:$0x1f]
      %s2822 = scalar_lea.vmem %s322, 2304
      %v2823 = vld [vmem:[%s2822] sm:$0xff]
      %v2824 = vld [vmem:[%s2822 + $0x8] sm:$0xff]
      %v2825 = vld [vmem:[%s2822 + $0x10] sm:$0xff]
      %v2826 = vld [vmem:[%s2822 + $0x18] sm:$0xff]
      %v2827 = vld [vmem:[%s2822 + $0x20] sm:$0xff]
      %v2828 = vld [vmem:[%s2822 + $0x28] sm:$0xff]
      %v2829 = vld [vmem:[%s2822 + $0x30] sm:$0xff]
      %v2830 = vld [vmem:[%s2822 + $0x38] sm:$0xff]
      %v2831 = vld [vmem:[%s2822 + $0x40] sm:$0xff]
      %v2832 = vld [vmem:[%s2822 + $0x48] sm:$0xff]
      %v2833 = vld [vmem:[%s2822 + $0x50] sm:$0xff]
      %v2834 = vld [vmem:[%s2822 + $0x58] sm:$0xff]
      %v2835 = vld [vmem:[%s2822 + $0x60] sm:$0xff]
      %v2836 = vld [vmem:[%s2822 + $0x68] sm:$0xff]
      %v2837 = vld [vmem:[%s2822 + $0x70] sm:$0xff]
      %v2838 = vld [vmem:[%s2822 + $0x78] sm:$0xff]
      %v2839 = vld [vmem:[%s2822 + $0x80] sm:$0xff]
      %v2840 = vld [vmem:[%s2822 + $0x88] sm:$0xff]
      %v2841 = vld [vmem:[%s2822 + $0x90] sm:$0xff]
      %v2842 = vld [vmem:[%s2822 + $0x98] sm:$0xff]
      %v2843 = vld [vmem:[%s2822 + $0xa0] sm:$0xff]
      %v2844 = vld [vmem:[%s2822 + $0xa8] sm:$0xff]
      %v2845 = vld [vmem:[%s2822 + $0xb0] sm:$0xff]
      %v2846 = vld [vmem:[%s2822 + $0xb8] sm:$0xff]
      %v2847 = vld [vmem:[%s2822 + $0xc0] sm:$0xff]
      %v2848 = vld [vmem:[%s2822 + $0xc8] sm:$0xff]
      %v2849 = vld [vmem:[%s2822 + $0xd0] sm:$0xff]
      %v2850 = vld [vmem:[%s2822 + $0xd8] sm:$0xff]
      %v2851 = vld [vmem:[%s2822 + $0xe0] sm:$0xff]
      %v2852 = vld [vmem:[%s2822 + $0xe8] sm:$0xff]
      %v2853 = vld [vmem:[%s2822 + $0xf0] sm:$0xff]
      %v2854 = vld [vmem:[%s2822 + $0xf8] sm:$0xff]
      %vm2855 = vsmask.f32 3328
      %v2857 = vshrl.u32 %v2818, 16
      %v2859 = vrot.slane %v2857, 4
      %v2860 = vshll.u32 %v2818, 16
      %v2862 = vrot.slane %v2860, 5
      %v2863 = vor.u32 %v2859, %v2862
      %v2865 = vshrl.u32 %v2820, 16
      %v2867 = vrot.slane %v2865, 4
      %v2868 = vshll.u32 %v2820, 16
      %v2870 = vrot.slane %v2868, 5
      %v2871 = vor.u32 %v2867, %v2870
      %v2872 = vsel %vm2855, %v2863, %v2871
      %v2874 = vshrl.u32 %v2819, 16
      %v2876 = vrot.slane %v2874, 4
      %v2877 = vshll.u32 %v2819, 16
      %v2879 = vrot.slane %v2877, 5
      %v2880 = vor.u32 %v2876, %v2879
      %v2882 = vshrl.u32 %v2821, 16
      %v2884 = vrot.slane %v2882, 4
      %v2885 = vshll.u32 %v2821, 16
      %v2887 = vrot.slane %v2885, 5
      %v2888 = vor.u32 %v2884, %v2887
      %v2889 = vsel %vm2855, %v2880, %v2888
      %v2924 = vunpack.c.l.b16 %v2823
      %v2925 = vunpack.c.h.b16 %v2823
      %v2926 = vunpack.c.l.b16 %v2824
      %v2927 = vunpack.c.h.b16 %v2824
      %v2928 = vunpack.c.l.b16 %v2825
      %v2929 = vunpack.c.h.b16 %v2825
      %v2930 = vunpack.c.l.b16 %v2826
      %v2931 = vunpack.c.h.b16 %v2826
      %v2932 = vunpack.c.l.b16 %v2827
      %v2933 = vunpack.c.h.b16 %v2827
      %v2934 = vunpack.c.l.b16 %v2828
      %v2935 = vunpack.c.h.b16 %v2828
      %v2936 = vunpack.c.l.b16 %v2829
      %v2937 = vunpack.c.h.b16 %v2829
      %v2938 = vunpack.c.l.b16 %v2830
      %v2939 = vunpack.c.h.b16 %v2830
      %v2940 = vunpack.c.l.b16 %v2831
      %v2941 = vunpack.c.h.b16 %v2831
      %v2942 = vunpack.c.l.b16 %v2832
      %v2943 = vunpack.c.h.b16 %v2832
      %v2944 = vunpack.c.l.b16 %v2833
      %v2945 = vunpack.c.h.b16 %v2833
      %v2946 = vunpack.c.l.b16 %v2834
      %v2947 = vunpack.c.h.b16 %v2834
      %v2948 = vunpack.c.l.b16 %v2835
      %v2949 = vunpack.c.h.b16 %v2835
      %v2950 = vunpack.c.l.b16 %v2836
      %v2951 = vunpack.c.h.b16 %v2836
      %v2952 = vunpack.c.l.b16 %v2837
      %v2953 = vunpack.c.h.b16 %v2837
      %v2954 = vunpack.c.l.b16 %v2838
      %v2955 = vunpack.c.h.b16 %v2838
      %v2956 = vunpack.c.l.b16 %v2839
      %v2957 = vunpack.c.h.b16 %v2839
      %v2958 = vunpack.c.l.b16 %v2840
      %v2959 = vunpack.c.h.b16 %v2840
      %v2960 = vunpack.c.l.b16 %v2841
      %v2961 = vunpack.c.h.b16 %v2841
      %v2962 = vunpack.c.l.b16 %v2842
      %v2963 = vunpack.c.h.b16 %v2842
      %v2964 = vunpack.c.l.b16 %v2843
      %v2965 = vunpack.c.h.b16 %v2843
      %v2966 = vunpack.c.l.b16 %v2844
      %v2967 = vunpack.c.h.b16 %v2844
      %v2968 = vunpack.c.l.b16 %v2845
      %v2969 = vunpack.c.h.b16 %v2845
      %v2970 = vunpack.c.l.b16 %v2846
      %v2971 = vunpack.c.h.b16 %v2846
      %v2972 = vunpack.c.l.b16 %v2847
      %v2973 = vunpack.c.h.b16 %v2847
      %v2974 = vunpack.c.l.b16 %v2848
      %v2975 = vunpack.c.h.b16 %v2848
      %v2976 = vunpack.c.l.b16 %v2849
      %v2977 = vunpack.c.h.b16 %v2849
      %v2978 = vunpack.c.l.b16 %v2850
      %v2979 = vunpack.c.h.b16 %v2850
      %v2980 = vunpack.c.l.b16 %v2851
      %v2981 = vunpack.c.h.b16 %v2851
      %v2982 = vunpack.c.l.b16 %v2852
      %v2983 = vunpack.c.h.b16 %v2852
      %v2984 = vunpack.c.l.b16 %v2853
      %v2985 = vunpack.c.h.b16 %v2853
      %v2986 = vunpack.c.l.b16 %v2854
      %v2987 = vunpack.c.h.b16 %v2854
      %v2988 = vpack.c.b16 %v2926, %v2924
      %v2989 = vpack.c.b16 %v2927, %v2925
      %v2990 = vpack.c.b16 %v2930, %v2928
      %v2991 = vpack.c.b16 %v2931, %v2929
      %v2992 = vpack.c.b16 %v2934, %v2932
      %v2993 = vpack.c.b16 %v2935, %v2933
      %v2994 = vpack.c.b16 %v2938, %v2936
      %v2995 = vpack.c.b16 %v2939, %v2937
      %v2996 = vpack.c.b16 %v2942, %v2940
      %v2997 = vpack.c.b16 %v2943, %v2941
      %v2998 = vpack.c.b16 %v2946, %v2944
      %v2999 = vpack.c.b16 %v2947, %v2945
      %v3000 = vpack.c.b16 %v2950, %v2948
      %v3001 = vpack.c.b16 %v2951, %v2949
      %v3002 = vpack.c.b16 %v2954, %v2952
      %v3003 = vpack.c.b16 %v2955, %v2953
      %v3004 = vpack.c.b16 %v2958, %v2956
      %v3005 = vpack.c.b16 %v2959, %v2957
      %v3006 = vpack.c.b16 %v2962, %v2960
      %v3007 = vpack.c.b16 %v2963, %v2961
      %v3008 = vpack.c.b16 %v2966, %v2964
      %v3009 = vpack.c.b16 %v2967, %v2965
      %v3010 = vpack.c.b16 %v2970, %v2968
      %v3011 = vpack.c.b16 %v2971, %v2969
      %v3012 = vpack.c.b16 %v2974, %v2972
      %v3013 = vpack.c.b16 %v2975, %v2973
      %v3014 = vpack.c.b16 %v2978, %v2976
      %v3015 = vpack.c.b16 %v2979, %v2977
      %v3016 = vpack.c.b16 %v2982, %v2980
      %v3017 = vpack.c.b16 %v2983, %v2981
      %v3018 = vpack.c.b16 %v2986, %v2984
      %v3019 = vpack.c.b16 %v2987, %v2985
      %3052 = vmatprep.subr.bf16.mxu0 %v2989
      %3053 = vmatpush1.bf16.msra.mxu0 %v2988
      %3054 = vmatprep.subr.bf16.mxu0 %v2991
      %3055 = vmatpush1.bf16.msra.mxu0 %v2990
      %3056 = vmatprep.subr.bf16.mxu0 %v2993
      %3057 = vmatpush1.bf16.msra.mxu0 %v2992
      %3058 = vmatprep.subr.bf16.mxu0 %v2995
      %3059 = vmatpush1.bf16.msra.mxu0 %v2994
      %3060 = vmatprep.subr.bf16.mxu0 %v2997
      %3061 = vmatpush1.bf16.msra.mxu0 %v2996
      %3062 = vmatprep.subr.bf16.mxu0 %v2999
      %3063 = vmatpush1.bf16.msra.mxu0 %v2998
      %3064 = vmatprep.subr.bf16.mxu0 %v3001
      %3065 = vmatpush1.bf16.msra.mxu0 %v3000
      %3066 = vmatprep.subr.bf16.mxu0 %v3003
      %3067 = vmatpush1.bf16.msra.mxu0 %v3002
      %3068 = vmatprep.subr.bf16.mxu0 %v3005
      %3069 = vmatpush1.bf16.msra.mxu0 %v3004
      %3070 = vmatprep.subr.bf16.mxu0 %v3007
      %3071 = vmatpush1.bf16.msra.mxu0 %v3006
      %3072 = vmatprep.subr.bf16.mxu0 %v3009
      %3073 = vmatpush1.bf16.msra.mxu0 %v3008
      %3074 = vmatprep.subr.bf16.mxu0 %v3011
      %3075 = vmatpush1.bf16.msra.mxu0 %v3010
      %3076 = vmatprep.subr.bf16.mxu0 %v3013
      %3077 = vmatpush1.bf16.msra.mxu0 %v3012
      %3078 = vmatprep.subr.bf16.mxu0 %v3015
      %3079 = vmatpush1.bf16.msra.mxu0 %v3014
      %3080 = vmatprep.subr.bf16.mxu0 %v3017
      %3081 = vmatpush1.bf16.msra.mxu0 %v3016
      %3082 = vmatprep.subr.bf16.mxu0 %v3019
      %3083 = vmatpush1.bf16.msra.mxu0 %v3018
      %3084 = vmatprep.mubr.bf16.mxu0 %v2889
      %3085 = vmatmul.mubr.bf16.gmra.mrb[0].mxu0 %v2872
      %v3086 = vpop.f32.mrb[0].mxu0
      %v3087 = vadd.f32 0.0, %v3086
      %v3088 = vpop.f32.mrb[0].mxu0
      %v3089 = vadd.f32 0.0, %v3088
      %v3090 = vpop.f32.mrb[0].mxu0
      %v3091 = vadd.f32 0.0, %v3090
      %v3092 = vpop.f32.mrb[0].mxu0
      %v3093 = vadd.f32 0.0, %v3092
      %3094 = vdwg.mxu0
      %v3095 = vld [vmem:[#allocation3] sm:$0xff]
      %v3096 = vld [vmem:[#allocation3 + $0x8] sm:$0xff]
      %v3097 = vld [vmem:[#allocation3 + $0x10] sm:$0xff]
      %v3098 = vld [vmem:[#allocation3 + $0x18] sm:$0xff]
      %v3099 = vadd.f32 %v3095, %v3087
      %v3100 = vadd.f32 %v3096, %v3089
      %v3101 = vadd.f32 %v3097, %v3091
      %v3102 = vadd.f32 %v3098, %v3093
      %3103 = vst [vmem:[#allocation3] sm:$0xff] %v3099
      %3104 = vst [vmem:[#allocation3 + $0x8] sm:$0xff] %v3100
      %3105 = vst [vmem:[#allocation3 + $0x10] sm:$0xff] %v3101
      %3106 = vst [vmem:[#allocation3 + $0x18] sm:$0xff] %v3102
      %v3107 = vld [vmem:[#allocation2] sm:$0xe0]
      %v3108 = vld [vmem:[#allocation2 + $0x8] sm:$0xe0]
      %v3109 = vld [vmem:[#allocation2 + $0x10] sm:$0x1f]
      %v3110 = vld [vmem:[#allocation2 + $0x18] sm:$0x1f]
      %s3111 = scalar_lea.vmem %s322, 2560
      %v3112 = vld [vmem:[%s3111] sm:$0xff]
      %v3113 = vld [vmem:[%s3111 + $0x8] sm:$0xff]
      %v3114 = vld [vmem:[%s3111 + $0x10] sm:$0xff]
      %v3115 = vld [vmem:[%s3111 + $0x18] sm:$0xff]
      %v3116 = vld [vmem:[%s3111 + $0x20] sm:$0xff]
      %v3117 = vld [vmem:[%s3111 + $0x28] sm:$0xff]
      %v3118 = vld [vmem:[%s3111 + $0x30] sm:$0xff]
      %v3119 = vld [vmem:[%s3111 + $0x38] sm:$0xff]
      %v3120 = vld [vmem:[%s3111 + $0x40] sm:$0xff]
      %v3121 = vld [vmem:[%s3111 + $0x48] sm:$0xff]
      %v3122 = vld [vmem:[%s3111 + $0x50] sm:$0xff]
      %v3123 = vld [vmem:[%s3111 + $0x58] sm:$0xff]
      %v3124 = vld [vmem:[%s3111 + $0x60] sm:$0xff]
      %v3125 = vld [vmem:[%s3111 + $0x68] sm:$0xff]
      %v3126 = vld [vmem:[%s3111 + $0x70] sm:$0xff]
      %v3127 = vld [vmem:[%s3111 + $0x78] sm:$0xff]
      %v3128 = vld [vmem:[%s3111 + $0x80] sm:$0xff]
      %v3129 = vld [vmem:[%s3111 + $0x88] sm:$0xff]
      %v3130 = vld [vmem:[%s3111 + $0x90] sm:$0xff]
      %v3131 = vld [vmem:[%s3111 + $0x98] sm:$0xff]
      %v3132 = vld [vmem:[%s3111 + $0xa0] sm:$0xff]
      %v3133 = vld [vmem:[%s3111 + $0xa8] sm:$0xff]
      %v3134 = vld [vmem:[%s3111 + $0xb0] sm:$0xff]
      %v3135 = vld [vmem:[%s3111 + $0xb8] sm:$0xff]
      %v3136 = vld [vmem:[%s3111 + $0xc0] sm:$0xff]
      %v3137 = vld [vmem:[%s3111 + $0xc8] sm:$0xff]
      %v3138 = vld [vmem:[%s3111 + $0xd0] sm:$0xff]
      %v3139 = vld [vmem:[%s3111 + $0xd8] sm:$0xff]
      %v3140 = vld [vmem:[%s3111 + $0xe0] sm:$0xff]
      %v3141 = vld [vmem:[%s3111 + $0xe8] sm:$0xff]
      %v3142 = vld [vmem:[%s3111 + $0xf0] sm:$0xff]
      %v3143 = vld [vmem:[%s3111 + $0xf8] sm:$0xff]
      %vm3148 = vcmask 1042432
      %v3149 = vrot.slane %v3107, 5
      %v3150 = vrot.slane %v3109, 5
      %v3151 = vsel %vm3148, %v3149, %v3150
      %v3152 = vrot.slane %v3108, 5
      %v3153 = vrot.slane %v3110, 5
      %v3154 = vsel %vm3148, %v3152, %v3153
      %v3189 = vunpack.c.l.b16 %v3112
      %v3190 = vunpack.c.h.b16 %v3112
      %v3191 = vunpack.c.l.b16 %v3113
      %v3192 = vunpack.c.h.b16 %v3113
      %v3193 = vunpack.c.l.b16 %v3114
      %v3194 = vunpack.c.h.b16 %v3114
      %v3195 = vunpack.c.l.b16 %v3115
      %v3196 = vunpack.c.h.b16 %v3115
      %v3197 = vunpack.c.l.b16 %v3116
      %v3198 = vunpack.c.h.b16 %v3116
      %v3199 = vunpack.c.l.b16 %v3117
      %v3200 = vunpack.c.h.b16 %v3117
      %v3201 = vunpack.c.l.b16 %v3118
      %v3202 = vunpack.c.h.b16 %v3118
      %v3203 = vunpack.c.l.b16 %v3119
      %v3204 = vunpack.c.h.b16 %v3119
      %v3205 = vunpack.c.l.b16 %v3120
      %v3206 = vunpack.c.h.b16 %v3120
      %v3207 = vunpack.c.l.b16 %v3121
      %v3208 = vunpack.c.h.b16 %v3121
      %v3209 = vunpack.c.l.b16 %v3122
      %v3210 = vunpack.c.h.b16 %v3122
      %v3211 = vunpack.c.l.b16 %v3123
      %v3212 = vunpack.c.h.b16 %v3123
      %v3213 = vunpack.c.l.b16 %v3124
      %v3214 = vunpack.c.h.b16 %v3124
      %v3215 = vunpack.c.l.b16 %v3125
      %v3216 = vunpack.c.h.b16 %v3125
      %v3217 = vunpack.c.l.b16 %v3126
      %v3218 = vunpack.c.h.b16 %v3126
      %v3219 = vunpack.c.l.b16 %v3127
      %v3220 = vunpack.c.h.b16 %v3127
      %v3221 = vunpack.c.l.b16 %v3128
      %v3222 = vunpack.c.h.b16 %v3128
      %v3223 = vunpack.c.l.b16 %v3129
      %v3224 = vunpack.c.h.b16 %v3129
      %v3225 = vunpack.c.l.b16 %v3130
      %v3226 = vunpack.c.h.b16 %v3130
      %v3227 = vunpack.c.l.b16 %v3131
      %v3228 = vunpack.c.h.b16 %v3131
      %v3229 = vunpack.c.l.b16 %v3132
      %v3230 = vunpack.c.h.b16 %v3132
      %v3231 = vunpack.c.l.b16 %v3133
      %v3232 = vunpack.c.h.b16 %v3133
      %v3233 = vunpack.c.l.b16 %v3134
      %v3234 = vunpack.c.h.b16 %v3134
      %v3235 = vunpack.c.l.b16 %v3135
      %v3236 = vunpack.c.h.b16 %v3135
      %v3237 = vunpack.c.l.b16 %v3136
      %v3238 = vunpack.c.h.b16 %v3136
      %v3239 = vunpack.c.l.b16 %v3137
      %v3240 = vunpack.c.h.b16 %v3137
      %v3241 = vunpack.c.l.b16 %v3138
      %v3242 = vunpack.c.h.b16 %v3138
      %v3243 = vunpack.c.l.b16 %v3139
      %v3244 = vunpack.c.h.b16 %v3139
      %v3245 = vunpack.c.l.b16 %v3140
      %v3246 = vunpack.c.h.b16 %v3140
      %v3247 = vunpack.c.l.b16 %v3141
      %v3248 = vunpack.c.h.b16 %v3141
      %v3249 = vunpack.c.l.b16 %v3142
      %v3250 = vunpack.c.h.b16 %v3142
      %v3251 = vunpack.c.l.b16 %v3143
      %v3252 = vunpack.c.h.b16 %v3143
      %v3253 = vpack.c.b16 %v3191, %v3189
      %v3254 = vpack.c.b16 %v3192, %v3190
      %v3255 = vpack.c.b16 %v3195, %v3193
      %v3256 = vpack.c.b16 %v3196, %v3194
      %v3257 = vpack.c.b16 %v3199, %v3197
      %v3258 = vpack.c.b16 %v3200, %v3198
      %v3259 = vpack.c.b16 %v3203, %v3201
      %v3260 = vpack.c.b16 %v3204, %v3202
      %v3261 = vpack.c.b16 %v3207, %v3205
      %v3262 = vpack.c.b16 %v3208, %v3206
      %v3263 = vpack.c.b16 %v3211, %v3209
      %v3264 = vpack.c.b16 %v3212, %v3210
      %v3265 = vpack.c.b16 %v3215, %v3213
      %v3266 = vpack.c.b16 %v3216, %v3214
      %v3267 = vpack.c.b16 %v3219, %v3217
      %v3268 = vpack.c.b16 %v3220, %v3218
      %v3269 = vpack.c.b16 %v3223, %v3221
      %v3270 = vpack.c.b16 %v3224, %v3222
      %v3271 = vpack.c.b16 %v3227, %v3225
      %v3272 = vpack.c.b16 %v3228, %v3226
      %v3273 = vpack.c.b16 %v3231, %v3229
      %v3274 = vpack.c.b16 %v3232, %v3230
      %v3275 = vpack.c.b16 %v3235, %v3233
      %v3276 = vpack.c.b16 %v3236, %v3234
      %v3277 = vpack.c.b16 %v3239, %v3237
      %v3278 = vpack.c.b16 %v3240, %v3238
      %v3279 = vpack.c.b16 %v3243, %v3241
      %v3280 = vpack.c.b16 %v3244, %v3242
      %v3281 = vpack.c.b16 %v3247, %v3245
      %v3282 = vpack.c.b16 %v3248, %v3246
      %v3283 = vpack.c.b16 %v3251, %v3249
      %v3284 = vpack.c.b16 %v3252, %v3250
      %3317 = vmatprep.subr.bf16.mxu0 %v3254
      %3318 = vmatpush1.bf16.msra.mxu0 %v3253
      %3319 = vmatprep.subr.bf16.mxu0 %v3256
      %3320 = vmatpush1.bf16.msra.mxu0 %v3255
      %3321 = vmatprep.subr.bf16.mxu0 %v3258
      %3322 = vmatpush1.bf16.msra.mxu0 %v3257
      %3323 = vmatprep.subr.bf16.mxu0 %v3260
      %3324 = vmatpush1.bf16.msra.mxu0 %v3259
      %3325 = vmatprep.subr.bf16.mxu0 %v3262
      %3326 = vmatpush1.bf16.msra.mxu0 %v3261
      %3327 = vmatprep.subr.bf16.mxu0 %v3264
      %3328 = vmatpush1.bf16.msra.mxu0 %v3263
      %3329 = vmatprep.subr.bf16.mxu0 %v3266
      %3330 = vmatpush1.bf16.msra.mxu0 %v3265
      %3331 = vmatprep.subr.bf16.mxu0 %v3268
      %3332 = vmatpush1.bf16.msra.mxu0 %v3267
      %3333 = vmatprep.subr.bf16.mxu0 %v3270
      %3334 = vmatpush1.bf16.msra.mxu0 %v3269
      %3335 = vmatprep.subr.bf16.mxu0 %v3272
      %3336 = vmatpush1.bf16.msra.mxu0 %v3271
      %3337 = vmatprep.subr.bf16.mxu0 %v3274
      %3338 = vmatpush1.bf16.msra.mxu0 %v3273
      %3339 = vmatprep.subr.bf16.mxu0 %v3276
      %3340 = vmatpush1.bf16.msra.mxu0 %v3275
      %3341 = vmatprep.subr.bf16.mxu0 %v3278
      %3342 = vmatpush1.bf16.msra.mxu0 %v3277
      %3343 = vmatprep.subr.bf16.mxu0 %v3280
      %3344 = vmatpush1.bf16.msra.mxu0 %v3279
      %3345 = vmatprep.subr.bf16.mxu0 %v3282
      %3346 = vmatpush1.bf16.msra.mxu0 %v3281
      %3347 = vmatprep.subr.bf16.mxu0 %v3284
      %3348 = vmatpush1.bf16.msra.mxu0 %v3283
      %3349 = vmatprep.mubr.bf16.mxu0 %v3154
      %3350 = vmatmul.mubr.bf16.gmra.mrb[0].mxu0 %v3151
      %v3351 = vpop.f32.mrb[0].mxu0
      %v3352 = vadd.f32 0.0, %v3351
      %v3353 = vpop.f32.mrb[0].mxu0
      %v3354 = vadd.f32 0.0, %v3353
      %v3355 = vpop.f32.mrb[0].mxu0
      %v3356 = vadd.f32 0.0, %v3355
      %v3357 = vpop.f32.mrb[0].mxu0
      %v3358 = vadd.f32 0.0, %v3357
      %3359 = vdwg.mxu0
      %v3360 = vld [vmem:[#allocation3] sm:$0xff]
      %v3361 = vld [vmem:[#allocation3 + $0x8] sm:$0xff]
      %v3362 = vld [vmem:[#allocation3 + $0x10] sm:$0xff]
      %v3363 = vld [vmem:[#allocation3 + $0x18] sm:$0xff]
      %v3364 = vadd.f32 %v3360, %v3352
      %v3365 = vadd.f32 %v3361, %v3354
      %v3366 = vadd.f32 %v3362, %v3356
      %v3367 = vadd.f32 %v3363, %v3358
      %3368 = vst [vmem:[#allocation3] sm:$0xff] %v3364
      %3369 = vst [vmem:[#allocation3 + $0x8] sm:$0xff] %v3365
      %3370 = vst [vmem:[#allocation3 + $0x10] sm:$0xff] %v3366
      %3371 = vst [vmem:[#allocation3 + $0x18] sm:$0xff] %v3367
      %v3372 = vld [vmem:[#allocation3] sm:$0xff]
      %v3373 = vld [vmem:[#allocation3 + $0x8] sm:$0xff]
      %v3374 = vld [vmem:[#allocation3 + $0x10] sm:$0xff]
      %v3375 = vld [vmem:[#allocation3 + $0x18] sm:$0xff]
      %v3376 = vld [vmem:[%s326] sm:$0x3]
      %v3378 = vlaneseq
      %v3379 = vshrl.u32 %v3378, 7
      %v3380 = vsub.s32 0, %v3379
      %v3381 = vrot.slane %v3376, %v3380
      %v3382 = vlaneseq
      %v3383 = vshrl.u32 %v3382, 7
      %v3384 = vsub.s32 1, %v3383
      %v3385 = vrot.slane %v3376, %v3384
      %v3388 = vadd.f32 %v3372, %v3381
      %v3389 = vadd.f32 %v3373, %v3385
      %v3390 = vadd.f32 %v3374, %v3381
      %v3391 = vadd.f32 %v3375, %v3385
      %vm3392 = vcmp.gt.f32.partialorder %v3388, 0.0
      %vm3393 = vcmp.gt.f32.partialorder %v3389, 0.0
      %vm3394 = vcmp.gt.f32.partialorder %v3390, 0.0
      %vm3395 = vcmp.gt.f32.partialorder %v3391, 0.0
      %v3396 = vmul.f32 %v3388, 0.1
      %v3397 = vmul.f32 %v3389, 0.1
      %v3398 = vmul.f32 %v3390, 0.1
      %v3399 = vmul.f32 %v3391, 0.1
      %v3400 = vsel %vm3392, %v3388, %v3396
      %v3401 = vsel %vm3393, %v3389, %v3397
      %v3402 = vsel %vm3394, %v3390, %v3398
      %v3403 = vsel %vm3395, %v3391, %v3399
      %v3404 = vpack.c.bf16 %v3402, %v3400
      %v3405 = vpack.c.bf16 %v3403, %v3401
      %v3408 = vunpack.c.l.b16 %v3404
      %v3409 = vunpack.c.l.b16 %v3405
      %v3410 = vunpack.c.h.b16 %v3404
      %v3411 = vunpack.c.h.b16 %v3405
      %v3412 = vpack.c.b16 %v3409, %v3408
      %v3413 = vpack.c.b16 %v3411, %v3410
      %3416 = vst [vmem:[%s340] sm:$0xff] %v3412
      %3417 = vst [vmem:[%s340 + $0x8] sm:$0xff] %v3413
      %s3418 = smul.u32 2, %s22
      %s3419 = smul.u32 2, %s20
      %p3420 = scmp.lt.s32.totalorder %s21, 1
      %s3421 = scalar_select %p3420, %s21, 1
      %p3422 = scmp.lt.s32.totalorder %s3418, 1
      %s3423 = scalar_select %p3422, %s3418, 1
      %p3424 = scmp.lt.s32.totalorder %s3419, 1
      %s3425 = scalar_select %p3424, %s3419, 1
      %s3426 = smul.addr %s3423, 2
      %s3427 = sadd.s32 %s3425, %s3426
      %s3428 = smul.addr %s3421, 4
      %s3429 = sadd.s32 %s3427, %s3428
      %s3430 = smul.addr %s3429, 4
      %s3431 = scalar_lea.vmem %s4, %s3430
      // Predicated region
      $region37: #{_lambda_.7} parent=35 // pred_check
        %p3432 = pneg %p166
      $region38: #{_lambda_.7} parent=35 // pred_check_branch
        %3434 = sbr.rel (%p3432) target = $region40
      $region39: #{_lambda_.7} parent=35 // pred_region
        %s3435 = smul.u32 2, %s22
        %s3436 = smul.u32 2, %s20
      $region40: #{_lambda_.7} parent=35 // pred_fallthru
        _
    $region36: #{_lambda_.7} parent=5 // pred_fallthru
      _
    %p3437 = scmp.le.s32.totalorder 2, %s10
    // Predicated region
    $region41: #{_lambda_.7} parent=5 // pred_check
      %p3438 = pneg %p3437
    $region42: #{_lambda_.7} parent=5 // pred_check_branch
      %3440 = sbr.rel (%p3438) target = $region44
    $region43: #{_lambda_.7} parent=5 // pred_region
      %s3441 = ssub.s32 %s10, 2
      // Predicated region
      $region45: #{_lambda_.7} parent=43 // pred_check
        %p3442 = pneg %p172
      $region46: #{_lambda_.7} parent=43 // pred_check_branch
        %3444 = sbr.rel (%p3442) target = $region48
      $region47: #{_lambda_.7} parent=43 // pred_region
        %s3445 = smul.u32 2, %s25
        %s3446 = smul.u32 2, %s23
        %p3447 = scmp.lt.s32.totalorder %s24, 1
        %s3448 = scalar_select %p3447, %s24, 1
        %p3449 = scmp.lt.s32.totalorder %s3445, 1
        %s3450 = scalar_select %p3449, %s3445, 1
        %p3451 = scmp.lt.s32.totalorder %s3446, 1
        %s3452 = scalar_select %p3451, %s3446, 1
        %s3453 = smul.addr %s3450, 2
        %s3454 = sadd.s32 %s3452, %s3453
        %s3455 = smul.addr %s3448, 4
        %s3456 = sadd.s32 %s3454, %s3455
        %s3457 = smul.addr %s3456, 4
        %s3458 = scalar_lea.vmem %s4, %s3457
      $region48: #{_lambda_.7} parent=43 // pred_fallthru
        _
    $region44: #{_lambda_.7} parent=5 // pred_fallthru
      _
  $region6: #{_lambda_.7} parent=0 // loop_footer
    %s14 = sadd.s32 1, %s10
  $region7: #{_lambda_.7} parent=0 // loop_footer_branch
    %9 = sbr.rel target = $region3
  $region8: #{_lambda_.7} parent=0 // loop_exit
    _

</llo_original>
